<compile_context>
chip_gen: v5e
topology: v5e:2x2
jax: 0.10.0
libtpu: 0.0.40
codegen_flags: <defaults>
</compile_context>

<pallas_src>
import functools
import math

import jax
import jax.numpy as jnp
from jax.experimental import pallas as pl
from jax.experimental.pallas import tpu as pltpu

HID = 128           # LSTM hidden size (nn.LSTM(hidden_size=128))
NUM_CLASSES = 2


# ---------------------------------------------------------------------------
# Kernel 1: tiled matmul + bias (+ optional ReLU), bf16 MXU / f32 accumulate
# ---------------------------------------------------------------------------
def _mm_bias_act_kernel(a_ref, w_ref, b_ref, o_ref, acc_ref, *, nk, relu):
    k = pl.program_id(1)

    @pl.when(k == 0)
    def _():
        acc_ref[...] = jnp.zeros_like(acc_ref)

    acc_ref[...] += jnp.dot(a_ref[...].astype(jnp.bfloat16),
                            w_ref[...].astype(jnp.bfloat16),
                            preferred_element_type=jnp.float32)

    @pl.when(k == nk - 1)
    def _():
        y = acc_ref[...] + b_ref[...]
        if relu:
            y = jnp.maximum(y, 0.0)
        o_ref[...] = y


def matmul_bias_act(a, w, b, *, relu=False):
    """y = act(a @ w + b).  a:(M,K)  w:(K,N)  b:(N,)  ->  (M,N) f32."""
    M, K = a.shape
    K2, N = w.shape
    assert K == K2
    tm = 512 if M % 512 == 0 else M          # M-tile (parallel axis)
    tk = 512 if K % 512 == 0 else K          # K-tile (reduction, last axis)
    nm, nk = M // tm, K // tk
    kernel = functools.partial(_mm_bias_act_kernel, nk=nk, relu=relu)
    return pl.pallas_call(
        kernel,
        grid=(nm, nk),
        in_specs=[pl.BlockSpec((tm, tk), lambda m, k: (m, k)),
                  pl.BlockSpec((tk, N), lambda m, k: (k, 0)),
                  pl.BlockSpec((1, N), lambda m, k: (0, 0))],
        out_specs=pl.BlockSpec((tm, N), lambda m, k: (m, 0)),
        out_shape=jax.ShapeDtypeStruct((M, N), jnp.float32),
        scratch_shapes=[pltpu.VMEM((tm, N), jnp.float32)],
        compiler_params=pltpu.CompilerParams(
            dimension_semantics=("parallel", "arbitrary")),
    )(a, w, b.reshape(1, N))


# ---------------------------------------------------------------------------
# Kernel 2: 2x2 max pool (stride 2) -- no HBM transpose, strided loads in-kernel
# ---------------------------------------------------------------------------
def _maxpool_kernel(x_ref, o_ref):
    # x_ref: (tr, 2, W, C) row-pairs of the feature map; o_ref: (tr, W//2, C)
    w2 = o_ref.shape[1]
    even = x_ref[:, :, pl.ds(0, w2, 2), :]        # columns 0, 2, 4, ...
    odd = x_ref[:, :, pl.ds(1, w2, 2), :]         # columns 1, 3, 5, ...
    m = jnp.maximum(even, odd)                    # horizontal max, rows paired
    o_ref[...] = jnp.maximum(m[:, 0], m[:, 1])    # vertical max of the pair


def maxpool_2x2(x):
    """x: (B, H, W, C) f32 -> (B, H//2, W//2, C), non-overlapping 2x2 max."""
    B, H, W, C = x.shape
    H2, W2 = H // 2, W // 2
    R = B * H2
    xr = x.reshape(R, 2, W, C)                    # pure reshape, no transpose
    tr = next(t for t in (4, 2, 1) if R % t == 0)
    out = pl.pallas_call(
        _maxpool_kernel,
        grid=(R // tr,),
        in_specs=[pl.BlockSpec((tr, 2, W, C), lambda i: (i, 0, 0, 0))],
        out_specs=pl.BlockSpec((tr, W2, C), lambda i: (i, 0, 0)),
        out_shape=jax.ShapeDtypeStruct((R, W2, C), jnp.float32),
        compiler_params=pltpu.CompilerParams(
            dimension_semantics=("parallel",)),
    )(xr)
    return out.reshape(B, H2, W2, C)


# ---------------------------------------------------------------------------
# Kernel 3: bidirectional LSTM scan (grid = 2 directions, in-kernel time loop)
# ---------------------------------------------------------------------------
def _bidir_lstm_kernel(xw_ref, whh_ref, o_ref, *, t_steps, hid):
    # xw_ref : (T, B, 4H) input projections (+ both biases) for direction d
    # whh_ref: (H, 4H)    recurrent weights (bf16) for direction d
    # o_ref  : (T, B, H)  hidden states for direction d, forward time order
    d = pl.program_id(0)                       # 0 = forward, 1 = backward
    bsz = xw_ref.shape[1]
    w_hh = whh_ref[...]                        # resident for the whole scan

    def step(t, carry):
        h, c = carry
        tt = jnp.where(d == 0, t, t_steps - 1 - t)
        gates = xw_ref[tt] + jnp.dot(h.astype(jnp.bfloat16), w_hh,
                                     preferred_element_type=jnp.float32)
        i_g = jax.nn.sigmoid(gates[:, 0 * hid:1 * hid])
        f_g = jax.nn.sigmoid(gates[:, 1 * hid:2 * hid])
        g_g = jnp.tanh(gates[:, 2 * hid:3 * hid])
        o_g = jax.nn.sigmoid(gates[:, 3 * hid:4 * hid])
        c = f_g * c + i_g * g_g
        h = o_g * jnp.tanh(c)
        o_ref[tt] = h
        return h, c

    init = (jnp.zeros((bsz, hid), jnp.float32),
            jnp.zeros((bsz, hid), jnp.float32))
    jax.lax.fori_loop(0, t_steps, step, init, unroll=True)


def bidir_lstm_scan(xw, w_hh, hid):
    """xw: (T, B, 8H) f32 = [fwd gates | bwd gates]; w_hh: (H, 8H) bf16.
       Returns (T, B, 2H) f32 = [fwd hidden | bwd hidden] per time step."""
    T, B, _ = xw.shape
    kernel = functools.partial(_bidir_lstm_kernel, t_steps=T, hid=hid)
    return pl.pallas_call(
        kernel,
        grid=(2,),
        in_specs=[pl.BlockSpec((T, B, 4 * hid), lambda d: (0, 0, d)),
                  pl.BlockSpec((hid, 4 * hid), lambda d: (0, d))],
        out_specs=pl.BlockSpec((T, B, hid), lambda d: (0, 0, d)),
        out_shape=jax.ShapeDtypeStruct((T, B, 2 * hid), jnp.float32),
        compiler_params=pltpu.CompilerParams(
            dimension_semantics=("parallel",)),
    )(xw, w_hh)


# ---------------------------------------------------------------------------
# Layers built on the kernels
# ---------------------------------------------------------------------------
def conv3x3_relu(x, wmat, b):
    """3x3 conv (stride 1, pad 1) + ReLU via im2col + tiled bf16 matmul.
       x: (B,H,W,Cin) f32; wmat: (9*Cin, Cout) bf16; b: (Cout,) f32."""
    # TODO(synk): conv1 keeps im2col with K=9 (lane-padded A); a VPU
    # shifted-add formulation would cut its DMA/VMEM waste further.
    B, H, W, Cin = x.shape
    Cout = wmat.shape[1]
    xp = jnp.pad(x.astype(jnp.bfloat16), ((0, 0), (1, 1), (1, 1), (0, 0)))
    patches = jnp.concatenate(
        [xp[:, dy:dy + H, dx:dx + W, :] for dy in range(3) for dx in range(3)],
        axis=-1)                                        # (B,H,W,9*Cin) bf16
    y = matmul_bias_act(patches.reshape(B * H * W, 9 * Cin), wmat, b, relu=True)
    return y.reshape(B, H, W, Cout)


def bidir_lstm_layer(x_tbf, p):
    """One bidirectional LSTM layer.  x_tbf: (T,B,F) -> (T,B,2H)."""
    T, B, F = x_tbf.shape
    # fused input projection for both directions (both biases folded in)
    xw = matmul_bias_act(x_tbf.reshape(T * B, F), p["w_ih"], p["b"])
    return bidir_lstm_scan(xw.reshape(T, B, 8 * HID), p["w_hh"], HID)


def crnn_forward(kp, x_nchw):
    # conv stack (NCHW -> NHWC)
    x = jnp.transpose(x_nchw, (0, 2, 3, 1)).astype(jnp.float32)   # (B,H,W,1)
    x = conv3x3_relu(x, kp["conv1_w"], kp["conv1_b"])
    x = maxpool_2x2(x)
    x = conv3x3_relu(x, kp["conv2_w"], kp["conv2_b"])
    x = maxpool_2x2(x)
    # TODO(synk): nn.Dropout(0.3) is treated as identity (eval-mode semantics).
    B, Hp, Wp, C = x.shape
    # PyTorch: permute(0,2,3,1) then flatten (W',C) == NHWC flatten of last 2
    seq = x.reshape(B, Hp, Wp * C)                 # (B, T, 64*64)
    seq = jnp.transpose(seq, (1, 0, 2))            # (T, B, F)
    seq = bidir_lstm_layer(seq, kp["lstm"][0])
    seq = bidir_lstm_layer(seq, kp["lstm"][1])
    last = seq[-1]                                 # x[:, -1, :]  -> (B, 2H)
    # final Linear is tiny (B x 256 @ 256 x 2): plain JAX, no kernel launch
    return last @ kp["fc_w"].T + kp["fc_b"]


# ---------------------------------------------------------------------------
# Parameters: PyTorch-layout init + one-time repack into kernel layouts
# ---------------------------------------------------------------------------
def init_params(key):
    keys = iter(jax.random.split(key, 32))

    def u(shape, fan_in):
        s = 1.0 / math.sqrt(fan_in)
        return jax.random.uniform(next(keys), shape, jnp.float32, -s, s)

    params = {
        "conv1_w": u((32, 1, 3, 3), 1 * 9),
        "conv1_b": u((32,), 1 * 9),
        "conv2_w": u((64, 32, 3, 3), 32 * 9),
        "conv2_b": u((64,), 32 * 9),
        "fc_w": u((NUM_CLASSES, 2 * HID), 2 * HID),
        "fc_b": u((NUM_CLASSES,), 2 * HID),
    }
    lstm = []
    for layer in range(2):
        in_size = 64 * 64 if layer == 0 else 2 * HID
        dirs = []
        for _d in range(2):
            dirs.append((u((4 * HID, in_size), HID),   # weight_ih (i,f,g,o)
                         u((4 * HID, HID), HID),       # weight_hh
                         u((4 * HID,), HID),           # bias_ih
                         u((4 * HID,), HID)))          # bias_hh
        lstm.append(tuple(dirs))
    params["lstm"] = tuple(lstm)
    return params


def prepare_params(p):
    """One-time (outside jit): pack matmul weights to bf16 kernel layouts."""
    def conv_mat(w):
        cout, cin = w.shape[0], w.shape[1]
        return (jnp.transpose(w, (2, 3, 1, 0))
                .reshape(9 * cin, cout).astype(jnp.bfloat16))

    lstm = []
    for layer in p["lstm"]:
        (wi_f, wh_f, bi_f, bh_f), (wi_r, wh_r, bi_r, bh_r) = layer
        lstm.append({
            "w_ih": jnp.concatenate([wi_f.T, wi_r.T], axis=1).astype(jnp.bfloat16),
            "w_hh": jnp.concatenate([wh_f.T, wh_r.T], axis=1).astype(jnp.bfloat16),
            "b": jnp.concatenate([bi_f + bh_f, bi_r + bh_r]),
        })
    return {
        "conv1_w": conv_mat(p["conv1_w"]), "conv1_b": p["conv1_b"],
        "conv2_w": conv_mat(p["conv2_w"]), "conv2_b": p["conv2_b"],
        "fc_w": p["fc_w"], "fc_b": p["fc_b"],
        "lstm": tuple(lstm),
    }


if __name__ == "__main__":
    key = jax.random.PRNGKey(0)
    pkey, xkey = jax.random.split(key)
    params = init_params(pkey)
    kparams = prepare_params(params)
    # Shapes implied by the module: two conv+pool stages give (B, H/4, W/4, 64);
    # LSTM input_size = 64*64 forces W/4 = 64 -> W = 256; pick H = 32 (T = 8).
    x = jax.random.normal(xkey, (2, 1, 32, 256), jnp.float32)

    fwd = jax.jit(crnn_forward)
    out = jax.block_until_ready(fwd(kparams, x))
    assert out.shape == (2, NUM_CLASSES)
    assert bool(jnp.all(jnp.isfinite(out)))
    print("KERNEL_OK")
</pallas_src>

<mosaic_0001>
module attributes {stable_mosaic.version = 11 : i64} {
  func.func @_mm_bias_act_kernel(%arg0: i32, %arg1: i32, %arg2: memref<512x9xbf16, #tpu.memory_space<vmem>>, %arg3: memref<9x32xbf16, #tpu.memory_space<vmem>>, %arg4: memref<1x32xf32, #tpu.memory_space<vmem>>, %arg5: memref<512x32xf32, #tpu.memory_space<vmem>>, %arg6: memref<512x32xf32, #tpu.memory_space<vmem>>) attributes {dimension_semantics = [#tpu.dimension_semantics<parallel>, #tpu.dimension_semantics<arbitrary>], iteration_bounds = array<i64: 32, 1>, scalar_prefetch = 0 : i64, scratch_operands = 1 : i64, tpu.core_type = #tpu.core_type<tc>, window_params = [{transform_indices = @transform_0, window_bounds = array<i64: 512, 9>}, {transform_indices = @transform_1, window_bounds = array<i64: 9, 32>}, {pipeline_mode = #tpu.pipeline_mode<synchronous>, transform_indices = @transform_2, window_bounds = array<i64: 1, 32>}, {transform_indices = @transform_3, window_bounds = array<i64: 512, 32>}]} {
    %c0_i32 = arith.constant 0 : i32
    %0 = arith.cmpi eq, %arg1, %c0_i32 : i32
    %1 = arith.extui %0 : i1 to i32
    %c0_i32_0 = arith.constant 0 : i32
    %2 = arith.cmpi ne, %1, %c0_i32_0 : i32
    scf.if %2 {
      %cst_10 = arith.constant 0.000000e+00 : f32
      %12 = vector.broadcast %cst_10 : f32 to vector<512x32xf32>
      %c0_11 = arith.constant 0 : index
      %c0_12 = arith.constant 0 : index
      %13 = vector.load %arg6[%c0_11, %c0_12] : memref<512x32xf32, #tpu.memory_space<vmem>>, vector<512x32xf32>
      tpu.vector_store %arg6[%c0_11, %c0_12], %12 {strides = array<i32>} : memref<512x32xf32, #tpu.memory_space<vmem>>, vector<512x32xf32>,
    } else {
    }
    %c0 = arith.constant 0 : index
    %c0_1 = arith.constant 0 : index
    %3 = vector.load %arg6[%c0, %c0_1] : memref<512x32xf32, #tpu.memory_space<vmem>>, vector<512x32xf32>
    %c0_2 = arith.constant 0 : index
    %c0_3 = arith.constant 0 : index
    %4 = vector.load %arg2[%c0_2, %c0_3] : memref<512x9xbf16, #tpu.memory_space<vmem>>, vector<512x9xbf16>
    %c0_4 = arith.constant 0 : index
    %c0_5 = arith.constant 0 : index
    %5 = vector.load %arg3[%c0_4, %c0_5] : memref<9x32xbf16, #tpu.memory_space<vmem>>, vector<9x32xbf16>
    %cst = arith.constant dense<0.000000e+00> : vector<512x32xf32>
    %6 = tpu.matmul %4, %5, %cst {dimension_numbers = #tpu.dot_dimension_numbers<[1], [0], [0], [1], [0, 0, 1, 1], [], []>} : vector<512x9xbf16>, vector<9x32xbf16>, vector<512x32xf32> -> vector<512x32xf32>
    %7 = arith.addf %3, %6 : vector<512x32xf32>
    %c0_6 = arith.constant 0 : index
    %c0_7 = arith.constant 0 : index
    %8 = vector.load %arg6[%c0_6, %c0_7] : memref<512x32xf32, #tpu.memory_space<vmem>>, vector<512x32xf32>
    tpu.vector_store %arg6[%c0_6, %c0_7], %7 {strides = array<i32>} : memref<512x32xf32, #tpu.memory_space<vmem>>, vector<512x32xf32>,
    %c0_i32_8 = arith.constant 0 : i32
    %9 = arith.cmpi eq, %arg1, %c0_i32_8 : i32
    %10 = arith.extui %9 : i1 to i32
    %c0_i32_9 = arith.constant 0 : i32
    %11 = arith.cmpi ne, %10, %c0_i32_9 : i32
    scf.if %11 {
      %c0_10 = arith.constant 0 : index
      %c0_11 = arith.constant 0 : index
      %12 = vector.load %arg6[%c0_10, %c0_11] : memref<512x32xf32, #tpu.memory_space<vmem>>, vector<512x32xf32>
      %c0_12 = arith.constant 0 : index
      %c0_13 = arith.constant 0 : index
      %13 = vector.load %arg4[%c0_12, %c0_13] : memref<1x32xf32, #tpu.memory_space<vmem>>, vector<1x32xf32>
      %14 = vector.broadcast %13 : vector<1x32xf32> to vector<512x32xf32>
      %15 = arith.addf %12, %14 : vector<512x32xf32>
      %cst_14 = arith.constant 0.000000e+00 : f32
      %16 = vector.broadcast %cst_14 : f32 to vector<512x32xf32>
      %17 = arith.maximumf %15, %16 : vector<512x32xf32>
      %c0_15 = arith.constant 0 : index
      %c0_16 = arith.constant 0 : index
      %18 = vector.load %arg5[%c0_15, %c0_16] : memref<512x32xf32, #tpu.memory_space<vmem>>, vector<512x32xf32>
      tpu.vector_store %arg5[%c0_15, %c0_16], %17 {strides = array<i32>} : memref<512x32xf32, #tpu.memory_space<vmem>>, vector<512x32xf32>,
    } else {
    }
    return
  }
  func.func @transform_0(%arg0: i32, %arg1: i32) -> (i32, i32) {
    %c0_i32 = arith.constant 0 : i32
    return %arg0, %arg1 : i32, i32
  }
  func.func @transform_1(%arg0: i32, %arg1: i32) -> (i32, i32) {
    %c0_i32 = arith.constant 0 : i32
    %c0_i32_0 = arith.constant 0 : i32
    return %arg1, %c0_i32 : i32, i32
  }
  func.func @transform_2(%arg0: i32, %arg1: i32) -> (i32, i32) {
    %c0_i32 = arith.constant 0 : i32
    %c0_i32_0 = arith.constant 0 : i32
    %c0_i32_1 = arith.constant 0 : i32
    return %c0_i32, %c0_i32_0 : i32, i32
  }
  func.func @transform_3(%arg0: i32, %arg1: i32) -> (i32, i32) {
    %c0_i32 = arith.constant 0 : i32
    %c0_i32_0 = arith.constant 0 : i32
    return %arg0, %c0_i32 : i32, i32
  }
}

module attributes {stable_mosaic.version = 11 : i64} {
  func.func @_maxpool_kernel(%arg0: i32, %arg1: memref<4x2x256x32xf32, #tpu.memory_space<vmem>>, %arg2: memref<4x128x32xf32, #tpu.memory_space<vmem>>) attributes {dimension_semantics = [#tpu.dimension_semantics<parallel>], iteration_bounds = array<i64: 8>, scalar_prefetch = 0 : i64, scratch_operands = 0 : i64, tpu.core_type = #tpu.core_type<tc>, window_params = [{transform_indices = @transform_0, window_bounds = array<i64: 4, 2, 256, 32>}, {transform_indices = @transform_1, window_bounds = array<i64: 4, 128, 32>}]} {
    %c0 = arith.constant 0 : index
    %c0_0 = arith.constant 0 : index
    %c0_1 = arith.constant 0 : index
    %c0_2 = arith.constant 0 : index
    %0 = tpu.strided_load %arg1[%c0, %c0_0, %c0_1, %c0_2] {strides = array<i32: 1, 1, 2, 1>} : memref<4x2x256x32xf32, #tpu.memory_space<vmem>>, vector<4x2x128x32xf32>
    %c0_3 = arith.constant 0 : index
    %c0_4 = arith.constant 0 : index
    %c1 = arith.constant 1 : index
    %c0_5 = arith.constant 0 : index
    %1 = tpu.strided_load %arg1[%c0_3, %c0_4, %c1, %c0_5] {strides = array<i32: 1, 1, 2, 1>} : memref<4x2x256x32xf32, #tpu.memory_space<vmem>>, vector<4x2x128x32xf32>
    %2 = arith.maximumf %0, %1 : vector<4x2x128x32xf32>
    %3 = vector.extract_strided_slice %2 {offsets = [0, 0, 0, 0], sizes = [4, 1, 128, 32], strides = [1, 1, 1, 1]} : vector<4x2x128x32xf32> to vector<4x1x128x32xf32>
    %4 = vector.shape_cast %3 : vector<4x1x128x32xf32> to vector<4x128x32xf32>
    %5 = vector.extract_strided_slice %2 {offsets = [0, 1, 0, 0], sizes = [4, 1, 128, 32], strides = [1, 1, 1, 1]} : vector<4x2x128x32xf32> to vector<4x1x128x32xf32>
    %6 = vector.shape_cast %5 : vector<4x1x128x32xf32> to vector<4x128x32xf32>
    %7 = arith.maximumf %4, %6 : vector<4x128x32xf32>
    %c0_6 = arith.constant 0 : index
    %c0_7 = arith.constant 0 : index
    %c0_8 = arith.constant 0 : index
    %8 = vector.load %arg2[%c0_6, %c0_7, %c0_8] : memref<4x128x32xf32, #tpu.memory_space<vmem>>, vector<4x128x32xf32>
    tpu.vector_store %arg2[%c0_6, %c0_7, %c0_8], %7 {strides = array<i32>} : memref<4x128x32xf32, #tpu.memory_space<vmem>>, vector<4x128x32xf32>,
    return
  }
  func.func @transform_0(%arg0: i32) -> (i32, i32, i32, i32) {
    %c0_i32 = arith.constant 0 : i32
    %c0_i32_0 = arith.constant 0 : i32
    %c0_i32_1 = arith.constant 0 : i32
    %c0_i32_2 = arith.constant 0 : i32
    return %arg0, %c0_i32, %c0_i32_0, %c0_i32_1 : i32, i32, i32, i32
  }
  func.func @transform_1(%arg0: i32) -> (i32, i32, i32) {
    %c0_i32 = arith.constant 0 : i32
    %c0_i32_0 = arith.constant 0 : i32
    %c0_i32_1 = arith.constant 0 : i32
    return %arg0, %c0_i32, %c0_i32_0 : i32, i32, i32
  }
}

module attributes {stable_mosaic.version = 11 : i64} {
  func.func @_mm_bias_act_kernel(%arg0: i32, %arg1: i32, %arg2: memref<512x288xbf16, #tpu.memory_space<vmem>>, %arg3: memref<288x64xbf16, #tpu.memory_space<vmem>>, %arg4: memref<1x64xf32, #tpu.memory_space<vmem>>, %arg5: memref<512x64xf32, #tpu.memory_space<vmem>>, %arg6: memref<512x64xf32, #tpu.memory_space<vmem>>) attributes {dimension_semantics = [#tpu.dimension_semantics<parallel>, #tpu.dimension_semantics<arbitrary>], iteration_bounds = array<i64: 8, 1>, scalar_prefetch = 0 : i64, scratch_operands = 1 : i64, tpu.core_type = #tpu.core_type<tc>, window_params = [{transform_indices = @transform_0, window_bounds = array<i64: 512, 288>}, {transform_indices = @transform_1, window_bounds = array<i64: 288, 64>}, {pipeline_mode = #tpu.pipeline_mode<synchronous>, transform_indices = @transform_2, window_bounds = array<i64: 1, 64>}, {transform_indices = @transform_3, window_bounds = array<i64: 512, 64>}]} {
    %c0_i32 = arith.constant 0 : i32
    %0 = arith.cmpi eq, %arg1, %c0_i32 : i32
    %1 = arith.extui %0 : i1 to i32
    %c0_i32_0 = arith.constant 0 : i32
    %2 = arith.cmpi ne, %1, %c0_i32_0 : i32
    scf.if %2 {
      %cst_10 = arith.constant 0.000000e+00 : f32
      %12 = vector.broadcast %cst_10 : f32 to vector<512x64xf32>
      %c0_11 = arith.constant 0 : index
      %c0_12 = arith.constant 0 : index
      %13 = vector.load %arg6[%c0_11, %c0_12] : memref<512x64xf32, #tpu.memory_space<vmem>>, vector<512x64xf32>
      tpu.vector_store %arg6[%c0_11, %c0_12], %12 {strides = array<i32>} : memref<512x64xf32, #tpu.memory_space<vmem>>, vector<512x64xf32>,
    } else {
    }
    %c0 = arith.constant 0 : index
    %c0_1 = arith.constant 0 : index
    %3 = vector.load %arg6[%c0, %c0_1] : memref<512x64xf32, #tpu.memory_space<vmem>>, vector<512x64xf32>
    %c0_2 = arith.constant 0 : index
    %c0_3 = arith.constant 0 : index
    %4 = vector.load %arg2[%c0_2, %c0_3] : memref<512x288xbf16, #tpu.memory_space<vmem>>, vector<512x288xbf16>
    %c0_4 = arith.constant 0 : index
    %c0_5 = arith.constant 0 : index
    %5 = vector.load %arg3[%c0_4, %c0_5] : memref<288x64xbf16, #tpu.memory_space<vmem>>, vector<288x64xbf16>
    %cst = arith.constant dense<0.000000e+00> : vector<512x64xf32>
    %6 = tpu.matmul %4, %5, %cst {dimension_numbers = #tpu.dot_dimension_numbers<[1], [0], [0], [1], [0, 0, 1, 1], [], []>} : vector<512x288xbf16>, vector<288x64xbf16>, vector<512x64xf32> -> vector<512x64xf32>
    %7 = arith.addf %3, %6 : vector<512x64xf32>
    %c0_6 = arith.constant 0 : index
    %c0_7 = arith.constant 0 : index
    %8 = vector.load %arg6[%c0_6, %c0_7] : memref<512x64xf32, #tpu.memory_space<vmem>>, vector<512x64xf32>
    tpu.vector_store %arg6[%c0_6, %c0_7], %7 {strides = array<i32>} : memref<512x64xf32, #tpu.memory_space<vmem>>, vector<512x64xf32>,
    %c0_i32_8 = arith.constant 0 : i32
    %9 = arith.cmpi eq, %arg1, %c0_i32_8 : i32
    %10 = arith.extui %9 : i1 to i32
    %c0_i32_9 = arith.constant 0 : i32
    %11 = arith.cmpi ne, %10, %c0_i32_9 : i32
    scf.if %11 {
      %c0_10 = arith.constant 0 : index
      %c0_11 = arith.constant 0 : index
      %12 = vector.load %arg6[%c0_10, %c0_11] : memref<512x64xf32, #tpu.memory_space<vmem>>, vector<512x64xf32>
      %c0_12 = arith.constant 0 : index
      %c0_13 = arith.constant 0 : index
      %13 = vector.load %arg4[%c0_12, %c0_13] : memref<1x64xf32, #tpu.memory_space<vmem>>, vector<1x64xf32>
      %14 = vector.broadcast %13 : vector<1x64xf32> to vector<512x64xf32>
      %15 = arith.addf %12, %14 : vector<512x64xf32>
      %cst_14 = arith.constant 0.000000e+00 : f32
      %16 = vector.broadcast %cst_14 : f32 to vector<512x64xf32>
      %17 = arith.maximumf %15, %16 : vector<512x64xf32>
      %c0_15 = arith.constant 0 : index
      %c0_16 = arith.constant 0 : index
      %18 = vector.load %arg5[%c0_15, %c0_16] : memref<512x64xf32, #tpu.memory_space<vmem>>, vector<512x64xf32>
      tpu.vector_store %arg5[%c0_15, %c0_16], %17 {strides = array<i32>} : memref<512x64xf32, #tpu.memory_space<vmem>>, vector<512x64xf32>,
    } else {
    }
    return
  }
  func.func @transform_0(%arg0: i32, %arg1: i32) -> (i32, i32) {
    %c0_i32 = arith.constant 0 : i32
    return %arg0, %arg1 : i32, i32
  }
  func.func @transform_1(%arg0: i32, %arg1: i32) -> (i32, i32) {
    %c0_i32 = arith.constant 0 : i32
    %c0_i32_0 = arith.constant 0 : i32
    return %arg1, %c0_i32 : i32, i32
  }
  func.func @transform_2(%arg0: i32, %arg1: i32) -> (i32, i32) {
    %c0_i32 = arith.constant 0 : i32
    %c0_i32_0 = arith.constant 0 : i32
    %c0_i32_1 = arith.constant 0 : i32
    return %c0_i32, %c0_i32_0 : i32, i32
  }
  func.func @transform_3(%arg0: i32, %arg1: i32) -> (i32, i32) {
    %c0_i32 = arith.constant 0 : i32
    %c0_i32_0 = arith.constant 0 : i32
    return %arg0, %c0_i32 : i32, i32
  }
}

module attributes {stable_mosaic.version = 11 : i64} {
  func.func @_maxpool_kernel(%arg0: i32, %arg1: memref<4x2x128x64xf32, #tpu.memory_space<vmem>>, %arg2: memref<4x64x64xf32, #tpu.memory_space<vmem>>) attributes {dimension_semantics = [#tpu.dimension_semantics<parallel>], iteration_bounds = array<i64: 4>, scalar_prefetch = 0 : i64, scratch_operands = 0 : i64, tpu.core_type = #tpu.core_type<tc>, window_params = [{transform_indices = @transform_0, window_bounds = array<i64: 4, 2, 128, 64>}, {transform_indices = @transform_1, window_bounds = array<i64: 4, 64, 64>}]} {
    %c0 = arith.constant 0 : index
    %c0_0 = arith.constant 0 : index
    %c0_1 = arith.constant 0 : index
    %c0_2 = arith.constant 0 : index
    %0 = tpu.strided_load %arg1[%c0, %c0_0, %c0_1, %c0_2] {strides = array<i32: 1, 1, 2, 1>} : memref<4x2x128x64xf32, #tpu.memory_space<vmem>>, vector<4x2x64x64xf32>
    %c0_3 = arith.constant 0 : index
    %c0_4 = arith.constant 0 : index
    %c1 = arith.constant 1 : index
    %c0_5 = arith.constant 0 : index
    %1 = tpu.strided_load %arg1[%c0_3, %c0_4, %c1, %c0_5] {strides = array<i32: 1, 1, 2, 1>} : memref<4x2x128x64xf32, #tpu.memory_space<vmem>>, vector<4x2x64x64xf32>
    %2 = arith.maximumf %0, %1 : vector<4x2x64x64xf32>
    %3 = vector.extract_strided_slice %2 {offsets = [0, 0, 0, 0], sizes = [4, 1, 64, 64], strides = [1, 1, 1, 1]} : vector<4x2x64x64xf32> to vector<4x1x64x64xf32>
    %4 = vector.shape_cast %3 : vector<4x1x64x64xf32> to vector<4x64x64xf32>
    %5 = vector.extract_strided_slice %2 {offsets = [0, 1, 0, 0], sizes = [4, 1, 64, 64], strides = [1, 1, 1, 1]} : vector<4x2x64x64xf32> to vector<4x1x64x64xf32>
    %6 = vector.shape_cast %5 : vector<4x1x64x64xf32> to vector<4x64x64xf32>
    %7 = arith.maximumf %4, %6 : vector<4x64x64xf32>
    %c0_6 = arith.constant 0 : index
    %c0_7 = arith.constant 0 : index
    %c0_8 = arith.constant 0 : index
    %8 = vector.load %arg2[%c0_6, %c0_7, %c0_8] : memref<4x64x64xf32, #tpu.memory_space<vmem>>, vector<4x64x64xf32>
    tpu.vector_store %arg2[%c0_6, %c0_7, %c0_8], %7 {strides = array<i32>} : memref<4x64x64xf32, #tpu.memory_space<vmem>>, vector<4x64x64xf32>,
    return
  }
  func.func @transform_0(%arg0: i32) -> (i32, i32, i32, i32) {
    %c0_i32 = arith.constant 0 : i32
    %c0_i32_0 = arith.constant 0 : i32
    %c0_i32_1 = arith.constant 0 : i32
    %c0_i32_2 = arith.constant 0 : i32
    return %arg0, %c0_i32, %c0_i32_0, %c0_i32_1 : i32, i32, i32, i32
  }
  func.func @transform_1(%arg0: i32) -> (i32, i32, i32) {
    %c0_i32 = arith.constant 0 : i32
    %c0_i32_0 = arith.constant 0 : i32
    %c0_i32_1 = arith.constant 0 : i32
    return %arg0, %c0_i32, %c0_i32_0 : i32, i32, i32
  }
}

module attributes {stable_mosaic.version = 11 : i64} {
  func.func @_mm_bias_act_kernel(%arg0: i32, %arg1: i32, %arg2: memref<16x512xf32, #tpu.memory_space<vmem>>, %arg3: memref<512x1024xbf16, #tpu.memory_space<vmem>>, %arg4: memref<1x1024xf32, #tpu.memory_space<vmem>>, %arg5: memref<16x1024xf32, #tpu.memory_space<vmem>>, %arg6: memref<16x1024xf32, #tpu.memory_space<vmem>>) attributes {dimension_semantics = [#tpu.dimension_semantics<parallel>, #tpu.dimension_semantics<arbitrary>], iteration_bounds = array<i64: 1, 8>, scalar_prefetch = 0 : i64, scratch_operands = 1 : i64, tpu.core_type = #tpu.core_type<tc>, window_params = [{transform_indices = @transform_0, window_bounds = array<i64: 16, 512>}, {transform_indices = @transform_1, window_bounds = array<i64: 512, 1024>}, {pipeline_mode = #tpu.pipeline_mode<synchronous>, transform_indices = @transform_2, window_bounds = array<i64: 1, 1024>}, {transform_indices = @transform_3, window_bounds = array<i64: 16, 1024>}]} {
    %c0_i32 = arith.constant 0 : i32
    %0 = arith.cmpi eq, %arg1, %c0_i32 : i32
    %1 = arith.extui %0 : i1 to i32
    %c0_i32_0 = arith.constant 0 : i32
    %2 = arith.cmpi ne, %1, %c0_i32_0 : i32
    scf.if %2 {
      %cst_9 = arith.constant 0.000000e+00 : f32
      %13 = vector.broadcast %cst_9 : f32 to vector<16x1024xf32>
      %c0_10 = arith.constant 0 : index
      %c0_11 = arith.constant 0 : index
      %14 = vector.load %arg6[%c0_10, %c0_11] : memref<16x1024xf32, #tpu.memory_space<vmem>>, vector<16x1024xf32>
      tpu.vector_store %arg6[%c0_10, %c0_11], %13 {strides = array<i32>} : memref<16x1024xf32, #tpu.memory_space<vmem>>, vector<16x1024xf32>,
    } else {
    }
    %c0 = arith.constant 0 : index
    %c0_1 = arith.constant 0 : index
    %3 = vector.load %arg6[%c0, %c0_1] : memref<16x1024xf32, #tpu.memory_space<vmem>>, vector<16x1024xf32>
    %c0_2 = arith.constant 0 : index
    %c0_3 = arith.constant 0 : index
    %4 = vector.load %arg2[%c0_2, %c0_3] : memref<16x512xf32, #tpu.memory_space<vmem>>, vector<16x512xf32>
    %5 = arith.truncf %4 : vector<16x512xf32> to vector<16x512xbf16>
    %c0_4 = arith.constant 0 : index
    %c0_5 = arith.constant 0 : index
    %6 = vector.load %arg3[%c0_4, %c0_5] : memref<512x1024xbf16, #tpu.memory_space<vmem>>, vector<512x1024xbf16>
    %cst = arith.constant dense<0.000000e+00> : vector<16x1024xf32>
    %7 = tpu.matmul %5, %6, %cst {dimension_numbers = #tpu.dot_dimension_numbers<[1], [0], [0], [1], [0, 0, 1, 1], [], []>} : vector<16x512xbf16>, vector<512x1024xbf16>, vector<16x1024xf32> -> vector<16x1024xf32>
    %8 = arith.addf %3, %7 : vector<16x1024xf32>
    %c0_6 = arith.constant 0 : index
    %c0_7 = arith.constant 0 : index
    %9 = vector.load %arg6[%c0_6, %c0_7] : memref<16x1024xf32, #tpu.memory_space<vmem>>, vector<16x1024xf32>
    tpu.vector_store %arg6[%c0_6, %c0_7], %8 {strides = array<i32>} : memref<16x1024xf32, #tpu.memory_space<vmem>>, vector<16x1024xf32>,
    %c7_i32 = arith.constant 7 : i32
    %10 = arith.cmpi eq, %arg1, %c7_i32 : i32
    %11 = arith.extui %10 : i1 to i32
    %c0_i32_8 = arith.constant 0 : i32
    %12 = arith.cmpi ne, %11, %c0_i32_8 : i32
    scf.if %12 {
      %c0_9 = arith.constant 0 : index
      %c0_10 = arith.constant 0 : index
      %13 = vector.load %arg6[%c0_9, %c0_10] : memref<16x1024xf32, #tpu.memory_space<vmem>>, vector<16x1024xf32>
      %c0_11 = arith.constant 0 : index
      %c0_12 = arith.constant 0 : index
      %14 = vector.load %arg4[%c0_11, %c0_12] : memref<1x1024xf32, #tpu.memory_space<vmem>>, vector<1x1024xf32>
      %15 = vector.broadcast %14 : vector<1x1024xf32> to vector<16x1024xf32>
      %16 = arith.addf %13, %15 : vector<16x1024xf32>
      %c0_13 = arith.constant 0 : index
      %c0_14 = arith.constant 0 : index
      %17 = vector.load %arg5[%c0_13, %c0_14] : memref<16x1024xf32, #tpu.memory_space<vmem>>, vector<16x1024xf32>
      tpu.vector_store %arg5[%c0_13, %c0_14], %16 {strides = array<i32>} : memref<16x1024xf32, #tpu.memory_space<vmem>>, vector<16x1024xf32>,
    } else {
    }
    return
  }
  func.func @transform_0(%arg0: i32, %arg1: i32) -> (i32, i32) {
    %c0_i32 = arith.constant 0 : i32
    return %arg0, %arg1 : i32, i32
  }
  func.func @transform_1(%arg0: i32, %arg1: i32) -> (i32, i32) {
    %c0_i32 = arith.constant 0 : i32
    %c0_i32_0 = arith.constant 0 : i32
    return %arg1, %c0_i32 : i32, i32
  }
  func.func @transform_2(%arg0: i32, %arg1: i32) -> (i32, i32) {
    %c0_i32 = arith.constant 0 : i32
    %c0_i32_0 = arith.constant 0 : i32
    %c0_i32_1 = arith.constant 0 : i32
    return %c0_i32, %c0_i32_0 : i32, i32
  }
  func.func @transform_3(%arg0: i32, %arg1: i32) -> (i32, i32) {
    %c0_i32 = arith.constant 0 : i32
    %c0_i32_0 = arith.constant 0 : i32
    return %arg0, %c0_i32 : i32, i32
  }
}

module attributes {stable_mosaic.version = 11 : i64} {
  func.func @_bidir_lstm_kernel(%arg0: i32, %arg1: memref<8x2x512xf32, #tpu.memory_space<vmem>>, %arg2: memref<128x512xbf16, #tpu.memory_space<vmem>>, %arg3: memref<8x2x128xf32, #tpu.memory_space<vmem>>) attributes {dimension_semantics = [#tpu.dimension_semantics<parallel>], iteration_bounds = array<i64: 2>, scalar_prefetch = 0 : i64, scratch_operands = 0 : i64, tpu.core_type = #tpu.core_type<tc>, window_params = [{transform_indices = @transform_0, window_bounds = array<i64: 8, 2, 512>}, {transform_indices = @transform_1, window_bounds = array<i64: 128, 512>}, {transform_indices = @transform_2, window_bounds = array<i64: 8, 2, 128>}]} {
    %c0 = arith.constant 0 : index
    %c0_0 = arith.constant 0 : index
    %0 = vector.load %arg2[%c0, %c0_0] : memref<128x512xbf16, #tpu.memory_space<vmem>>, vector<128x512xbf16>
    %cst = arith.constant 0.000000e+00 : f32
    %1 = vector.broadcast %cst : f32 to vector<2x128xf32>
    %cst_1 = arith.constant 0.000000e+00 : f32
    %2 = vector.broadcast %cst_1 : f32 to vector<2x128xf32>
    %c0_i32 = arith.constant 0 : i32
    %c0_i32_2 = arith.constant 0 : i32
    %3 = arith.cmpi eq, %arg0, %c0_i32_2 : i32
    %c7_i32 = arith.constant 7 : i32
    %4 = arith.subi %c7_i32, %c0_i32 : i32
    %5 = arith.select %3, %c0_i32, %4 : i32
    %6 = arith.index_cast %5 : i32 to index
    %c0_3 = arith.constant 0 : index
    %c0_4 = arith.constant 0 : index
    %7 = vector.load %arg1[%6, %c0_3, %c0_4] : memref<8x2x512xf32, #tpu.memory_space<vmem>>, vector<1x2x512xf32>
    %8 = vector.shape_cast %7 : vector<1x2x512xf32> to vector<2x512xf32>
    %9 = arith.truncf %1 : vector<2x128xf32> to vector<2x128xbf16>
    %cst_5 = arith.constant dense<0.000000e+00> : vector<2x512xf32>
    %10 = tpu.matmul %9, %0, %cst_5 {dimension_numbers = #tpu.dot_dimension_numbers<[1], [0], [0], [1], [0, 0, 1, 1], [], []>} : vector<2x128xbf16>, vector<128x512xbf16>, vector<2x512xf32> -> vector<2x512xf32>
    %11 = arith.addf %8, %10 : vector<2x512xf32>
    %12 = vector.extract_strided_slice %11 {offsets = [0, 0], sizes = [2, 128], strides = [1, 1]} : vector<2x512xf32> to vector<2x128xf32>
    %13 = arith.negf %12 : vector<2x128xf32>
    %14 = math.exp %13 : vector<2x128xf32>
    %cst_6 = arith.constant 1.000000e+00 : f32
    %15 = vector.broadcast %cst_6 : f32 to vector<2x128xf32>
    %16 = arith.addf %15, %14 : vector<2x128xf32>
    %17 = arith.divf %15, %16 : vector<2x128xf32>
    %18 = vector.extract_strided_slice %11 {offsets = [0, 128], sizes = [2, 128], strides = [1, 1]} : vector<2x512xf32> to vector<2x128xf32>
    %19 = arith.negf %18 : vector<2x128xf32>
    %20 = math.exp %19 : vector<2x128xf32>
    %cst_7 = arith.constant 1.000000e+00 : f32
    %21 = vector.broadcast %cst_7 : f32 to vector<2x128xf32>
    %22 = arith.addf %21, %20 : vector<2x128xf32>
    %23 = arith.divf %21, %22 : vector<2x128xf32>
    %24 = vector.extract_strided_slice %11 {offsets = [0, 256], sizes = [2, 128], strides = [1, 1]} : vector<2x512xf32> to vector<2x128xf32>
    %25 = math.tanh %24 : vector<2x128xf32>
    %26 = vector.extract_strided_slice %11 {offsets = [0, 384], sizes = [2, 128], strides = [1, 1]} : vector<2x512xf32> to vector<2x128xf32>
    %27 = arith.negf %26 : vector<2x128xf32>
    %28 = math.exp %27 : vector<2x128xf32>
    %cst_8 = arith.constant 1.000000e+00 : f32
    %29 = vector.broadcast %cst_8 : f32 to vector<2x128xf32>
    %30 = arith.addf %29, %28 : vector<2x128xf32>
    %31 = arith.divf %29, %30 : vector<2x128xf32>
    %32 = arith.mulf %23, %2 : vector<2x128xf32>
    %33 = arith.mulf %17, %25 : vector<2x128xf32>
    %34 = arith.addf %32, %33 : vector<2x128xf32>
    %35 = math.tanh %34 : vector<2x128xf32>
    %36 = arith.mulf %31, %35 : vector<2x128xf32>
    %37 = arith.index_cast %5 : i32 to index
    %c0_9 = arith.constant 0 : index
    %c0_10 = arith.constant 0 : index
    %38 = vector.load %arg3[%37, %c0_9, %c0_10] : memref<8x2x128xf32, #tpu.memory_space<vmem>>, vector<1x2x128xf32>
    %39 = vector.shape_cast %38 : vector<1x2x128xf32> to vector<2x128xf32>
    %40 = vector.shape_cast %36 : vector<2x128xf32> to vector<1x2x128xf32>
    tpu.vector_store %arg3[%37, %c0_9, %c0_10], %40 {strides = array<i32>} : memref<8x2x128xf32, #tpu.memory_space<vmem>>, vector<1x2x128xf32>,
    %c1_i32 = arith.constant 1 : i32
    %c0_i32_11 = arith.constant 0 : i32
    %41 = arith.cmpi eq, %arg0, %c0_i32_11 : i32
    %c7_i32_12 = arith.constant 7 : i32
    %42 = arith.subi %c7_i32_12, %c1_i32 : i32
    %43 = arith.select %41, %c1_i32, %42 : i32
    %44 = arith.index_cast %43 : i32 to index
    %c0_13 = arith.constant 0 : index
    %c0_14 = arith.constant 0 : index
    %45 = vector.load %arg1[%44, %c0_13, %c0_14] : memref<8x2x512xf32, #tpu.memory_space<vmem>>, vector<1x2x512xf32>
    %46 = vector.shape_cast %45 : vector<1x2x512xf32> to vector<2x512xf32>
    %47 = arith.truncf %36 : vector<2x128xf32> to vector<2x128xbf16>
    %cst_15 = arith.constant dense<0.000000e+00> : vector<2x512xf32>
    %48 = tpu.matmul %47, %0, %cst_15 {dimension_numbers = #tpu.dot_dimension_numbers<[1], [0], [0], [1], [0, 0, 1, 1], [], []>} : vector<2x128xbf16>, vector<128x512xbf16>, vector<2x512xf32> -> vector<2x512xf32>
    %49 = arith.addf %46, %48 : vector<2x512xf32>
    %50 = vector.extract_strided_slice %49 {offsets = [0, 0], sizes = [2, 128], strides = [1, 1]} : vector<2x512xf32> to vector<2x128xf32>
    %51 = arith.negf %50 : vector<2x128xf32>
    %52 = math.exp %51 : vector<2x128xf32>
    %cst_16 = arith.constant 1.000000e+00 : f32
    %53 = vector.broadcast %cst_16 : f32 to vector<2x128xf32>
    %54 = arith.addf %53, %52 : vector<2x128xf32>
    %55 = arith.divf %53, %54 : vector<2x128xf32>
    %56 = vector.extract_strided_slice %49 {offsets = [0, 128], sizes = [2, 128], strides = [1, 1]} : vector<2x512xf32> to vector<2x128xf32>
    %57 = arith.negf %56 : vector<2x128xf32>
    %58 = math.exp %57 : vector<2x128xf32>
    %cst_17 = arith.constant 1.000000e+00 : f32
    %59 = vector.broadcast %cst_17 : f32 to vector<2x128xf32>
    %60 = arith.addf %59, %58 : vector<2x128xf32>
    %61 = arith.divf %59, %60 : vector<2x128xf32>
    %62 = vector.extract_strided_slice %49 {offsets = [0, 256], sizes = [2, 128], strides = [1, 1]} : vector<2x512xf32> to vector<2x128xf32>
    %63 = math.tanh %62 : vector<2x128xf32>
    %64 = vector.extract_strided_slice %49 {offsets = [0, 384], sizes = [2, 128], strides = [1, 1]} : vector<2x512xf32> to vector<2x128xf32>
    %65 = arith.negf %64 : vector<2x128xf32>
    %66 = math.exp %65 : vector<2x128xf32>
    %cst_18 = arith.constant 1.000000e+00 : f32
    %67 = vector.broadcast %cst_18 : f32 to vector<2x128xf32>
    %68 = arith.addf %67, %66 : vector<2x128xf32>
    %69 = arith.divf %67, %68 : vector<2x128xf32>
    %70 = arith.mulf %61, %34 : vector<2x128xf32>
    %71 = arith.mulf %55, %63 : vector<2x128xf32>
    %72 = arith.addf %70, %71 : vector<2x128xf32>
    %73 = math.tanh %72 : vector<2x128xf32>
    %74 = arith.mulf %69, %73 : vector<2x128xf32>
    %75 = arith.index_cast %43 : i32 to index
    %c0_19 = arith.constant 0 : index
    %c0_20 = arith.constant 0 : index
    %76 = vector.load %arg3[%75, %c0_19, %c0_20] : memref<8x2x128xf32, #tpu.memory_space<vmem>>, vector<1x2x128xf32>
    %77 = vector.shape_cast %76 : vector<1x2x128xf32> to vector<2x128xf32>
    %78 = vector.shape_cast %74 : vector<2x128xf32> to vector<1x2x128xf32>
    tpu.vector_store %arg3[%75, %c0_19, %c0_20], %78 {strides = array<i32>} : memref<8x2x128xf32, #tpu.memory_space<vmem>>, vector<1x2x128xf32>,
    %c2_i32 = arith.constant 2 : i32
    %c0_i32_21 = arith.constant 0 : i32
    %79 = arith.cmpi eq, %arg0, %c0_i32_21 : i32
    %c7_i32_22 = arith.constant 7 : i32
    %80 = arith.subi %c7_i32_22, %c2_i32 : i32
    %81 = arith.select %79, %c2_i32, %80 : i32
    %82 = arith.index_cast %81 : i32 to index
    %c0_23 = arith.constant 0 : index
    %c0_24 = arith.constant 0 : index
    %83 = vector.load %arg1[%82, %c0_23, %c0_24] : memref<8x2x512xf32, #tpu.memory_space<vmem>>, vector<1x2x512xf32>
    %84 = vector.shape_cast %83 : vector<1x2x512xf32> to vector<2x512xf32>
    %85 = arith.truncf %74 : vector<2x128xf32> to vector<2x128xbf16>
    %cst_25 = arith.constant dense<0.000000e+00> : vector<2x512xf32>
    %86 = tpu.matmul %85, %0, %cst_25 {dimension_numbers = #tpu.dot_dimension_numbers<[1], [0], [0], [1], [0, 0, 1, 1], [], []>} : vector<2x128xbf16>, vector<128x512xbf16>, vector<2x512xf32> -> vector<2x512xf32>
    %87 = arith.addf %84, %86 : vector<2x512xf32>
    %88 = vector.extract_strided_slice %87 {offsets = [0, 0], sizes = [2, 128], strides = [1, 1]} : vector<2x512xf32> to vector<2x128xf32>
    %89 = arith.negf %88 : vector<2x128xf32>
    %90 = math.exp %89 : vector<2x128xf32>
    %cst_26 = arith.constant 1.000000e+00 : f32
    %91 = vector.broadcast %cst_26 : f32 to vector<2x128xf32>
    %92 = arith.addf %91, %90 : vector<2x128xf32>
    %93 = arith.divf %91, %92 : vector<2x128xf32>
    %94 = vector.extract_strided_slice %87 {offsets = [0, 128], sizes = [2, 128], strides = [1, 1]} : vector<2x512xf32> to vector<2x128xf32>
    %95 = arith.negf %94 : vector<2x128xf32>
    %96 = math.exp %95 : vector<2x128xf32>
    %cst_27 = arith.constant 1.000000e+00 : f32
    %97 = vector.broadcast %cst_27 : f32 to vector<2x128xf32>
    %98 = arith.addf %97, %96 : vector<2x128xf32>
    %99 = arith.divf %97, %98 : vector<2x128xf32>
    %100 = vector.extract_strided_slice %87 {offsets = [0, 256], sizes = [2, 128], strides = [1, 1]} : vector<2x512xf32> to vector<2x128xf32>
    %101 = math.tanh %100 : vector<2x128xf32>
    %102 = vector.extract_strided_slice %87 {offsets = [0, 384], sizes = [2, 128], strides = [1, 1]} : vector<2x512xf32> to vector<2x128xf32>
    %103 = arith.negf %102 : vector<2x128xf32>
    %104 = math.exp %103 : vector<2x128xf32>
    %cst_28 = arith.constant 1.000000e+00 : f32
    %105 = vector.broadcast %cst_28 : f32 to vector<2x128xf32>
    %106 = arith.addf %105, %104 : vector<2x128xf32>
    %107 = arith.divf %105, %106 : vector<2x128xf32>
    %108 = arith.mulf %99, %72 : vector<2x128xf32>
    %109 = arith.mulf %93, %101 : vector<2x128xf32>
    %110 = arith.addf %108, %109 : vector<2x128xf32>
    %111 = math.tanh %110 : vector<2x128xf32>
    %112 = arith.mulf %107, %111 : vector<2x128xf32>
    %113 = arith.index_cast %81 : i32 to index
    %c0_29 = arith.constant 0 : index
    %c0_30 = arith.constant 0 : index
    %114 = vector.load %arg3[%113, %c0_29, %c0_30] : memref<8x2x128xf32, #tpu.memory_space<vmem>>, vector<1x2x128xf32>
    %115 = vector.shape_cast %114 : vector<1x2x128xf32> to vector<2x128xf32>
    %116 = vector.shape_cast %112 : vector<2x128xf32> to vector<1x2x128xf32>
    tpu.vector_store %arg3[%113, %c0_29, %c0_30], %116 {strides = array<i32>} : memref<8x2x128xf32, #tpu.memory_space<vmem>>, vector<1x2x128xf32>,
    %c3_i32 = arith.constant 3 : i32
    %c0_i32_31 = arith.constant 0 : i32
    %117 = arith.cmpi eq, %arg0, %c0_i32_31 : i32
    %c7_i32_32 = arith.constant 7 : i32
    %118 = arith.subi %c7_i32_32, %c3_i32 : i32
    %119 = arith.select %117, %c3_i32, %118 : i32
    %120 = arith.index_cast %119 : i32 to index
    %c0_33 = arith.constant 0 : index
    %c0_34 = arith.constant 0 : index
    %121 = vector.load %arg1[%120, %c0_33, %c0_34] : memref<8x2x512xf32, #tpu.memory_space<vmem>>, vector<1x2x512xf32>
    %122 = vector.shape_cast %121 : vector<1x2x512xf32> to vector<2x512xf32>
    %123 = arith.truncf %112 : vector<2x128xf32> to vector<2x128xbf16>
    %cst_35 = arith.constant dense<0.000000e+00> : vector<2x512xf32>
    %124 = tpu.matmul %123, %0, %cst_35 {dimension_numbers = #tpu.dot_dimension_numbers<[1], [0], [0], [1], [0, 0, 1, 1], [], []>} : vector<2x128xbf16>, vector<128x512xbf16>, vector<2x512xf32> -> vector<2x512xf32>
    %125 = arith.addf %122, %124 : vector<2x512xf32>
    %126 = vector.extract_strided_slice %125 {offsets = [0, 0], sizes = [2, 128], strides = [1, 1]} : vector<2x512xf32> to vector<2x128xf32>
    %127 = arith.negf %126 : vector<2x128xf32>
    %128 = math.exp %127 : vector<2x128xf32>
    %cst_36 = arith.constant 1.000000e+00 : f32
    %129 = vector.broadcast %cst_36 : f32 to vector<2x128xf32>
    %130 = arith.addf %129, %128 : vector<2x128xf32>
    %131 = arith.divf %129, %130 : vector<2x128xf32>
    %132 = vector.extract_strided_slice %125 {offsets = [0, 128], sizes = [2, 128], strides = [1, 1]} : vector<2x512xf32> to vector<2x128xf32>
    %133 = arith.negf %132 : vector<2x128xf32>
    %134 = math.exp %133 : vector<2x128xf32>
    %cst_37 = arith.constant 1.000000e+00 : f32
    %135 = vector.broadcast %cst_37 : f32 to vector<2x128xf32>
    %136 = arith.addf %135, %134 : vector<2x128xf32>
    %137 = arith.divf %135, %136 : vector<2x128xf32>
    %138 = vector.extract_strided_slice %125 {offsets = [0, 256], sizes = [2, 128], strides = [1, 1]} : vector<2x512xf32> to vector<2x128xf32>
    %139 = math.tanh %138 : vector<2x128xf32>
    %140 = vector.extract_strided_slice %125 {offsets = [0, 384], sizes = [2, 128], strides = [1, 1]} : vector<2x512xf32> to vector<2x128xf32>
    %141 = arith.negf %140 : vector<2x128xf32>
    %142 = math.exp %141 : vector<2x128xf32>
    %cst_38 = arith.constant 1.000000e+00 : f32
    %143 = vector.broadcast %cst_38 : f32 to vector<2x128xf32>
    %144 = arith.addf %143, %142 : vector<2x128xf32>
    %145 = arith.divf %143, %144 : vector<2x128xf32>
    %146 = arith.mulf %137, %110 : vector<2x128xf32>
    %147 = arith.mulf %131, %139 : vector<2x128xf32>
    %148 = arith.addf %146, %147 : vector<2x128xf32>
    %149 = math.tanh %148 : vector<2x128xf32>
    %150 = arith.mulf %145, %149 : vector<2x128xf32>
    %151 = arith.index_cast %119 : i32 to index
    %c0_39 = arith.constant 0 : index
    %c0_40 = arith.constant 0 : index
    %152 = vector.load %arg3[%151, %c0_39, %c0_40] : memref<8x2x128xf32, #tpu.memory_space<vmem>>, vector<1x2x128xf32>
    %153 = vector.shape_cast %152 : vector<1x2x128xf32> to vector<2x128xf32>
    %154 = vector.shape_cast %150 : vector<2x128xf32> to vector<1x2x128xf32>
    tpu.vector_store %arg3[%151, %c0_39, %c0_40], %154 {strides = array<i32>} : memref<8x2x128xf32, #tpu.memory_space<vmem>>, vector<1x2x128xf32>,
    %c4_i32 = arith.constant 4 : i32
    %c0_i32_41 = arith.constant 0 : i32
    %155 = arith.cmpi eq, %arg0, %c0_i32_41 : i32
    %c7_i32_42 = arith.constant 7 : i32
    %156 = arith.subi %c7_i32_42, %c4_i32 : i32
    %157 = arith.select %155, %c4_i32, %156 : i32
    %158 = arith.index_cast %157 : i32 to index
    %c0_43 = arith.constant 0 : index
    %c0_44 = arith.constant 0 : index
    %159 = vector.load %arg1[%158, %c0_43, %c0_44] : memref<8x2x512xf32, #tpu.memory_space<vmem>>, vector<1x2x512xf32>
    %160 = vector.shape_cast %159 : vector<1x2x512xf32> to vector<2x512xf32>
    %161 = arith.truncf %150 : vector<2x128xf32> to vector<2x128xbf16>
    %cst_45 = arith.constant dense<0.000000e+00> : vector<2x512xf32>
    %162 = tpu.matmul %161, %0, %cst_45 {dimension_numbers = #tpu.dot_dimension_numbers<[1], [0], [0], [1], [0, 0, 1, 1], [], []>} : vector<2x128xbf16>, vector<128x512xbf16>, vector<2x512xf32> -> vector<2x512xf32>
    %163 = arith.addf %160, %162 : vector<2x512xf32>
    %164 = vector.extract_strided_slice %163 {offsets = [0, 0], sizes = [2, 128], strides = [1, 1]} : vector<2x512xf32> to vector<2x128xf32>
    %165 = arith.negf %164 : vector<2x128xf32>
    %166 = math.exp %165 : vector<2x128xf32>
    %cst_46 = arith.constant 1.000000e+00 : f32
    %167 = vector.broadcast %cst_46 : f32 to vector<2x128xf32>
    %168 = arith.addf %167, %166 : vector<2x128xf32>
    %169 = arith.divf %167, %168 : vector<2x128xf32>
    %170 = vector.extract_strided_slice %163 {offsets = [0, 128], sizes = [2, 128], strides = [1, 1]} : vector<2x512xf32> to vector<2x128xf32>
    %171 = arith.negf %170 : vector<2x128xf32>
    %172 = math.exp %171 : vector<2x128xf32>
    %cst_47 = arith.constant 1.000000e+00 : f32
    %173 = vector.broadcast %cst_47 : f32 to vector<2x128xf32>
    %174 = arith.addf %173, %172 : vector<2x128xf32>
    %175 = arith.divf %173, %174 : vector<2x128xf32>
    %176 = vector.extract_strided_slice %163 {offsets = [0, 256], sizes = [2, 128], strides = [1, 1]} : vector<2x512xf32> to vector<2x128xf32>
    %177 = math.tanh %176 : vector<2x128xf32>
    %178 = vector.extract_strided_slice %163 {offsets = [0, 384], sizes = [2, 128], strides = [1, 1]} : vector<2x512xf32> to vector<2x128xf32>
    %179 = arith.negf %178 : vector<2x128xf32>
    %180 = math.exp %179 : vector<2x128xf32>
    %cst_48 = arith.constant 1.000000e+00 : f32
    %181 = vector.broadcast %cst_48 : f32 to vector<2x128xf32>
    %182 = arith.addf %181, %180 : vector<2x128xf32>
    %183 = arith.divf %181, %182 : vector<2x128xf32>
    %184 = arith.mulf %175, %148 : vector<2x128xf32>
    %185 = arith.mulf %169, %177 : vector<2x128xf32>
    %186 = arith.addf %184, %185 : vector<2x128xf32>
    %187 = math.tanh %186 : vector<2x128xf32>
    %188 = arith.mulf %183, %187 : vector<2x128xf32>
    %189 = arith.index_cast %157 : i32 to index
    %c0_49 = arith.constant 0 : index
    %c0_50 = arith.constant 0 : index
    %190 = vector.load %arg3[%189, %c0_49, %c0_50] : memref<8x2x128xf32, #tpu.memory_space<vmem>>, vector<1x2x128xf32>
    %191 = vector.shape_cast %190 : vector<1x2x128xf32> to vector<2x128xf32>
    %192 = vector.shape_cast %188 : vector<2x128xf32> to vector<1x2x128xf32>
    tpu.vector_store %arg3[%189, %c0_49, %c0_50], %192 {strides = array<i32>} : memref<8x2x128xf32, #tpu.memory_space<vmem>>, vector<1x2x128xf32>,
    %c5_i32 = arith.constant 5 : i32
    %c0_i32_51 = arith.constant 0 : i32
    %193 = arith.cmpi eq, %arg0, %c0_i32_51 : i32
    %c7_i32_52 = arith.constant 7 : i32
    %194 = arith.subi %c7_i32_52, %c5_i32 : i32
    %195 = arith.select %193, %c5_i32, %194 : i32
    %196 = arith.index_cast %195 : i32 to index
    %c0_53 = arith.constant 0 : index
    %c0_54 = arith.constant 0 : index
    %197 = vector.load %arg1[%196, %c0_53, %c0_54] : memref<8x2x512xf32, #tpu.memory_space<vmem>>, vector<1x2x512xf32>
    %198 = vector.shape_cast %197 : vector<1x2x512xf32> to vector<2x512xf32>
    %199 = arith.truncf %188 : vector<2x128xf32> to vector<2x128xbf16>
    %cst_55 = arith.constant dense<0.000000e+00> : vector<2x512xf32>
    %200 = tpu.matmul %199, %0, %cst_55 {dimension_numbers = #tpu.dot_dimension_numbers<[1], [0], [0], [1], [0, 0, 1, 1], [], []>} : vector<2x128xbf16>, vector<128x512xbf16>, vector<2x512xf32> -> vector<2x512xf32>
    %201 = arith.addf %198, %200 : vector<2x512xf32>
    %202 = vector.extract_strided_slice %201 {offsets = [0, 0], sizes = [2, 128], strides = [1, 1]} : vector<2x512xf32> to vector<2x128xf32>
    %203 = arith.negf %202 : vector<2x128xf32>
    %204 = math.exp %203 : vector<2x128xf32>
    %cst_56 = arith.constant 1.000000e+00 : f32
    %205 = vector.broadcast %cst_56 : f32 to vector<2x128xf32>
    %206 = arith.addf %205, %204 : vector<2x128xf32>
    %207 = arith.divf %205, %206 : vector<2x128xf32>
    %208 = vector.extract_strided_slice %201 {offsets = [0, 128], sizes = [2, 128], strides = [1, 1]} : vector<2x512xf32> to vector<2x128xf32>
    %209 = arith.negf %208 : vector<2x128xf32>
    %210 = math.exp %209 : vector<2x128xf32>
    %cst_57 = arith.constant 1.000000e+00 : f32
    %211 = vector.broadcast %cst_57 : f32 to vector<2x128xf32>
    %212 = arith.addf %211, %210 : vector<2x128xf32>
    %213 = arith.divf %211, %212 : vector<2x128xf32>
    %214 = vector.extract_strided_slice %201 {offsets = [0, 256], sizes = [2, 128], strides = [1, 1]} : vector<2x512xf32> to vector<2x128xf32>
    %215 = math.tanh %214 : vector<2x128xf32>
    %216 = vector.extract_strided_slice %201 {offsets = [0, 384], sizes = [2, 128], strides = [1, 1]} : vector<2x512xf32> to vector<2x128xf32>
    %217 = arith.negf %216 : vector<2x128xf32>
    %218 = math.exp %217 : vector<2x128xf32>
    %cst_58 = arith.constant 1.000000e+00 : f32
    %219 = vector.broadcast %cst_58 : f32 to vector<2x128xf32>
    %220 = arith.addf %219, %218 : vector<2x128xf32>
    %221 = arith.divf %219, %220 : vector<2x128xf32>
    %222 = arith.mulf %213, %186 : vector<2x128xf32>
    %223 = arith.mulf %207, %215 : vector<2x128xf32>
    %224 = arith.addf %222, %223 : vector<2x128xf32>
    %225 = math.tanh %224 : vector<2x128xf32>
    %226 = arith.mulf %221, %225 : vector<2x128xf32>
    %227 = arith.index_cast %195 : i32 to index
    %c0_59 = arith.constant 0 : index
    %c0_60 = arith.constant 0 : index
    %228 = vector.load %arg3[%227, %c0_59, %c0_60] : memref<8x2x128xf32, #tpu.memory_space<vmem>>, vector<1x2x128xf32>
    %229 = vector.shape_cast %228 : vector<1x2x128xf32> to vector<2x128xf32>
    %230 = vector.shape_cast %226 : vector<2x128xf32> to vector<1x2x128xf32>
    tpu.vector_store %arg3[%227, %c0_59, %c0_60], %230 {strides = array<i32>} : memref<8x2x128xf32, #tpu.memory_space<vmem>>, vector<1x2x128xf32>,
    %c6_i32 = arith.constant 6 : i32
    %c0_i32_61 = arith.constant 0 : i32
    %231 = arith.cmpi eq, %arg0, %c0_i32_61 : i32
    %c7_i32_62 = arith.constant 7 : i32
    %232 = arith.subi %c7_i32_62, %c6_i32 : i32
    %233 = arith.select %231, %c6_i32, %232 : i32
    %234 = arith.index_cast %233 : i32 to index
    %c0_63 = arith.constant 0 : index
    %c0_64 = arith.constant 0 : index
    %235 = vector.load %arg1[%234, %c0_63, %c0_64] : memref<8x2x512xf32, #tpu.memory_space<vmem>>, vector<1x2x512xf32>
    %236 = vector.shape_cast %235 : vector<1x2x512xf32> to vector<2x512xf32>
    %237 = arith.truncf %226 : vector<2x128xf32> to vector<2x128xbf16>
    %cst_65 = arith.constant dense<0.000000e+00> : vector<2x512xf32>
    %238 = tpu.matmul %237, %0, %cst_65 {dimension_numbers = #tpu.dot_dimension_numbers<[1], [0], [0], [1], [0, 0, 1, 1], [], []>} : vector<2x128xbf16>, vector<128x512xbf16>, vector<2x512xf32> -> vector<2x512xf32>
    %239 = arith.addf %236, %238 : vector<2x512xf32>
    %240 = vector.extract_strided_slice %239 {offsets = [0, 0], sizes = [2, 128], strides = [1, 1]} : vector<2x512xf32> to vector<2x128xf32>
    %241 = arith.negf %240 : vector<2x128xf32>
    %242 = math.exp %241 : vector<2x128xf32>
    %cst_66 = arith.constant 1.000000e+00 : f32
    %243 = vector.broadcast %cst_66 : f32 to vector<2x128xf32>
    %244 = arith.addf %243, %242 : vector<2x128xf32>
    %245 = arith.divf %243, %244 : vector<2x128xf32>
    %246 = vector.extract_strided_slice %239 {offsets = [0, 128], sizes = [2, 128], strides = [1, 1]} : vector<2x512xf32> to vector<2x128xf32>
    %247 = arith.negf %246 : vector<2x128xf32>
    %248 = math.exp %247 : vector<2x128xf32>
    %cst_67 = arith.constant 1.000000e+00 : f32
    %249 = vector.broadcast %cst_67 : f32 to vector<2x128xf32>
    %250 = arith.addf %249, %248 : vector<2x128xf32>
    %251 = arith.divf %249, %250 : vector<2x128xf32>
    %252 = vector.extract_strided_slice %239 {offsets = [0, 256], sizes = [2, 128], strides = [1, 1]} : vector<2x512xf32> to vector<2x128xf32>
    %253 = math.tanh %252 : vector<2x128xf32>
    %254 = vector.extract_strided_slice %239 {offsets = [0, 384], sizes = [2, 128], strides = [1, 1]} : vector<2x512xf32> to vector<2x128xf32>
    %255 = arith.negf %254 : vector<2x128xf32>
    %256 = math.exp %255 : vector<2x128xf32>
    %cst_68 = arith.constant 1.000000e+00 : f32
    %257 = vector.broadcast %cst_68 : f32 to vector<2x128xf32>
    %258 = arith.addf %257, %256 : vector<2x128xf32>
    %259 = arith.divf %257, %258 : vector<2x128xf32>
    %260 = arith.mulf %251, %224 : vector<2x128xf32>
    %261 = arith.mulf %245, %253 : vector<2x128xf32>
    %262 = arith.addf %260, %261 : vector<2x128xf32>
    %263 = math.tanh %262 : vector<2x128xf32>
    %264 = arith.mulf %259, %263 : vector<2x128xf32>
    %265 = arith.index_cast %233 : i32 to index
    %c0_69 = arith.constant 0 : index
    %c0_70 = arith.constant 0 : index
    %266 = vector.load %arg3[%265, %c0_69, %c0_70] : memref<8x2x128xf32, #tpu.memory_space<vmem>>, vector<1x2x128xf32>
    %267 = vector.shape_cast %266 : vector<1x2x128xf32> to vector<2x128xf32>
    %268 = vector.shape_cast %264 : vector<2x128xf32> to vector<1x2x128xf32>
    tpu.vector_store %arg3[%265, %c0_69, %c0_70], %268 {strides = array<i32>} : memref<8x2x128xf32, #tpu.memory_space<vmem>>, vector<1x2x128xf32>,
    %c7_i32_71 = arith.constant 7 : i32
    %c0_i32_72 = arith.constant 0 : i32
    %269 = arith.cmpi eq, %arg0, %c0_i32_72 : i32
    %c7_i32_73 = arith.constant 7 : i32
    %270 = arith.subi %c7_i32_73, %c7_i32_71 : i32
    %271 = arith.select %269, %c7_i32_71, %270 : i32
    %272 = arith.index_cast %271 : i32 to index
    %c0_74 = arith.constant 0 : index
    %c0_75 = arith.constant 0 : index
    %273 = vector.load %arg1[%272, %c0_74, %c0_75] : memref<8x2x512xf32, #tpu.memory_space<vmem>>, vector<1x2x512xf32>
    %274 = vector.shape_cast %273 : vector<1x2x512xf32> to vector<2x512xf32>
    %275 = arith.truncf %264 : vector<2x128xf32> to vector<2x128xbf16>
    %cst_76 = arith.constant dense<0.000000e+00> : vector<2x512xf32>
    %276 = tpu.matmul %275, %0, %cst_76 {dimension_numbers = #tpu.dot_dimension_numbers<[1], [0], [0], [1], [0, 0, 1, 1], [], []>} : vector<2x128xbf16>, vector<128x512xbf16>, vector<2x512xf32> -> vector<2x512xf32>
    %277 = arith.addf %274, %276 : vector<2x512xf32>
    %278 = vector.extract_strided_slice %277 {offsets = [0, 0], sizes = [2, 128], strides = [1, 1]} : vector<2x512xf32> to vector<2x128xf32>
    %279 = arith.negf %278 : vector<2x128xf32>
    %280 = math.exp %279 : vector<2x128xf32>
    %cst_77 = arith.constant 1.000000e+00 : f32
    %281 = vector.broadcast %cst_77 : f32 to vector<2x128xf32>
    %282 = arith.addf %281, %280 : vector<2x128xf32>
    %283 = arith.divf %281, %282 : vector<2x128xf32>
    %284 = vector.extract_strided_slice %277 {offsets = [0, 128], sizes = [2, 128], strides = [1, 1]} : vector<2x512xf32> to vector<2x128xf32>
    %285 = arith.negf %284 : vector<2x128xf32>
    %286 = math.exp %285 : vector<2x128xf32>
    %cst_78 = arith.constant 1.000000e+00 : f32
    %287 = vector.broadcast %cst_78 : f32 to vector<2x128xf32>
    %288 = arith.addf %287, %286 : vector<2x128xf32>
    %289 = arith.divf %287, %288 : vector<2x128xf32>
    %290 = vector.extract_strided_slice %277 {offsets = [0, 256], sizes = [2, 128], strides = [1, 1]} : vector<2x512xf32> to vector<2x128xf32>
    %291 = math.tanh %290 : vector<2x128xf32>
    %292 = vector.extract_strided_slice %277 {offsets = [0, 384], sizes = [2, 128], strides = [1, 1]} : vector<2x512xf32> to vector<2x128xf32>
    %293 = arith.negf %292 : vector<2x128xf32>
    %294 = math.exp %293 : vector<2x128xf32>
    %cst_79 = arith.constant 1.000000e+00 : f32
    %295 = vector.broadcast %cst_79 : f32 to vector<2x128xf32>
    %296 = arith.addf %295, %294 : vector<2x128xf32>
    %297 = arith.divf %295, %296 : vector<2x128xf32>
    %298 = arith.mulf %289, %262 : vector<2x128xf32>
    %299 = arith.mulf %283, %291 : vector<2x128xf32>
    %300 = arith.addf %298, %299 : vector<2x128xf32>
    %301 = math.tanh %300 : vector<2x128xf32>
    %302 = arith.mulf %297, %301 : vector<2x128xf32>
    %303 = arith.index_cast %271 : i32 to index
    %c0_80 = arith.constant 0 : index
    %c0_81 = arith.constant 0 : index
    %304 = vector.load %arg3[%303, %c0_80, %c0_81] : memref<8x2x128xf32, #tpu.memory_space<vmem>>, vector<1x2x128xf32>
    %305 = vector.shape_cast %304 : vector<1x2x128xf32> to vector<2x128xf32>
    %306 = vector.shape_cast %302 : vector<2x128xf32> to vector<1x2x128xf32>
    tpu.vector_store %arg3[%303, %c0_80, %c0_81], %306 {strides = array<i32>} : memref<8x2x128xf32, #tpu.memory_space<vmem>>, vector<1x2x128xf32>,
    %c8_i32 = arith.constant 8 : i32
    return
  }
  func.func @transform_0(%arg0: i32) -> (i32, i32, i32) {
    %c0_i32 = arith.constant 0 : i32
    %c0_i32_0 = arith.constant 0 : i32
    %c0_i32_1 = arith.constant 0 : i32
    return %c0_i32, %c0_i32_0, %arg0 : i32, i32, i32
  }
  func.func @transform_1(%arg0: i32) -> (i32, i32) {
    %c0_i32 = arith.constant 0 : i32
    %c0_i32_0 = arith.constant 0 : i32
    return %c0_i32, %arg0 : i32, i32
  }
  func.func @transform_2(%arg0: i32) -> (i32, i32, i32) {
    %c0_i32 = arith.constant 0 : i32
    %c0_i32_0 = arith.constant 0 : i32
    %c0_i32_1 = arith.constant 0 : i32
    return %c0_i32, %c0_i32_0, %arg0 : i32, i32, i32
  }
}

module attributes {stable_mosaic.version = 11 : i64} {
  func.func @_mm_bias_act_kernel(%arg0: i32, %arg1: i32, %arg2: memref<16x256xf32, #tpu.memory_space<vmem>>, %arg3: memref<256x1024xbf16, #tpu.memory_space<vmem>>, %arg4: memref<1x1024xf32, #tpu.memory_space<vmem>>, %arg5: memref<16x1024xf32, #tpu.memory_space<vmem>>, %arg6: memref<16x1024xf32, #tpu.memory_space<vmem>>) attributes {dimension_semantics = [#tpu.dimension_semantics<parallel>, #tpu.dimension_semantics<arbitrary>], iteration_bounds = array<i64: 1, 1>, scalar_prefetch = 0 : i64, scratch_operands = 1 : i64, tpu.core_type = #tpu.core_type<tc>, window_params = [{transform_indices = @transform_0, window_bounds = array<i64: 16, 256>}, {transform_indices = @transform_1, window_bounds = array<i64: 256, 1024>}, {pipeline_mode = #tpu.pipeline_mode<synchronous>, transform_indices = @transform_2, window_bounds = array<i64: 1, 1024>}, {transform_indices = @transform_3, window_bounds = array<i64: 16, 1024>}]} {
    %c0_i32 = arith.constant 0 : i32
    %0 = arith.cmpi eq, %arg1, %c0_i32 : i32
    %1 = arith.extui %0 : i1 to i32
    %c0_i32_0 = arith.constant 0 : i32
    %2 = arith.cmpi ne, %1, %c0_i32_0 : i32
    scf.if %2 {
      %cst_10 = arith.constant 0.000000e+00 : f32
      %13 = vector.broadcast %cst_10 : f32 to vector<16x1024xf32>
      %c0_11 = arith.constant 0 : index
      %c0_12 = arith.constant 0 : index
      %14 = vector.load %arg6[%c0_11, %c0_12] : memref<16x1024xf32, #tpu.memory_space<vmem>>, vector<16x1024xf32>
      tpu.vector_store %arg6[%c0_11, %c0_12], %13 {strides = array<i32>} : memref<16x1024xf32, #tpu.memory_space<vmem>>, vector<16x1024xf32>,
    } else {
    }
    %c0 = arith.constant 0 : index
    %c0_1 = arith.constant 0 : index
    %3 = vector.load %arg6[%c0, %c0_1] : memref<16x1024xf32, #tpu.memory_space<vmem>>, vector<16x1024xf32>
    %c0_2 = arith.constant 0 : index
    %c0_3 = arith.constant 0 : index
    %4 = vector.load %arg2[%c0_2, %c0_3] : memref<16x256xf32, #tpu.memory_space<vmem>>, vector<16x256xf32>
    %5 = arith.truncf %4 : vector<16x256xf32> to vector<16x256xbf16>
    %c0_4 = arith.constant 0 : index
    %c0_5 = arith.constant 0 : index
    %6 = vector.load %arg3[%c0_4, %c0_5] : memref<256x1024xbf16, #tpu.memory_space<vmem>>, vector<256x1024xbf16>
    %cst = arith.constant dense<0.000000e+00> : vector<16x1024xf32>
    %7 = tpu.matmul %5, %6, %cst {dimension_numbers = #tpu.dot_dimension_numbers<[1], [0], [0], [1], [0, 0, 1, 1], [], []>} : vector<16x256xbf16>, vector<256x1024xbf16>, vector<16x1024xf32> -> vector<16x1024xf32>
    %8 = arith.addf %3, %7 : vector<16x1024xf32>
    %c0_6 = arith.constant 0 : index
    %c0_7 = arith.constant 0 : index
    %9 = vector.load %arg6[%c0_6, %c0_7] : memref<16x1024xf32, #tpu.memory_space<vmem>>, vector<16x1024xf32>
    tpu.vector_store %arg6[%c0_6, %c0_7], %8 {strides = array<i32>} : memref<16x1024xf32, #tpu.memory_space<vmem>>, vector<16x1024xf32>,
    %c0_i32_8 = arith.constant 0 : i32
    %10 = arith.cmpi eq, %arg1, %c0_i32_8 : i32
    %11 = arith.extui %10 : i1 to i32
    %c0_i32_9 = arith.constant 0 : i32
    %12 = arith.cmpi ne, %11, %c0_i32_9 : i32
    scf.if %12 {
      %c0_10 = arith.constant 0 : index
      %c0_11 = arith.constant 0 : index
      %13 = vector.load %arg6[%c0_10, %c0_11] : memref<16x1024xf32, #tpu.memory_space<vmem>>, vector<16x1024xf32>
      %c0_12 = arith.constant 0 : index
      %c0_13 = arith.constant 0 : index
      %14 = vector.load %arg4[%c0_12, %c0_13] : memref<1x1024xf32, #tpu.memory_space<vmem>>, vector<1x1024xf32>
      %15 = vector.broadcast %14 : vector<1x1024xf32> to vector<16x1024xf32>
      %16 = arith.addf %13, %15 : vector<16x1024xf32>
      %c0_14 = arith.constant 0 : index
      %c0_15 = arith.constant 0 : index
      %17 = vector.load %arg5[%c0_14, %c0_15] : memref<16x1024xf32, #tpu.memory_space<vmem>>, vector<16x1024xf32>
      tpu.vector_store %arg5[%c0_14, %c0_15], %16 {strides = array<i32>} : memref<16x1024xf32, #tpu.memory_space<vmem>>, vector<16x1024xf32>,
    } else {
    }
    return
  }
  func.func @transform_0(%arg0: i32, %arg1: i32) -> (i32, i32) {
    %c0_i32 = arith.constant 0 : i32
    return %arg0, %arg1 : i32, i32
  }
  func.func @transform_1(%arg0: i32, %arg1: i32) -> (i32, i32) {
    %c0_i32 = arith.constant 0 : i32
    %c0_i32_0 = arith.constant 0 : i32
    return %arg1, %c0_i32 : i32, i32
  }
  func.func @transform_2(%arg0: i32, %arg1: i32) -> (i32, i32) {
    %c0_i32 = arith.constant 0 : i32
    %c0_i32_0 = arith.constant 0 : i32
    %c0_i32_1 = arith.constant 0 : i32
    return %c0_i32, %c0_i32_0 : i32, i32
  }
  func.func @transform_3(%arg0: i32, %arg1: i32) -> (i32, i32) {
    %c0_i32 = arith.constant 0 : i32
    %c0_i32_0 = arith.constant 0 : i32
    return %arg0, %c0_i32 : i32, i32
  }
}

</mosaic_0001>

<llo_original>
// kernel: crnn_forward.8
$region0: #{crnn_forward.8}
  #allocation0 [shape = 'u32[]', space=smem, size = 0x4, offset = 0x4, fixed_abs, tag = 'smem constant byte address 0x4 - core index']
  #allocation1 [shape = 'u32[72,128]{1,0:T(1,128)}', space=vmem, size = 0x9000, scoped, tag = 'internal scratch']
  #allocation2 [shape = 'f32[512,32]{1,0:T(8,128)}', space=vmem, size = 0x40000, scoped, tag = 'scratch operand']
  %s0 = inlined_call_operand.vmem [shape: bf16[16384,9], index: 0, kind: input, shape index: {}]
  %s1 = inlined_call_operand.vmem [shape: bf16[9,32], index: 1, kind: input, shape index: {}]
  %s2 = inlined_call_operand.vmem [shape: f32[1,32], index: 2, kind: input, shape index: {}]
  %s3 = inlined_call_operand.vmem [shape: f32[16384,32], index: 3, kind: output, shape index: {}]
  %s4 = sld [smem:[#allocation0]]
  $region53: #{crnn_forward.8} parent=0
    _
  %s6 = ssub.s32 1, %s4
  %s7 = scalar_select 0, %s6, %s4
  loop: start=0, step=1, limit=34
  $region2: #{crnn_forward.8} parent=0 // loop_pre_header
    _
  $region3: #{crnn_forward.8} parent=0 // loop_header
    %s9 = sphi 0, %s13
    %p10 = scmp.ge.s32.totalorder %s9, 34
    %s16 = sphi 0, %s28
    %s17 = sphi 0, %s24
    %s18 = sphi 0, %s16
    %s19 = sphi 0, %s17
    %s20 = sphi 0, %s18
    %s21 = sphi 0, %s19
    %s33 = sphi 0, %s35
    %s36 = sphi 0, %s33
    %s37 = sphi 0, %s36
    %s53 = sphi 0, %s37
    %s59 = sphi 0, %s61
    %s62 = sphi 0, %s59
    %s63 = sphi 0, %s62
    %s79 = sphi 0, %s63
    %s83 = sphi 0, %s83
    %s85 = sphi 0, %s83
    %s86 = sphi 0, %s85
    %s100 = sphi 0, %s86
    %s106 = sphi 0, %s108
    %s109 = sphi 0, %s106
    %s110 = sphi 0, %s109
    %s126 = sphi 0, %s110
  $region4: #{crnn_forward.8} parent=0 // loop_header_branch
    %12 = sbr.rel (%p10) target = $region8
  $region5: #{crnn_forward.8} parent=0 // loop_body
    %s14 = ssub.s32 %s9, 1
    %s15 = ssub.s32 %s9, 2
    %s22 = sadd.s32 1, %s17
    %p23 = scmp.ge.s32.totalorder %s22, 1
    %s24 = scalar_select %p23, 0, %s22
    %s25 = sadd.s32 1, %s16
    %s26 = scalar_select %p23, %s25, %s16
    %p27 = scmp.ge.s32.totalorder %s26, 32
    %s28 = scalar_select %p27, 0, %s26
    %s29 = ssub.s32 %s16, %s28
    %s30 = ssub.s32 %s17, %s24
    %s31 = sor.u32 %s29, %s30
    %p32 = scmp.eq.s32.totalorder %s31, 0
    %s34 = sadd.s32 %s33, 1
    %s35 = scalar_select %p32, %s33, %s34
    %p38 = pneg %p32
    %p39 = scmp.eq.s32.totalorder %s9, 31
    %p40 = por %p38, %p39
    %p41 = scmp.ne.s32.totalorder %s33, %s36
    %p42 = scmp.eq.s32.totalorder %s9, 0
    %p43 = por %p41, %p42
    %p44 = scmp.ne.s32.totalorder %s33, %s36
    %p45 = scmp.eq.s32.totalorder %s14, 31
    %p46 = por %p44, %p45
    %p47 = scmp.ne.s32.totalorder %s36, %s37
    %p48 = scmp.eq.s32.totalorder %s14, 0
    %p49 = por %p47, %p48
    %p50 = scmp.ne.s32.totalorder %s36, %s37
    %p51 = scmp.eq.s32.totalorder %s15, 31
    %p52 = por %p50, %p51
    %p54 = scmp.ne.s32.totalorder %s37, %s53
    %p55 = scmp.eq.s32.totalorder %s15, 0
    %p56 = por %p54, %p55
    %s57 = ssub.s32 %s17, %s24
    %p58 = scmp.eq.s32.totalorder %s57, 0
    %s60 = sadd.s32 %s59, 1
    %s61 = scalar_select %p58, %s59, %s60
    %p64 = pneg %p58
    %p65 = scmp.eq.s32.totalorder %s9, 31
    %p66 = por %p64, %p65
    %p67 = scmp.ne.s32.totalorder %s59, %s62
    %p68 = scmp.eq.s32.totalorder %s9, 0
    %p69 = por %p67, %p68
    %p70 = scmp.ne.s32.totalorder %s59, %s62
    %p71 = scmp.eq.s32.totalorder %s14, 31
    %p72 = por %p70, %p71
    %p73 = scmp.ne.s32.totalorder %s62, %s63
    %p74 = scmp.eq.s32.totalorder %s14, 0
    %p75 = por %p73, %p74
    %p76 = scmp.ne.s32.totalorder %s62, %s63
    %p77 = scmp.eq.s32.totalorder %s15, 31
    %p78 = por %p76, %p77
    %p80 = scmp.ne.s32.totalorder %s63, %s79
    %p81 = scmp.eq.s32.totalorder %s15, 0
    %p82 = por %p80, %p81
    %s84 = sadd.s32 %s83, 1
    %p87 = scmp.eq.s32.totalorder %s9, 31
    %p88 = scmp.ne.s32.totalorder %s83, %s85
    %p89 = scmp.eq.s32.totalorder %s9, 0
    %p90 = por %p88, %p89
    %p91 = scmp.ne.s32.totalorder %s83, %s85
    %p92 = scmp.eq.s32.totalorder %s14, 31
    %p93 = por %p91, %p92
    %p94 = scmp.ne.s32.totalorder %s85, %s86
    %p95 = scmp.eq.s32.totalorder %s14, 0
    %p96 = por %p94, %p95
    %p97 = scmp.ne.s32.totalorder %s85, %s86
    %p98 = scmp.eq.s32.totalorder %s15, 31
    %p99 = por %p97, %p98
    %p101 = scmp.ne.s32.totalorder %s86, %s100
    %p102 = scmp.eq.s32.totalorder %s15, 0
    %p103 = por %p101, %p102
    %s104 = ssub.s32 %s16, %s28
    %p105 = scmp.eq.s32.totalorder %s104, 0
    %s107 = sadd.s32 %s106, 1
    %s108 = scalar_select %p105, %s106, %s107
    %p111 = pneg %p105
    %p112 = scmp.eq.s32.totalorder %s9, 31
    %p113 = por %p111, %p112
    %p114 = scmp.ne.s32.totalorder %s106, %s109
    %p115 = scmp.eq.s32.totalorder %s9, 0
    %p116 = por %p114, %p115
    %p117 = scmp.ne.s32.totalorder %s106, %s109
    %p118 = scmp.eq.s32.totalorder %s14, 31
    %p119 = por %p117, %p118
    %p120 = scmp.ne.s32.totalorder %s109, %s110
    %p121 = scmp.eq.s32.totalorder %s14, 0
    %p122 = por %p120, %p121
    %p123 = scmp.ne.s32.totalorder %s109, %s110
    %p124 = scmp.eq.s32.totalorder %s15, 31
    %p125 = por %p123, %p124
    %p127 = scmp.ne.s32.totalorder %s110, %s126
    %p128 = scmp.eq.s32.totalorder %s15, 0
    %p129 = por %p127, %p128
    %p130 = scmp.le.s32.totalorder 1, %s9
    %p131 = scmp.lt.s32.totalorder %s9, 33
    %p132 = pnand %p130, %p131
    %p133 = pneg %p132
    // Predicated region
    $region9: #{crnn_forward.8} parent=5 // pred_check
      _
    $region10: #{crnn_forward.8} parent=5 // pred_check_branch
      %135 = sbr.rel (%p132) target = $region12
    $region11: #{crnn_forward.8} parent=5 // pred_region
      %s136 = ssub.s32 %s9, 1
      // Predicated region
      $region13: #{crnn_forward.8} parent=11 // pred_check
        %p137 = pneg %p75
      $region14: #{crnn_forward.8} parent=11 // pred_check_branch
        %139 = sbr.rel (%p137) target = $region16
      $region15: #{crnn_forward.8} parent=11 // pred_region
        %s140 = smul.u32 2, %s19
        %p141 = scmp.lt.s32.totalorder %s140, 1
        %s142 = scalar_select %p141, %s140, 1
        %s143 = smul.addr %s142, 4
        %s144 = scalar_lea.vmem %s1, %s143
        %s145 = smul.u32 2, %s19
      $region16: #{crnn_forward.8} parent=11 // pred_fallthru
        _
      // Predicated region
      $region17: #{crnn_forward.8} parent=11 // pred_check
        %p146 = pneg %p96
      $region18: #{crnn_forward.8} parent=11 // pred_check_branch
        %148 = sbr.rel (%p146) target = $region20
      $region19: #{crnn_forward.8} parent=11 // pred_region
        _
      $region20: #{crnn_forward.8} parent=11 // pred_fallthru
        _
    $region12: #{crnn_forward.8} parent=5 // pred_fallthru
      _
    %p149 = scmp.lt.s32.totalorder %s9, 32
    // Predicated region
    $region21: #{crnn_forward.8} parent=5 // pred_check
      %p150 = pneg %p149
    $region22: #{crnn_forward.8} parent=5 // pred_check_branch
      %152 = sbr.rel (%p150) target = $region24
    $region23: #{crnn_forward.8} parent=5 // pred_region
      // Predicated region
      $region25: #{crnn_forward.8} parent=23 // pred_check
        %p153 = pneg %p43
      $region26: #{crnn_forward.8} parent=23 // pred_check_branch
        %155 = sbr.rel (%p153) target = $region28
      $region27: #{crnn_forward.8} parent=23 // pred_region
        %s156 = smul.u32 64, %s16
        %p157 = scmp.lt.s32.totalorder %s156, 2047
        %s158 = scalar_select %p157, %s156, 2047
        %p159 = scmp.lt.s32.totalorder %s17, 0
        %s160 = scalar_select %p159, %s17, 0
        %s161 = sadd.s32 %s160, %s158
        %s162 = smul.addr %s161, 4
        %s163 = scalar_lea.vmem %s0, %s162
        %s164 = smul.u32 64, %s16
      $region28: #{crnn_forward.8} parent=23 // pred_fallthru
        _
    $region24: #{crnn_forward.8} parent=5 // pred_fallthru
      _
    %p165 = scmp.le.s32.totalorder 1, %s9
    %p166 = scmp.lt.s32.totalorder %s9, 33
    %p167 = pnand %p165, %p166
    %p168 = pneg %p167
    // Predicated region
    $region29: #{crnn_forward.8} parent=5 // pred_check
      _
    $region30: #{crnn_forward.8} parent=5 // pred_check_branch
      %170 = sbr.rel (%p167) target = $region32
    $region31: #{crnn_forward.8} parent=5 // pred_region
      %s171 = ssub.s32 %s9, 1
      %s172 = smul.u32 64, %s18
      %p173 = scmp.lt.s32.totalorder %s172, 2047
      %s174 = scalar_select %p173, %s172, 2047
      %p175 = scmp.lt.s32.totalorder %s19, 0
      %s176 = scalar_select %p175, %s19, 0
      %s177 = sadd.s32 %s176, %s174
      %s178 = smul.addr %s177, 4
      %s179 = scalar_lea.vmem %s0, %s178
      %p180 = pneg %p49
      %p181 = pneg %p46
      %s182 = smul.u32 2, %s19
      %p183 = scmp.lt.s32.totalorder %s182, 1
      %s184 = scalar_select %p183, %s182, 1
      %s185 = smul.addr %s184, 4
      %s186 = scalar_lea.vmem %s1, %s185
      %p187 = pneg %p75
      %p188 = pneg %p72
      %p189 = pneg %p96
      %p190 = pneg %p93
      %p191 = pneg %p122
      %p192 = pneg %p119
      %s193 = smul.u32 64, %s18
      %p194 = scmp.lt.s32.totalorder %s193, 2047
      %s195 = scalar_select %p194, %s193, 2047
      %s196 = smul.addr %s195, 8
      %s197 = scalar_lea.vmem %s3, %s196
      %s198 = smul.u32 64, %s18
      %p199 = scmp.lt.s32.totalorder %s198, 2047
      %s200 = scalar_select %p199, %s198, 2047
      %p201 = scmp.lt.s32.totalorder %s19, 0
      %s202 = scalar_select %p201, %s19, 0
      %s203 = sadd.s32 %s202, %s200
      %s204 = smul.addr %s203, 4
      %s205 = scalar_lea.vmem %s0, %s204
      %s206 = smul.u32 64, %s18
      %s207 = smul.u32 2, %s19
      %p208 = scmp.lt.s32.totalorder %s207, 1
      %s209 = scalar_select %p208, %s207, 1
      %s210 = smul.addr %s209, 4
      %s211 = scalar_lea.vmem %s1, %s210
      %s212 = smul.u32 2, %s19
      %s213 = smul.u32 64, %s18
      %p214 = scmp.lt.s32.totalorder %s213, 2047
      %s215 = scalar_select %p214, %s213, 2047
      %s216 = smul.addr %s215, 8
      %s217 = scalar_lea.vmem %s3, %s216
      %s218 = smul.u32 64, %s18
      %p220 = scmp.eq.s32.totalorder %s19, 0
      // Predicated region
      $region33: #{crnn_forward.8} parent=31 // pred_check
        %p221 = pneg %p220
      $region34: #{crnn_forward.8} parent=31 // pred_check_branch
        %223 = sbr.rel (%p221) target = $region36
      $region35: #{crnn_forward.8} parent=31 // pred_region
        %vm224 = vcmask 261120
        %225 = vst.msk [vmem:[#allocation2] sm:$0xff] %vm224, 0.0
        %226 = vst.msk [vmem:[#allocation2 + $0x8] sm:$0xff] %vm224, 0.0
        %227 = vst.msk [vmem:[#allocation2 + $0x10] sm:$0xff] %vm224, 0.0
        %228 = vst.msk [vmem:[#allocation2 + $0x18] sm:$0xff] %vm224, 0.0
        %229 = vst.msk [vmem:[#allocation2 + $0x20] sm:$0xff] %vm224, 0.0
        %230 = vst.msk [vmem:[#allocation2 + $0x28] sm:$0xff] %vm224, 0.0
        %231 = vst.msk [vmem:[#allocation2 + $0x30] sm:$0xff] %vm224, 0.0
        %232 = vst.msk [vmem:[#allocation2 + $0x38] sm:$0xff] %vm224, 0.0
        %233 = vst.msk [vmem:[#allocation2 + $0x40] sm:$0xff] %vm224, 0.0
        %234 = vst.msk [vmem:[#allocation2 + $0x48] sm:$0xff] %vm224, 0.0
        %235 = vst.msk [vmem:[#allocation2 + $0x50] sm:$0xff] %vm224, 0.0
        %236 = vst.msk [vmem:[#allocation2 + $0x58] sm:$0xff] %vm224, 0.0
        %237 = vst.msk [vmem:[#allocation2 + $0x60] sm:$0xff] %vm224, 0.0
        %238 = vst.msk [vmem:[#allocation2 + $0x68] sm:$0xff] %vm224, 0.0
        %239 = vst.msk [vmem:[#allocation2 + $0x70] sm:$0xff] %vm224, 0.0
        %240 = vst.msk [vmem:[#allocation2 + $0x78] sm:$0xff] %vm224, 0.0
        %241 = vst.msk [vmem:[#allocation2 + $0x80] sm:$0xff] %vm224, 0.0
        %242 = vst.msk [vmem:[#allocation2 + $0x88] sm:$0xff] %vm224, 0.0
        %243 = vst.msk [vmem:[#allocation2 + $0x90] sm:$0xff] %vm224, 0.0
        %244 = vst.msk [vmem:[#allocation2 + $0x98] sm:$0xff] %vm224, 0.0
        %245 = vst.msk [vmem:[#allocation2 + $0xa0] sm:$0xff] %vm224, 0.0
        %246 = vst.msk [vmem:[#allocation2 + $0xa8] sm:$0xff] %vm224, 0.0
        %247 = vst.msk [vmem:[#allocation2 + $0xb0] sm:$0xff] %vm224, 0.0
        %248 = vst.msk [vmem:[#allocation2 + $0xb8] sm:$0xff] %vm224, 0.0
        %249 = vst.msk [vmem:[#allocation2 + $0xc0] sm:$0xff] %vm224, 0.0
        %250 = vst.msk [vmem:[#allocation2 + $0xc8] sm:$0xff] %vm224, 0.0
        %251 = vst.msk [vmem:[#allocation2 + $0xd0] sm:$0xff] %vm224, 0.0
        %252 = vst.msk [vmem:[#allocation2 + $0xd8] sm:$0xff] %vm224, 0.0
        %253 = vst.msk [vmem:[#allocation2 + $0xe0] sm:$0xff] %vm224, 0.0
        %254 = vst.msk [vmem:[#allocation2 + $0xe8] sm:$0xff] %vm224, 0.0
        %255 = vst.msk [vmem:[#allocation2 + $0xf0] sm:$0xff] %vm224, 0.0
        %256 = vst.msk [vmem:[#allocation2 + $0xf8] sm:$0xff] %vm224, 0.0
        %257 = vst.msk [vmem:[#allocation2 + $0x100] sm:$0xff] %vm224, 0.0
        %258 = vst.msk [vmem:[#allocation2 + $0x108] sm:$0xff] %vm224, 0.0
        %259 = vst.msk [vmem:[#allocation2 + $0x110] sm:$0xff] %vm224, 0.0
        %260 = vst.msk [vmem:[#allocation2 + $0x118] sm:$0xff] %vm224, 0.0
        %261 = vst.msk [vmem:[#allocation2 + $0x120] sm:$0xff] %vm224, 0.0
        %262 = vst.msk [vmem:[#allocation2 + $0x128] sm:$0xff] %vm224, 0.0
        %263 = vst.msk [vmem:[#allocation2 + $0x130] sm:$0xff] %vm224, 0.0
        %264 = vst.msk [vmem:[#allocation2 + $0x138] sm:$0xff] %vm224, 0.0
        %265 = vst.msk [vmem:[#allocation2 + $0x140] sm:$0xff] %vm224, 0.0
        %266 = vst.msk [vmem:[#allocation2 + $0x148] sm:$0xff] %vm224, 0.0
        %267 = vst.msk [vmem:[#allocation2 + $0x150] sm:$0xff] %vm224, 0.0
        %268 = vst.msk [vmem:[#allocation2 + $0x158] sm:$0xff] %vm224, 0.0
        %269 = vst.msk [vmem:[#allocation2 + $0x160] sm:$0xff] %vm224, 0.0
        %270 = vst.msk [vmem:[#allocation2 + $0x168] sm:$0xff] %vm224, 0.0
        %271 = vst.msk [vmem:[#allocation2 + $0x170] sm:$0xff] %vm224, 0.0
        %272 = vst.msk [vmem:[#allocation2 + $0x178] sm:$0xff] %vm224, 0.0
        %273 = vst.msk [vmem:[#allocation2 + $0x180] sm:$0xff] %vm224, 0.0
        %274 = vst.msk [vmem:[#allocation2 + $0x188] sm:$0xff] %vm224, 0.0
        %275 = vst.msk [vmem:[#allocation2 + $0x190] sm:$0xff] %vm224, 0.0
        %276 = vst.msk [vmem:[#allocation2 + $0x198] sm:$0xff] %vm224, 0.0
        %277 = vst.msk [vmem:[#allocation2 + $0x1a0] sm:$0xff] %vm224, 0.0
        %278 = vst.msk [vmem:[#allocation2 + $0x1a8] sm:$0xff] %vm224, 0.0
        %279 = vst.msk [vmem:[#allocation2 + $0x1b0] sm:$0xff] %vm224, 0.0
        %280 = vst.msk [vmem:[#allocation2 + $0x1b8] sm:$0xff] %vm224, 0.0
        %281 = vst.msk [vmem:[#allocation2 + $0x1c0] sm:$0xff] %vm224, 0.0
        %282 = vst.msk [vmem:[#allocation2 + $0x1c8] sm:$0xff] %vm224, 0.0
        %283 = vst.msk [vmem:[#allocation2 + $0x1d0] sm:$0xff] %vm224, 0.0
        %284 = vst.msk [vmem:[#allocation2 + $0x1d8] sm:$0xff] %vm224, 0.0
        %285 = vst.msk [vmem:[#allocation2 + $0x1e0] sm:$0xff] %vm224, 0.0
        %286 = vst.msk [vmem:[#allocation2 + $0x1e8] sm:$0xff] %vm224, 0.0
        %287 = vst.msk [vmem:[#allocation2 + $0x1f0] sm:$0xff] %vm224, 0.0
        %288 = vst.msk [vmem:[#allocation2 + $0x1f8] sm:$0xff] %vm224, 0.0
      $region36: #{crnn_forward.8} parent=31 // pred_fallthru
        _
      %v289 = vld [vmem:[#allocation2] sm:$0xff]
      %v290 = vld [vmem:[#allocation2 + $0x8] sm:$0xff]
      %v291 = vld [vmem:[#allocation2 + $0x10] sm:$0xff]
      %v292 = vld [vmem:[#allocation2 + $0x18] sm:$0xff]
      %v293 = vld [vmem:[#allocation2 + $0x20] sm:$0xff]
      %v294 = vld [vmem:[#allocation2 + $0x28] sm:$0xff]
      %v295 = vld [vmem:[#allocation2 + $0x30] sm:$0xff]
      %v296 = vld [vmem:[#allocation2 + $0x38] sm:$0xff]
      %v297 = vld [vmem:[#allocation2 + $0x40] sm:$0xff]
      %v298 = vld [vmem:[#allocation2 + $0x48] sm:$0xff]
      %v299 = vld [vmem:[#allocation2 + $0x50] sm:$0xff]
      %v300 = vld [vmem:[#allocation2 + $0x58] sm:$0xff]
      %v301 = vld [vmem:[#allocation2 + $0x60] sm:$0xff]
      %v302 = vld [vmem:[#allocation2 + $0x68] sm:$0xff]
      %v303 = vld [vmem:[#allocation2 + $0x70] sm:$0xff]
      %v304 = vld [vmem:[#allocation2 + $0x78] sm:$0xff]
      %v305 = vld [vmem:[#allocation2 + $0x80] sm:$0xff]
      %v306 = vld [vmem:[#allocation2 + $0x88] sm:$0xff]
      %v307 = vld [vmem:[#allocation2 + $0x90] sm:$0xff]
      %v308 = vld [vmem:[#allocation2 + $0x98] sm:$0xff]
      %v309 = vld [vmem:[#allocation2 + $0xa0] sm:$0xff]
      %v310 = vld [vmem:[#allocation2 + $0xa8] sm:$0xff]
      %v311 = vld [vmem:[#allocation2 + $0xb0] sm:$0xff]
      %v312 = vld [vmem:[#allocation2 + $0xb8] sm:$0xff]
      %v313 = vld [vmem:[#allocation2 + $0xc0] sm:$0xff]
      %v314 = vld [vmem:[#allocation2 + $0xc8] sm:$0xff]
      %v315 = vld [vmem:[#allocation2 + $0xd0] sm:$0xff]
      %v316 = vld [vmem:[#allocation2 + $0xd8] sm:$0xff]
      %v317 = vld [vmem:[#allocation2 + $0xe0] sm:$0xff]
      %v318 = vld [vmem:[#allocation2 + $0xe8] sm:$0xff]
      %v319 = vld [vmem:[#allocation2 + $0xf0] sm:$0xff]
      %v320 = vld [vmem:[#allocation2 + $0xf8] sm:$0xff]
      %v321 = vld [vmem:[#allocation2 + $0x100] sm:$0xff]
      %v322 = vld [vmem:[#allocation2 + $0x108] sm:$0xff]
      %v323 = vld [vmem:[#allocation2 + $0x110] sm:$0xff]
      %v324 = vld [vmem:[#allocation2 + $0x118] sm:$0xff]
      %v325 = vld [vmem:[#allocation2 + $0x120] sm:$0xff]
      %v326 = vld [vmem:[#allocation2 + $0x128] sm:$0xff]
      %v327 = vld [vmem:[#allocation2 + $0x130] sm:$0xff]
      %v328 = vld [vmem:[#allocation2 + $0x138] sm:$0xff]
      %v329 = vld [vmem:[#allocation2 + $0x140] sm:$0xff]
      %v330 = vld [vmem:[#allocation2 + $0x148] sm:$0xff]
      %v331 = vld [vmem:[#allocation2 + $0x150] sm:$0xff]
      %v332 = vld [vmem:[#allocation2 + $0x158] sm:$0xff]
      %v333 = vld [vmem:[#allocation2 + $0x160] sm:$0xff]
      %v334 = vld [vmem:[#allocation2 + $0x168] sm:$0xff]
      %v335 = vld [vmem:[#allocation2 + $0x170] sm:$0xff]
      %v336 = vld [vmem:[#allocation2 + $0x178] sm:$0xff]
      %v337 = vld [vmem:[#allocation2 + $0x180] sm:$0xff]
      %v338 = vld [vmem:[#allocation2 + $0x188] sm:$0xff]
      %v339 = vld [vmem:[#allocation2 + $0x190] sm:$0xff]
      %v340 = vld [vmem:[#allocation2 + $0x198] sm:$0xff]
      %v341 = vld [vmem:[#allocation2 + $0x1a0] sm:$0xff]
      %v342 = vld [vmem:[#allocation2 + $0x1a8] sm:$0xff]
      %v343 = vld [vmem:[#allocation2 + $0x1b0] sm:$0xff]
      %v344 = vld [vmem:[#allocation2 + $0x1b8] sm:$0xff]
      %v345 = vld [vmem:[#allocation2 + $0x1c0] sm:$0xff]
      %v346 = vld [vmem:[#allocation2 + $0x1c8] sm:$0xff]
      %v347 = vld [vmem:[#allocation2 + $0x1d0] sm:$0xff]
      %v348 = vld [vmem:[#allocation2 + $0x1d8] sm:$0xff]
      %v349 = vld [vmem:[#allocation2 + $0x1e0] sm:$0xff]
      %v350 = vld [vmem:[#allocation2 + $0x1e8] sm:$0xff]
      %v351 = vld [vmem:[#allocation2 + $0x1f0] sm:$0xff]
      %v352 = vld [vmem:[#allocation2 + $0x1f8] sm:$0xff]
      %v353 = vld [vmem:[%s205] sm:$0xf]
      %v354 = vld [vmem:[%s205 + $0x4] sm:$0xf]
      %v355 = vld [vmem:[%s205 + $0x8] sm:$0xf]
      %v356 = vld [vmem:[%s205 + $0xc] sm:$0xf]
      %v357 = vld [vmem:[%s205 + $0x10] sm:$0xf]
      %v358 = vld [vmem:[%s205 + $0x14] sm:$0xf]
      %v359 = vld [vmem:[%s205 + $0x18] sm:$0xf]
      %v360 = vld [vmem:[%s205 + $0x1c] sm:$0xf]
      %v361 = vld [vmem:[%s205 + $0x20] sm:$0xf]
      %v362 = vld [vmem:[%s205 + $0x24] sm:$0xf]
      %v363 = vld [vmem:[%s205 + $0x28] sm:$0xf]
      %v364 = vld [vmem:[%s205 + $0x2c] sm:$0xf]
      %v365 = vld [vmem:[%s205 + $0x30] sm:$0xf]
      %v366 = vld [vmem:[%s205 + $0x34] sm:$0xf]
      %v367 = vld [vmem:[%s205 + $0x38] sm:$0xf]
      %v368 = vld [vmem:[%s205 + $0x3c] sm:$0xf]
      %v369 = vld [vmem:[%s205 + $0x40] sm:$0xf]
      %v370 = vld [vmem:[%s205 + $0x44] sm:$0xf]
      %v371 = vld [vmem:[%s205 + $0x48] sm:$0xf]
      %v372 = vld [vmem:[%s205 + $0x4c] sm:$0xf]
      %v373 = vld [vmem:[%s205 + $0x50] sm:$0xf]
      %v374 = vld [vmem:[%s205 + $0x54] sm:$0xf]
      %v375 = vld [vmem:[%s205 + $0x58] sm:$0xf]
      %v376 = vld [vmem:[%s205 + $0x5c] sm:$0xf]
      %v377 = vld [vmem:[%s205 + $0x60] sm:$0xf]
      %v378 = vld [vmem:[%s205 + $0x64] sm:$0xf]
      %v379 = vld [vmem:[%s205 + $0x68] sm:$0xf]
      %v380 = vld [vmem:[%s205 + $0x6c] sm:$0xf]
      %v381 = vld [vmem:[%s205 + $0x70] sm:$0xf]
      %v382 = vld [vmem:[%s205 + $0x74] sm:$0xf]
      %v383 = vld [vmem:[%s205 + $0x78] sm:$0xf]
      %v384 = vld [vmem:[%s205 + $0x7c] sm:$0xf]
      %v385 = vld [vmem:[%s205 + $0x80] sm:$0xf]
      %v386 = vld [vmem:[%s205 + $0x84] sm:$0xf]
      %v387 = vld [vmem:[%s205 + $0x88] sm:$0xf]
      %v388 = vld [vmem:[%s205 + $0x8c] sm:$0xf]
      %v389 = vld [vmem:[%s205 + $0x90] sm:$0xf]
      %v390 = vld [vmem:[%s205 + $0x94] sm:$0xf]
      %v391 = vld [vmem:[%s205 + $0x98] sm:$0xf]
      %v392 = vld [vmem:[%s205 + $0x9c] sm:$0xf]
      %v393 = vld [vmem:[%s205 + $0xa0] sm:$0xf]
      %v394 = vld [vmem:[%s205 + $0xa4] sm:$0xf]
      %v395 = vld [vmem:[%s205 + $0xa8] sm:$0xf]
      %v396 = vld [vmem:[%s205 + $0xac] sm:$0xf]
      %v397 = vld [vmem:[%s205 + $0xb0] sm:$0xf]
      %v398 = vld [vmem:[%s205 + $0xb4] sm:$0xf]
      %v399 = vld [vmem:[%s205 + $0xb8] sm:$0xf]
      %v400 = vld [vmem:[%s205 + $0xbc] sm:$0xf]
      %v401 = vld [vmem:[%s205 + $0xc0] sm:$0xf]
      %v402 = vld [vmem:[%s205 + $0xc4] sm:$0xf]
      %v403 = vld [vmem:[%s205 + $0xc8] sm:$0xf]
      %v404 = vld [vmem:[%s205 + $0xcc] sm:$0xf]
      %v405 = vld [vmem:[%s205 + $0xd0] sm:$0xf]
      %v406 = vld [vmem:[%s205 + $0xd4] sm:$0xf]
      %v407 = vld [vmem:[%s205 + $0xd8] sm:$0xf]
      %v408 = vld [vmem:[%s205 + $0xdc] sm:$0xf]
      %v409 = vld [vmem:[%s205 + $0xe0] sm:$0xf]
      %v410 = vld [vmem:[%s205 + $0xe4] sm:$0xf]
      %v411 = vld [vmem:[%s205 + $0xe8] sm:$0xf]
      %v412 = vld [vmem:[%s205 + $0xec] sm:$0xf]
      %v413 = vld [vmem:[%s205 + $0xf0] sm:$0xf]
      %v414 = vld [vmem:[%s205 + $0xf4] sm:$0xf]
      %v415 = vld [vmem:[%s205 + $0xf8] sm:$0xf]
      %v416 = vld [vmem:[%s205 + $0xfc] sm:$0xf]
      %v417 = vld [vmem:[%s211] sm:$0xf]
      %v418 = vld [vmem:[%s211 + $0x4] sm:$0x1]
      %v483 = vunpack.c.l.b16 %v353
      %v484 = vunpack.c.l.b16 %v354
      %v485 = vunpack.c.l.b16 %v355
      %v486 = vunpack.c.l.b16 %v356
      %v487 = vunpack.c.l.b16 %v357
      %v488 = vunpack.c.l.b16 %v358
      %v489 = vunpack.c.l.b16 %v359
      %v490 = vunpack.c.l.b16 %v360
      %v491 = vunpack.c.l.b16 %v361
      %v492 = vunpack.c.l.b16 %v362
      %v493 = vunpack.c.l.b16 %v363
      %v494 = vunpack.c.l.b16 %v364
      %v495 = vunpack.c.l.b16 %v365
      %v496 = vunpack.c.l.b16 %v366
      %v497 = vunpack.c.l.b16 %v367
      %v498 = vunpack.c.l.b16 %v368
      %v499 = vunpack.c.l.b16 %v369
      %v500 = vunpack.c.l.b16 %v370
      %v501 = vunpack.c.l.b16 %v371
      %v502 = vunpack.c.l.b16 %v372
      %v503 = vunpack.c.l.b16 %v373
      %v504 = vunpack.c.l.b16 %v374
      %v505 = vunpack.c.l.b16 %v375
      %v506 = vunpack.c.l.b16 %v376
      %v507 = vunpack.c.l.b16 %v377
      %v508 = vunpack.c.l.b16 %v378
      %v509 = vunpack.c.l.b16 %v379
      %v510 = vunpack.c.l.b16 %v380
      %v511 = vunpack.c.l.b16 %v381
      %v512 = vunpack.c.l.b16 %v382
      %v513 = vunpack.c.l.b16 %v383
      %v514 = vunpack.c.l.b16 %v384
      %v515 = vunpack.c.l.b16 %v385
      %v516 = vunpack.c.l.b16 %v386
      %v517 = vunpack.c.l.b16 %v387
      %v518 = vunpack.c.l.b16 %v388
      %v519 = vunpack.c.l.b16 %v389
      %v520 = vunpack.c.l.b16 %v390
      %v521 = vunpack.c.l.b16 %v391
      %v522 = vunpack.c.l.b16 %v392
      %v523 = vunpack.c.l.b16 %v393
      %v524 = vunpack.c.l.b16 %v394
      %v525 = vunpack.c.l.b16 %v395
      %v526 = vunpack.c.l.b16 %v396
      %v527 = vunpack.c.l.b16 %v397
      %v528 = vunpack.c.l.b16 %v398
      %v529 = vunpack.c.l.b16 %v399
      %v530 = vunpack.c.l.b16 %v400
      %v531 = vunpack.c.l.b16 %v401
      %v532 = vunpack.c.l.b16 %v402
      %v533 = vunpack.c.l.b16 %v403
      %v534 = vunpack.c.l.b16 %v404
      %v535 = vunpack.c.l.b16 %v405
      %v536 = vunpack.c.l.b16 %v406
      %v537 = vunpack.c.l.b16 %v407
      %v538 = vunpack.c.l.b16 %v408
      %v539 = vunpack.c.l.b16 %v409
      %v540 = vunpack.c.l.b16 %v410
      %v541 = vunpack.c.l.b16 %v411
      %v542 = vunpack.c.l.b16 %v412
      %v543 = vunpack.c.l.b16 %v413
      %v544 = vunpack.c.l.b16 %v414
      %v545 = vunpack.c.l.b16 %v415
      %v546 = vunpack.c.l.b16 %v416
      %v547 = vpack.c.b16 %v484, %v483
      %v548 = vpack.c.b16 %v486, %v485
      %v549 = vpack.c.b16 %v488, %v487
      %v550 = vpack.c.b16 %v490, %v489
      %v551 = vpack.c.b16 %v492, %v491
      %v552 = vpack.c.b16 %v494, %v493
      %v553 = vpack.c.b16 %v496, %v495
      %v554 = vpack.c.b16 %v498, %v497
      %v555 = vpack.c.b16 %v500, %v499
      %v556 = vpack.c.b16 %v502, %v501
      %v557 = vpack.c.b16 %v504, %v503
      %v558 = vpack.c.b16 %v506, %v505
      %v559 = vpack.c.b16 %v508, %v507
      %v560 = vpack.c.b16 %v510, %v509
      %v561 = vpack.c.b16 %v512, %v511
      %v562 = vpack.c.b16 %v514, %v513
      %v563 = vpack.c.b16 %v516, %v515
      %v564 = vpack.c.b16 %v518, %v517
      %v565 = vpack.c.b16 %v520, %v519
      %v566 = vpack.c.b16 %v522, %v521
      %v567 = vpack.c.b16 %v524, %v523
      %v568 = vpack.c.b16 %v526, %v525
      %v569 = vpack.c.b16 %v528, %v527
      %v570 = vpack.c.b16 %v530, %v529
      %v571 = vpack.c.b16 %v532, %v531
      %v572 = vpack.c.b16 %v534, %v533
      %v573 = vpack.c.b16 %v536, %v535
      %v574 = vpack.c.b16 %v538, %v537
      %v575 = vpack.c.b16 %v540, %v539
      %v576 = vpack.c.b16 %v542, %v541
      %v577 = vpack.c.b16 %v544, %v543
      %v578 = vpack.c.b16 %v546, %v545
      %v581 = vunpack.c.l.b16 %v417
      %v582 = vunpack.c.l.b16 %v418
      %v583 = vpack.c.b16 %v582, %v581
      %vm584 = vcmask 72704
      %v586 = vsel %vm584, %v547, 0
      %v589 = vsel %vm584, %v548, 0
      %v592 = vsel %vm584, %v549, 0
      %v595 = vsel %vm584, %v550, 0
      %v598 = vsel %vm584, %v551, 0
      %v601 = vsel %vm584, %v552, 0
      %v604 = vsel %vm584, %v553, 0
      %v607 = vsel %vm584, %v554, 0
      %v610 = vsel %vm584, %v555, 0
      %v613 = vsel %vm584, %v556, 0
      %v616 = vsel %vm584, %v557, 0
      %v619 = vsel %vm584, %v558, 0
      %v622 = vsel %vm584, %v559, 0
      %v625 = vsel %vm584, %v560, 0
      %v628 = vsel %vm584, %v561, 0
      %v631 = vsel %vm584, %v562, 0
      %v634 = vsel %vm584, %v563, 0
      %v637 = vsel %vm584, %v564, 0
      %v640 = vsel %vm584, %v565, 0
      %v643 = vsel %vm584, %v566, 0
      %v646 = vsel %vm584, %v567, 0
      %v649 = vsel %vm584, %v568, 0
      %v652 = vsel %vm584, %v569, 0
      %v655 = vsel %vm584, %v570, 0
      %v658 = vsel %vm584, %v571, 0
      %v661 = vsel %vm584, %v572, 0
      %v664 = vsel %vm584, %v573, 0
      %v667 = vsel %vm584, %v574, 0
      %v670 = vsel %vm584, %v575, 0
      %v673 = vsel %vm584, %v576, 0
      %v676 = vsel %vm584, %v577, 0
      %v679 = vsel %vm584, %v578, 0
      %vm681 = vcmask 1043456
      %vm682 = vcmask 1044480
      %v683 = vsel %vm681, 4294967295, 65535
      %v684 = vsel %vm682, %v683, 0
      %v686 = vand.u32 %v583, %v684
      %688 = vmatpush.bf16.msra.mxu0 0
      %689 = vmatpush.bf16.msra.mxu0 0
      %690 = vmatpush.bf16.msra.mxu0 0
      %691 = vmatpush.bf16.msra.mxu0 0
      %692 = vmatpush.bf16.msra.mxu0 0
      %693 = vmatpush.bf16.msra.mxu0 0
      %694 = vmatpush.bf16.msra.mxu0 0
      %695 = vmatpush.bf16.msra.mxu0 %v686
      %696 = vmatmul.bf16.gmra.mxu0 %v586
      %v697 = vpop.f32.mrf.mxu0
      %v698 = vadd.f32 0.0, %v697
      %v699 = vpop.f32.mrf.mxu0
      %v700 = vadd.f32 0.0, %v699
      %701 = vmatmul.bf16.gmra.mxu0 %v589
      %v702 = vpop.f32.mrf.mxu0
      %v703 = vadd.f32 0.0, %v702
      %v704 = vpop.f32.mrf.mxu0
      %v705 = vadd.f32 0.0, %v704
      %706 = vmatmul.bf16.gmra.mxu0 %v592
      %v707 = vpop.f32.mrf.mxu0
      %v708 = vadd.f32 0.0, %v707
      %v709 = vpop.f32.mrf.mxu0
      %v710 = vadd.f32 0.0, %v709
      %711 = vmatmul.bf16.gmra.mxu0 %v595
      %v712 = vpop.f32.mrf.mxu0
      %v713 = vadd.f32 0.0, %v712
      %v714 = vpop.f32.mrf.mxu0
      %v715 = vadd.f32 0.0, %v714
      %716 = vmatmul.bf16.gmra.mxu0 %v598
      %v717 = vpop.f32.mrf.mxu0
      %v718 = vadd.f32 0.0, %v717
      %v719 = vpop.f32.mrf.mxu0
      %v720 = vadd.f32 0.0, %v719
      %721 = vmatmul.bf16.gmra.mxu0 %v601
      %v722 = vpop.f32.mrf.mxu0
      %v723 = vadd.f32 0.0, %v722
      %v724 = vpop.f32.mrf.mxu0
      %v725 = vadd.f32 0.0, %v724
      %726 = vmatmul.bf16.gmra.mxu0 %v604
      %v727 = vpop.f32.mrf.mxu0
      %v728 = vadd.f32 0.0, %v727
      %v729 = vpop.f32.mrf.mxu0
      %v730 = vadd.f32 0.0, %v729
      %731 = vmatmul.bf16.gmra.mxu0 %v607
      %v732 = vpop.f32.mrf.mxu0
      %v733 = vadd.f32 0.0, %v732
      %v734 = vpop.f32.mrf.mxu0
      %v735 = vadd.f32 0.0, %v734
      %736 = vmatmul.bf16.gmra.mxu0 %v610
      %v737 = vpop.f32.mrf.mxu0
      %v738 = vadd.f32 0.0, %v737
      %v739 = vpop.f32.mrf.mxu0
      %v740 = vadd.f32 0.0, %v739
      %741 = vmatmul.bf16.gmra.mxu0 %v613
      %v742 = vpop.f32.mrf.mxu0
      %v743 = vadd.f32 0.0, %v742
      %v744 = vpop.f32.mrf.mxu0
      %v745 = vadd.f32 0.0, %v744
      %746 = vmatmul.bf16.gmra.mxu0 %v616
      %v747 = vpop.f32.mrf.mxu0
      %v748 = vadd.f32 0.0, %v747
      %v749 = vpop.f32.mrf.mxu0
      %v750 = vadd.f32 0.0, %v749
      %751 = vmatmul.bf16.gmra.mxu0 %v619
      %v752 = vpop.f32.mrf.mxu0
      %v753 = vadd.f32 0.0, %v752
      %v754 = vpop.f32.mrf.mxu0
      %v755 = vadd.f32 0.0, %v754
      %756 = vmatmul.bf16.gmra.mxu0 %v622
      %v757 = vpop.f32.mrf.mxu0
      %v758 = vadd.f32 0.0, %v757
      %v759 = vpop.f32.mrf.mxu0
      %v760 = vadd.f32 0.0, %v759
      %761 = vmatmul.bf16.gmra.mxu0 %v625
      %v762 = vpop.f32.mrf.mxu0
      %v763 = vadd.f32 0.0, %v762
      %v764 = vpop.f32.mrf.mxu0
      %v765 = vadd.f32 0.0, %v764
      %766 = vmatmul.bf16.gmra.mxu0 %v628
      %v767 = vpop.f32.mrf.mxu0
      %v768 = vadd.f32 0.0, %v767
      %v769 = vpop.f32.mrf.mxu0
      %v770 = vadd.f32 0.0, %v769
      %771 = vmatmul.bf16.gmra.mxu0 %v631
      %v772 = vpop.f32.mrf.mxu0
      %v773 = vadd.f32 0.0, %v772
      %v774 = vpop.f32.mrf.mxu0
      %v775 = vadd.f32 0.0, %v774
      %776 = vmatmul.bf16.gmra.mxu0 %v634
      %v777 = vpop.f32.mrf.mxu0
      %v778 = vadd.f32 0.0, %v777
      %v779 = vpop.f32.mrf.mxu0
      %v780 = vadd.f32 0.0, %v779
      %781 = vmatmul.bf16.gmra.mxu0 %v637
      %v782 = vpop.f32.mrf.mxu0
      %v783 = vadd.f32 0.0, %v782
      %v784 = vpop.f32.mrf.mxu0
      %v785 = vadd.f32 0.0, %v784
      %786 = vmatmul.bf16.gmra.mxu0 %v640
      %v787 = vpop.f32.mrf.mxu0
      %v788 = vadd.f32 0.0, %v787
      %v789 = vpop.f32.mrf.mxu0
      %v790 = vadd.f32 0.0, %v789
      %791 = vmatmul.bf16.gmra.mxu0 %v643
      %v792 = vpop.f32.mrf.mxu0
      %v793 = vadd.f32 0.0, %v792
      %v794 = vpop.f32.mrf.mxu0
      %v795 = vadd.f32 0.0, %v794
      %796 = vmatmul.bf16.gmra.mxu0 %v646
      %v797 = vpop.f32.mrf.mxu0
      %v798 = vadd.f32 0.0, %v797
      %v799 = vpop.f32.mrf.mxu0
      %v800 = vadd.f32 0.0, %v799
      %801 = vmatmul.bf16.gmra.mxu0 %v649
      %v802 = vpop.f32.mrf.mxu0
      %v803 = vadd.f32 0.0, %v802
      %v804 = vpop.f32.mrf.mxu0
      %v805 = vadd.f32 0.0, %v804
      %806 = vmatmul.bf16.gmra.mxu0 %v652
      %v807 = vpop.f32.mrf.mxu0
      %v808 = vadd.f32 0.0, %v807
      %v809 = vpop.f32.mrf.mxu0
      %v810 = vadd.f32 0.0, %v809
      %811 = vmatmul.bf16.gmra.mxu0 %v655
      %v812 = vpop.f32.mrf.mxu0
      %v813 = vadd.f32 0.0, %v812
      %v814 = vpop.f32.mrf.mxu0
      %v815 = vadd.f32 0.0, %v814
      %816 = vmatmul.bf16.gmra.mxu0 %v658
      %v817 = vpop.f32.mrf.mxu0
      %v818 = vadd.f32 0.0, %v817
      %v819 = vpop.f32.mrf.mxu0
      %v820 = vadd.f32 0.0, %v819
      %821 = vmatmul.bf16.gmra.mxu0 %v661
      %v822 = vpop.f32.mrf.mxu0
      %v823 = vadd.f32 0.0, %v822
      %v824 = vpop.f32.mrf.mxu0
      %v825 = vadd.f32 0.0, %v824
      %826 = vmatmul.bf16.gmra.mxu0 %v664
      %v827 = vpop.f32.mrf.mxu0
      %v828 = vadd.f32 0.0, %v827
      %v829 = vpop.f32.mrf.mxu0
      %v830 = vadd.f32 0.0, %v829
      %831 = vmatmul.bf16.gmra.mxu0 %v667
      %v832 = vpop.f32.mrf.mxu0
      %v833 = vadd.f32 0.0, %v832
      %v834 = vpop.f32.mrf.mxu0
      %v835 = vadd.f32 0.0, %v834
      %836 = vmatmul.bf16.gmra.mxu0 %v670
      %v837 = vpop.f32.mrf.mxu0
      %v838 = vadd.f32 0.0, %v837
      %v839 = vpop.f32.mrf.mxu0
      %v840 = vadd.f32 0.0, %v839
      %841 = vmatmul.bf16.gmra.mxu0 %v673
      %v842 = vpop.f32.mrf.mxu0
      %v843 = vadd.f32 0.0, %v842
      %v844 = vpop.f32.mrf.mxu0
      %v845 = vadd.f32 0.0, %v844
      %846 = vmatmul.bf16.gmra.mxu0 %v676
      %v847 = vpop.f32.mrf.mxu0
      %v848 = vadd.f32 0.0, %v847
      %v849 = vpop.f32.mrf.mxu0
      %v850 = vadd.f32 0.0, %v849
      %851 = vmatmul.bf16.gmra.mxu0 %v679
      %v852 = vpop.f32.mrf.mxu0
      %v853 = vadd.f32 0.0, %v852
      %v854 = vpop.f32.mrf.mxu0
      %v855 = vadd.f32 0.0, %v854
      %856 = vdwg.mxu0
      %v857 = vadd.f32 %v289, %v698
      %v858 = vadd.f32 %v290, %v700
      %v859 = vadd.f32 %v291, %v703
      %v860 = vadd.f32 %v292, %v705
      %v861 = vadd.f32 %v293, %v708
      %v862 = vadd.f32 %v294, %v710
      %v863 = vadd.f32 %v295, %v713
      %v864 = vadd.f32 %v296, %v715
      %v865 = vadd.f32 %v297, %v718
      %v866 = vadd.f32 %v298, %v720
      %v867 = vadd.f32 %v299, %v723
      %v868 = vadd.f32 %v300, %v725
      %v869 = vadd.f32 %v301, %v728
      %v870 = vadd.f32 %v302, %v730
      %v871 = vadd.f32 %v303, %v733
      %v872 = vadd.f32 %v304, %v735
      %v873 = vadd.f32 %v305, %v738
      %v874 = vadd.f32 %v306, %v740
      %v875 = vadd.f32 %v307, %v743
      %v876 = vadd.f32 %v308, %v745
      %v877 = vadd.f32 %v309, %v748
      %v878 = vadd.f32 %v310, %v750
      %v879 = vadd.f32 %v311, %v753
      %v880 = vadd.f32 %v312, %v755
      %v881 = vadd.f32 %v313, %v758
      %v882 = vadd.f32 %v314, %v760
      %v883 = vadd.f32 %v315, %v763
      %v884 = vadd.f32 %v316, %v765
      %v885 = vadd.f32 %v317, %v768
      %v886 = vadd.f32 %v318, %v770
      %v887 = vadd.f32 %v319, %v773
      %v888 = vadd.f32 %v320, %v775
      %v889 = vadd.f32 %v321, %v778
      %v890 = vadd.f32 %v322, %v780
      %v891 = vadd.f32 %v323, %v783
      %v892 = vadd.f32 %v324, %v785
      %v893 = vadd.f32 %v325, %v788
      %v894 = vadd.f32 %v326, %v790
      %v895 = vadd.f32 %v327, %v793
      %v896 = vadd.f32 %v328, %v795
      %v897 = vadd.f32 %v329, %v798
      %v898 = vadd.f32 %v330, %v800
      %v899 = vadd.f32 %v331, %v803
      %v900 = vadd.f32 %v332, %v805
      %v901 = vadd.f32 %v333, %v808
      %v902 = vadd.f32 %v334, %v810
      %v903 = vadd.f32 %v335, %v813
      %v904 = vadd.f32 %v336, %v815
      %v905 = vadd.f32 %v337, %v818
      %v906 = vadd.f32 %v338, %v820
      %v907 = vadd.f32 %v339, %v823
      %v908 = vadd.f32 %v340, %v825
      %v909 = vadd.f32 %v341, %v828
      %v910 = vadd.f32 %v342, %v830
      %v911 = vadd.f32 %v343, %v833
      %v912 = vadd.f32 %v344, %v835
      %v913 = vadd.f32 %v345, %v838
      %v914 = vadd.f32 %v346, %v840
      %v915 = vadd.f32 %v347, %v843
      %v916 = vadd.f32 %v348, %v845
      %v917 = vadd.f32 %v349, %v848
      %v918 = vadd.f32 %v350, %v850
      %v919 = vadd.f32 %v351, %v853
      %v920 = vadd.f32 %v352, %v855
      %vm921 = vcmask 261120
      %922 = vst.msk [vmem:[#allocation2] sm:$0xff] %vm921, %v857
      %923 = vst.msk [vmem:[#allocation2 + $0x8] sm:$0xff] %vm921, %v858
      %924 = vst.msk [vmem:[#allocation2 + $0x10] sm:$0xff] %vm921, %v859
      %925 = vst.msk [vmem:[#allocation2 + $0x18] sm:$0xff] %vm921, %v860
      %926 = vst.msk [vmem:[#allocation2 + $0x20] sm:$0xff] %vm921, %v861
      %927 = vst.msk [vmem:[#allocation2 + $0x28] sm:$0xff] %vm921, %v862
      %928 = vst.msk [vmem:[#allocation2 + $0x30] sm:$0xff] %vm921, %v863
      %929 = vst.msk [vmem:[#allocation2 + $0x38] sm:$0xff] %vm921, %v864
      %930 = vst.msk [vmem:[#allocation2 + $0x40] sm:$0xff] %vm921, %v865
      %931 = vst.msk [vmem:[#allocation2 + $0x48] sm:$0xff] %vm921, %v866
      %932 = vst.msk [vmem:[#allocation2 + $0x50] sm:$0xff] %vm921, %v867
      %933 = vst.msk [vmem:[#allocation2 + $0x58] sm:$0xff] %vm921, %v868
      %934 = vst.msk [vmem:[#allocation2 + $0x60] sm:$0xff] %vm921, %v869
      %935 = vst.msk [vmem:[#allocation2 + $0x68] sm:$0xff] %vm921, %v870
      %936 = vst.msk [vmem:[#allocation2 + $0x70] sm:$0xff] %vm921, %v871
      %937 = vst.msk [vmem:[#allocation2 + $0x78] sm:$0xff] %vm921, %v872
      %938 = vst.msk [vmem:[#allocation2 + $0x80] sm:$0xff] %vm921, %v873
      %939 = vst.msk [vmem:[#allocation2 + $0x88] sm:$0xff] %vm921, %v874
      %940 = vst.msk [vmem:[#allocation2 + $0x90] sm:$0xff] %vm921, %v875
      %941 = vst.msk [vmem:[#allocation2 + $0x98] sm:$0xff] %vm921, %v876
      %942 = vst.msk [vmem:[#allocation2 + $0xa0] sm:$0xff] %vm921, %v877
      %943 = vst.msk [vmem:[#allocation2 + $0xa8] sm:$0xff] %vm921, %v878
      %944 = vst.msk [vmem:[#allocation2 + $0xb0] sm:$0xff] %vm921, %v879
      %945 = vst.msk [vmem:[#allocation2 + $0xb8] sm:$0xff] %vm921, %v880
      %946 = vst.msk [vmem:[#allocation2 + $0xc0] sm:$0xff] %vm921, %v881
      %947 = vst.msk [vmem:[#allocation2 + $0xc8] sm:$0xff] %vm921, %v882
      %948 = vst.msk [vmem:[#allocation2 + $0xd0] sm:$0xff] %vm921, %v883
      %949 = vst.msk [vmem:[#allocation2 + $0xd8] sm:$0xff] %vm921, %v884
      %950 = vst.msk [vmem:[#allocation2 + $0xe0] sm:$0xff] %vm921, %v885
      %951 = vst.msk [vmem:[#allocation2 + $0xe8] sm:$0xff] %vm921, %v886
      %952 = vst.msk [vmem:[#allocation2 + $0xf0] sm:$0xff] %vm921, %v887
      %953 = vst.msk [vmem:[#allocation2 + $0xf8] sm:$0xff] %vm921, %v888
      %954 = vst.msk [vmem:[#allocation2 + $0x100] sm:$0xff] %vm921, %v889
      %955 = vst.msk [vmem:[#allocation2 + $0x108] sm:$0xff] %vm921, %v890
      %956 = vst.msk [vmem:[#allocation2 + $0x110] sm:$0xff] %vm921, %v891
      %957 = vst.msk [vmem:[#allocation2 + $0x118] sm:$0xff] %vm921, %v892
      %958 = vst.msk [vmem:[#allocation2 + $0x120] sm:$0xff] %vm921, %v893
      %959 = vst.msk [vmem:[#allocation2 + $0x128] sm:$0xff] %vm921, %v894
      %960 = vst.msk [vmem:[#allocation2 + $0x130] sm:$0xff] %vm921, %v895
      %961 = vst.msk [vmem:[#allocation2 + $0x138] sm:$0xff] %vm921, %v896
      %962 = vst.msk [vmem:[#allocation2 + $0x140] sm:$0xff] %vm921, %v897
      %963 = vst.msk [vmem:[#allocation2 + $0x148] sm:$0xff] %vm921, %v898
      %964 = vst.msk [vmem:[#allocation2 + $0x150] sm:$0xff] %vm921, %v899
      %965 = vst.msk [vmem:[#allocation2 + $0x158] sm:$0xff] %vm921, %v900
      %966 = vst.msk [vmem:[#allocation2 + $0x160] sm:$0xff] %vm921, %v901
      %967 = vst.msk [vmem:[#allocation2 + $0x168] sm:$0xff] %vm921, %v902
      %968 = vst.msk [vmem:[#allocation2 + $0x170] sm:$0xff] %vm921, %v903
      %969 = vst.msk [vmem:[#allocation2 + $0x178] sm:$0xff] %vm921, %v904
      %970 = vst.msk [vmem:[#allocation2 + $0x180] sm:$0xff] %vm921, %v905
      %971 = vst.msk [vmem:[#allocation2 + $0x188] sm:$0xff] %vm921, %v906
      %972 = vst.msk [vmem:[#allocation2 + $0x190] sm:$0xff] %vm921, %v907
      %973 = vst.msk [vmem:[#allocation2 + $0x198] sm:$0xff] %vm921, %v908
      %974 = vst.msk [vmem:[#allocation2 + $0x1a0] sm:$0xff] %vm921, %v909
      %975 = vst.msk [vmem:[#allocation2 + $0x1a8] sm:$0xff] %vm921, %v910
      %976 = vst.msk [vmem:[#allocation2 + $0x1b0] sm:$0xff] %vm921, %v911
      %977 = vst.msk [vmem:[#allocation2 + $0x1b8] sm:$0xff] %vm921, %v912
      %978 = vst.msk [vmem:[#allocation2 + $0x1c0] sm:$0xff] %vm921, %v913
      %979 = vst.msk [vmem:[#allocation2 + $0x1c8] sm:$0xff] %vm921, %v914
      %980 = vst.msk [vmem:[#allocation2 + $0x1d0] sm:$0xff] %vm921, %v915
      %981 = vst.msk [vmem:[#allocation2 + $0x1d8] sm:$0xff] %vm921, %v916
      %982 = vst.msk [vmem:[#allocation2 + $0x1e0] sm:$0xff] %vm921, %v917
      %983 = vst.msk [vmem:[#allocation2 + $0x1e8] sm:$0xff] %vm921, %v918
      %984 = vst.msk [vmem:[#allocation2 + $0x1f0] sm:$0xff] %vm921, %v919
      %985 = vst.msk [vmem:[#allocation2 + $0x1f8] sm:$0xff] %vm921, %v920
      // Predicated region
      $region37: #{crnn_forward.8} parent=31 // pred_check
        %p986 = pneg %p220
      $region38: #{crnn_forward.8} parent=31 // pred_check_branch
        %988 = sbr.rel (%p986) target = $region40
      $region39: #{crnn_forward.8} parent=31 // pred_region
        %v989 = vld [vmem:[#allocation2] sm:$0xff]
        %v990 = vld [vmem:[#allocation2 + $0x8] sm:$0xff]
        %v991 = vld [vmem:[#allocation2 + $0x10] sm:$0xff]
        %v992 = vld [vmem:[#allocation2 + $0x18] sm:$0xff]
        %v993 = vld [vmem:[#allocation2 + $0x20] sm:$0xff]
        %v994 = vld [vmem:[#allocation2 + $0x28] sm:$0xff]
        %v995 = vld [vmem:[#allocation2 + $0x30] sm:$0xff]
        %v996 = vld [vmem:[#allocation2 + $0x38] sm:$0xff]
        %v997 = vld [vmem:[#allocation2 + $0x40] sm:$0xff]
        %v998 = vld [vmem:[#allocation2 + $0x48] sm:$0xff]
        %v999 = vld [vmem:[#allocation2 + $0x50] sm:$0xff]
        %v1000 = vld [vmem:[#allocation2 + $0x58] sm:$0xff]
        %v1001 = vld [vmem:[#allocation2 + $0x60] sm:$0xff]
        %v1002 = vld [vmem:[#allocation2 + $0x68] sm:$0xff]
        %v1003 = vld [vmem:[#allocation2 + $0x70] sm:$0xff]
        %v1004 = vld [vmem:[#allocation2 + $0x78] sm:$0xff]
        %v1005 = vld [vmem:[#allocation2 + $0x80] sm:$0xff]
        %v1006 = vld [vmem:[#allocation2 + $0x88] sm:$0xff]
        %v1007 = vld [vmem:[#allocation2 + $0x90] sm:$0xff]
        %v1008 = vld [vmem:[#allocation2 + $0x98] sm:$0xff]
        %v1009 = vld [vmem:[#allocation2 + $0xa0] sm:$0xff]
        %v1010 = vld [vmem:[#allocation2 + $0xa8] sm:$0xff]
        %v1011 = vld [vmem:[#allocation2 + $0xb0] sm:$0xff]
        %v1012 = vld [vmem:[#allocation2 + $0xb8] sm:$0xff]
        %v1013 = vld [vmem:[#allocation2 + $0xc0] sm:$0xff]
        %v1014 = vld [vmem:[#allocation2 + $0xc8] sm:$0xff]
        %v1015 = vld [vmem:[#allocation2 + $0xd0] sm:$0xff]
        %v1016 = vld [vmem:[#allocation2 + $0xd8] sm:$0xff]
        %v1017 = vld [vmem:[#allocation2 + $0xe0] sm:$0xff]
        %v1018 = vld [vmem:[#allocation2 + $0xe8] sm:$0xff]
        %v1019 = vld [vmem:[#allocation2 + $0xf0] sm:$0xff]
        %v1020 = vld [vmem:[#allocation2 + $0xf8] sm:$0xff]
        %v1021 = vld [vmem:[#allocation2 + $0x100] sm:$0xff]
        %v1022 = vld [vmem:[#allocation2 + $0x108] sm:$0xff]
        %v1023 = vld [vmem:[#allocation2 + $0x110] sm:$0xff]
        %v1024 = vld [vmem:[#allocation2 + $0x118] sm:$0xff]
        %v1025 = vld [vmem:[#allocation2 + $0x120] sm:$0xff]
        %v1026 = vld [vmem:[#allocation2 + $0x128] sm:$0xff]
        %v1027 = vld [vmem:[#allocation2 + $0x130] sm:$0xff]
        %v1028 = vld [vmem:[#allocation2 + $0x138] sm:$0xff]
        %v1029 = vld [vmem:[#allocation2 + $0x140] sm:$0xff]
        %v1030 = vld [vmem:[#allocation2 + $0x148] sm:$0xff]
        %v1031 = vld [vmem:[#allocation2 + $0x150] sm:$0xff]
        %v1032 = vld [vmem:[#allocation2 + $0x158] sm:$0xff]
        %v1033 = vld [vmem:[#allocation2 + $0x160] sm:$0xff]
        %v1034 = vld [vmem:[#allocation2 + $0x168] sm:$0xff]
        %v1035 = vld [vmem:[#allocation2 + $0x170] sm:$0xff]
        %v1036 = vld [vmem:[#allocation2 + $0x178] sm:$0xff]
        %v1037 = vld [vmem:[#allocation2 + $0x180] sm:$0xff]
        %v1038 = vld [vmem:[#allocation2 + $0x188] sm:$0xff]
        %v1039 = vld [vmem:[#allocation2 + $0x190] sm:$0xff]
        %v1040 = vld [vmem:[#allocation2 + $0x198] sm:$0xff]
        %v1041 = vld [vmem:[#allocation2 + $0x1a0] sm:$0xff]
        %v1042 = vld [vmem:[#allocation2 + $0x1a8] sm:$0xff]
        %v1043 = vld [vmem:[#allocation2 + $0x1b0] sm:$0xff]
        %v1044 = vld [vmem:[#allocation2 + $0x1b8] sm:$0xff]
        %v1045 = vld [vmem:[#allocation2 + $0x1c0] sm:$0xff]
        %v1046 = vld [vmem:[#allocation2 + $0x1c8] sm:$0xff]
        %v1047 = vld [vmem:[#allocation2 + $0x1d0] sm:$0xff]
        %v1048 = vld [vmem:[#allocation2 + $0x1d8] sm:$0xff]
        %v1049 = vld [vmem:[#allocation2 + $0x1e0] sm:$0xff]
        %v1050 = vld [vmem:[#allocation2 + $0x1e8] sm:$0xff]
        %v1051 = vld [vmem:[#allocation2 + $0x1f0] sm:$0xff]
        %v1052 = vld [vmem:[#allocation2 + $0x1f8] sm:$0xff]
        %v1053 = vld [vmem:[%s2] sm:$0x1]
        %v1055 = vperm.slane %v1053, 0
        %v1057 = vadd.f32 %v989, %v1055
        %v1058 = vadd.f32 %v990, %v1055
        %v1059 = vadd.f32 %v991, %v1055
        %v1060 = vadd.f32 %v992, %v1055
        %v1061 = vadd.f32 %v993, %v1055
        %v1062 = vadd.f32 %v994, %v1055
        %v1063 = vadd.f32 %v995, %v1055
        %v1064 = vadd.f32 %v996, %v1055
        %v1065 = vadd.f32 %v997, %v1055
        %v1066 = vadd.f32 %v998, %v1055
        %v1067 = vadd.f32 %v999, %v1055
        %v1068 = vadd.f32 %v1000, %v1055
        %v1069 = vadd.f32 %v1001, %v1055
        %v1070 = vadd.f32 %v1002, %v1055
        %v1071 = vadd.f32 %v1003, %v1055
        %v1072 = vadd.f32 %v1004, %v1055
        %v1073 = vadd.f32 %v1005, %v1055
        %v1074 = vadd.f32 %v1006, %v1055
        %v1075 = vadd.f32 %v1007, %v1055
        %v1076 = vadd.f32 %v1008, %v1055
        %v1077 = vadd.f32 %v1009, %v1055
        %v1078 = vadd.f32 %v1010, %v1055
        %v1079 = vadd.f32 %v1011, %v1055
        %v1080 = vadd.f32 %v1012, %v1055
        %v1081 = vadd.f32 %v1013, %v1055
        %v1082 = vadd.f32 %v1014, %v1055
        %v1083 = vadd.f32 %v1015, %v1055
        %v1084 = vadd.f32 %v1016, %v1055
        %v1085 = vadd.f32 %v1017, %v1055
        %v1086 = vadd.f32 %v1018, %v1055
        %v1087 = vadd.f32 %v1019, %v1055
        %v1088 = vadd.f32 %v1020, %v1055
        %v1089 = vadd.f32 %v1021, %v1055
        %v1090 = vadd.f32 %v1022, %v1055
        %v1091 = vadd.f32 %v1023, %v1055
        %v1092 = vadd.f32 %v1024, %v1055
        %v1093 = vadd.f32 %v1025, %v1055
        %v1094 = vadd.f32 %v1026, %v1055
        %v1095 = vadd.f32 %v1027, %v1055
        %v1096 = vadd.f32 %v1028, %v1055
        %v1097 = vadd.f32 %v1029, %v1055
        %v1098 = vadd.f32 %v1030, %v1055
        %v1099 = vadd.f32 %v1031, %v1055
        %v1100 = vadd.f32 %v1032, %v1055
        %v1101 = vadd.f32 %v1033, %v1055
        %v1102 = vadd.f32 %v1034, %v1055
        %v1103 = vadd.f32 %v1035, %v1055
        %v1104 = vadd.f32 %v1036, %v1055
        %v1105 = vadd.f32 %v1037, %v1055
        %v1106 = vadd.f32 %v1038, %v1055
        %v1107 = vadd.f32 %v1039, %v1055
        %v1108 = vadd.f32 %v1040, %v1055
        %v1109 = vadd.f32 %v1041, %v1055
        %v1110 = vadd.f32 %v1042, %v1055
        %v1111 = vadd.f32 %v1043, %v1055
        %v1112 = vadd.f32 %v1044, %v1055
        %v1113 = vadd.f32 %v1045, %v1055
        %v1114 = vadd.f32 %v1046, %v1055
        %v1115 = vadd.f32 %v1047, %v1055
        %v1116 = vadd.f32 %v1048, %v1055
        %v1117 = vadd.f32 %v1049, %v1055
        %v1118 = vadd.f32 %v1050, %v1055
        %v1119 = vadd.f32 %v1051, %v1055
        %v1120 = vadd.f32 %v1052, %v1055
        %v1121 = vmax.f32 %v1057, 0.0
        %v1122 = vmax.f32 %v1058, 0.0
        %v1123 = vmax.f32 %v1059, 0.0
        %v1124 = vmax.f32 %v1060, 0.0
        %v1125 = vmax.f32 %v1061, 0.0
        %v1126 = vmax.f32 %v1062, 0.0
        %v1127 = vmax.f32 %v1063, 0.0
        %v1128 = vmax.f32 %v1064, 0.0
        %v1129 = vmax.f32 %v1065, 0.0
        %v1130 = vmax.f32 %v1066, 0.0
        %v1131 = vmax.f32 %v1067, 0.0
        %v1132 = vmax.f32 %v1068, 0.0
        %v1133 = vmax.f32 %v1069, 0.0
        %v1134 = vmax.f32 %v1070, 0.0
        %v1135 = vmax.f32 %v1071, 0.0
        %v1136 = vmax.f32 %v1072, 0.0
        %v1137 = vmax.f32 %v1073, 0.0
        %v1138 = vmax.f32 %v1074, 0.0
        %v1139 = vmax.f32 %v1075, 0.0
        %v1140 = vmax.f32 %v1076, 0.0
        %v1141 = vmax.f32 %v1077, 0.0
        %v1142 = vmax.f32 %v1078, 0.0
        %v1143 = vmax.f32 %v1079, 0.0
        %v1144 = vmax.f32 %v1080, 0.0
        %v1145 = vmax.f32 %v1081, 0.0
        %v1146 = vmax.f32 %v1082, 0.0
        %v1147 = vmax.f32 %v1083, 0.0
        %v1148 = vmax.f32 %v1084, 0.0
        %v1149 = vmax.f32 %v1085, 0.0
        %v1150 = vmax.f32 %v1086, 0.0
        %v1151 = vmax.f32 %v1087, 0.0
        %v1152 = vmax.f32 %v1088, 0.0
        %v1153 = vmax.f32 %v1089, 0.0
        %v1154 = vmax.f32 %v1090, 0.0
        %v1155 = vmax.f32 %v1091, 0.0
        %v1156 = vmax.f32 %v1092, 0.0
        %v1157 = vmax.f32 %v1093, 0.0
        %v1158 = vmax.f32 %v1094, 0.0
        %v1159 = vmax.f32 %v1095, 0.0
        %v1160 = vmax.f32 %v1096, 0.0
        %v1161 = vmax.f32 %v1097, 0.0
        %v1162 = vmax.f32 %v1098, 0.0
        %v1163 = vmax.f32 %v1099, 0.0
        %v1164 = vmax.f32 %v1100, 0.0
        %v1165 = vmax.f32 %v1101, 0.0
        %v1166 = vmax.f32 %v1102, 0.0
        %v1167 = vmax.f32 %v1103, 0.0
        %v1168 = vmax.f32 %v1104, 0.0
        %v1169 = vmax.f32 %v1105, 0.0
        %v1170 = vmax.f32 %v1106, 0.0
        %v1171 = vmax.f32 %v1107, 0.0
        %v1172 = vmax.f32 %v1108, 0.0
        %v1173 = vmax.f32 %v1109, 0.0
        %v1174 = vmax.f32 %v1110, 0.0
        %v1175 = vmax.f32 %v1111, 0.0
        %v1176 = vmax.f32 %v1112, 0.0
        %v1177 = vmax.f32 %v1113, 0.0
        %v1178 = vmax.f32 %v1114, 0.0
        %v1179 = vmax.f32 %v1115, 0.0
        %v1180 = vmax.f32 %v1116, 0.0
        %v1181 = vmax.f32 %v1117, 0.0
        %v1182 = vmax.f32 %v1118, 0.0
        %v1183 = vmax.f32 %v1119, 0.0
        %v1184 = vmax.f32 %v1120, 0.0
        %1185 = vst.msk [vmem:[%s217] sm:$0xff] %vm921, %v1121
        %1186 = vst.msk [vmem:[%s217 + $0x8] sm:$0xff] %vm921, %v1122
        %1187 = vst.msk [vmem:[%s217 + $0x10] sm:$0xff] %vm921, %v1123
        %1188 = vst.msk [vmem:[%s217 + $0x18] sm:$0xff] %vm921, %v1124
        %1189 = vst.msk [vmem:[%s217 + $0x20] sm:$0xff] %vm921, %v1125
        %1190 = vst.msk [vmem:[%s217 + $0x28] sm:$0xff] %vm921, %v1126
        %1191 = vst.msk [vmem:[%s217 + $0x30] sm:$0xff] %vm921, %v1127
        %1192 = vst.msk [vmem:[%s217 + $0x38] sm:$0xff] %vm921, %v1128
        %1193 = vst.msk [vmem:[%s217 + $0x40] sm:$0xff] %vm921, %v1129
        %1194 = vst.msk [vmem:[%s217 + $0x48] sm:$0xff] %vm921, %v1130
        %1195 = vst.msk [vmem:[%s217 + $0x50] sm:$0xff] %vm921, %v1131
        %1196 = vst.msk [vmem:[%s217 + $0x58] sm:$0xff] %vm921, %v1132
        %1197 = vst.msk [vmem:[%s217 + $0x60] sm:$0xff] %vm921, %v1133
        %1198 = vst.msk [vmem:[%s217 + $0x68] sm:$0xff] %vm921, %v1134
        %1199 = vst.msk [vmem:[%s217 + $0x70] sm:$0xff] %vm921, %v1135
        %1200 = vst.msk [vmem:[%s217 + $0x78] sm:$0xff] %vm921, %v1136
        %1201 = vst.msk [vmem:[%s217 + $0x80] sm:$0xff] %vm921, %v1137
        %1202 = vst.msk [vmem:[%s217 + $0x88] sm:$0xff] %vm921, %v1138
        %1203 = vst.msk [vmem:[%s217 + $0x90] sm:$0xff] %vm921, %v1139
        %1204 = vst.msk [vmem:[%s217 + $0x98] sm:$0xff] %vm921, %v1140
        %1205 = vst.msk [vmem:[%s217 + $0xa0] sm:$0xff] %vm921, %v1141
        %1206 = vst.msk [vmem:[%s217 + $0xa8] sm:$0xff] %vm921, %v1142
        %1207 = vst.msk [vmem:[%s217 + $0xb0] sm:$0xff] %vm921, %v1143
        %1208 = vst.msk [vmem:[%s217 + $0xb8] sm:$0xff] %vm921, %v1144
        %1209 = vst.msk [vmem:[%s217 + $0xc0] sm:$0xff] %vm921, %v1145
        %1210 = vst.msk [vmem:[%s217 + $0xc8] sm:$0xff] %vm921, %v1146
        %1211 = vst.msk [vmem:[%s217 + $0xd0] sm:$0xff] %vm921, %v1147
        %1212 = vst.msk [vmem:[%s217 + $0xd8] sm:$0xff] %vm921, %v1148
        %1213 = vst.msk [vmem:[%s217 + $0xe0] sm:$0xff] %vm921, %v1149
        %1214 = vst.msk [vmem:[%s217 + $0xe8] sm:$0xff] %vm921, %v1150
        %1215 = vst.msk [vmem:[%s217 + $0xf0] sm:$0xff] %vm921, %v1151
        %1216 = vst.msk [vmem:[%s217 + $0xf8] sm:$0xff] %vm921, %v1152
        %1217 = vst.msk [vmem:[%s217 + $0x100] sm:$0xff] %vm921, %v1153
        %1218 = vst.msk [vmem:[%s217 + $0x108] sm:$0xff] %vm921, %v1154
        %1219 = vst.msk [vmem:[%s217 + $0x110] sm:$0xff] %vm921, %v1155
        %1220 = vst.msk [vmem:[%s217 + $0x118] sm:$0xff] %vm921, %v1156
        %1221 = vst.msk [vmem:[%s217 + $0x120] sm:$0xff] %vm921, %v1157
        %1222 = vst.msk [vmem:[%s217 + $0x128] sm:$0xff] %vm921, %v1158
        %1223 = vst.msk [vmem:[%s217 + $0x130] sm:$0xff] %vm921, %v1159
        %1224 = vst.msk [vmem:[%s217 + $0x138] sm:$0xff] %vm921, %v1160
        %1225 = vst.msk [vmem:[%s217 + $0x140] sm:$0xff] %vm921, %v1161
        %1226 = vst.msk [vmem:[%s217 + $0x148] sm:$0xff] %vm921, %v1162
        %1227 = vst.msk [vmem:[%s217 + $0x150] sm:$0xff] %vm921, %v1163
        %1228 = vst.msk [vmem:[%s217 + $0x158] sm:$0xff] %vm921, %v1164
        %1229 = vst.msk [vmem:[%s217 + $0x160] sm:$0xff] %vm921, %v1165
        %1230 = vst.msk [vmem:[%s217 + $0x168] sm:$0xff] %vm921, %v1166
        %1231 = vst.msk [vmem:[%s217 + $0x170] sm:$0xff] %vm921, %v1167
        %1232 = vst.msk [vmem:[%s217 + $0x178] sm:$0xff] %vm921, %v1168
        %1233 = vst.msk [vmem:[%s217 + $0x180] sm:$0xff] %vm921, %v1169
        %1234 = vst.msk [vmem:[%s217 + $0x188] sm:$0xff] %vm921, %v1170
        %1235 = vst.msk [vmem:[%s217 + $0x190] sm:$0xff] %vm921, %v1171
        %1236 = vst.msk [vmem:[%s217 + $0x198] sm:$0xff] %vm921, %v1172
        %1237 = vst.msk [vmem:[%s217 + $0x1a0] sm:$0xff] %vm921, %v1173
        %1238 = vst.msk [vmem:[%s217 + $0x1a8] sm:$0xff] %vm921, %v1174
        %1239 = vst.msk [vmem:[%s217 + $0x1b0] sm:$0xff] %vm921, %v1175
        %1240 = vst.msk [vmem:[%s217 + $0x1b8] sm:$0xff] %vm921, %v1176
        %1241 = vst.msk [vmem:[%s217 + $0x1c0] sm:$0xff] %vm921, %v1177
        %1242 = vst.msk [vmem:[%s217 + $0x1c8] sm:$0xff] %vm921, %v1178
        %1243 = vst.msk [vmem:[%s217 + $0x1d0] sm:$0xff] %vm921, %v1179
        %1244 = vst.msk [vmem:[%s217 + $0x1d8] sm:$0xff] %vm921, %v1180
        %1245 = vst.msk [vmem:[%s217 + $0x1e0] sm:$0xff] %vm921, %v1181
        %1246 = vst.msk [vmem:[%s217 + $0x1e8] sm:$0xff] %vm921, %v1182
        %1247 = vst.msk [vmem:[%s217 + $0x1f0] sm:$0xff] %vm921, %v1183
        %1248 = vst.msk [vmem:[%s217 + $0x1f8] sm:$0xff] %vm921, %v1184
      $region40: #{crnn_forward.8} parent=31 // pred_fallthru
        _
      %s1249 = smul.u32 64, %s18
      %p1250 = scmp.lt.s32.totalorder %s1249, 2047
      %s1251 = scalar_select %p1250, %s1249, 2047
      %s1252 = smul.addr %s1251, 8
      %s1253 = scalar_lea.vmem %s3, %s1252
      // Predicated region
      $region41: #{crnn_forward.8} parent=31 // pred_check
        %p1254 = pneg %p119
      $region42: #{crnn_forward.8} parent=31 // pred_check_branch
        %1256 = sbr.rel (%p1254) target = $region44
      $region43: #{crnn_forward.8} parent=31 // pred_region
        %s1257 = smul.u32 64, %s18
      $region44: #{crnn_forward.8} parent=31 // pred_fallthru
        _
    $region32: #{crnn_forward.8} parent=5 // pred_fallthru
      _
    %p1258 = scmp.le.s32.totalorder 2, %s9
    // Predicated region
    $region45: #{crnn_forward.8} parent=5 // pred_check
      %p1259 = pneg %p1258
    $region46: #{crnn_forward.8} parent=5 // pred_check_branch
      %1261 = sbr.rel (%p1259) target = $region48
    $region47: #{crnn_forward.8} parent=5 // pred_region
      %s1262 = ssub.s32 %s9, 2
      // Predicated region
      $region49: #{crnn_forward.8} parent=47 // pred_check
        %p1263 = pneg %p125
      $region50: #{crnn_forward.8} parent=47 // pred_check_branch
        %1265 = sbr.rel (%p1263) target = $region52
      $region51: #{crnn_forward.8} parent=47 // pred_region
        %s1266 = smul.u32 64, %s20
        %p1267 = scmp.lt.s32.totalorder %s1266, 2047
        %s1268 = scalar_select %p1267, %s1266, 2047
        %s1269 = smul.addr %s1268, 8
        %s1270 = scalar_lea.vmem %s3, %s1269
      $region52: #{crnn_forward.8} parent=47 // pred_fallthru
        _
    $region48: #{crnn_forward.8} parent=5 // pred_fallthru
      _
  $region6: #{crnn_forward.8} parent=0 // loop_footer
    %s13 = sadd.s32 1, %s9
  $region7: #{crnn_forward.8} parent=0 // loop_footer_branch
    %8 = sbr.rel target = $region3
  $region8: #{crnn_forward.8} parent=0 // loop_exit
    _

// kernel: crnn_forward.9
$region0: #{crnn_forward.9}
  #allocation0 [shape = 'u32[]', space=smem, size = 0x4, offset = 0x4, fixed_abs, tag = 'smem constant byte address 0x4 - core index']
  #allocation1 [shape = 'u32[72,128]{1,0:T(1,128)}', space=vmem, size = 0x9000, scoped, tag = 'internal scratch']
  %s0 = inlined_call_operand.vmem [shape: f32[32,2,256,32], index: 0, kind: input, shape index: {}]
  %s1 = inlined_call_operand.vmem [shape: f32[32,128,32], index: 1, kind: output, shape index: {}]
  %s2 = sld [smem:[#allocation0]]
  $region37: #{crnn_forward.9} parent=0
    _
  %s4 = ssub.s32 1, %s2
  %s5 = scalar_select 0, %s4, %s2
  loop: start=0, step=1, limit=10
  $region2: #{crnn_forward.9} parent=0 // loop_pre_header
    _
  $region3: #{crnn_forward.9} parent=0 // loop_header
    %s7 = sphi 0, %s11
    %p8 = scmp.ge.s32.totalorder %s7, 10
    %s17 = sphi 0, %s19
    %s20 = sphi 0, %s17
    %s21 = sphi 0, %s20
    %s37 = sphi 0, %s21
    %s43 = sphi 0, %s45
    %s46 = sphi 0, %s43
    %s47 = sphi 0, %s46
    %s63 = sphi 0, %s47
  $region4: #{crnn_forward.9} parent=0 // loop_header_branch
    %10 = sbr.rel (%p8) target = $region8
  $region5: #{crnn_forward.9} parent=0 // loop_body
    %s12 = ssub.s32 %s7, 1
    %s13 = ssub.s32 %s7, 2
    %s14 = sadd.s32 %s7, 1
    %s15 = ssub.s32 %s7, %s14
    %p16 = scmp.eq.s32.totalorder %s15, 0
    %s18 = sadd.s32 %s17, 1
    %s19 = scalar_select %p16, %s17, %s18
    %p22 = pneg %p16
    %p23 = scmp.eq.s32.totalorder %s7, 7
    %p24 = por %p22, %p23
    %p25 = scmp.ne.s32.totalorder %s17, %s20
    %p26 = scmp.eq.s32.totalorder %s7, 0
    %p27 = por %p25, %p26
    %p28 = scmp.ne.s32.totalorder %s17, %s20
    %p29 = scmp.eq.s32.totalorder %s12, 7
    %p30 = por %p28, %p29
    %p31 = scmp.ne.s32.totalorder %s20, %s21
    %p32 = scmp.eq.s32.totalorder %s12, 0
    %p33 = por %p31, %p32
    %p34 = scmp.ne.s32.totalorder %s20, %s21
    %p35 = scmp.eq.s32.totalorder %s13, 7
    %p36 = por %p34, %p35
    %p38 = scmp.ne.s32.totalorder %s21, %s37
    %p39 = scmp.eq.s32.totalorder %s13, 0
    %p40 = por %p38, %p39
    %s41 = ssub.s32 %s7, %s14
    %p42 = scmp.eq.s32.totalorder %s41, 0
    %s44 = sadd.s32 %s43, 1
    %s45 = scalar_select %p42, %s43, %s44
    %p48 = pneg %p42
    %p49 = scmp.eq.s32.totalorder %s7, 7
    %p50 = por %p48, %p49
    %p51 = scmp.ne.s32.totalorder %s43, %s46
    %p52 = scmp.eq.s32.totalorder %s7, 0
    %p53 = por %p51, %p52
    %p54 = scmp.ne.s32.totalorder %s43, %s46
    %p55 = scmp.eq.s32.totalorder %s12, 7
    %p56 = por %p54, %p55
    %p57 = scmp.ne.s32.totalorder %s46, %s47
    %p58 = scmp.eq.s32.totalorder %s12, 0
    %p59 = por %p57, %p58
    %p60 = scmp.ne.s32.totalorder %s46, %s47
    %p61 = scmp.eq.s32.totalorder %s13, 7
    %p62 = por %p60, %p61
    %p64 = scmp.ne.s32.totalorder %s47, %s63
    %p65 = scmp.eq.s32.totalorder %s13, 0
    %p66 = por %p64, %p65
    %p67 = scmp.le.s32.totalorder 1, %s7
    %p68 = scmp.lt.s32.totalorder %s7, 9
    %p69 = pnand %p67, %p68
    %p70 = pneg %p69
    // Predicated region
    $region9: #{crnn_forward.9} parent=5 // pred_check
      _
    $region10: #{crnn_forward.9} parent=5 // pred_check_branch
      %72 = sbr.rel (%p69) target = $region12
    $region11: #{crnn_forward.9} parent=5 // pred_region
      %s73 = ssub.s32 %s7, 1
    $region12: #{crnn_forward.9} parent=5 // pred_fallthru
      _
    %p74 = scmp.lt.s32.totalorder %s7, 8
    // Predicated region
    $region13: #{crnn_forward.9} parent=5 // pred_check
      %p75 = pneg %p74
    $region14: #{crnn_forward.9} parent=5 // pred_check_branch
      %77 = sbr.rel (%p75) target = $region16
    $region15: #{crnn_forward.9} parent=5 // pred_region
      // Predicated region
      $region17: #{crnn_forward.9} parent=15 // pred_check
        %p78 = pneg %p27
      $region18: #{crnn_forward.9} parent=15 // pred_check_branch
        %80 = sbr.rel (%p78) target = $region20
      $region19: #{crnn_forward.9} parent=15 // pred_region
        %s81 = smul.u32 4, %s7
        %p82 = scmp.lt.s32.totalorder %s81, 31
        %s83 = scalar_select %p82, %s81, 31
        %s84 = smul.addr %s83, 64
        %s85 = smul.addr %s84, 8
        %s86 = scalar_lea.vmem %s0, %s85
        %s87 = smul.u32 4, %s7
      $region20: #{crnn_forward.9} parent=15 // pred_fallthru
        _
    $region16: #{crnn_forward.9} parent=5 // pred_fallthru
      _
    %p88 = scmp.le.s32.totalorder 1, %s7
    %p89 = scmp.lt.s32.totalorder %s7, 9
    %p90 = pnand %p88, %p89
    %p91 = pneg %p90
    // Predicated region
    $region21: #{crnn_forward.9} parent=5 // pred_check
      _
    $region22: #{crnn_forward.9} parent=5 // pred_check_branch
      %93 = sbr.rel (%p90) target = $region24
    $region23: #{crnn_forward.9} parent=5 // pred_region
      %s94 = ssub.s32 %s7, 1
      %s95 = smul.u32 4, %s12
      %p96 = scmp.lt.s32.totalorder %s95, 31
      %s97 = scalar_select %p96, %s95, 31
      %s98 = smul.addr %s97, 64
      %s99 = smul.addr %s98, 8
      %s100 = scalar_lea.vmem %s0, %s99
      %p101 = pneg %p33
      %p102 = pneg %p30
      %p103 = pneg %p59
      %p104 = pneg %p56
      %s105 = smul.u32 4, %s12
      %p106 = scmp.lt.s32.totalorder %s105, 31
      %s107 = scalar_select %p106, %s105, 31
      %s108 = smul.addr %s107, 16
      %s109 = smul.addr %s108, 8
      %s110 = scalar_lea.vmem %s1, %s109
      %s111 = smul.u32 4, %s12
      %p112 = scmp.lt.s32.totalorder %s111, 31
      %s113 = scalar_select %p112, %s111, 31
      %s114 = smul.addr %s113, 64
      %s115 = smul.addr %s114, 8
      %s116 = scalar_lea.vmem %s0, %s115
      %s117 = smul.u32 4, %s12
      %s118 = smul.u32 4, %s12
      %p119 = scmp.lt.s32.totalorder %s118, 31
      %s120 = scalar_select %p119, %s118, 31
      %s121 = smul.addr %s120, 16
      %s122 = smul.addr %s121, 8
      %s123 = scalar_lea.vmem %s1, %s122
      %s124 = smul.u32 4, %s12
      %v125 = vld [vmem:[%s116] ss:$2 sm:$0xff]
      %s126 = scalar_lea.vmem %s116, 16
      %v127 = vld [vmem:[%s126] ss:$2 sm:$0xff]
      %s128 = scalar_lea.vmem %s116, 32
      %v129 = vld [vmem:[%s128] ss:$2 sm:$0xff]
      %s130 = scalar_lea.vmem %s116, 48
      %v131 = vld [vmem:[%s130] ss:$2 sm:$0xff]
      %s132 = scalar_lea.vmem %s116, 64
      %v133 = vld [vmem:[%s132] ss:$2 sm:$0xff]
      %s134 = scalar_lea.vmem %s116, 80
      %v135 = vld [vmem:[%s134] ss:$2 sm:$0xff]
      %s136 = scalar_lea.vmem %s116, 96
      %v137 = vld [vmem:[%s136] ss:$2 sm:$0xff]
      %s138 = scalar_lea.vmem %s116, 112
      %v139 = vld [vmem:[%s138] ss:$2 sm:$0xff]
      %s140 = scalar_lea.vmem %s116, 128
      %v141 = vld [vmem:[%s140] ss:$2 sm:$0xff]
      %s142 = scalar_lea.vmem %s116, 144
      %v143 = vld [vmem:[%s142] ss:$2 sm:$0xff]
      %s144 = scalar_lea.vmem %s116, 160
      %v145 = vld [vmem:[%s144] ss:$2 sm:$0xff]
      %s146 = scalar_lea.vmem %s116, 176
      %v147 = vld [vmem:[%s146] ss:$2 sm:$0xff]
      %s148 = scalar_lea.vmem %s116, 192
      %v149 = vld [vmem:[%s148] ss:$2 sm:$0xff]
      %s150 = scalar_lea.vmem %s116, 208
      %v151 = vld [vmem:[%s150] ss:$2 sm:$0xff]
      %s152 = scalar_lea.vmem %s116, 224
      %v153 = vld [vmem:[%s152] ss:$2 sm:$0xff]
      %s154 = scalar_lea.vmem %s116, 240
      %v155 = vld [vmem:[%s154] ss:$2 sm:$0xff]
      %s156 = scalar_lea.vmem %s116, 256
      %v157 = vld [vmem:[%s156] ss:$2 sm:$0xff]
      %s158 = scalar_lea.vmem %s116, 272
      %v159 = vld [vmem:[%s158] ss:$2 sm:$0xff]
      %s160 = scalar_lea.vmem %s116, 288
      %v161 = vld [vmem:[%s160] ss:$2 sm:$0xff]
      %s162 = scalar_lea.vmem %s116, 304
      %v163 = vld [vmem:[%s162] ss:$2 sm:$0xff]
      %s164 = scalar_lea.vmem %s116, 320
      %v165 = vld [vmem:[%s164] ss:$2 sm:$0xff]
      %s166 = scalar_lea.vmem %s116, 336
      %v167 = vld [vmem:[%s166] ss:$2 sm:$0xff]
      %s168 = scalar_lea.vmem %s116, 352
      %v169 = vld [vmem:[%s168] ss:$2 sm:$0xff]
      %s170 = scalar_lea.vmem %s116, 368
      %v171 = vld [vmem:[%s170] ss:$2 sm:$0xff]
      %s172 = scalar_lea.vmem %s116, 384
      %v173 = vld [vmem:[%s172] ss:$2 sm:$0xff]
      %s174 = scalar_lea.vmem %s116, 400
      %v175 = vld [vmem:[%s174] ss:$2 sm:$0xff]
      %s176 = scalar_lea.vmem %s116, 416
      %v177 = vld [vmem:[%s176] ss:$2 sm:$0xff]
      %s178 = scalar_lea.vmem %s116, 432
      %v179 = vld [vmem:[%s178] ss:$2 sm:$0xff]
      %s180 = scalar_lea.vmem %s116, 448
      %v181 = vld [vmem:[%s180] ss:$2 sm:$0xff]
      %s182 = scalar_lea.vmem %s116, 464
      %v183 = vld [vmem:[%s182] ss:$2 sm:$0xff]
      %s184 = scalar_lea.vmem %s116, 480
      %v185 = vld [vmem:[%s184] ss:$2 sm:$0xff]
      %s186 = scalar_lea.vmem %s116, 496
      %v187 = vld [vmem:[%s186] ss:$2 sm:$0xff]
      %s188 = scalar_lea.vmem %s116, 512
      %v189 = vld [vmem:[%s188] ss:$2 sm:$0xff]
      %s190 = scalar_lea.vmem %s116, 528
      %v191 = vld [vmem:[%s190] ss:$2 sm:$0xff]
      %s192 = scalar_lea.vmem %s116, 544
      %v193 = vld [vmem:[%s192] ss:$2 sm:$0xff]
      %s194 = scalar_lea.vmem %s116, 560
      %v195 = vld [vmem:[%s194] ss:$2 sm:$0xff]
      %s196 = scalar_lea.vmem %s116, 576
      %v197 = vld [vmem:[%s196] ss:$2 sm:$0xff]
      %s198 = scalar_lea.vmem %s116, 592
      %v199 = vld [vmem:[%s198] ss:$2 sm:$0xff]
      %s200 = scalar_lea.vmem %s116, 608
      %v201 = vld [vmem:[%s200] ss:$2 sm:$0xff]
      %s202 = scalar_lea.vmem %s116, 624
      %v203 = vld [vmem:[%s202] ss:$2 sm:$0xff]
      %s204 = scalar_lea.vmem %s116, 640
      %v205 = vld [vmem:[%s204] ss:$2 sm:$0xff]
      %s206 = scalar_lea.vmem %s116, 656
      %v207 = vld [vmem:[%s206] ss:$2 sm:$0xff]
      %s208 = scalar_lea.vmem %s116, 672
      %v209 = vld [vmem:[%s208] ss:$2 sm:$0xff]
      %s210 = scalar_lea.vmem %s116, 688
      %v211 = vld [vmem:[%s210] ss:$2 sm:$0xff]
      %s212 = scalar_lea.vmem %s116, 704
      %v213 = vld [vmem:[%s212] ss:$2 sm:$0xff]
      %s214 = scalar_lea.vmem %s116, 720
      %v215 = vld [vmem:[%s214] ss:$2 sm:$0xff]
      %s216 = scalar_lea.vmem %s116, 736
      %v217 = vld [vmem:[%s216] ss:$2 sm:$0xff]
      %s218 = scalar_lea.vmem %s116, 752
      %v219 = vld [vmem:[%s218] ss:$2 sm:$0xff]
      %s220 = scalar_lea.vmem %s116, 768
      %v221 = vld [vmem:[%s220] ss:$2 sm:$0xff]
      %s222 = scalar_lea.vmem %s116, 784
      %v223 = vld [vmem:[%s222] ss:$2 sm:$0xff]
      %s224 = scalar_lea.vmem %s116, 800
      %v225 = vld [vmem:[%s224] ss:$2 sm:$0xff]
      %s226 = scalar_lea.vmem %s116, 816
      %v227 = vld [vmem:[%s226] ss:$2 sm:$0xff]
      %s228 = scalar_lea.vmem %s116, 832
      %v229 = vld [vmem:[%s228] ss:$2 sm:$0xff]
      %s230 = scalar_lea.vmem %s116, 848
      %v231 = vld [vmem:[%s230] ss:$2 sm:$0xff]
      %s232 = scalar_lea.vmem %s116, 864
      %v233 = vld [vmem:[%s232] ss:$2 sm:$0xff]
      %s234 = scalar_lea.vmem %s116, 880
      %v235 = vld [vmem:[%s234] ss:$2 sm:$0xff]
      %s236 = scalar_lea.vmem %s116, 896
      %v237 = vld [vmem:[%s236] ss:$2 sm:$0xff]
      %s238 = scalar_lea.vmem %s116, 912
      %v239 = vld [vmem:[%s238] ss:$2 sm:$0xff]
      %s240 = scalar_lea.vmem %s116, 928
      %v241 = vld [vmem:[%s240] ss:$2 sm:$0xff]
      %s242 = scalar_lea.vmem %s116, 944
      %v243 = vld [vmem:[%s242] ss:$2 sm:$0xff]
      %s244 = scalar_lea.vmem %s116, 960
      %v245 = vld [vmem:[%s244] ss:$2 sm:$0xff]
      %s246 = scalar_lea.vmem %s116, 976
      %v247 = vld [vmem:[%s246] ss:$2 sm:$0xff]
      %s248 = scalar_lea.vmem %s116, 992
      %v249 = vld [vmem:[%s248] ss:$2 sm:$0xff]
      %s250 = scalar_lea.vmem %s116, 1008
      %v251 = vld [vmem:[%s250] ss:$2 sm:$0xff]
      %s252 = scalar_lea.vmem %s116, 1024
      %v253 = vld [vmem:[%s252] ss:$2 sm:$0xff]
      %s254 = scalar_lea.vmem %s116, 1040
      %v255 = vld [vmem:[%s254] ss:$2 sm:$0xff]
      %s256 = scalar_lea.vmem %s116, 1056
      %v257 = vld [vmem:[%s256] ss:$2 sm:$0xff]
      %s258 = scalar_lea.vmem %s116, 1072
      %v259 = vld [vmem:[%s258] ss:$2 sm:$0xff]
      %s260 = scalar_lea.vmem %s116, 1088
      %v261 = vld [vmem:[%s260] ss:$2 sm:$0xff]
      %s262 = scalar_lea.vmem %s116, 1104
      %v263 = vld [vmem:[%s262] ss:$2 sm:$0xff]
      %s264 = scalar_lea.vmem %s116, 1120
      %v265 = vld [vmem:[%s264] ss:$2 sm:$0xff]
      %s266 = scalar_lea.vmem %s116, 1136
      %v267 = vld [vmem:[%s266] ss:$2 sm:$0xff]
      %s268 = scalar_lea.vmem %s116, 1152
      %v269 = vld [vmem:[%s268] ss:$2 sm:$0xff]
      %s270 = scalar_lea.vmem %s116, 1168
      %v271 = vld [vmem:[%s270] ss:$2 sm:$0xff]
      %s272 = scalar_lea.vmem %s116, 1184
      %v273 = vld [vmem:[%s272] ss:$2 sm:$0xff]
      %s274 = scalar_lea.vmem %s116, 1200
      %v275 = vld [vmem:[%s274] ss:$2 sm:$0xff]
      %s276 = scalar_lea.vmem %s116, 1216
      %v277 = vld [vmem:[%s276] ss:$2 sm:$0xff]
      %s278 = scalar_lea.vmem %s116, 1232
      %v279 = vld [vmem:[%s278] ss:$2 sm:$0xff]
      %s280 = scalar_lea.vmem %s116, 1248
      %v281 = vld [vmem:[%s280] ss:$2 sm:$0xff]
      %s282 = scalar_lea.vmem %s116, 1264
      %v283 = vld [vmem:[%s282] ss:$2 sm:$0xff]
      %s284 = scalar_lea.vmem %s116, 1280
      %v285 = vld [vmem:[%s284] ss:$2 sm:$0xff]
      %s286 = scalar_lea.vmem %s116, 1296
      %v287 = vld [vmem:[%s286] ss:$2 sm:$0xff]
      %s288 = scalar_lea.vmem %s116, 1312
      %v289 = vld [vmem:[%s288] ss:$2 sm:$0xff]
      %s290 = scalar_lea.vmem %s116, 1328
      %v291 = vld [vmem:[%s290] ss:$2 sm:$0xff]
      %s292 = scalar_lea.vmem %s116, 1344
      %v293 = vld [vmem:[%s292] ss:$2 sm:$0xff]
      %s294 = scalar_lea.vmem %s116, 1360
      %v295 = vld [vmem:[%s294] ss:$2 sm:$0xff]
      %s296 = scalar_lea.vmem %s116, 1376
      %v297 = vld [vmem:[%s296] ss:$2 sm:$0xff]
      %s298 = scalar_lea.vmem %s116, 1392
      %v299 = vld [vmem:[%s298] ss:$2 sm:$0xff]
      %s300 = scalar_lea.vmem %s116, 1408
      %v301 = vld [vmem:[%s300] ss:$2 sm:$0xff]
      %s302 = scalar_lea.vmem %s116, 1424
      %v303 = vld [vmem:[%s302] ss:$2 sm:$0xff]
      %s304 = scalar_lea.vmem %s116, 1440
      %v305 = vld [vmem:[%s304] ss:$2 sm:$0xff]
      %s306 = scalar_lea.vmem %s116, 1456
      %v307 = vld [vmem:[%s306] ss:$2 sm:$0xff]
      %s308 = scalar_lea.vmem %s116, 1472
      %v309 = vld [vmem:[%s308] ss:$2 sm:$0xff]
      %s310 = scalar_lea.vmem %s116, 1488
      %v311 = vld [vmem:[%s310] ss:$2 sm:$0xff]
      %s312 = scalar_lea.vmem %s116, 1504
      %v313 = vld [vmem:[%s312] ss:$2 sm:$0xff]
      %s314 = scalar_lea.vmem %s116, 1520
      %v315 = vld [vmem:[%s314] ss:$2 sm:$0xff]
      %s316 = scalar_lea.vmem %s116, 1536
      %v317 = vld [vmem:[%s316] ss:$2 sm:$0xff]
      %s318 = scalar_lea.vmem %s116, 1552
      %v319 = vld [vmem:[%s318] ss:$2 sm:$0xff]
      %s320 = scalar_lea.vmem %s116, 1568
      %v321 = vld [vmem:[%s320] ss:$2 sm:$0xff]
      %s322 = scalar_lea.vmem %s116, 1584
      %v323 = vld [vmem:[%s322] ss:$2 sm:$0xff]
      %s324 = scalar_lea.vmem %s116, 1600
      %v325 = vld [vmem:[%s324] ss:$2 sm:$0xff]
      %s326 = scalar_lea.vmem %s116, 1616
      %v327 = vld [vmem:[%s326] ss:$2 sm:$0xff]
      %s328 = scalar_lea.vmem %s116, 1632
      %v329 = vld [vmem:[%s328] ss:$2 sm:$0xff]
      %s330 = scalar_lea.vmem %s116, 1648
      %v331 = vld [vmem:[%s330] ss:$2 sm:$0xff]
      %s332 = scalar_lea.vmem %s116, 1664
      %v333 = vld [vmem:[%s332] ss:$2 sm:$0xff]
      %s334 = scalar_lea.vmem %s116, 1680
      %v335 = vld [vmem:[%s334] ss:$2 sm:$0xff]
      %s336 = scalar_lea.vmem %s116, 1696
      %v337 = vld [vmem:[%s336] ss:$2 sm:$0xff]
      %s338 = scalar_lea.vmem %s116, 1712
      %v339 = vld [vmem:[%s338] ss:$2 sm:$0xff]
      %s340 = scalar_lea.vmem %s116, 1728
      %v341 = vld [vmem:[%s340] ss:$2 sm:$0xff]
      %s342 = scalar_lea.vmem %s116, 1744
      %v343 = vld [vmem:[%s342] ss:$2 sm:$0xff]
      %s344 = scalar_lea.vmem %s116, 1760
      %v345 = vld [vmem:[%s344] ss:$2 sm:$0xff]
      %s346 = scalar_lea.vmem %s116, 1776
      %v347 = vld [vmem:[%s346] ss:$2 sm:$0xff]
      %s348 = scalar_lea.vmem %s116, 1792
      %v349 = vld [vmem:[%s348] ss:$2 sm:$0xff]
      %s350 = scalar_lea.vmem %s116, 1808
      %v351 = vld [vmem:[%s350] ss:$2 sm:$0xff]
      %s352 = scalar_lea.vmem %s116, 1824
      %v353 = vld [vmem:[%s352] ss:$2 sm:$0xff]
      %s354 = scalar_lea.vmem %s116, 1840
      %v355 = vld [vmem:[%s354] ss:$2 sm:$0xff]
      %s356 = scalar_lea.vmem %s116, 1856
      %v357 = vld [vmem:[%s356] ss:$2 sm:$0xff]
      %s358 = scalar_lea.vmem %s116, 1872
      %v359 = vld [vmem:[%s358] ss:$2 sm:$0xff]
      %s360 = scalar_lea.vmem %s116, 1888
      %v361 = vld [vmem:[%s360] ss:$2 sm:$0xff]
      %s362 = scalar_lea.vmem %s116, 1904
      %v363 = vld [vmem:[%s362] ss:$2 sm:$0xff]
      %s364 = scalar_lea.vmem %s116, 1920
      %v365 = vld [vmem:[%s364] ss:$2 sm:$0xff]
      %s366 = scalar_lea.vmem %s116, 1936
      %v367 = vld [vmem:[%s366] ss:$2 sm:$0xff]
      %s368 = scalar_lea.vmem %s116, 1952
      %v369 = vld [vmem:[%s368] ss:$2 sm:$0xff]
      %s370 = scalar_lea.vmem %s116, 1968
      %v371 = vld [vmem:[%s370] ss:$2 sm:$0xff]
      %s372 = scalar_lea.vmem %s116, 1984
      %v373 = vld [vmem:[%s372] ss:$2 sm:$0xff]
      %s374 = scalar_lea.vmem %s116, 2000
      %v375 = vld [vmem:[%s374] ss:$2 sm:$0xff]
      %s376 = scalar_lea.vmem %s116, 2016
      %v377 = vld [vmem:[%s376] ss:$2 sm:$0xff]
      %s378 = scalar_lea.vmem %s116, 2032
      %v379 = vld [vmem:[%s378] ss:$2 sm:$0xff]
      %s380 = scalar_lea.vmem %s116, 1
      %v381 = vld [vmem:[%s380] ss:$2 sm:$0xff]
      %s382 = scalar_lea.vmem %s116, 17
      %v383 = vld [vmem:[%s382] ss:$2 sm:$0xff]
      %s384 = scalar_lea.vmem %s116, 33
      %v385 = vld [vmem:[%s384] ss:$2 sm:$0xff]
      %s386 = scalar_lea.vmem %s116, 49
      %v387 = vld [vmem:[%s386] ss:$2 sm:$0xff]
      %s388 = scalar_lea.vmem %s116, 65
      %v389 = vld [vmem:[%s388] ss:$2 sm:$0xff]
      %s390 = scalar_lea.vmem %s116, 81
      %v391 = vld [vmem:[%s390] ss:$2 sm:$0xff]
      %s392 = scalar_lea.vmem %s116, 97
      %v393 = vld [vmem:[%s392] ss:$2 sm:$0xff]
      %s394 = scalar_lea.vmem %s116, 113
      %v395 = vld [vmem:[%s394] ss:$2 sm:$0xff]
      %s396 = scalar_lea.vmem %s116, 129
      %v397 = vld [vmem:[%s396] ss:$2 sm:$0xff]
      %s398 = scalar_lea.vmem %s116, 145
      %v399 = vld [vmem:[%s398] ss:$2 sm:$0xff]
      %s400 = scalar_lea.vmem %s116, 161
      %v401 = vld [vmem:[%s400] ss:$2 sm:$0xff]
      %s402 = scalar_lea.vmem %s116, 177
      %v403 = vld [vmem:[%s402] ss:$2 sm:$0xff]
      %s404 = scalar_lea.vmem %s116, 193
      %v405 = vld [vmem:[%s404] ss:$2 sm:$0xff]
      %s406 = scalar_lea.vmem %s116, 209
      %v407 = vld [vmem:[%s406] ss:$2 sm:$0xff]
      %s408 = scalar_lea.vmem %s116, 225
      %v409 = vld [vmem:[%s408] ss:$2 sm:$0xff]
      %s410 = scalar_lea.vmem %s116, 241
      %v411 = vld [vmem:[%s410] ss:$2 sm:$0xff]
      %s412 = scalar_lea.vmem %s116, 257
      %v413 = vld [vmem:[%s412] ss:$2 sm:$0xff]
      %s414 = scalar_lea.vmem %s116, 273
      %v415 = vld [vmem:[%s414] ss:$2 sm:$0xff]
      %s416 = scalar_lea.vmem %s116, 289
      %v417 = vld [vmem:[%s416] ss:$2 sm:$0xff]
      %s418 = scalar_lea.vmem %s116, 305
      %v419 = vld [vmem:[%s418] ss:$2 sm:$0xff]
      %s420 = scalar_lea.vmem %s116, 321
      %v421 = vld [vmem:[%s420] ss:$2 sm:$0xff]
      %s422 = scalar_lea.vmem %s116, 337
      %v423 = vld [vmem:[%s422] ss:$2 sm:$0xff]
      %s424 = scalar_lea.vmem %s116, 353
      %v425 = vld [vmem:[%s424] ss:$2 sm:$0xff]
      %s426 = scalar_lea.vmem %s116, 369
      %v427 = vld [vmem:[%s426] ss:$2 sm:$0xff]
      %s428 = scalar_lea.vmem %s116, 385
      %v429 = vld [vmem:[%s428] ss:$2 sm:$0xff]
      %s430 = scalar_lea.vmem %s116, 401
      %v431 = vld [vmem:[%s430] ss:$2 sm:$0xff]
      %s432 = scalar_lea.vmem %s116, 417
      %v433 = vld [vmem:[%s432] ss:$2 sm:$0xff]
      %s434 = scalar_lea.vmem %s116, 433
      %v435 = vld [vmem:[%s434] ss:$2 sm:$0xff]
      %s436 = scalar_lea.vmem %s116, 449
      %v437 = vld [vmem:[%s436] ss:$2 sm:$0xff]
      %s438 = scalar_lea.vmem %s116, 465
      %v439 = vld [vmem:[%s438] ss:$2 sm:$0xff]
      %s440 = scalar_lea.vmem %s116, 481
      %v441 = vld [vmem:[%s440] ss:$2 sm:$0xff]
      %s442 = scalar_lea.vmem %s116, 497
      %v443 = vld [vmem:[%s442] ss:$2 sm:$0xff]
      %s444 = scalar_lea.vmem %s116, 513
      %v445 = vld [vmem:[%s444] ss:$2 sm:$0xff]
      %s446 = scalar_lea.vmem %s116, 529
      %v447 = vld [vmem:[%s446] ss:$2 sm:$0xff]
      %s448 = scalar_lea.vmem %s116, 545
      %v449 = vld [vmem:[%s448] ss:$2 sm:$0xff]
      %s450 = scalar_lea.vmem %s116, 561
      %v451 = vld [vmem:[%s450] ss:$2 sm:$0xff]
      %s452 = scalar_lea.vmem %s116, 577
      %v453 = vld [vmem:[%s452] ss:$2 sm:$0xff]
      %s454 = scalar_lea.vmem %s116, 593
      %v455 = vld [vmem:[%s454] ss:$2 sm:$0xff]
      %s456 = scalar_lea.vmem %s116, 609
      %v457 = vld [vmem:[%s456] ss:$2 sm:$0xff]
      %s458 = scalar_lea.vmem %s116, 625
      %v459 = vld [vmem:[%s458] ss:$2 sm:$0xff]
      %s460 = scalar_lea.vmem %s116, 641
      %v461 = vld [vmem:[%s460] ss:$2 sm:$0xff]
      %s462 = scalar_lea.vmem %s116, 657
      %v463 = vld [vmem:[%s462] ss:$2 sm:$0xff]
      %s464 = scalar_lea.vmem %s116, 673
      %v465 = vld [vmem:[%s464] ss:$2 sm:$0xff]
      %s466 = scalar_lea.vmem %s116, 689
      %v467 = vld [vmem:[%s466] ss:$2 sm:$0xff]
      %s468 = scalar_lea.vmem %s116, 705
      %v469 = vld [vmem:[%s468] ss:$2 sm:$0xff]
      %s470 = scalar_lea.vmem %s116, 721
      %v471 = vld [vmem:[%s470] ss:$2 sm:$0xff]
      %s472 = scalar_lea.vmem %s116, 737
      %v473 = vld [vmem:[%s472] ss:$2 sm:$0xff]
      %s474 = scalar_lea.vmem %s116, 753
      %v475 = vld [vmem:[%s474] ss:$2 sm:$0xff]
      %s476 = scalar_lea.vmem %s116, 769
      %v477 = vld [vmem:[%s476] ss:$2 sm:$0xff]
      %s478 = scalar_lea.vmem %s116, 785
      %v479 = vld [vmem:[%s478] ss:$2 sm:$0xff]
      %s480 = scalar_lea.vmem %s116, 801
      %v481 = vld [vmem:[%s480] ss:$2 sm:$0xff]
      %s482 = scalar_lea.vmem %s116, 817
      %v483 = vld [vmem:[%s482] ss:$2 sm:$0xff]
      %s484 = scalar_lea.vmem %s116, 833
      %v485 = vld [vmem:[%s484] ss:$2 sm:$0xff]
      %s486 = scalar_lea.vmem %s116, 849
      %v487 = vld [vmem:[%s486] ss:$2 sm:$0xff]
      %s488 = scalar_lea.vmem %s116, 865
      %v489 = vld [vmem:[%s488] ss:$2 sm:$0xff]
      %s490 = scalar_lea.vmem %s116, 881
      %v491 = vld [vmem:[%s490] ss:$2 sm:$0xff]
      %s492 = scalar_lea.vmem %s116, 897
      %v493 = vld [vmem:[%s492] ss:$2 sm:$0xff]
      %s494 = scalar_lea.vmem %s116, 913
      %v495 = vld [vmem:[%s494] ss:$2 sm:$0xff]
      %s496 = scalar_lea.vmem %s116, 929
      %v497 = vld [vmem:[%s496] ss:$2 sm:$0xff]
      %s498 = scalar_lea.vmem %s116, 945
      %v499 = vld [vmem:[%s498] ss:$2 sm:$0xff]
      %s500 = scalar_lea.vmem %s116, 961
      %v501 = vld [vmem:[%s500] ss:$2 sm:$0xff]
      %s502 = scalar_lea.vmem %s116, 977
      %v503 = vld [vmem:[%s502] ss:$2 sm:$0xff]
      %s504 = scalar_lea.vmem %s116, 993
      %v505 = vld [vmem:[%s504] ss:$2 sm:$0xff]
      %s506 = scalar_lea.vmem %s116, 1009
      %v507 = vld [vmem:[%s506] ss:$2 sm:$0xff]
      %s508 = scalar_lea.vmem %s116, 1025
      %v509 = vld [vmem:[%s508] ss:$2 sm:$0xff]
      %s510 = scalar_lea.vmem %s116, 1041
      %v511 = vld [vmem:[%s510] ss:$2 sm:$0xff]
      %s512 = scalar_lea.vmem %s116, 1057
      %v513 = vld [vmem:[%s512] ss:$2 sm:$0xff]
      %s514 = scalar_lea.vmem %s116, 1073
      %v515 = vld [vmem:[%s514] ss:$2 sm:$0xff]
      %s516 = scalar_lea.vmem %s116, 1089
      %v517 = vld [vmem:[%s516] ss:$2 sm:$0xff]
      %s518 = scalar_lea.vmem %s116, 1105
      %v519 = vld [vmem:[%s518] ss:$2 sm:$0xff]
      %s520 = scalar_lea.vmem %s116, 1121
      %v521 = vld [vmem:[%s520] ss:$2 sm:$0xff]
      %s522 = scalar_lea.vmem %s116, 1137
      %v523 = vld [vmem:[%s522] ss:$2 sm:$0xff]
      %s524 = scalar_lea.vmem %s116, 1153
      %v525 = vld [vmem:[%s524] ss:$2 sm:$0xff]
      %s526 = scalar_lea.vmem %s116, 1169
      %v527 = vld [vmem:[%s526] ss:$2 sm:$0xff]
      %s528 = scalar_lea.vmem %s116, 1185
      %v529 = vld [vmem:[%s528] ss:$2 sm:$0xff]
      %s530 = scalar_lea.vmem %s116, 1201
      %v531 = vld [vmem:[%s530] ss:$2 sm:$0xff]
      %s532 = scalar_lea.vmem %s116, 1217
      %v533 = vld [vmem:[%s532] ss:$2 sm:$0xff]
      %s534 = scalar_lea.vmem %s116, 1233
      %v535 = vld [vmem:[%s534] ss:$2 sm:$0xff]
      %s536 = scalar_lea.vmem %s116, 1249
      %v537 = vld [vmem:[%s536] ss:$2 sm:$0xff]
      %s538 = scalar_lea.vmem %s116, 1265
      %v539 = vld [vmem:[%s538] ss:$2 sm:$0xff]
      %s540 = scalar_lea.vmem %s116, 1281
      %v541 = vld [vmem:[%s540] ss:$2 sm:$0xff]
      %s542 = scalar_lea.vmem %s116, 1297
      %v543 = vld [vmem:[%s542] ss:$2 sm:$0xff]
      %s544 = scalar_lea.vmem %s116, 1313
      %v545 = vld [vmem:[%s544] ss:$2 sm:$0xff]
      %s546 = scalar_lea.vmem %s116, 1329
      %v547 = vld [vmem:[%s546] ss:$2 sm:$0xff]
      %s548 = scalar_lea.vmem %s116, 1345
      %v549 = vld [vmem:[%s548] ss:$2 sm:$0xff]
      %s550 = scalar_lea.vmem %s116, 1361
      %v551 = vld [vmem:[%s550] ss:$2 sm:$0xff]
      %s552 = scalar_lea.vmem %s116, 1377
      %v553 = vld [vmem:[%s552] ss:$2 sm:$0xff]
      %s554 = scalar_lea.vmem %s116, 1393
      %v555 = vld [vmem:[%s554] ss:$2 sm:$0xff]
      %s556 = scalar_lea.vmem %s116, 1409
      %v557 = vld [vmem:[%s556] ss:$2 sm:$0xff]
      %s558 = scalar_lea.vmem %s116, 1425
      %v559 = vld [vmem:[%s558] ss:$2 sm:$0xff]
      %s560 = scalar_lea.vmem %s116, 1441
      %v561 = vld [vmem:[%s560] ss:$2 sm:$0xff]
      %s562 = scalar_lea.vmem %s116, 1457
      %v563 = vld [vmem:[%s562] ss:$2 sm:$0xff]
      %s564 = scalar_lea.vmem %s116, 1473
      %v565 = vld [vmem:[%s564] ss:$2 sm:$0xff]
      %s566 = scalar_lea.vmem %s116, 1489
      %v567 = vld [vmem:[%s566] ss:$2 sm:$0xff]
      %s568 = scalar_lea.vmem %s116, 1505
      %v569 = vld [vmem:[%s568] ss:$2 sm:$0xff]
      %s570 = scalar_lea.vmem %s116, 1521
      %v571 = vld [vmem:[%s570] ss:$2 sm:$0xff]
      %s572 = scalar_lea.vmem %s116, 1537
      %v573 = vld [vmem:[%s572] ss:$2 sm:$0xff]
      %s574 = scalar_lea.vmem %s116, 1553
      %v575 = vld [vmem:[%s574] ss:$2 sm:$0xff]
      %s576 = scalar_lea.vmem %s116, 1569
      %v577 = vld [vmem:[%s576] ss:$2 sm:$0xff]
      %s578 = scalar_lea.vmem %s116, 1585
      %v579 = vld [vmem:[%s578] ss:$2 sm:$0xff]
      %s580 = scalar_lea.vmem %s116, 1601
      %v581 = vld [vmem:[%s580] ss:$2 sm:$0xff]
      %s582 = scalar_lea.vmem %s116, 1617
      %v583 = vld [vmem:[%s582] ss:$2 sm:$0xff]
      %s584 = scalar_lea.vmem %s116, 1633
      %v585 = vld [vmem:[%s584] ss:$2 sm:$0xff]
      %s586 = scalar_lea.vmem %s116, 1649
      %v587 = vld [vmem:[%s586] ss:$2 sm:$0xff]
      %s588 = scalar_lea.vmem %s116, 1665
      %v589 = vld [vmem:[%s588] ss:$2 sm:$0xff]
      %s590 = scalar_lea.vmem %s116, 1681
      %v591 = vld [vmem:[%s590] ss:$2 sm:$0xff]
      %s592 = scalar_lea.vmem %s116, 1697
      %v593 = vld [vmem:[%s592] ss:$2 sm:$0xff]
      %s594 = scalar_lea.vmem %s116, 1713
      %v595 = vld [vmem:[%s594] ss:$2 sm:$0xff]
      %s596 = scalar_lea.vmem %s116, 1729
      %v597 = vld [vmem:[%s596] ss:$2 sm:$0xff]
      %s598 = scalar_lea.vmem %s116, 1745
      %v599 = vld [vmem:[%s598] ss:$2 sm:$0xff]
      %s600 = scalar_lea.vmem %s116, 1761
      %v601 = vld [vmem:[%s600] ss:$2 sm:$0xff]
      %s602 = scalar_lea.vmem %s116, 1777
      %v603 = vld [vmem:[%s602] ss:$2 sm:$0xff]
      %s604 = scalar_lea.vmem %s116, 1793
      %v605 = vld [vmem:[%s604] ss:$2 sm:$0xff]
      %s606 = scalar_lea.vmem %s116, 1809
      %v607 = vld [vmem:[%s606] ss:$2 sm:$0xff]
      %s608 = scalar_lea.vmem %s116, 1825
      %v609 = vld [vmem:[%s608] ss:$2 sm:$0xff]
      %s610 = scalar_lea.vmem %s116, 1841
      %v611 = vld [vmem:[%s610] ss:$2 sm:$0xff]
      %s612 = scalar_lea.vmem %s116, 1857
      %v613 = vld [vmem:[%s612] ss:$2 sm:$0xff]
      %s614 = scalar_lea.vmem %s116, 1873
      %v615 = vld [vmem:[%s614] ss:$2 sm:$0xff]
      %s616 = scalar_lea.vmem %s116, 1889
      %v617 = vld [vmem:[%s616] ss:$2 sm:$0xff]
      %s618 = scalar_lea.vmem %s116, 1905
      %v619 = vld [vmem:[%s618] ss:$2 sm:$0xff]
      %s620 = scalar_lea.vmem %s116, 1921
      %v621 = vld [vmem:[%s620] ss:$2 sm:$0xff]
      %s622 = scalar_lea.vmem %s116, 1937
      %v623 = vld [vmem:[%s622] ss:$2 sm:$0xff]
      %s624 = scalar_lea.vmem %s116, 1953
      %v625 = vld [vmem:[%s624] ss:$2 sm:$0xff]
      %s626 = scalar_lea.vmem %s116, 1969
      %v627 = vld [vmem:[%s626] ss:$2 sm:$0xff]
      %s628 = scalar_lea.vmem %s116, 1985
      %v629 = vld [vmem:[%s628] ss:$2 sm:$0xff]
      %s630 = scalar_lea.vmem %s116, 2001
      %v631 = vld [vmem:[%s630] ss:$2 sm:$0xff]
      %s632 = scalar_lea.vmem %s116, 2017
      %v633 = vld [vmem:[%s632] ss:$2 sm:$0xff]
      %s634 = scalar_lea.vmem %s116, 2033
      %v635 = vld [vmem:[%s634] ss:$2 sm:$0xff]
      %v636 = vmax.f32 %v125, %v381
      %v637 = vmax.f32 %v127, %v383
      %v638 = vmax.f32 %v129, %v385
      %v639 = vmax.f32 %v131, %v387
      %v640 = vmax.f32 %v133, %v389
      %v641 = vmax.f32 %v135, %v391
      %v642 = vmax.f32 %v137, %v393
      %v643 = vmax.f32 %v139, %v395
      %v644 = vmax.f32 %v141, %v397
      %v645 = vmax.f32 %v143, %v399
      %v646 = vmax.f32 %v145, %v401
      %v647 = vmax.f32 %v147, %v403
      %v648 = vmax.f32 %v149, %v405
      %v649 = vmax.f32 %v151, %v407
      %v650 = vmax.f32 %v153, %v409
      %v651 = vmax.f32 %v155, %v411
      %v652 = vmax.f32 %v157, %v413
      %v653 = vmax.f32 %v159, %v415
      %v654 = vmax.f32 %v161, %v417
      %v655 = vmax.f32 %v163, %v419
      %v656 = vmax.f32 %v165, %v421
      %v657 = vmax.f32 %v167, %v423
      %v658 = vmax.f32 %v169, %v425
      %v659 = vmax.f32 %v171, %v427
      %v660 = vmax.f32 %v173, %v429
      %v661 = vmax.f32 %v175, %v431
      %v662 = vmax.f32 %v177, %v433
      %v663 = vmax.f32 %v179, %v435
      %v664 = vmax.f32 %v181, %v437
      %v665 = vmax.f32 %v183, %v439
      %v666 = vmax.f32 %v185, %v441
      %v667 = vmax.f32 %v187, %v443
      %v668 = vmax.f32 %v189, %v445
      %v669 = vmax.f32 %v191, %v447
      %v670 = vmax.f32 %v193, %v449
      %v671 = vmax.f32 %v195, %v451
      %v672 = vmax.f32 %v197, %v453
      %v673 = vmax.f32 %v199, %v455
      %v674 = vmax.f32 %v201, %v457
      %v675 = vmax.f32 %v203, %v459
      %v676 = vmax.f32 %v205, %v461
      %v677 = vmax.f32 %v207, %v463
      %v678 = vmax.f32 %v209, %v465
      %v679 = vmax.f32 %v211, %v467
      %v680 = vmax.f32 %v213, %v469
      %v681 = vmax.f32 %v215, %v471
      %v682 = vmax.f32 %v217, %v473
      %v683 = vmax.f32 %v219, %v475
      %v684 = vmax.f32 %v221, %v477
      %v685 = vmax.f32 %v223, %v479
      %v686 = vmax.f32 %v225, %v481
      %v687 = vmax.f32 %v227, %v483
      %v688 = vmax.f32 %v229, %v485
      %v689 = vmax.f32 %v231, %v487
      %v690 = vmax.f32 %v233, %v489
      %v691 = vmax.f32 %v235, %v491
      %v692 = vmax.f32 %v237, %v493
      %v693 = vmax.f32 %v239, %v495
      %v694 = vmax.f32 %v241, %v497
      %v695 = vmax.f32 %v243, %v499
      %v696 = vmax.f32 %v245, %v501
      %v697 = vmax.f32 %v247, %v503
      %v698 = vmax.f32 %v249, %v505
      %v699 = vmax.f32 %v251, %v507
      %v700 = vmax.f32 %v253, %v509
      %v701 = vmax.f32 %v255, %v511
      %v702 = vmax.f32 %v257, %v513
      %v703 = vmax.f32 %v259, %v515
      %v704 = vmax.f32 %v261, %v517
      %v705 = vmax.f32 %v263, %v519
      %v706 = vmax.f32 %v265, %v521
      %v707 = vmax.f32 %v267, %v523
      %v708 = vmax.f32 %v269, %v525
      %v709 = vmax.f32 %v271, %v527
      %v710 = vmax.f32 %v273, %v529
      %v711 = vmax.f32 %v275, %v531
      %v712 = vmax.f32 %v277, %v533
      %v713 = vmax.f32 %v279, %v535
      %v714 = vmax.f32 %v281, %v537
      %v715 = vmax.f32 %v283, %v539
      %v716 = vmax.f32 %v285, %v541
      %v717 = vmax.f32 %v287, %v543
      %v718 = vmax.f32 %v289, %v545
      %v719 = vmax.f32 %v291, %v547
      %v720 = vmax.f32 %v293, %v549
      %v721 = vmax.f32 %v295, %v551
      %v722 = vmax.f32 %v297, %v553
      %v723 = vmax.f32 %v299, %v555
      %v724 = vmax.f32 %v301, %v557
      %v725 = vmax.f32 %v303, %v559
      %v726 = vmax.f32 %v305, %v561
      %v727 = vmax.f32 %v307, %v563
      %v728 = vmax.f32 %v309, %v565
      %v729 = vmax.f32 %v311, %v567
      %v730 = vmax.f32 %v313, %v569
      %v731 = vmax.f32 %v315, %v571
      %v732 = vmax.f32 %v317, %v573
      %v733 = vmax.f32 %v319, %v575
      %v734 = vmax.f32 %v321, %v577
      %v735 = vmax.f32 %v323, %v579
      %v736 = vmax.f32 %v325, %v581
      %v737 = vmax.f32 %v327, %v583
      %v738 = vmax.f32 %v329, %v585
      %v739 = vmax.f32 %v331, %v587
      %v740 = vmax.f32 %v333, %v589
      %v741 = vmax.f32 %v335, %v591
      %v742 = vmax.f32 %v337, %v593
      %v743 = vmax.f32 %v339, %v595
      %v744 = vmax.f32 %v341, %v597
      %v745 = vmax.f32 %v343, %v599
      %v746 = vmax.f32 %v345, %v601
      %v747 = vmax.f32 %v347, %v603
      %v748 = vmax.f32 %v349, %v605
      %v749 = vmax.f32 %v351, %v607
      %v750 = vmax.f32 %v353, %v609
      %v751 = vmax.f32 %v355, %v611
      %v752 = vmax.f32 %v357, %v613
      %v753 = vmax.f32 %v359, %v615
      %v754 = vmax.f32 %v361, %v617
      %v755 = vmax.f32 %v363, %v619
      %v756 = vmax.f32 %v365, %v621
      %v757 = vmax.f32 %v367, %v623
      %v758 = vmax.f32 %v369, %v625
      %v759 = vmax.f32 %v371, %v627
      %v760 = vmax.f32 %v373, %v629
      %v761 = vmax.f32 %v375, %v631
      %v762 = vmax.f32 %v377, %v633
      %v763 = vmax.f32 %v379, %v635
      %v764 = vmax.f32 %v636, %v652
      %v765 = vmax.f32 %v637, %v653
      %v766 = vmax.f32 %v638, %v654
      %v767 = vmax.f32 %v639, %v655
      %v768 = vmax.f32 %v640, %v656
      %v769 = vmax.f32 %v641, %v657
      %v770 = vmax.f32 %v642, %v658
      %v771 = vmax.f32 %v643, %v659
      %v772 = vmax.f32 %v644, %v660
      %v773 = vmax.f32 %v645, %v661
      %v774 = vmax.f32 %v646, %v662
      %v775 = vmax.f32 %v647, %v663
      %v776 = vmax.f32 %v648, %v664
      %v777 = vmax.f32 %v649, %v665
      %v778 = vmax.f32 %v650, %v666
      %v779 = vmax.f32 %v651, %v667
      %v780 = vmax.f32 %v668, %v684
      %v781 = vmax.f32 %v669, %v685
      %v782 = vmax.f32 %v670, %v686
      %v783 = vmax.f32 %v671, %v687
      %v784 = vmax.f32 %v672, %v688
      %v785 = vmax.f32 %v673, %v689
      %v786 = vmax.f32 %v674, %v690
      %v787 = vmax.f32 %v675, %v691
      %v788 = vmax.f32 %v676, %v692
      %v789 = vmax.f32 %v677, %v693
      %v790 = vmax.f32 %v678, %v694
      %v791 = vmax.f32 %v679, %v695
      %v792 = vmax.f32 %v680, %v696
      %v793 = vmax.f32 %v681, %v697
      %v794 = vmax.f32 %v682, %v698
      %v795 = vmax.f32 %v683, %v699
      %v796 = vmax.f32 %v700, %v716
      %v797 = vmax.f32 %v701, %v717
      %v798 = vmax.f32 %v702, %v718
      %v799 = vmax.f32 %v703, %v719
      %v800 = vmax.f32 %v704, %v720
      %v801 = vmax.f32 %v705, %v721
      %v802 = vmax.f32 %v706, %v722
      %v803 = vmax.f32 %v707, %v723
      %v804 = vmax.f32 %v708, %v724
      %v805 = vmax.f32 %v709, %v725
      %v806 = vmax.f32 %v710, %v726
      %v807 = vmax.f32 %v711, %v727
      %v808 = vmax.f32 %v712, %v728
      %v809 = vmax.f32 %v713, %v729
      %v810 = vmax.f32 %v714, %v730
      %v811 = vmax.f32 %v715, %v731
      %v812 = vmax.f32 %v732, %v748
      %v813 = vmax.f32 %v733, %v749
      %v814 = vmax.f32 %v734, %v750
      %v815 = vmax.f32 %v735, %v751
      %v816 = vmax.f32 %v736, %v752
      %v817 = vmax.f32 %v737, %v753
      %v818 = vmax.f32 %v738, %v754
      %v819 = vmax.f32 %v739, %v755
      %v820 = vmax.f32 %v740, %v756
      %v821 = vmax.f32 %v741, %v757
      %v822 = vmax.f32 %v742, %v758
      %v823 = vmax.f32 %v743, %v759
      %v824 = vmax.f32 %v744, %v760
      %v825 = vmax.f32 %v745, %v761
      %v826 = vmax.f32 %v746, %v762
      %v827 = vmax.f32 %v747, %v763
      %vm828 = vcmask 261120
      %829 = vst.msk [vmem:[%s123] sm:$0xff] %vm828, %v764
      %830 = vst.msk [vmem:[%s123 + $0x8] sm:$0xff] %vm828, %v765
      %831 = vst.msk [vmem:[%s123 + $0x10] sm:$0xff] %vm828, %v766
      %832 = vst.msk [vmem:[%s123 + $0x18] sm:$0xff] %vm828, %v767
      %833 = vst.msk [vmem:[%s123 + $0x20] sm:$0xff] %vm828, %v768
      %834 = vst.msk [vmem:[%s123 + $0x28] sm:$0xff] %vm828, %v769
      %835 = vst.msk [vmem:[%s123 + $0x30] sm:$0xff] %vm828, %v770
      %836 = vst.msk [vmem:[%s123 + $0x38] sm:$0xff] %vm828, %v771
      %837 = vst.msk [vmem:[%s123 + $0x40] sm:$0xff] %vm828, %v772
      %838 = vst.msk [vmem:[%s123 + $0x48] sm:$0xff] %vm828, %v773
      %839 = vst.msk [vmem:[%s123 + $0x50] sm:$0xff] %vm828, %v774
      %840 = vst.msk [vmem:[%s123 + $0x58] sm:$0xff] %vm828, %v775
      %841 = vst.msk [vmem:[%s123 + $0x60] sm:$0xff] %vm828, %v776
      %842 = vst.msk [vmem:[%s123 + $0x68] sm:$0xff] %vm828, %v777
      %843 = vst.msk [vmem:[%s123 + $0x70] sm:$0xff] %vm828, %v778
      %844 = vst.msk [vmem:[%s123 + $0x78] sm:$0xff] %vm828, %v779
      %845 = vst.msk [vmem:[%s123 + $0x80] sm:$0xff] %vm828, %v780
      %846 = vst.msk [vmem:[%s123 + $0x88] sm:$0xff] %vm828, %v781
      %847 = vst.msk [vmem:[%s123 + $0x90] sm:$0xff] %vm828, %v782
      %848 = vst.msk [vmem:[%s123 + $0x98] sm:$0xff] %vm828, %v783
      %849 = vst.msk [vmem:[%s123 + $0xa0] sm:$0xff] %vm828, %v784
      %850 = vst.msk [vmem:[%s123 + $0xa8] sm:$0xff] %vm828, %v785
      %851 = vst.msk [vmem:[%s123 + $0xb0] sm:$0xff] %vm828, %v786
      %852 = vst.msk [vmem:[%s123 + $0xb8] sm:$0xff] %vm828, %v787
      %853 = vst.msk [vmem:[%s123 + $0xc0] sm:$0xff] %vm828, %v788
      %854 = vst.msk [vmem:[%s123 + $0xc8] sm:$0xff] %vm828, %v789
      %855 = vst.msk [vmem:[%s123 + $0xd0] sm:$0xff] %vm828, %v790
      %856 = vst.msk [vmem:[%s123 + $0xd8] sm:$0xff] %vm828, %v791
      %857 = vst.msk [vmem:[%s123 + $0xe0] sm:$0xff] %vm828, %v792
      %858 = vst.msk [vmem:[%s123 + $0xe8] sm:$0xff] %vm828, %v793
      %859 = vst.msk [vmem:[%s123 + $0xf0] sm:$0xff] %vm828, %v794
      %860 = vst.msk [vmem:[%s123 + $0xf8] sm:$0xff] %vm828, %v795
      %861 = vst.msk [vmem:[%s123 + $0x100] sm:$0xff] %vm828, %v796
      %862 = vst.msk [vmem:[%s123 + $0x108] sm:$0xff] %vm828, %v797
      %863 = vst.msk [vmem:[%s123 + $0x110] sm:$0xff] %vm828, %v798
      %864 = vst.msk [vmem:[%s123 + $0x118] sm:$0xff] %vm828, %v799
      %865 = vst.msk [vmem:[%s123 + $0x120] sm:$0xff] %vm828, %v800
      %866 = vst.msk [vmem:[%s123 + $0x128] sm:$0xff] %vm828, %v801
      %867 = vst.msk [vmem:[%s123 + $0x130] sm:$0xff] %vm828, %v802
      %868 = vst.msk [vmem:[%s123 + $0x138] sm:$0xff] %vm828, %v803
      %869 = vst.msk [vmem:[%s123 + $0x140] sm:$0xff] %vm828, %v804
      %870 = vst.msk [vmem:[%s123 + $0x148] sm:$0xff] %vm828, %v805
      %871 = vst.msk [vmem:[%s123 + $0x150] sm:$0xff] %vm828, %v806
      %872 = vst.msk [vmem:[%s123 + $0x158] sm:$0xff] %vm828, %v807
      %873 = vst.msk [vmem:[%s123 + $0x160] sm:$0xff] %vm828, %v808
      %874 = vst.msk [vmem:[%s123 + $0x168] sm:$0xff] %vm828, %v809
      %875 = vst.msk [vmem:[%s123 + $0x170] sm:$0xff] %vm828, %v810
      %876 = vst.msk [vmem:[%s123 + $0x178] sm:$0xff] %vm828, %v811
      %877 = vst.msk [vmem:[%s123 + $0x180] sm:$0xff] %vm828, %v812
      %878 = vst.msk [vmem:[%s123 + $0x188] sm:$0xff] %vm828, %v813
      %879 = vst.msk [vmem:[%s123 + $0x190] sm:$0xff] %vm828, %v814
      %880 = vst.msk [vmem:[%s123 + $0x198] sm:$0xff] %vm828, %v815
      %881 = vst.msk [vmem:[%s123 + $0x1a0] sm:$0xff] %vm828, %v816
      %882 = vst.msk [vmem:[%s123 + $0x1a8] sm:$0xff] %vm828, %v817
      %883 = vst.msk [vmem:[%s123 + $0x1b0] sm:$0xff] %vm828, %v818
      %884 = vst.msk [vmem:[%s123 + $0x1b8] sm:$0xff] %vm828, %v819
      %885 = vst.msk [vmem:[%s123 + $0x1c0] sm:$0xff] %vm828, %v820
      %886 = vst.msk [vmem:[%s123 + $0x1c8] sm:$0xff] %vm828, %v821
      %887 = vst.msk [vmem:[%s123 + $0x1d0] sm:$0xff] %vm828, %v822
      %888 = vst.msk [vmem:[%s123 + $0x1d8] sm:$0xff] %vm828, %v823
      %889 = vst.msk [vmem:[%s123 + $0x1e0] sm:$0xff] %vm828, %v824
      %890 = vst.msk [vmem:[%s123 + $0x1e8] sm:$0xff] %vm828, %v825
      %891 = vst.msk [vmem:[%s123 + $0x1f0] sm:$0xff] %vm828, %v826
      %892 = vst.msk [vmem:[%s123 + $0x1f8] sm:$0xff] %vm828, %v827
      %s893 = smul.u32 4, %s12
      %p894 = scmp.lt.s32.totalorder %s893, 31
      %s895 = scalar_select %p894, %s893, 31
      %s896 = smul.addr %s895, 16
      %s897 = smul.addr %s896, 8
      %s898 = scalar_lea.vmem %s1, %s897
      // Predicated region
      $region25: #{crnn_forward.9} parent=23 // pred_check
        %p899 = pneg %p56
      $region26: #{crnn_forward.9} parent=23 // pred_check_branch
        %901 = sbr.rel (%p899) target = $region28
      $region27: #{crnn_forward.9} parent=23 // pred_region
        %s902 = smul.u32 4, %s12
      $region28: #{crnn_forward.9} parent=23 // pred_fallthru
        _
    $region24: #{crnn_forward.9} parent=5 // pred_fallthru
      _
    %p903 = scmp.le.s32.totalorder 2, %s7
    // Predicated region
    $region29: #{crnn_forward.9} parent=5 // pred_check
      %p904 = pneg %p903
    $region30: #{crnn_forward.9} parent=5 // pred_check_branch
      %906 = sbr.rel (%p904) target = $region32
    $region31: #{crnn_forward.9} parent=5 // pred_region
      %s907 = ssub.s32 %s7, 2
      // Predicated region
      $region33: #{crnn_forward.9} parent=31 // pred_check
        %p908 = pneg %p62
      $region34: #{crnn_forward.9} parent=31 // pred_check_branch
        %910 = sbr.rel (%p908) target = $region36
      $region35: #{crnn_forward.9} parent=31 // pred_region
        %s911 = smul.u32 4, %s13
        %p912 = scmp.lt.s32.totalorder %s911, 31
        %s913 = scalar_select %p912, %s911, 31
        %s914 = smul.addr %s913, 16
        %s915 = smul.addr %s914, 8
        %s916 = scalar_lea.vmem %s1, %s915
      $region36: #{crnn_forward.9} parent=31 // pred_fallthru
        _
    $region32: #{crnn_forward.9} parent=5 // pred_fallthru
      _
  $region6: #{crnn_forward.9} parent=0 // loop_footer
    %s11 = sadd.s32 1, %s7
  $region7: #{crnn_forward.9} parent=0 // loop_footer_branch
    %6 = sbr.rel target = $region3
  $region8: #{crnn_forward.9} parent=0 // loop_exit
    _

// kernel: crnn_forward.10
$region0: #{crnn_forward.10}
  #allocation0 [shape = 'u32[]', space=smem, size = 0x4, offset = 0x4, fixed_abs, tag = 'smem constant byte address 0x4 - core index']
  #allocation1 [shape = 'u32[72,128]{1,0:T(1,128)}', space=vmem, size = 0x9000, scoped, tag = 'internal scratch']
  #allocation2 [shape = 'f32[512,64]{1,0:T(8,128)}', space=vmem, size = 0x40000, scoped, tag = 'scratch operand']
  %s0 = inlined_call_operand.vmem [shape: bf16[4096,288], index: 0, kind: input, shape index: {}]
  %s1 = inlined_call_operand.vmem [shape: bf16[288,64], index: 1, kind: input, shape index: {}]
  %s2 = inlined_call_operand.vmem [shape: f32[1,64], index: 2, kind: input, shape index: {}]
  %s3 = inlined_call_operand.vmem [shape: f32[4096,64], index: 3, kind: output, shape index: {}]
  %s4 = sld [smem:[#allocation0]]
  $region53: #{crnn_forward.10} parent=0
    _
  %s6 = ssub.s32 1, %s4
  %s7 = scalar_select 0, %s6, %s4
  loop: start=0, step=1, limit=10
  $region2: #{crnn_forward.10} parent=0 // loop_pre_header
    _
  $region3: #{crnn_forward.10} parent=0 // loop_header
    %s9 = sphi 0, %s13
    %p10 = scmp.ge.s32.totalorder %s9, 10
    %s16 = sphi 0, %s28
    %s17 = sphi 0, %s24
    %s18 = sphi 0, %s16
    %s19 = sphi 0, %s17
    %s20 = sphi 0, %s18
    %s21 = sphi 0, %s19
    %s33 = sphi 0, %s35
    %s36 = sphi 0, %s33
    %s37 = sphi 0, %s36
    %s53 = sphi 0, %s37
    %s59 = sphi 0, %s61
    %s62 = sphi 0, %s59
    %s63 = sphi 0, %s62
    %s79 = sphi 0, %s63
    %s83 = sphi 0, %s83
    %s85 = sphi 0, %s83
    %s86 = sphi 0, %s85
    %s100 = sphi 0, %s86
    %s106 = sphi 0, %s108
    %s109 = sphi 0, %s106
    %s110 = sphi 0, %s109
    %s126 = sphi 0, %s110
  $region4: #{crnn_forward.10} parent=0 // loop_header_branch
    %12 = sbr.rel (%p10) target = $region8
  $region5: #{crnn_forward.10} parent=0 // loop_body
    %s14 = ssub.s32 %s9, 1
    %s15 = ssub.s32 %s9, 2
    %s22 = sadd.s32 1, %s17
    %p23 = scmp.ge.s32.totalorder %s22, 1
    %s24 = scalar_select %p23, 0, %s22
    %s25 = sadd.s32 1, %s16
    %s26 = scalar_select %p23, %s25, %s16
    %p27 = scmp.ge.s32.totalorder %s26, 8
    %s28 = scalar_select %p27, 0, %s26
    %s29 = ssub.s32 %s16, %s28
    %s30 = ssub.s32 %s17, %s24
    %s31 = sor.u32 %s29, %s30
    %p32 = scmp.eq.s32.totalorder %s31, 0
    %s34 = sadd.s32 %s33, 1
    %s35 = scalar_select %p32, %s33, %s34
    %p38 = pneg %p32
    %p39 = scmp.eq.s32.totalorder %s9, 7
    %p40 = por %p38, %p39
    %p41 = scmp.ne.s32.totalorder %s33, %s36
    %p42 = scmp.eq.s32.totalorder %s9, 0
    %p43 = por %p41, %p42
    %p44 = scmp.ne.s32.totalorder %s33, %s36
    %p45 = scmp.eq.s32.totalorder %s14, 7
    %p46 = por %p44, %p45
    %p47 = scmp.ne.s32.totalorder %s36, %s37
    %p48 = scmp.eq.s32.totalorder %s14, 0
    %p49 = por %p47, %p48
    %p50 = scmp.ne.s32.totalorder %s36, %s37
    %p51 = scmp.eq.s32.totalorder %s15, 7
    %p52 = por %p50, %p51
    %p54 = scmp.ne.s32.totalorder %s37, %s53
    %p55 = scmp.eq.s32.totalorder %s15, 0
    %p56 = por %p54, %p55
    %s57 = ssub.s32 %s17, %s24
    %p58 = scmp.eq.s32.totalorder %s57, 0
    %s60 = sadd.s32 %s59, 1
    %s61 = scalar_select %p58, %s59, %s60
    %p64 = pneg %p58
    %p65 = scmp.eq.s32.totalorder %s9, 7
    %p66 = por %p64, %p65
    %p67 = scmp.ne.s32.totalorder %s59, %s62
    %p68 = scmp.eq.s32.totalorder %s9, 0
    %p69 = por %p67, %p68
    %p70 = scmp.ne.s32.totalorder %s59, %s62
    %p71 = scmp.eq.s32.totalorder %s14, 7
    %p72 = por %p70, %p71
    %p73 = scmp.ne.s32.totalorder %s62, %s63
    %p74 = scmp.eq.s32.totalorder %s14, 0
    %p75 = por %p73, %p74
    %p76 = scmp.ne.s32.totalorder %s62, %s63
    %p77 = scmp.eq.s32.totalorder %s15, 7
    %p78 = por %p76, %p77
    %p80 = scmp.ne.s32.totalorder %s63, %s79
    %p81 = scmp.eq.s32.totalorder %s15, 0
    %p82 = por %p80, %p81
    %s84 = sadd.s32 %s83, 1
    %p87 = scmp.eq.s32.totalorder %s9, 7
    %p88 = scmp.ne.s32.totalorder %s83, %s85
    %p89 = scmp.eq.s32.totalorder %s9, 0
    %p90 = por %p88, %p89
    %p91 = scmp.ne.s32.totalorder %s83, %s85
    %p92 = scmp.eq.s32.totalorder %s14, 7
    %p93 = por %p91, %p92
    %p94 = scmp.ne.s32.totalorder %s85, %s86
    %p95 = scmp.eq.s32.totalorder %s14, 0
    %p96 = por %p94, %p95
    %p97 = scmp.ne.s32.totalorder %s85, %s86
    %p98 = scmp.eq.s32.totalorder %s15, 7
    %p99 = por %p97, %p98
    %p101 = scmp.ne.s32.totalorder %s86, %s100
    %p102 = scmp.eq.s32.totalorder %s15, 0
    %p103 = por %p101, %p102
    %s104 = ssub.s32 %s16, %s28
    %p105 = scmp.eq.s32.totalorder %s104, 0
    %s107 = sadd.s32 %s106, 1
    %s108 = scalar_select %p105, %s106, %s107
    %p111 = pneg %p105
    %p112 = scmp.eq.s32.totalorder %s9, 7
    %p113 = por %p111, %p112
    %p114 = scmp.ne.s32.totalorder %s106, %s109
    %p115 = scmp.eq.s32.totalorder %s9, 0
    %p116 = por %p114, %p115
    %p117 = scmp.ne.s32.totalorder %s106, %s109
    %p118 = scmp.eq.s32.totalorder %s14, 7
    %p119 = por %p117, %p118
    %p120 = scmp.ne.s32.totalorder %s109, %s110
    %p121 = scmp.eq.s32.totalorder %s14, 0
    %p122 = por %p120, %p121
    %p123 = scmp.ne.s32.totalorder %s109, %s110
    %p124 = scmp.eq.s32.totalorder %s15, 7
    %p125 = por %p123, %p124
    %p127 = scmp.ne.s32.totalorder %s110, %s126
    %p128 = scmp.eq.s32.totalorder %s15, 0
    %p129 = por %p127, %p128
    %p130 = scmp.le.s32.totalorder 1, %s9
    %p131 = scmp.lt.s32.totalorder %s9, 9
    %p132 = pnand %p130, %p131
    %p133 = pneg %p132
    // Predicated region
    $region9: #{crnn_forward.10} parent=5 // pred_check
      _
    $region10: #{crnn_forward.10} parent=5 // pred_check_branch
      %135 = sbr.rel (%p132) target = $region12
    $region11: #{crnn_forward.10} parent=5 // pred_region
      %s136 = ssub.s32 %s9, 1
      // Predicated region
      $region13: #{crnn_forward.10} parent=11 // pred_check
        %p137 = pneg %p75
      $region14: #{crnn_forward.10} parent=11 // pred_check_branch
        %139 = sbr.rel (%p137) target = $region16
      $region15: #{crnn_forward.10} parent=11 // pred_region
        %s140 = smul.u32 36, %s19
        %p141 = scmp.lt.s32.totalorder %s140, 35
        %s142 = scalar_select %p141, %s140, 35
        %s143 = smul.addr %s142, 4
        %s144 = scalar_lea.vmem %s1, %s143
        %s145 = smul.u32 36, %s19
      $region16: #{crnn_forward.10} parent=11 // pred_fallthru
        _
      // Predicated region
      $region17: #{crnn_forward.10} parent=11 // pred_check
        %p146 = pneg %p96
      $region18: #{crnn_forward.10} parent=11 // pred_check_branch
        %148 = sbr.rel (%p146) target = $region20
      $region19: #{crnn_forward.10} parent=11 // pred_region
        _
      $region20: #{crnn_forward.10} parent=11 // pred_fallthru
        _
    $region12: #{crnn_forward.10} parent=5 // pred_fallthru
      _
    %p149 = scmp.lt.s32.totalorder %s9, 8
    // Predicated region
    $region21: #{crnn_forward.10} parent=5 // pred_check
      %p150 = pneg %p149
    $region22: #{crnn_forward.10} parent=5 // pred_check_branch
      %152 = sbr.rel (%p150) target = $region24
    $region23: #{crnn_forward.10} parent=5 // pred_region
      // Predicated region
      $region25: #{crnn_forward.10} parent=23 // pred_check
        %p153 = pneg %p43
      $region26: #{crnn_forward.10} parent=23 // pred_check_branch
        %155 = sbr.rel (%p153) target = $region28
      $region27: #{crnn_forward.10} parent=23 // pred_region
        %s156 = smul.u32 64, %s16
        %s157 = smul.u32 3, %s17
        %p158 = scmp.lt.s32.totalorder %s156, 511
        %s159 = scalar_select %p158, %s156, 511
        %p160 = scmp.lt.s32.totalorder %s157, 2
        %s161 = scalar_select %p160, %s157, 2
        %s162 = smul.addr %s159, 3
        %s163 = sadd.s32 %s161, %s162
        %s164 = smul.addr %s163, 4
        %s165 = scalar_lea.vmem %s0, %s164
        %s166 = smul.u32 64, %s16
        %s167 = smul.u32 3, %s17
      $region28: #{crnn_forward.10} parent=23 // pred_fallthru
        _
    $region24: #{crnn_forward.10} parent=5 // pred_fallthru
      _
    %p168 = scmp.le.s32.totalorder 1, %s9
    %p169 = scmp.lt.s32.totalorder %s9, 9
    %p170 = pnand %p168, %p169
    %p171 = pneg %p170
    // Predicated region
    $region29: #{crnn_forward.10} parent=5 // pred_check
      _
    $region30: #{crnn_forward.10} parent=5 // pred_check_branch
      %173 = sbr.rel (%p170) target = $region32
    $region31: #{crnn_forward.10} parent=5 // pred_region
      %s174 = ssub.s32 %s9, 1
      %s175 = smul.u32 64, %s18
      %s176 = smul.u32 3, %s19
      %p177 = scmp.lt.s32.totalorder %s175, 511
      %s178 = scalar_select %p177, %s175, 511
      %p179 = scmp.lt.s32.totalorder %s176, 2
      %s180 = scalar_select %p179, %s176, 2
      %s181 = smul.addr %s178, 3
      %s182 = sadd.s32 %s180, %s181
      %s183 = smul.addr %s182, 4
      %s184 = scalar_lea.vmem %s0, %s183
      %p185 = pneg %p49
      %p186 = pneg %p46
      %s187 = smul.u32 36, %s19
      %p188 = scmp.lt.s32.totalorder %s187, 35
      %s189 = scalar_select %p188, %s187, 35
      %s190 = smul.addr %s189, 4
      %s191 = scalar_lea.vmem %s1, %s190
      %p192 = pneg %p75
      %p193 = pneg %p72
      %p194 = pneg %p96
      %p195 = pneg %p93
      %p196 = pneg %p122
      %p197 = pneg %p119
      %s198 = smul.u32 64, %s18
      %p199 = scmp.lt.s32.totalorder %s198, 511
      %s200 = scalar_select %p199, %s198, 511
      %s201 = smul.addr %s200, 8
      %s202 = scalar_lea.vmem %s3, %s201
      %s203 = smul.u32 64, %s18
      %s204 = smul.u32 3, %s19
      %p205 = scmp.lt.s32.totalorder %s203, 511
      %s206 = scalar_select %p205, %s203, 511
      %p207 = scmp.lt.s32.totalorder %s204, 2
      %s208 = scalar_select %p207, %s204, 2
      %s209 = smul.addr %s206, 3
      %s210 = sadd.s32 %s208, %s209
      %s211 = smul.addr %s210, 4
      %s212 = scalar_lea.vmem %s0, %s211
      %s213 = smul.u32 64, %s18
      %s214 = smul.u32 3, %s19
      %s215 = smul.u32 36, %s19
      %p216 = scmp.lt.s32.totalorder %s215, 35
      %s217 = scalar_select %p216, %s215, 35
      %s218 = smul.addr %s217, 4
      %s219 = scalar_lea.vmem %s1, %s218
      %s220 = smul.u32 36, %s19
      %s221 = smul.u32 64, %s18
      %p222 = scmp.lt.s32.totalorder %s221, 511
      %s223 = scalar_select %p222, %s221, 511
      %s224 = smul.addr %s223, 8
      %s225 = scalar_lea.vmem %s3, %s224
      %s226 = smul.u32 64, %s18
      %p228 = scmp.eq.s32.totalorder %s19, 0
      // Predicated region
      $region33: #{crnn_forward.10} parent=31 // pred_check
        %p229 = pneg %p228
      $region34: #{crnn_forward.10} parent=31 // pred_check_branch
        %231 = sbr.rel (%p229) target = $region36
      $region35: #{crnn_forward.10} parent=31 // pred_region
        %vm232 = vcmask 523264
        %233 = vst.msk [vmem:[#allocation2] sm:$0xff] %vm232, 0.0
        %234 = vst.msk [vmem:[#allocation2 + $0x8] sm:$0xff] %vm232, 0.0
        %235 = vst.msk [vmem:[#allocation2 + $0x10] sm:$0xff] %vm232, 0.0
        %236 = vst.msk [vmem:[#allocation2 + $0x18] sm:$0xff] %vm232, 0.0
        %237 = vst.msk [vmem:[#allocation2 + $0x20] sm:$0xff] %vm232, 0.0
        %238 = vst.msk [vmem:[#allocation2 + $0x28] sm:$0xff] %vm232, 0.0
        %239 = vst.msk [vmem:[#allocation2 + $0x30] sm:$0xff] %vm232, 0.0
        %240 = vst.msk [vmem:[#allocation2 + $0x38] sm:$0xff] %vm232, 0.0
        %241 = vst.msk [vmem:[#allocation2 + $0x40] sm:$0xff] %vm232, 0.0
        %242 = vst.msk [vmem:[#allocation2 + $0x48] sm:$0xff] %vm232, 0.0
        %243 = vst.msk [vmem:[#allocation2 + $0x50] sm:$0xff] %vm232, 0.0
        %244 = vst.msk [vmem:[#allocation2 + $0x58] sm:$0xff] %vm232, 0.0
        %245 = vst.msk [vmem:[#allocation2 + $0x60] sm:$0xff] %vm232, 0.0
        %246 = vst.msk [vmem:[#allocation2 + $0x68] sm:$0xff] %vm232, 0.0
        %247 = vst.msk [vmem:[#allocation2 + $0x70] sm:$0xff] %vm232, 0.0
        %248 = vst.msk [vmem:[#allocation2 + $0x78] sm:$0xff] %vm232, 0.0
        %249 = vst.msk [vmem:[#allocation2 + $0x80] sm:$0xff] %vm232, 0.0
        %250 = vst.msk [vmem:[#allocation2 + $0x88] sm:$0xff] %vm232, 0.0
        %251 = vst.msk [vmem:[#allocation2 + $0x90] sm:$0xff] %vm232, 0.0
        %252 = vst.msk [vmem:[#allocation2 + $0x98] sm:$0xff] %vm232, 0.0
        %253 = vst.msk [vmem:[#allocation2 + $0xa0] sm:$0xff] %vm232, 0.0
        %254 = vst.msk [vmem:[#allocation2 + $0xa8] sm:$0xff] %vm232, 0.0
        %255 = vst.msk [vmem:[#allocation2 + $0xb0] sm:$0xff] %vm232, 0.0
        %256 = vst.msk [vmem:[#allocation2 + $0xb8] sm:$0xff] %vm232, 0.0
        %257 = vst.msk [vmem:[#allocation2 + $0xc0] sm:$0xff] %vm232, 0.0
        %258 = vst.msk [vmem:[#allocation2 + $0xc8] sm:$0xff] %vm232, 0.0
        %259 = vst.msk [vmem:[#allocation2 + $0xd0] sm:$0xff] %vm232, 0.0
        %260 = vst.msk [vmem:[#allocation2 + $0xd8] sm:$0xff] %vm232, 0.0
        %261 = vst.msk [vmem:[#allocation2 + $0xe0] sm:$0xff] %vm232, 0.0
        %262 = vst.msk [vmem:[#allocation2 + $0xe8] sm:$0xff] %vm232, 0.0
        %263 = vst.msk [vmem:[#allocation2 + $0xf0] sm:$0xff] %vm232, 0.0
        %264 = vst.msk [vmem:[#allocation2 + $0xf8] sm:$0xff] %vm232, 0.0
        %265 = vst.msk [vmem:[#allocation2 + $0x100] sm:$0xff] %vm232, 0.0
        %266 = vst.msk [vmem:[#allocation2 + $0x108] sm:$0xff] %vm232, 0.0
        %267 = vst.msk [vmem:[#allocation2 + $0x110] sm:$0xff] %vm232, 0.0
        %268 = vst.msk [vmem:[#allocation2 + $0x118] sm:$0xff] %vm232, 0.0
        %269 = vst.msk [vmem:[#allocation2 + $0x120] sm:$0xff] %vm232, 0.0
        %270 = vst.msk [vmem:[#allocation2 + $0x128] sm:$0xff] %vm232, 0.0
        %271 = vst.msk [vmem:[#allocation2 + $0x130] sm:$0xff] %vm232, 0.0
        %272 = vst.msk [vmem:[#allocation2 + $0x138] sm:$0xff] %vm232, 0.0
        %273 = vst.msk [vmem:[#allocation2 + $0x140] sm:$0xff] %vm232, 0.0
        %274 = vst.msk [vmem:[#allocation2 + $0x148] sm:$0xff] %vm232, 0.0
        %275 = vst.msk [vmem:[#allocation2 + $0x150] sm:$0xff] %vm232, 0.0
        %276 = vst.msk [vmem:[#allocation2 + $0x158] sm:$0xff] %vm232, 0.0
        %277 = vst.msk [vmem:[#allocation2 + $0x160] sm:$0xff] %vm232, 0.0
        %278 = vst.msk [vmem:[#allocation2 + $0x168] sm:$0xff] %vm232, 0.0
        %279 = vst.msk [vmem:[#allocation2 + $0x170] sm:$0xff] %vm232, 0.0
        %280 = vst.msk [vmem:[#allocation2 + $0x178] sm:$0xff] %vm232, 0.0
        %281 = vst.msk [vmem:[#allocation2 + $0x180] sm:$0xff] %vm232, 0.0
        %282 = vst.msk [vmem:[#allocation2 + $0x188] sm:$0xff] %vm232, 0.0
        %283 = vst.msk [vmem:[#allocation2 + $0x190] sm:$0xff] %vm232, 0.0
        %284 = vst.msk [vmem:[#allocation2 + $0x198] sm:$0xff] %vm232, 0.0
        %285 = vst.msk [vmem:[#allocation2 + $0x1a0] sm:$0xff] %vm232, 0.0
        %286 = vst.msk [vmem:[#allocation2 + $0x1a8] sm:$0xff] %vm232, 0.0
        %287 = vst.msk [vmem:[#allocation2 + $0x1b0] sm:$0xff] %vm232, 0.0
        %288 = vst.msk [vmem:[#allocation2 + $0x1b8] sm:$0xff] %vm232, 0.0
        %289 = vst.msk [vmem:[#allocation2 + $0x1c0] sm:$0xff] %vm232, 0.0
        %290 = vst.msk [vmem:[#allocation2 + $0x1c8] sm:$0xff] %vm232, 0.0
        %291 = vst.msk [vmem:[#allocation2 + $0x1d0] sm:$0xff] %vm232, 0.0
        %292 = vst.msk [vmem:[#allocation2 + $0x1d8] sm:$0xff] %vm232, 0.0
        %293 = vst.msk [vmem:[#allocation2 + $0x1e0] sm:$0xff] %vm232, 0.0
        %294 = vst.msk [vmem:[#allocation2 + $0x1e8] sm:$0xff] %vm232, 0.0
        %295 = vst.msk [vmem:[#allocation2 + $0x1f0] sm:$0xff] %vm232, 0.0
        %296 = vst.msk [vmem:[#allocation2 + $0x1f8] sm:$0xff] %vm232, 0.0
      $region36: #{crnn_forward.10} parent=31 // pred_fallthru
        _
      %v297 = vld [vmem:[#allocation2] sm:$0xff]
      %v298 = vld [vmem:[#allocation2 + $0x8] sm:$0xff]
      %v299 = vld [vmem:[#allocation2 + $0x10] sm:$0xff]
      %v300 = vld [vmem:[#allocation2 + $0x18] sm:$0xff]
      %v301 = vld [vmem:[#allocation2 + $0x20] sm:$0xff]
      %v302 = vld [vmem:[#allocation2 + $0x28] sm:$0xff]
      %v303 = vld [vmem:[#allocation2 + $0x30] sm:$0xff]
      %v304 = vld [vmem:[#allocation2 + $0x38] sm:$0xff]
      %v305 = vld [vmem:[#allocation2 + $0x40] sm:$0xff]
      %v306 = vld [vmem:[#allocation2 + $0x48] sm:$0xff]
      %v307 = vld [vmem:[#allocation2 + $0x50] sm:$0xff]
      %v308 = vld [vmem:[#allocation2 + $0x58] sm:$0xff]
      %v309 = vld [vmem:[#allocation2 + $0x60] sm:$0xff]
      %v310 = vld [vmem:[#allocation2 + $0x68] sm:$0xff]
      %v311 = vld [vmem:[#allocation2 + $0x70] sm:$0xff]
      %v312 = vld [vmem:[#allocation2 + $0x78] sm:$0xff]
      %v313 = vld [vmem:[#allocation2 + $0x80] sm:$0xff]
      %v314 = vld [vmem:[#allocation2 + $0x88] sm:$0xff]
      %v315 = vld [vmem:[#allocation2 + $0x90] sm:$0xff]
      %v316 = vld [vmem:[#allocation2 + $0x98] sm:$0xff]
      %v317 = vld [vmem:[#allocation2 + $0xa0] sm:$0xff]
      %v318 = vld [vmem:[#allocation2 + $0xa8] sm:$0xff]
      %v319 = vld [vmem:[#allocation2 + $0xb0] sm:$0xff]
      %v320 = vld [vmem:[#allocation2 + $0xb8] sm:$0xff]
      %v321 = vld [vmem:[#allocation2 + $0xc0] sm:$0xff]
      %v322 = vld [vmem:[#allocation2 + $0xc8] sm:$0xff]
      %v323 = vld [vmem:[#allocation2 + $0xd0] sm:$0xff]
      %v324 = vld [vmem:[#allocation2 + $0xd8] sm:$0xff]
      %v325 = vld [vmem:[#allocation2 + $0xe0] sm:$0xff]
      %v326 = vld [vmem:[#allocation2 + $0xe8] sm:$0xff]
      %v327 = vld [vmem:[#allocation2 + $0xf0] sm:$0xff]
      %v328 = vld [vmem:[#allocation2 + $0xf8] sm:$0xff]
      %v329 = vld [vmem:[#allocation2 + $0x100] sm:$0xff]
      %v330 = vld [vmem:[#allocation2 + $0x108] sm:$0xff]
      %v331 = vld [vmem:[#allocation2 + $0x110] sm:$0xff]
      %v332 = vld [vmem:[#allocation2 + $0x118] sm:$0xff]
      %v333 = vld [vmem:[#allocation2 + $0x120] sm:$0xff]
      %v334 = vld [vmem:[#allocation2 + $0x128] sm:$0xff]
      %v335 = vld [vmem:[#allocation2 + $0x130] sm:$0xff]
      %v336 = vld [vmem:[#allocation2 + $0x138] sm:$0xff]
      %v337 = vld [vmem:[#allocation2 + $0x140] sm:$0xff]
      %v338 = vld [vmem:[#allocation2 + $0x148] sm:$0xff]
      %v339 = vld [vmem:[#allocation2 + $0x150] sm:$0xff]
      %v340 = vld [vmem:[#allocation2 + $0x158] sm:$0xff]
      %v341 = vld [vmem:[#allocation2 + $0x160] sm:$0xff]
      %v342 = vld [vmem:[#allocation2 + $0x168] sm:$0xff]
      %v343 = vld [vmem:[#allocation2 + $0x170] sm:$0xff]
      %v344 = vld [vmem:[#allocation2 + $0x178] sm:$0xff]
      %v345 = vld [vmem:[#allocation2 + $0x180] sm:$0xff]
      %v346 = vld [vmem:[#allocation2 + $0x188] sm:$0xff]
      %v347 = vld [vmem:[#allocation2 + $0x190] sm:$0xff]
      %v348 = vld [vmem:[#allocation2 + $0x198] sm:$0xff]
      %v349 = vld [vmem:[#allocation2 + $0x1a0] sm:$0xff]
      %v350 = vld [vmem:[#allocation2 + $0x1a8] sm:$0xff]
      %v351 = vld [vmem:[#allocation2 + $0x1b0] sm:$0xff]
      %v352 = vld [vmem:[#allocation2 + $0x1b8] sm:$0xff]
      %v353 = vld [vmem:[#allocation2 + $0x1c0] sm:$0xff]
      %v354 = vld [vmem:[#allocation2 + $0x1c8] sm:$0xff]
      %v355 = vld [vmem:[#allocation2 + $0x1d0] sm:$0xff]
      %v356 = vld [vmem:[#allocation2 + $0x1d8] sm:$0xff]
      %v357 = vld [vmem:[#allocation2 + $0x1e0] sm:$0xff]
      %v358 = vld [vmem:[#allocation2 + $0x1e8] sm:$0xff]
      %v359 = vld [vmem:[#allocation2 + $0x1f0] sm:$0xff]
      %v360 = vld [vmem:[#allocation2 + $0x1f8] sm:$0xff]
      %v361 = vld [vmem:[%s212] sm:$0xff]
      %v362 = vld [vmem:[%s212 + $0x8] sm:$0xf]
      %v363 = vld [vmem:[%s212 + $0xc] sm:$0xff]
      %v364 = vld [vmem:[%s212 + $0x14] sm:$0xf]
      %v365 = vld [vmem:[%s212 + $0x18] sm:$0xff]
      %v366 = vld [vmem:[%s212 + $0x20] sm:$0xf]
      %v367 = vld [vmem:[%s212 + $0x24] sm:$0xff]
      %v368 = vld [vmem:[%s212 + $0x2c] sm:$0xf]
      %v369 = vld [vmem:[%s212 + $0x30] sm:$0xff]
      %v370 = vld [vmem:[%s212 + $0x38] sm:$0xf]
      %v371 = vld [vmem:[%s212 + $0x3c] sm:$0xff]
      %v372 = vld [vmem:[%s212 + $0x44] sm:$0xf]
      %v373 = vld [vmem:[%s212 + $0x48] sm:$0xff]
      %v374 = vld [vmem:[%s212 + $0x50] sm:$0xf]
      %v375 = vld [vmem:[%s212 + $0x54] sm:$0xff]
      %v376 = vld [vmem:[%s212 + $0x5c] sm:$0xf]
      %v377 = vld [vmem:[%s212 + $0x60] sm:$0xff]
      %v378 = vld [vmem:[%s212 + $0x68] sm:$0xf]
      %v379 = vld [vmem:[%s212 + $0x6c] sm:$0xff]
      %v380 = vld [vmem:[%s212 + $0x74] sm:$0xf]
      %v381 = vld [vmem:[%s212 + $0x78] sm:$0xff]
      %v382 = vld [vmem:[%s212 + $0x80] sm:$0xf]
      %v383 = vld [vmem:[%s212 + $0x84] sm:$0xff]
      %v384 = vld [vmem:[%s212 + $0x8c] sm:$0xf]
      %v385 = vld [vmem:[%s212 + $0x90] sm:$0xff]
      %v386 = vld [vmem:[%s212 + $0x98] sm:$0xf]
      %v387 = vld [vmem:[%s212 + $0x9c] sm:$0xff]
      %v388 = vld [vmem:[%s212 + $0xa4] sm:$0xf]
      %v389 = vld [vmem:[%s212 + $0xa8] sm:$0xff]
      %v390 = vld [vmem:[%s212 + $0xb0] sm:$0xf]
      %v391 = vld [vmem:[%s212 + $0xb4] sm:$0xff]
      %v392 = vld [vmem:[%s212 + $0xbc] sm:$0xf]
      %v393 = vld [vmem:[%s212 + $0xc0] sm:$0xff]
      %v394 = vld [vmem:[%s212 + $0xc8] sm:$0xf]
      %v395 = vld [vmem:[%s212 + $0xcc] sm:$0xff]
      %v396 = vld [vmem:[%s212 + $0xd4] sm:$0xf]
      %v397 = vld [vmem:[%s212 + $0xd8] sm:$0xff]
      %v398 = vld [vmem:[%s212 + $0xe0] sm:$0xf]
      %v399 = vld [vmem:[%s212 + $0xe4] sm:$0xff]
      %v400 = vld [vmem:[%s212 + $0xec] sm:$0xf]
      %v401 = vld [vmem:[%s212 + $0xf0] sm:$0xff]
      %v402 = vld [vmem:[%s212 + $0xf8] sm:$0xf]
      %v403 = vld [vmem:[%s212 + $0xfc] sm:$0xff]
      %v404 = vld [vmem:[%s212 + $0x104] sm:$0xf]
      %v405 = vld [vmem:[%s212 + $0x108] sm:$0xff]
      %v406 = vld [vmem:[%s212 + $0x110] sm:$0xf]
      %v407 = vld [vmem:[%s212 + $0x114] sm:$0xff]
      %v408 = vld [vmem:[%s212 + $0x11c] sm:$0xf]
      %v409 = vld [vmem:[%s212 + $0x120] sm:$0xff]
      %v410 = vld [vmem:[%s212 + $0x128] sm:$0xf]
      %v411 = vld [vmem:[%s212 + $0x12c] sm:$0xff]
      %v412 = vld [vmem:[%s212 + $0x134] sm:$0xf]
      %v413 = vld [vmem:[%s212 + $0x138] sm:$0xff]
      %v414 = vld [vmem:[%s212 + $0x140] sm:$0xf]
      %v415 = vld [vmem:[%s212 + $0x144] sm:$0xff]
      %v416 = vld [vmem:[%s212 + $0x14c] sm:$0xf]
      %v417 = vld [vmem:[%s212 + $0x150] sm:$0xff]
      %v418 = vld [vmem:[%s212 + $0x158] sm:$0xf]
      %v419 = vld [vmem:[%s212 + $0x15c] sm:$0xff]
      %v420 = vld [vmem:[%s212 + $0x164] sm:$0xf]
      %v421 = vld [vmem:[%s212 + $0x168] sm:$0xff]
      %v422 = vld [vmem:[%s212 + $0x170] sm:$0xf]
      %v423 = vld [vmem:[%s212 + $0x174] sm:$0xff]
      %v424 = vld [vmem:[%s212 + $0x17c] sm:$0xf]
      %v425 = vld [vmem:[%s212 + $0x180] sm:$0xff]
      %v426 = vld [vmem:[%s212 + $0x188] sm:$0xf]
      %v427 = vld [vmem:[%s212 + $0x18c] sm:$0xff]
      %v428 = vld [vmem:[%s212 + $0x194] sm:$0xf]
      %v429 = vld [vmem:[%s212 + $0x198] sm:$0xff]
      %v430 = vld [vmem:[%s212 + $0x1a0] sm:$0xf]
      %v431 = vld [vmem:[%s212 + $0x1a4] sm:$0xff]
      %v432 = vld [vmem:[%s212 + $0x1ac] sm:$0xf]
      %v433 = vld [vmem:[%s212 + $0x1b0] sm:$0xff]
      %v434 = vld [vmem:[%s212 + $0x1b8] sm:$0xf]
      %v435 = vld [vmem:[%s212 + $0x1bc] sm:$0xff]
      %v436 = vld [vmem:[%s212 + $0x1c4] sm:$0xf]
      %v437 = vld [vmem:[%s212 + $0x1c8] sm:$0xff]
      %v438 = vld [vmem:[%s212 + $0x1d0] sm:$0xf]
      %v439 = vld [vmem:[%s212 + $0x1d4] sm:$0xff]
      %v440 = vld [vmem:[%s212 + $0x1dc] sm:$0xf]
      %v441 = vld [vmem:[%s212 + $0x1e0] sm:$0xff]
      %v442 = vld [vmem:[%s212 + $0x1e8] sm:$0xf]
      %v443 = vld [vmem:[%s212 + $0x1ec] sm:$0xff]
      %v444 = vld [vmem:[%s212 + $0x1f4] sm:$0xf]
      %v445 = vld [vmem:[%s212 + $0x1f8] sm:$0xff]
      %v446 = vld [vmem:[%s212 + $0x200] sm:$0xf]
      %v447 = vld [vmem:[%s212 + $0x204] sm:$0xff]
      %v448 = vld [vmem:[%s212 + $0x20c] sm:$0xf]
      %v449 = vld [vmem:[%s212 + $0x210] sm:$0xff]
      %v450 = vld [vmem:[%s212 + $0x218] sm:$0xf]
      %v451 = vld [vmem:[%s212 + $0x21c] sm:$0xff]
      %v452 = vld [vmem:[%s212 + $0x224] sm:$0xf]
      %v453 = vld [vmem:[%s212 + $0x228] sm:$0xff]
      %v454 = vld [vmem:[%s212 + $0x230] sm:$0xf]
      %v455 = vld [vmem:[%s212 + $0x234] sm:$0xff]
      %v456 = vld [vmem:[%s212 + $0x23c] sm:$0xf]
      %v457 = vld [vmem:[%s212 + $0x240] sm:$0xff]
      %v458 = vld [vmem:[%s212 + $0x248] sm:$0xf]
      %v459 = vld [vmem:[%s212 + $0x24c] sm:$0xff]
      %v460 = vld [vmem:[%s212 + $0x254] sm:$0xf]
      %v461 = vld [vmem:[%s212 + $0x258] sm:$0xff]
      %v462 = vld [vmem:[%s212 + $0x260] sm:$0xf]
      %v463 = vld [vmem:[%s212 + $0x264] sm:$0xff]
      %v464 = vld [vmem:[%s212 + $0x26c] sm:$0xf]
      %v465 = vld [vmem:[%s212 + $0x270] sm:$0xff]
      %v466 = vld [vmem:[%s212 + $0x278] sm:$0xf]
      %v467 = vld [vmem:[%s212 + $0x27c] sm:$0xff]
      %v468 = vld [vmem:[%s212 + $0x284] sm:$0xf]
      %v469 = vld [vmem:[%s212 + $0x288] sm:$0xff]
      %v470 = vld [vmem:[%s212 + $0x290] sm:$0xf]
      %v471 = vld [vmem:[%s212 + $0x294] sm:$0xff]
      %v472 = vld [vmem:[%s212 + $0x29c] sm:$0xf]
      %v473 = vld [vmem:[%s212 + $0x2a0] sm:$0xff]
      %v474 = vld [vmem:[%s212 + $0x2a8] sm:$0xf]
      %v475 = vld [vmem:[%s212 + $0x2ac] sm:$0xff]
      %v476 = vld [vmem:[%s212 + $0x2b4] sm:$0xf]
      %v477 = vld [vmem:[%s212 + $0x2b8] sm:$0xff]
      %v478 = vld [vmem:[%s212 + $0x2c0] sm:$0xf]
      %v479 = vld [vmem:[%s212 + $0x2c4] sm:$0xff]
      %v480 = vld [vmem:[%s212 + $0x2cc] sm:$0xf]
      %v481 = vld [vmem:[%s212 + $0x2d0] sm:$0xff]
      %v482 = vld [vmem:[%s212 + $0x2d8] sm:$0xf]
      %v483 = vld [vmem:[%s212 + $0x2dc] sm:$0xff]
      %v484 = vld [vmem:[%s212 + $0x2e4] sm:$0xf]
      %v485 = vld [vmem:[%s212 + $0x2e8] sm:$0xff]
      %v486 = vld [vmem:[%s212 + $0x2f0] sm:$0xf]
      %v487 = vld [vmem:[%s212 + $0x2f4] sm:$0xff]
      %v488 = vld [vmem:[%s212 + $0x2fc] sm:$0xf]
      %v489 = vld [vmem:[%s219] sm:$0xf]
      %v490 = vld [vmem:[%s219 + $0x4] sm:$0xf]
      %v491 = vld [vmem:[%s219 + $0x8] sm:$0xf]
      %v492 = vld [vmem:[%s219 + $0xc] sm:$0xf]
      %v493 = vld [vmem:[%s219 + $0x10] sm:$0xf]
      %v494 = vld [vmem:[%s219 + $0x14] sm:$0xf]
      %v495 = vld [vmem:[%s219 + $0x18] sm:$0xf]
      %v496 = vld [vmem:[%s219 + $0x1c] sm:$0xf]
      %v497 = vld [vmem:[%s219 + $0x20] sm:$0xf]
      %v498 = vld [vmem:[%s219 + $0x24] sm:$0xf]
      %v499 = vld [vmem:[%s219 + $0x28] sm:$0xf]
      %v500 = vld [vmem:[%s219 + $0x2c] sm:$0xf]
      %v501 = vld [vmem:[%s219 + $0x30] sm:$0xf]
      %v502 = vld [vmem:[%s219 + $0x34] sm:$0xf]
      %v503 = vld [vmem:[%s219 + $0x38] sm:$0xf]
      %v504 = vld [vmem:[%s219 + $0x3c] sm:$0xf]
      %v505 = vld [vmem:[%s219 + $0x40] sm:$0xf]
      %v506 = vld [vmem:[%s219 + $0x44] sm:$0xf]
      %v507 = vld [vmem:[%s219 + $0x48] sm:$0xf]
      %v508 = vld [vmem:[%s219 + $0x4c] sm:$0xf]
      %v509 = vld [vmem:[%s219 + $0x50] sm:$0xf]
      %v510 = vld [vmem:[%s219 + $0x54] sm:$0xf]
      %v511 = vld [vmem:[%s219 + $0x58] sm:$0xf]
      %v512 = vld [vmem:[%s219 + $0x5c] sm:$0xf]
      %v513 = vld [vmem:[%s219 + $0x60] sm:$0xf]
      %v514 = vld [vmem:[%s219 + $0x64] sm:$0xf]
      %v515 = vld [vmem:[%s219 + $0x68] sm:$0xf]
      %v516 = vld [vmem:[%s219 + $0x6c] sm:$0xf]
      %v517 = vld [vmem:[%s219 + $0x70] sm:$0xf]
      %v518 = vld [vmem:[%s219 + $0x74] sm:$0xf]
      %v519 = vld [vmem:[%s219 + $0x78] sm:$0xf]
      %v520 = vld [vmem:[%s219 + $0x7c] sm:$0xf]
      %v521 = vld [vmem:[%s219 + $0x80] sm:$0xf]
      %v522 = vld [vmem:[%s219 + $0x84] sm:$0xf]
      %v523 = vld [vmem:[%s219 + $0x88] sm:$0xf]
      %v524 = vld [vmem:[%s219 + $0x8c] sm:$0xf]
      %v653 = vunpack.c.l.b16 %v361
      %v654 = vunpack.c.h.b16 %v361
      %v655 = vunpack.c.l.b16 %v362
      %v656 = vunpack.c.l.b16 %v363
      %v657 = vunpack.c.h.b16 %v363
      %v658 = vunpack.c.l.b16 %v364
      %v659 = vunpack.c.l.b16 %v365
      %v660 = vunpack.c.h.b16 %v365
      %v661 = vunpack.c.l.b16 %v366
      %v662 = vunpack.c.l.b16 %v367
      %v663 = vunpack.c.h.b16 %v367
      %v664 = vunpack.c.l.b16 %v368
      %v665 = vunpack.c.l.b16 %v369
      %v666 = vunpack.c.h.b16 %v369
      %v667 = vunpack.c.l.b16 %v370
      %v668 = vunpack.c.l.b16 %v371
      %v669 = vunpack.c.h.b16 %v371
      %v670 = vunpack.c.l.b16 %v372
      %v671 = vunpack.c.l.b16 %v373
      %v672 = vunpack.c.h.b16 %v373
      %v673 = vunpack.c.l.b16 %v374
      %v674 = vunpack.c.l.b16 %v375
      %v675 = vunpack.c.h.b16 %v375
      %v676 = vunpack.c.l.b16 %v376
      %v677 = vunpack.c.l.b16 %v377
      %v678 = vunpack.c.h.b16 %v377
      %v679 = vunpack.c.l.b16 %v378
      %v680 = vunpack.c.l.b16 %v379
      %v681 = vunpack.c.h.b16 %v379
      %v682 = vunpack.c.l.b16 %v380
      %v683 = vunpack.c.l.b16 %v381
      %v684 = vunpack.c.h.b16 %v381
      %v685 = vunpack.c.l.b16 %v382
      %v686 = vunpack.c.l.b16 %v383
      %v687 = vunpack.c.h.b16 %v383
      %v688 = vunpack.c.l.b16 %v384
      %v689 = vunpack.c.l.b16 %v385
      %v690 = vunpack.c.h.b16 %v385
      %v691 = vunpack.c.l.b16 %v386
      %v692 = vunpack.c.l.b16 %v387
      %v693 = vunpack.c.h.b16 %v387
      %v694 = vunpack.c.l.b16 %v388
      %v695 = vunpack.c.l.b16 %v389
      %v696 = vunpack.c.h.b16 %v389
      %v697 = vunpack.c.l.b16 %v390
      %v698 = vunpack.c.l.b16 %v391
      %v699 = vunpack.c.h.b16 %v391
      %v700 = vunpack.c.l.b16 %v392
      %v701 = vunpack.c.l.b16 %v393
      %v702 = vunpack.c.h.b16 %v393
      %v703 = vunpack.c.l.b16 %v394
      %v704 = vunpack.c.l.b16 %v395
      %v705 = vunpack.c.h.b16 %v395
      %v706 = vunpack.c.l.b16 %v396
      %v707 = vunpack.c.l.b16 %v397
      %v708 = vunpack.c.h.b16 %v397
      %v709 = vunpack.c.l.b16 %v398
      %v710 = vunpack.c.l.b16 %v399
      %v711 = vunpack.c.h.b16 %v399
      %v712 = vunpack.c.l.b16 %v400
      %v713 = vunpack.c.l.b16 %v401
      %v714 = vunpack.c.h.b16 %v401
      %v715 = vunpack.c.l.b16 %v402
      %v716 = vunpack.c.l.b16 %v403
      %v717 = vunpack.c.h.b16 %v403
      %v718 = vunpack.c.l.b16 %v404
      %v719 = vunpack.c.l.b16 %v405
      %v720 = vunpack.c.h.b16 %v405
      %v721 = vunpack.c.l.b16 %v406
      %v722 = vunpack.c.l.b16 %v407
      %v723 = vunpack.c.h.b16 %v407
      %v724 = vunpack.c.l.b16 %v408
      %v725 = vunpack.c.l.b16 %v409
      %v726 = vunpack.c.h.b16 %v409
      %v727 = vunpack.c.l.b16 %v410
      %v728 = vunpack.c.l.b16 %v411
      %v729 = vunpack.c.h.b16 %v411
      %v730 = vunpack.c.l.b16 %v412
      %v731 = vunpack.c.l.b16 %v413
      %v732 = vunpack.c.h.b16 %v413
      %v733 = vunpack.c.l.b16 %v414
      %v734 = vunpack.c.l.b16 %v415
      %v735 = vunpack.c.h.b16 %v415
      %v736 = vunpack.c.l.b16 %v416
      %v737 = vunpack.c.l.b16 %v417
      %v738 = vunpack.c.h.b16 %v417
      %v739 = vunpack.c.l.b16 %v418
      %v740 = vunpack.c.l.b16 %v419
      %v741 = vunpack.c.h.b16 %v419
      %v742 = vunpack.c.l.b16 %v420
      %v743 = vunpack.c.l.b16 %v421
      %v744 = vunpack.c.h.b16 %v421
      %v745 = vunpack.c.l.b16 %v422
      %v746 = vunpack.c.l.b16 %v423
      %v747 = vunpack.c.h.b16 %v423
      %v748 = vunpack.c.l.b16 %v424
      %v749 = vunpack.c.l.b16 %v425
      %v750 = vunpack.c.h.b16 %v425
      %v751 = vunpack.c.l.b16 %v426
      %v752 = vunpack.c.l.b16 %v427
      %v753 = vunpack.c.h.b16 %v427
      %v754 = vunpack.c.l.b16 %v428
      %v755 = vunpack.c.l.b16 %v429
      %v756 = vunpack.c.h.b16 %v429
      %v757 = vunpack.c.l.b16 %v430
      %v758 = vunpack.c.l.b16 %v431
      %v759 = vunpack.c.h.b16 %v431
      %v760 = vunpack.c.l.b16 %v432
      %v761 = vunpack.c.l.b16 %v433
      %v762 = vunpack.c.h.b16 %v433
      %v763 = vunpack.c.l.b16 %v434
      %v764 = vunpack.c.l.b16 %v435
      %v765 = vunpack.c.h.b16 %v435
      %v766 = vunpack.c.l.b16 %v436
      %v767 = vunpack.c.l.b16 %v437
      %v768 = vunpack.c.h.b16 %v437
      %v769 = vunpack.c.l.b16 %v438
      %v770 = vunpack.c.l.b16 %v439
      %v771 = vunpack.c.h.b16 %v439
      %v772 = vunpack.c.l.b16 %v440
      %v773 = vunpack.c.l.b16 %v441
      %v774 = vunpack.c.h.b16 %v441
      %v775 = vunpack.c.l.b16 %v442
      %v776 = vunpack.c.l.b16 %v443
      %v777 = vunpack.c.h.b16 %v443
      %v778 = vunpack.c.l.b16 %v444
      %v779 = vunpack.c.l.b16 %v445
      %v780 = vunpack.c.h.b16 %v445
      %v781 = vunpack.c.l.b16 %v446
      %v782 = vunpack.c.l.b16 %v447
      %v783 = vunpack.c.h.b16 %v447
      %v784 = vunpack.c.l.b16 %v448
      %v785 = vunpack.c.l.b16 %v449
      %v786 = vunpack.c.h.b16 %v449
      %v787 = vunpack.c.l.b16 %v450
      %v788 = vunpack.c.l.b16 %v451
      %v789 = vunpack.c.h.b16 %v451
      %v790 = vunpack.c.l.b16 %v452
      %v791 = vunpack.c.l.b16 %v453
      %v792 = vunpack.c.h.b16 %v453
      %v793 = vunpack.c.l.b16 %v454
      %v794 = vunpack.c.l.b16 %v455
      %v795 = vunpack.c.h.b16 %v455
      %v796 = vunpack.c.l.b16 %v456
      %v797 = vunpack.c.l.b16 %v457
      %v798 = vunpack.c.h.b16 %v457
      %v799 = vunpack.c.l.b16 %v458
      %v800 = vunpack.c.l.b16 %v459
      %v801 = vunpack.c.h.b16 %v459
      %v802 = vunpack.c.l.b16 %v460
      %v803 = vunpack.c.l.b16 %v461
      %v804 = vunpack.c.h.b16 %v461
      %v805 = vunpack.c.l.b16 %v462
      %v806 = vunpack.c.l.b16 %v463
      %v807 = vunpack.c.h.b16 %v463
      %v808 = vunpack.c.l.b16 %v464
      %v809 = vunpack.c.l.b16 %v465
      %v810 = vunpack.c.h.b16 %v465
      %v811 = vunpack.c.l.b16 %v466
      %v812 = vunpack.c.l.b16 %v467
      %v813 = vunpack.c.h.b16 %v467
      %v814 = vunpack.c.l.b16 %v468
      %v815 = vunpack.c.l.b16 %v469
      %v816 = vunpack.c.h.b16 %v469
      %v817 = vunpack.c.l.b16 %v470
      %v818 = vunpack.c.l.b16 %v471
      %v819 = vunpack.c.h.b16 %v471
      %v820 = vunpack.c.l.b16 %v472
      %v821 = vunpack.c.l.b16 %v473
      %v822 = vunpack.c.h.b16 %v473
      %v823 = vunpack.c.l.b16 %v474
      %v824 = vunpack.c.l.b16 %v475
      %v825 = vunpack.c.h.b16 %v475
      %v826 = vunpack.c.l.b16 %v476
      %v827 = vunpack.c.l.b16 %v477
      %v828 = vunpack.c.h.b16 %v477
      %v829 = vunpack.c.l.b16 %v478
      %v830 = vunpack.c.l.b16 %v479
      %v831 = vunpack.c.h.b16 %v479
      %v832 = vunpack.c.l.b16 %v480
      %v833 = vunpack.c.l.b16 %v481
      %v834 = vunpack.c.h.b16 %v481
      %v835 = vunpack.c.l.b16 %v482
      %v836 = vunpack.c.l.b16 %v483
      %v837 = vunpack.c.h.b16 %v483
      %v838 = vunpack.c.l.b16 %v484
      %v839 = vunpack.c.l.b16 %v485
      %v840 = vunpack.c.h.b16 %v485
      %v841 = vunpack.c.l.b16 %v486
      %v842 = vunpack.c.l.b16 %v487
      %v843 = vunpack.c.h.b16 %v487
      %v844 = vunpack.c.l.b16 %v488
      %v845 = vpack.c.b16 %v656, %v653
      %v846 = vpack.c.b16 %v657, %v654
      %v847 = vpack.c.b16 %v658, %v655
      %v848 = vpack.c.b16 %v662, %v659
      %v849 = vpack.c.b16 %v663, %v660
      %v850 = vpack.c.b16 %v664, %v661
      %v851 = vpack.c.b16 %v668, %v665
      %v852 = vpack.c.b16 %v669, %v666
      %v853 = vpack.c.b16 %v670, %v667
      %v854 = vpack.c.b16 %v674, %v671
      %v855 = vpack.c.b16 %v675, %v672
      %v856 = vpack.c.b16 %v676, %v673
      %v857 = vpack.c.b16 %v680, %v677
      %v858 = vpack.c.b16 %v681, %v678
      %v859 = vpack.c.b16 %v682, %v679
      %v860 = vpack.c.b16 %v686, %v683
      %v861 = vpack.c.b16 %v687, %v684
      %v862 = vpack.c.b16 %v688, %v685
      %v863 = vpack.c.b16 %v692, %v689
      %v864 = vpack.c.b16 %v693, %v690
      %v865 = vpack.c.b16 %v694, %v691
      %v866 = vpack.c.b16 %v698, %v695
      %v867 = vpack.c.b16 %v699, %v696
      %v868 = vpack.c.b16 %v700, %v697
      %v869 = vpack.c.b16 %v704, %v701
      %v870 = vpack.c.b16 %v705, %v702
      %v871 = vpack.c.b16 %v706, %v703
      %v872 = vpack.c.b16 %v710, %v707
      %v873 = vpack.c.b16 %v711, %v708
      %v874 = vpack.c.b16 %v712, %v709
      %v875 = vpack.c.b16 %v716, %v713
      %v876 = vpack.c.b16 %v717, %v714
      %v877 = vpack.c.b16 %v718, %v715
      %v878 = vpack.c.b16 %v722, %v719
      %v879 = vpack.c.b16 %v723, %v720
      %v880 = vpack.c.b16 %v724, %v721
      %v881 = vpack.c.b16 %v728, %v725
      %v882 = vpack.c.b16 %v729, %v726
      %v883 = vpack.c.b16 %v730, %v727
      %v884 = vpack.c.b16 %v734, %v731
      %v885 = vpack.c.b16 %v735, %v732
      %v886 = vpack.c.b16 %v736, %v733
      %v887 = vpack.c.b16 %v740, %v737
      %v888 = vpack.c.b16 %v741, %v738
      %v889 = vpack.c.b16 %v742, %v739
      %v890 = vpack.c.b16 %v746, %v743
      %v891 = vpack.c.b16 %v747, %v744
      %v892 = vpack.c.b16 %v748, %v745
      %v893 = vpack.c.b16 %v752, %v749
      %v894 = vpack.c.b16 %v753, %v750
      %v895 = vpack.c.b16 %v754, %v751
      %v896 = vpack.c.b16 %v758, %v755
      %v897 = vpack.c.b16 %v759, %v756
      %v898 = vpack.c.b16 %v760, %v757
      %v899 = vpack.c.b16 %v764, %v761
      %v900 = vpack.c.b16 %v765, %v762
      %v901 = vpack.c.b16 %v766, %v763
      %v902 = vpack.c.b16 %v770, %v767
      %v903 = vpack.c.b16 %v771, %v768
      %v904 = vpack.c.b16 %v772, %v769
      %v905 = vpack.c.b16 %v776, %v773
      %v906 = vpack.c.b16 %v777, %v774
      %v907 = vpack.c.b16 %v778, %v775
      %v908 = vpack.c.b16 %v782, %v779
      %v909 = vpack.c.b16 %v783, %v780
      %v910 = vpack.c.b16 %v784, %v781
      %v911 = vpack.c.b16 %v788, %v785
      %v912 = vpack.c.b16 %v789, %v786
      %v913 = vpack.c.b16 %v790, %v787
      %v914 = vpack.c.b16 %v794, %v791
      %v915 = vpack.c.b16 %v795, %v792
      %v916 = vpack.c.b16 %v796, %v793
      %v917 = vpack.c.b16 %v800, %v797
      %v918 = vpack.c.b16 %v801, %v798
      %v919 = vpack.c.b16 %v802, %v799
      %v920 = vpack.c.b16 %v806, %v803
      %v921 = vpack.c.b16 %v807, %v804
      %v922 = vpack.c.b16 %v808, %v805
      %v923 = vpack.c.b16 %v812, %v809
      %v924 = vpack.c.b16 %v813, %v810
      %v925 = vpack.c.b16 %v814, %v811
      %v926 = vpack.c.b16 %v818, %v815
      %v927 = vpack.c.b16 %v819, %v816
      %v928 = vpack.c.b16 %v820, %v817
      %v929 = vpack.c.b16 %v824, %v821
      %v930 = vpack.c.b16 %v825, %v822
      %v931 = vpack.c.b16 %v826, %v823
      %v932 = vpack.c.b16 %v830, %v827
      %v933 = vpack.c.b16 %v831, %v828
      %v934 = vpack.c.b16 %v832, %v829
      %v935 = vpack.c.b16 %v836, %v833
      %v936 = vpack.c.b16 %v837, %v834
      %v937 = vpack.c.b16 %v838, %v835
      %v938 = vpack.c.b16 %v842, %v839
      %v939 = vpack.c.b16 %v843, %v840
      %v940 = vpack.c.b16 %v844, %v841
      %v1041 = vunpack.c.l.b16 %v489
      %v1042 = vunpack.c.l.b16 %v490
      %v1043 = vunpack.c.l.b16 %v491
      %v1044 = vunpack.c.l.b16 %v492
      %v1045 = vunpack.c.l.b16 %v493
      %v1046 = vunpack.c.l.b16 %v494
      %v1047 = vunpack.c.l.b16 %v495
      %v1048 = vunpack.c.l.b16 %v496
      %v1049 = vunpack.c.l.b16 %v497
      %v1050 = vunpack.c.l.b16 %v498
      %v1051 = vunpack.c.l.b16 %v499
      %v1052 = vunpack.c.l.b16 %v500
      %v1053 = vunpack.c.l.b16 %v501
      %v1054 = vunpack.c.l.b16 %v502
      %v1055 = vunpack.c.l.b16 %v503
      %v1056 = vunpack.c.l.b16 %v504
      %v1057 = vunpack.c.l.b16 %v505
      %v1058 = vunpack.c.l.b16 %v506
      %v1059 = vunpack.c.l.b16 %v507
      %v1060 = vunpack.c.l.b16 %v508
      %v1061 = vunpack.c.l.b16 %v509
      %v1062 = vunpack.c.l.b16 %v510
      %v1063 = vunpack.c.l.b16 %v511
      %v1064 = vunpack.c.l.b16 %v512
      %v1065 = vunpack.c.l.b16 %v513
      %v1066 = vunpack.c.l.b16 %v514
      %v1067 = vunpack.c.l.b16 %v515
      %v1068 = vunpack.c.l.b16 %v516
      %v1069 = vunpack.c.l.b16 %v517
      %v1070 = vunpack.c.l.b16 %v518
      %v1071 = vunpack.c.l.b16 %v519
      %v1072 = vunpack.c.l.b16 %v520
      %v1073 = vunpack.c.l.b16 %v521
      %v1074 = vunpack.c.l.b16 %v522
      %v1075 = vunpack.c.l.b16 %v523
      %v1076 = vunpack.c.l.b16 %v524
      %v1077 = vpack.c.b16 %v1042, %v1041
      %v1078 = vpack.c.b16 %v1044, %v1043
      %v1079 = vpack.c.b16 %v1046, %v1045
      %v1080 = vpack.c.b16 %v1048, %v1047
      %v1081 = vpack.c.b16 %v1050, %v1049
      %v1082 = vpack.c.b16 %v1052, %v1051
      %v1083 = vpack.c.b16 %v1054, %v1053
      %v1084 = vpack.c.b16 %v1056, %v1055
      %v1085 = vpack.c.b16 %v1058, %v1057
      %v1086 = vpack.c.b16 %v1060, %v1059
      %v1087 = vpack.c.b16 %v1062, %v1061
      %v1088 = vpack.c.b16 %v1064, %v1063
      %v1089 = vpack.c.b16 %v1066, %v1065
      %v1090 = vpack.c.b16 %v1068, %v1067
      %v1091 = vpack.c.b16 %v1070, %v1069
      %v1092 = vpack.c.b16 %v1072, %v1071
      %v1093 = vpack.c.b16 %v1074, %v1073
      %v1094 = vpack.c.b16 %v1076, %v1075
      %vm1113 = vcmask 261120
      %v1115 = vsel %vm1113, %v847, 0
      %v1118 = vsel %vm1113, %v850, 0
      %v1121 = vsel %vm1113, %v853, 0
      %v1124 = vsel %vm1113, %v856, 0
      %v1127 = vsel %vm1113, %v859, 0
      %v1130 = vsel %vm1113, %v862, 0
      %v1133 = vsel %vm1113, %v865, 0
      %v1136 = vsel %vm1113, %v868, 0
      %v1139 = vsel %vm1113, %v871, 0
      %v1142 = vsel %vm1113, %v874, 0
      %v1145 = vsel %vm1113, %v877, 0
      %v1148 = vsel %vm1113, %v880, 0
      %v1151 = vsel %vm1113, %v883, 0
      %v1154 = vsel %vm1113, %v886, 0
      %v1157 = vsel %vm1113, %v889, 0
      %v1160 = vsel %vm1113, %v892, 0
      %v1163 = vsel %vm1113, %v895, 0
      %v1166 = vsel %vm1113, %v898, 0
      %v1169 = vsel %vm1113, %v901, 0
      %v1172 = vsel %vm1113, %v904, 0
      %v1175 = vsel %vm1113, %v907, 0
      %v1178 = vsel %vm1113, %v910, 0
      %v1181 = vsel %vm1113, %v913, 0
      %v1184 = vsel %vm1113, %v916, 0
      %v1187 = vsel %vm1113, %v919, 0
      %v1190 = vsel %vm1113, %v922, 0
      %v1193 = vsel %vm1113, %v925, 0
      %v1196 = vsel %vm1113, %v928, 0
      %v1199 = vsel %vm1113, %v931, 0
      %v1202 = vsel %vm1113, %v934, 0
      %v1205 = vsel %vm1113, %v937, 0
      %v1208 = vsel %vm1113, %v940, 0
      %1210 = vmatpush.bf16.msra.mxu0 %v1084
      %1211 = vmatpush.bf16.msra.mxu0 %v1083
      %1212 = vmatpush.bf16.msra.mxu0 %v1082
      %1213 = vmatpush.bf16.msra.mxu0 %v1081
      %1214 = vmatpush.bf16.msra.mxu0 %v1080
      %1215 = vmatpush.bf16.msra.mxu0 %v1079
      %1216 = vmatpush.bf16.msra.mxu0 %v1078
      %1217 = vmatpush.bf16.msra.mxu0 %v1077
      %1218 = vmatmul.bf16.gmra.mxu0 %v845
      %v1219 = vpop.f32.mrf.mxu0
      %v1220 = vadd.f32 0.0, %v1219
      %v1221 = vpop.f32.mrf.mxu0
      %v1222 = vadd.f32 0.0, %v1221
      %1223 = vmatmul.bf16.gmra.mxu0 %v848
      %v1224 = vpop.f32.mrf.mxu0
      %v1225 = vadd.f32 0.0, %v1224
      %v1226 = vpop.f32.mrf.mxu0
      %v1227 = vadd.f32 0.0, %v1226
      %1228 = vmatmul.bf16.gmra.mxu0 %v851
      %v1229 = vpop.f32.mrf.mxu0
      %v1230 = vadd.f32 0.0, %v1229
      %v1231 = vpop.f32.mrf.mxu0
      %v1232 = vadd.f32 0.0, %v1231
      %1233 = vmatmul.bf16.gmra.mxu0 %v854
      %v1234 = vpop.f32.mrf.mxu0
      %v1235 = vadd.f32 0.0, %v1234
      %v1236 = vpop.f32.mrf.mxu0
      %v1237 = vadd.f32 0.0, %v1236
      %1238 = vmatmul.bf16.gmra.mxu0 %v857
      %v1239 = vpop.f32.mrf.mxu0
      %v1240 = vadd.f32 0.0, %v1239
      %v1241 = vpop.f32.mrf.mxu0
      %v1242 = vadd.f32 0.0, %v1241
      %1243 = vmatmul.bf16.gmra.mxu0 %v860
      %v1244 = vpop.f32.mrf.mxu0
      %v1245 = vadd.f32 0.0, %v1244
      %v1246 = vpop.f32.mrf.mxu0
      %v1247 = vadd.f32 0.0, %v1246
      %1248 = vmatmul.bf16.gmra.mxu0 %v863
      %v1249 = vpop.f32.mrf.mxu0
      %v1250 = vadd.f32 0.0, %v1249
      %v1251 = vpop.f32.mrf.mxu0
      %v1252 = vadd.f32 0.0, %v1251
      %1253 = vmatmul.bf16.gmra.mxu0 %v866
      %v1254 = vpop.f32.mrf.mxu0
      %v1255 = vadd.f32 0.0, %v1254
      %v1256 = vpop.f32.mrf.mxu0
      %v1257 = vadd.f32 0.0, %v1256
      %1258 = vmatmul.bf16.gmra.mxu0 %v869
      %v1259 = vpop.f32.mrf.mxu0
      %v1260 = vadd.f32 0.0, %v1259
      %v1261 = vpop.f32.mrf.mxu0
      %v1262 = vadd.f32 0.0, %v1261
      %1263 = vmatmul.bf16.gmra.mxu0 %v872
      %v1264 = vpop.f32.mrf.mxu0
      %v1265 = vadd.f32 0.0, %v1264
      %v1266 = vpop.f32.mrf.mxu0
      %v1267 = vadd.f32 0.0, %v1266
      %1268 = vmatmul.bf16.gmra.mxu0 %v875
      %v1269 = vpop.f32.mrf.mxu0
      %v1270 = vadd.f32 0.0, %v1269
      %v1271 = vpop.f32.mrf.mxu0
      %v1272 = vadd.f32 0.0, %v1271
      %1273 = vmatmul.bf16.gmra.mxu0 %v878
      %v1274 = vpop.f32.mrf.mxu0
      %v1275 = vadd.f32 0.0, %v1274
      %v1276 = vpop.f32.mrf.mxu0
      %v1277 = vadd.f32 0.0, %v1276
      %1278 = vmatmul.bf16.gmra.mxu0 %v881
      %v1279 = vpop.f32.mrf.mxu0
      %v1280 = vadd.f32 0.0, %v1279
      %v1281 = vpop.f32.mrf.mxu0
      %v1282 = vadd.f32 0.0, %v1281
      %1283 = vmatmul.bf16.gmra.mxu0 %v884
      %v1284 = vpop.f32.mrf.mxu0
      %v1285 = vadd.f32 0.0, %v1284
      %v1286 = vpop.f32.mrf.mxu0
      %v1287 = vadd.f32 0.0, %v1286
      %1288 = vmatmul.bf16.gmra.mxu0 %v887
      %v1289 = vpop.f32.mrf.mxu0
      %v1290 = vadd.f32 0.0, %v1289
      %v1291 = vpop.f32.mrf.mxu0
      %v1292 = vadd.f32 0.0, %v1291
      %1293 = vmatmul.bf16.gmra.mxu0 %v890
      %v1294 = vpop.f32.mrf.mxu0
      %v1295 = vadd.f32 0.0, %v1294
      %v1296 = vpop.f32.mrf.mxu0
      %v1297 = vadd.f32 0.0, %v1296
      %1298 = vmatmul.bf16.gmra.mxu0 %v893
      %v1299 = vpop.f32.mrf.mxu0
      %v1300 = vadd.f32 0.0, %v1299
      %v1301 = vpop.f32.mrf.mxu0
      %v1302 = vadd.f32 0.0, %v1301
      %1303 = vmatmul.bf16.gmra.mxu0 %v896
      %v1304 = vpop.f32.mrf.mxu0
      %v1305 = vadd.f32 0.0, %v1304
      %v1306 = vpop.f32.mrf.mxu0
      %v1307 = vadd.f32 0.0, %v1306
      %1308 = vmatmul.bf16.gmra.mxu0 %v899
      %v1309 = vpop.f32.mrf.mxu0
      %v1310 = vadd.f32 0.0, %v1309
      %v1311 = vpop.f32.mrf.mxu0
      %v1312 = vadd.f32 0.0, %v1311
      %1313 = vmatmul.bf16.gmra.mxu0 %v902
      %v1314 = vpop.f32.mrf.mxu0
      %v1315 = vadd.f32 0.0, %v1314
      %v1316 = vpop.f32.mrf.mxu0
      %v1317 = vadd.f32 0.0, %v1316
      %1318 = vmatmul.bf16.gmra.mxu0 %v905
      %v1319 = vpop.f32.mrf.mxu0
      %v1320 = vadd.f32 0.0, %v1319
      %v1321 = vpop.f32.mrf.mxu0
      %v1322 = vadd.f32 0.0, %v1321
      %1323 = vmatmul.bf16.gmra.mxu0 %v908
      %v1324 = vpop.f32.mrf.mxu0
      %v1325 = vadd.f32 0.0, %v1324
      %v1326 = vpop.f32.mrf.mxu0
      %v1327 = vadd.f32 0.0, %v1326
      %1328 = vmatmul.bf16.gmra.mxu0 %v911
      %v1329 = vpop.f32.mrf.mxu0
      %v1330 = vadd.f32 0.0, %v1329
      %v1331 = vpop.f32.mrf.mxu0
      %v1332 = vadd.f32 0.0, %v1331
      %1333 = vmatmul.bf16.gmra.mxu0 %v914
      %v1334 = vpop.f32.mrf.mxu0
      %v1335 = vadd.f32 0.0, %v1334
      %v1336 = vpop.f32.mrf.mxu0
      %v1337 = vadd.f32 0.0, %v1336
      %1338 = vmatmul.bf16.gmra.mxu0 %v917
      %v1339 = vpop.f32.mrf.mxu0
      %v1340 = vadd.f32 0.0, %v1339
      %v1341 = vpop.f32.mrf.mxu0
      %v1342 = vadd.f32 0.0, %v1341
      %1343 = vmatmul.bf16.gmra.mxu0 %v920
      %v1344 = vpop.f32.mrf.mxu0
      %v1345 = vadd.f32 0.0, %v1344
      %v1346 = vpop.f32.mrf.mxu0
      %v1347 = vadd.f32 0.0, %v1346
      %1348 = vmatmul.bf16.gmra.mxu0 %v923
      %v1349 = vpop.f32.mrf.mxu0
      %v1350 = vadd.f32 0.0, %v1349
      %v1351 = vpop.f32.mrf.mxu0
      %v1352 = vadd.f32 0.0, %v1351
      %1353 = vmatmul.bf16.gmra.mxu0 %v926
      %v1354 = vpop.f32.mrf.mxu0
      %v1355 = vadd.f32 0.0, %v1354
      %v1356 = vpop.f32.mrf.mxu0
      %v1357 = vadd.f32 0.0, %v1356
      %1358 = vmatmul.bf16.gmra.mxu0 %v929
      %v1359 = vpop.f32.mrf.mxu0
      %v1360 = vadd.f32 0.0, %v1359
      %v1361 = vpop.f32.mrf.mxu0
      %v1362 = vadd.f32 0.0, %v1361
      %1363 = vmatmul.bf16.gmra.mxu0 %v932
      %v1364 = vpop.f32.mrf.mxu0
      %v1365 = vadd.f32 0.0, %v1364
      %v1366 = vpop.f32.mrf.mxu0
      %v1367 = vadd.f32 0.0, %v1366
      %1368 = vmatmul.bf16.gmra.mxu0 %v935
      %v1369 = vpop.f32.mrf.mxu0
      %v1370 = vadd.f32 0.0, %v1369
      %v1371 = vpop.f32.mrf.mxu0
      %v1372 = vadd.f32 0.0, %v1371
      %1373 = vmatmul.bf16.gmra.mxu0 %v938
      %v1374 = vpop.f32.mrf.mxu0
      %v1375 = vadd.f32 0.0, %v1374
      %v1376 = vpop.f32.mrf.mxu0
      %v1377 = vadd.f32 0.0, %v1376
      %1378 = vdwg.mxu0
      %1379 = vmatpush.bf16.msra.mxu0 %v1092
      %1380 = vmatpush.bf16.msra.mxu0 %v1091
      %1381 = vmatpush.bf16.msra.mxu0 %v1090
      %1382 = vmatpush.bf16.msra.mxu0 %v1089
      %1383 = vmatpush.bf16.msra.mxu0 %v1088
      %1384 = vmatpush.bf16.msra.mxu0 %v1087
      %1385 = vmatpush.bf16.msra.mxu0 %v1086
      %1386 = vmatpush.bf16.msra.mxu0 %v1085
      %1387 = vmatmul.bf16.gmra.mxu0 %v846
      %v1388 = vpop.f32.mrf.mxu0
      %v1389 = vadd.f32 %v1220, %v1388
      %v1390 = vpop.f32.mrf.mxu0
      %v1391 = vadd.f32 %v1222, %v1390
      %1392 = vmatmul.bf16.gmra.mxu0 %v849
      %v1393 = vpop.f32.mrf.mxu0
      %v1394 = vadd.f32 %v1225, %v1393
      %v1395 = vpop.f32.mrf.mxu0
      %v1396 = vadd.f32 %v1227, %v1395
      %1397 = vmatmul.bf16.gmra.mxu0 %v852
      %v1398 = vpop.f32.mrf.mxu0
      %v1399 = vadd.f32 %v1230, %v1398
      %v1400 = vpop.f32.mrf.mxu0
      %v1401 = vadd.f32 %v1232, %v1400
      %1402 = vmatmul.bf16.gmra.mxu0 %v855
      %v1403 = vpop.f32.mrf.mxu0
      %v1404 = vadd.f32 %v1235, %v1403
      %v1405 = vpop.f32.mrf.mxu0
      %v1406 = vadd.f32 %v1237, %v1405
      %1407 = vmatmul.bf16.gmra.mxu0 %v858
      %v1408 = vpop.f32.mrf.mxu0
      %v1409 = vadd.f32 %v1240, %v1408
      %v1410 = vpop.f32.mrf.mxu0
      %v1411 = vadd.f32 %v1242, %v1410
      %1412 = vmatmul.bf16.gmra.mxu0 %v861
      %v1413 = vpop.f32.mrf.mxu0
      %v1414 = vadd.f32 %v1245, %v1413
      %v1415 = vpop.f32.mrf.mxu0
      %v1416 = vadd.f32 %v1247, %v1415
      %1417 = vmatmul.bf16.gmra.mxu0 %v864
      %v1418 = vpop.f32.mrf.mxu0
      %v1419 = vadd.f32 %v1250, %v1418
      %v1420 = vpop.f32.mrf.mxu0
      %v1421 = vadd.f32 %v1252, %v1420
      %1422 = vmatmul.bf16.gmra.mxu0 %v867
      %v1423 = vpop.f32.mrf.mxu0
      %v1424 = vadd.f32 %v1255, %v1423
      %v1425 = vpop.f32.mrf.mxu0
      %v1426 = vadd.f32 %v1257, %v1425
      %1427 = vmatmul.bf16.gmra.mxu0 %v870
      %v1428 = vpop.f32.mrf.mxu0
      %v1429 = vadd.f32 %v1260, %v1428
      %v1430 = vpop.f32.mrf.mxu0
      %v1431 = vadd.f32 %v1262, %v1430
      %1432 = vmatmul.bf16.gmra.mxu0 %v873
      %v1433 = vpop.f32.mrf.mxu0
      %v1434 = vadd.f32 %v1265, %v1433
      %v1435 = vpop.f32.mrf.mxu0
      %v1436 = vadd.f32 %v1267, %v1435
      %1437 = vmatmul.bf16.gmra.mxu0 %v876
      %v1438 = vpop.f32.mrf.mxu0
      %v1439 = vadd.f32 %v1270, %v1438
      %v1440 = vpop.f32.mrf.mxu0
      %v1441 = vadd.f32 %v1272, %v1440
      %1442 = vmatmul.bf16.gmra.mxu0 %v879
      %v1443 = vpop.f32.mrf.mxu0
      %v1444 = vadd.f32 %v1275, %v1443
      %v1445 = vpop.f32.mrf.mxu0
      %v1446 = vadd.f32 %v1277, %v1445
      %1447 = vmatmul.bf16.gmra.mxu0 %v882
      %v1448 = vpop.f32.mrf.mxu0
      %v1449 = vadd.f32 %v1280, %v1448
      %v1450 = vpop.f32.mrf.mxu0
      %v1451 = vadd.f32 %v1282, %v1450
      %1452 = vmatmul.bf16.gmra.mxu0 %v885
      %v1453 = vpop.f32.mrf.mxu0
      %v1454 = vadd.f32 %v1285, %v1453
      %v1455 = vpop.f32.mrf.mxu0
      %v1456 = vadd.f32 %v1287, %v1455
      %1457 = vmatmul.bf16.gmra.mxu0 %v888
      %v1458 = vpop.f32.mrf.mxu0
      %v1459 = vadd.f32 %v1290, %v1458
      %v1460 = vpop.f32.mrf.mxu0
      %v1461 = vadd.f32 %v1292, %v1460
      %1462 = vmatmul.bf16.gmra.mxu0 %v891
      %v1463 = vpop.f32.mrf.mxu0
      %v1464 = vadd.f32 %v1295, %v1463
      %v1465 = vpop.f32.mrf.mxu0
      %v1466 = vadd.f32 %v1297, %v1465
      %1467 = vmatmul.bf16.gmra.mxu0 %v894
      %v1468 = vpop.f32.mrf.mxu0
      %v1469 = vadd.f32 %v1300, %v1468
      %v1470 = vpop.f32.mrf.mxu0
      %v1471 = vadd.f32 %v1302, %v1470
      %1472 = vmatmul.bf16.gmra.mxu0 %v897
      %v1473 = vpop.f32.mrf.mxu0
      %v1474 = vadd.f32 %v1305, %v1473
      %v1475 = vpop.f32.mrf.mxu0
      %v1476 = vadd.f32 %v1307, %v1475
      %1477 = vmatmul.bf16.gmra.mxu0 %v900
      %v1478 = vpop.f32.mrf.mxu0
      %v1479 = vadd.f32 %v1310, %v1478
      %v1480 = vpop.f32.mrf.mxu0
      %v1481 = vadd.f32 %v1312, %v1480
      %1482 = vmatmul.bf16.gmra.mxu0 %v903
      %v1483 = vpop.f32.mrf.mxu0
      %v1484 = vadd.f32 %v1315, %v1483
      %v1485 = vpop.f32.mrf.mxu0
      %v1486 = vadd.f32 %v1317, %v1485
      %1487 = vmatmul.bf16.gmra.mxu0 %v906
      %v1488 = vpop.f32.mrf.mxu0
      %v1489 = vadd.f32 %v1320, %v1488
      %v1490 = vpop.f32.mrf.mxu0
      %v1491 = vadd.f32 %v1322, %v1490
      %1492 = vmatmul.bf16.gmra.mxu0 %v909
      %v1493 = vpop.f32.mrf.mxu0
      %v1494 = vadd.f32 %v1325, %v1493
      %v1495 = vpop.f32.mrf.mxu0
      %v1496 = vadd.f32 %v1327, %v1495
      %1497 = vmatmul.bf16.gmra.mxu0 %v912
      %v1498 = vpop.f32.mrf.mxu0
      %v1499 = vadd.f32 %v1330, %v1498
      %v1500 = vpop.f32.mrf.mxu0
      %v1501 = vadd.f32 %v1332, %v1500
      %1502 = vmatmul.bf16.gmra.mxu0 %v915
      %v1503 = vpop.f32.mrf.mxu0
      %v1504 = vadd.f32 %v1335, %v1503
      %v1505 = vpop.f32.mrf.mxu0
      %v1506 = vadd.f32 %v1337, %v1505
      %1507 = vmatmul.bf16.gmra.mxu0 %v918
      %v1508 = vpop.f32.mrf.mxu0
      %v1509 = vadd.f32 %v1340, %v1508
      %v1510 = vpop.f32.mrf.mxu0
      %v1511 = vadd.f32 %v1342, %v1510
      %1512 = vmatmul.bf16.gmra.mxu0 %v921
      %v1513 = vpop.f32.mrf.mxu0
      %v1514 = vadd.f32 %v1345, %v1513
      %v1515 = vpop.f32.mrf.mxu0
      %v1516 = vadd.f32 %v1347, %v1515
      %1517 = vmatmul.bf16.gmra.mxu0 %v924
      %v1518 = vpop.f32.mrf.mxu0
      %v1519 = vadd.f32 %v1350, %v1518
      %v1520 = vpop.f32.mrf.mxu0
      %v1521 = vadd.f32 %v1352, %v1520
      %1522 = vmatmul.bf16.gmra.mxu0 %v927
      %v1523 = vpop.f32.mrf.mxu0
      %v1524 = vadd.f32 %v1355, %v1523
      %v1525 = vpop.f32.mrf.mxu0
      %v1526 = vadd.f32 %v1357, %v1525
      %1527 = vmatmul.bf16.gmra.mxu0 %v930
      %v1528 = vpop.f32.mrf.mxu0
      %v1529 = vadd.f32 %v1360, %v1528
      %v1530 = vpop.f32.mrf.mxu0
      %v1531 = vadd.f32 %v1362, %v1530
      %1532 = vmatmul.bf16.gmra.mxu0 %v933
      %v1533 = vpop.f32.mrf.mxu0
      %v1534 = vadd.f32 %v1365, %v1533
      %v1535 = vpop.f32.mrf.mxu0
      %v1536 = vadd.f32 %v1367, %v1535
      %1537 = vmatmul.bf16.gmra.mxu0 %v936
      %v1538 = vpop.f32.mrf.mxu0
      %v1539 = vadd.f32 %v1370, %v1538
      %v1540 = vpop.f32.mrf.mxu0
      %v1541 = vadd.f32 %v1372, %v1540
      %1542 = vmatmul.bf16.gmra.mxu0 %v939
      %v1543 = vpop.f32.mrf.mxu0
      %v1544 = vadd.f32 %v1375, %v1543
      %v1545 = vpop.f32.mrf.mxu0
      %v1546 = vadd.f32 %v1377, %v1545
      %1547 = vdwg.mxu0
      %1548 = vmatpush.bf16.msra.mxu0 0
      %1549 = vmatpush.bf16.msra.mxu0 0
      %1550 = vmatpush.bf16.msra.mxu0 0
      %1551 = vmatpush.bf16.msra.mxu0 0
      %1552 = vmatpush.bf16.msra.mxu0 0
      %1553 = vmatpush.bf16.msra.mxu0 0
      %1554 = vmatpush.bf16.msra.mxu0 %v1094
      %1555 = vmatpush.bf16.msra.mxu0 %v1093
      %1556 = vmatmul.bf16.gmra.mxu0 %v1115
      %v1557 = vpop.f32.mrf.mxu0
      %v1558 = vadd.f32 %v1389, %v1557
      %v1559 = vpop.f32.mrf.mxu0
      %v1560 = vadd.f32 %v1391, %v1559
      %1561 = vmatmul.bf16.gmra.mxu0 %v1118
      %v1562 = vpop.f32.mrf.mxu0
      %v1563 = vadd.f32 %v1394, %v1562
      %v1564 = vpop.f32.mrf.mxu0
      %v1565 = vadd.f32 %v1396, %v1564
      %1566 = vmatmul.bf16.gmra.mxu0 %v1121
      %v1567 = vpop.f32.mrf.mxu0
      %v1568 = vadd.f32 %v1399, %v1567
      %v1569 = vpop.f32.mrf.mxu0
      %v1570 = vadd.f32 %v1401, %v1569
      %1571 = vmatmul.bf16.gmra.mxu0 %v1124
      %v1572 = vpop.f32.mrf.mxu0
      %v1573 = vadd.f32 %v1404, %v1572
      %v1574 = vpop.f32.mrf.mxu0
      %v1575 = vadd.f32 %v1406, %v1574
      %1576 = vmatmul.bf16.gmra.mxu0 %v1127
      %v1577 = vpop.f32.mrf.mxu0
      %v1578 = vadd.f32 %v1409, %v1577
      %v1579 = vpop.f32.mrf.mxu0
      %v1580 = vadd.f32 %v1411, %v1579
      %1581 = vmatmul.bf16.gmra.mxu0 %v1130
      %v1582 = vpop.f32.mrf.mxu0
      %v1583 = vadd.f32 %v1414, %v1582
      %v1584 = vpop.f32.mrf.mxu0
      %v1585 = vadd.f32 %v1416, %v1584
      %1586 = vmatmul.bf16.gmra.mxu0 %v1133
      %v1587 = vpop.f32.mrf.mxu0
      %v1588 = vadd.f32 %v1419, %v1587
      %v1589 = vpop.f32.mrf.mxu0
      %v1590 = vadd.f32 %v1421, %v1589
      %1591 = vmatmul.bf16.gmra.mxu0 %v1136
      %v1592 = vpop.f32.mrf.mxu0
      %v1593 = vadd.f32 %v1424, %v1592
      %v1594 = vpop.f32.mrf.mxu0
      %v1595 = vadd.f32 %v1426, %v1594
      %1596 = vmatmul.bf16.gmra.mxu0 %v1139
      %v1597 = vpop.f32.mrf.mxu0
      %v1598 = vadd.f32 %v1429, %v1597
      %v1599 = vpop.f32.mrf.mxu0
      %v1600 = vadd.f32 %v1431, %v1599
      %1601 = vmatmul.bf16.gmra.mxu0 %v1142
      %v1602 = vpop.f32.mrf.mxu0
      %v1603 = vadd.f32 %v1434, %v1602
      %v1604 = vpop.f32.mrf.mxu0
      %v1605 = vadd.f32 %v1436, %v1604
      %1606 = vmatmul.bf16.gmra.mxu0 %v1145
      %v1607 = vpop.f32.mrf.mxu0
      %v1608 = vadd.f32 %v1439, %v1607
      %v1609 = vpop.f32.mrf.mxu0
      %v1610 = vadd.f32 %v1441, %v1609
      %1611 = vmatmul.bf16.gmra.mxu0 %v1148
      %v1612 = vpop.f32.mrf.mxu0
      %v1613 = vadd.f32 %v1444, %v1612
      %v1614 = vpop.f32.mrf.mxu0
      %v1615 = vadd.f32 %v1446, %v1614
      %1616 = vmatmul.bf16.gmra.mxu0 %v1151
      %v1617 = vpop.f32.mrf.mxu0
      %v1618 = vadd.f32 %v1449, %v1617
      %v1619 = vpop.f32.mrf.mxu0
      %v1620 = vadd.f32 %v1451, %v1619
      %1621 = vmatmul.bf16.gmra.mxu0 %v1154
      %v1622 = vpop.f32.mrf.mxu0
      %v1623 = vadd.f32 %v1454, %v1622
      %v1624 = vpop.f32.mrf.mxu0
      %v1625 = vadd.f32 %v1456, %v1624
      %1626 = vmatmul.bf16.gmra.mxu0 %v1157
      %v1627 = vpop.f32.mrf.mxu0
      %v1628 = vadd.f32 %v1459, %v1627
      %v1629 = vpop.f32.mrf.mxu0
      %v1630 = vadd.f32 %v1461, %v1629
      %1631 = vmatmul.bf16.gmra.mxu0 %v1160
      %v1632 = vpop.f32.mrf.mxu0
      %v1633 = vadd.f32 %v1464, %v1632
      %v1634 = vpop.f32.mrf.mxu0
      %v1635 = vadd.f32 %v1466, %v1634
      %1636 = vmatmul.bf16.gmra.mxu0 %v1163
      %v1637 = vpop.f32.mrf.mxu0
      %v1638 = vadd.f32 %v1469, %v1637
      %v1639 = vpop.f32.mrf.mxu0
      %v1640 = vadd.f32 %v1471, %v1639
      %1641 = vmatmul.bf16.gmra.mxu0 %v1166
      %v1642 = vpop.f32.mrf.mxu0
      %v1643 = vadd.f32 %v1474, %v1642
      %v1644 = vpop.f32.mrf.mxu0
      %v1645 = vadd.f32 %v1476, %v1644
      %1646 = vmatmul.bf16.gmra.mxu0 %v1169
      %v1647 = vpop.f32.mrf.mxu0
      %v1648 = vadd.f32 %v1479, %v1647
      %v1649 = vpop.f32.mrf.mxu0
      %v1650 = vadd.f32 %v1481, %v1649
      %1651 = vmatmul.bf16.gmra.mxu0 %v1172
      %v1652 = vpop.f32.mrf.mxu0
      %v1653 = vadd.f32 %v1484, %v1652
      %v1654 = vpop.f32.mrf.mxu0
      %v1655 = vadd.f32 %v1486, %v1654
      %1656 = vmatmul.bf16.gmra.mxu0 %v1175
      %v1657 = vpop.f32.mrf.mxu0
      %v1658 = vadd.f32 %v1489, %v1657
      %v1659 = vpop.f32.mrf.mxu0
      %v1660 = vadd.f32 %v1491, %v1659
      %1661 = vmatmul.bf16.gmra.mxu0 %v1178
      %v1662 = vpop.f32.mrf.mxu0
      %v1663 = vadd.f32 %v1494, %v1662
      %v1664 = vpop.f32.mrf.mxu0
      %v1665 = vadd.f32 %v1496, %v1664
      %1666 = vmatmul.bf16.gmra.mxu0 %v1181
      %v1667 = vpop.f32.mrf.mxu0
      %v1668 = vadd.f32 %v1499, %v1667
      %v1669 = vpop.f32.mrf.mxu0
      %v1670 = vadd.f32 %v1501, %v1669
      %1671 = vmatmul.bf16.gmra.mxu0 %v1184
      %v1672 = vpop.f32.mrf.mxu0
      %v1673 = vadd.f32 %v1504, %v1672
      %v1674 = vpop.f32.mrf.mxu0
      %v1675 = vadd.f32 %v1506, %v1674
      %1676 = vmatmul.bf16.gmra.mxu0 %v1187
      %v1677 = vpop.f32.mrf.mxu0
      %v1678 = vadd.f32 %v1509, %v1677
      %v1679 = vpop.f32.mrf.mxu0
      %v1680 = vadd.f32 %v1511, %v1679
      %1681 = vmatmul.bf16.gmra.mxu0 %v1190
      %v1682 = vpop.f32.mrf.mxu0
      %v1683 = vadd.f32 %v1514, %v1682
      %v1684 = vpop.f32.mrf.mxu0
      %v1685 = vadd.f32 %v1516, %v1684
      %1686 = vmatmul.bf16.gmra.mxu0 %v1193
      %v1687 = vpop.f32.mrf.mxu0
      %v1688 = vadd.f32 %v1519, %v1687
      %v1689 = vpop.f32.mrf.mxu0
      %v1690 = vadd.f32 %v1521, %v1689
      %1691 = vmatmul.bf16.gmra.mxu0 %v1196
      %v1692 = vpop.f32.mrf.mxu0
      %v1693 = vadd.f32 %v1524, %v1692
      %v1694 = vpop.f32.mrf.mxu0
      %v1695 = vadd.f32 %v1526, %v1694
      %1696 = vmatmul.bf16.gmra.mxu0 %v1199
      %v1697 = vpop.f32.mrf.mxu0
      %v1698 = vadd.f32 %v1529, %v1697
      %v1699 = vpop.f32.mrf.mxu0
      %v1700 = vadd.f32 %v1531, %v1699
      %1701 = vmatmul.bf16.gmra.mxu0 %v1202
      %v1702 = vpop.f32.mrf.mxu0
      %v1703 = vadd.f32 %v1534, %v1702
      %v1704 = vpop.f32.mrf.mxu0
      %v1705 = vadd.f32 %v1536, %v1704
      %1706 = vmatmul.bf16.gmra.mxu0 %v1205
      %v1707 = vpop.f32.mrf.mxu0
      %v1708 = vadd.f32 %v1539, %v1707
      %v1709 = vpop.f32.mrf.mxu0
      %v1710 = vadd.f32 %v1541, %v1709
      %1711 = vmatmul.bf16.gmra.mxu0 %v1208
      %v1712 = vpop.f32.mrf.mxu0
      %v1713 = vadd.f32 %v1544, %v1712
      %v1714 = vpop.f32.mrf.mxu0
      %v1715 = vadd.f32 %v1546, %v1714
      %1716 = vdwg.mxu0
      %v1717 = vadd.f32 %v297, %v1558
      %v1718 = vadd.f32 %v298, %v1560
      %v1719 = vadd.f32 %v299, %v1563
      %v1720 = vadd.f32 %v300, %v1565
      %v1721 = vadd.f32 %v301, %v1568
      %v1722 = vadd.f32 %v302, %v1570
      %v1723 = vadd.f32 %v303, %v1573
      %v1724 = vadd.f32 %v304, %v1575
      %v1725 = vadd.f32 %v305, %v1578
      %v1726 = vadd.f32 %v306, %v1580
      %v1727 = vadd.f32 %v307, %v1583
      %v1728 = vadd.f32 %v308, %v1585
      %v1729 = vadd.f32 %v309, %v1588
      %v1730 = vadd.f32 %v310, %v1590
      %v1731 = vadd.f32 %v311, %v1593
      %v1732 = vadd.f32 %v312, %v1595
      %v1733 = vadd.f32 %v313, %v1598
      %v1734 = vadd.f32 %v314, %v1600
      %v1735 = vadd.f32 %v315, %v1603
      %v1736 = vadd.f32 %v316, %v1605
      %v1737 = vadd.f32 %v317, %v1608
      %v1738 = vadd.f32 %v318, %v1610
      %v1739 = vadd.f32 %v319, %v1613
      %v1740 = vadd.f32 %v320, %v1615
      %v1741 = vadd.f32 %v321, %v1618
      %v1742 = vadd.f32 %v322, %v1620
      %v1743 = vadd.f32 %v323, %v1623
      %v1744 = vadd.f32 %v324, %v1625
      %v1745 = vadd.f32 %v325, %v1628
      %v1746 = vadd.f32 %v326, %v1630
      %v1747 = vadd.f32 %v327, %v1633
      %v1748 = vadd.f32 %v328, %v1635
      %v1749 = vadd.f32 %v329, %v1638
      %v1750 = vadd.f32 %v330, %v1640
      %v1751 = vadd.f32 %v331, %v1643
      %v1752 = vadd.f32 %v332, %v1645
      %v1753 = vadd.f32 %v333, %v1648
      %v1754 = vadd.f32 %v334, %v1650
      %v1755 = vadd.f32 %v335, %v1653
      %v1756 = vadd.f32 %v336, %v1655
      %v1757 = vadd.f32 %v337, %v1658
      %v1758 = vadd.f32 %v338, %v1660
      %v1759 = vadd.f32 %v339, %v1663
      %v1760 = vadd.f32 %v340, %v1665
      %v1761 = vadd.f32 %v341, %v1668
      %v1762 = vadd.f32 %v342, %v1670
      %v1763 = vadd.f32 %v343, %v1673
      %v1764 = vadd.f32 %v344, %v1675
      %v1765 = vadd.f32 %v345, %v1678
      %v1766 = vadd.f32 %v346, %v1680
      %v1767 = vadd.f32 %v347, %v1683
      %v1768 = vadd.f32 %v348, %v1685
      %v1769 = vadd.f32 %v349, %v1688
      %v1770 = vadd.f32 %v350, %v1690
      %v1771 = vadd.f32 %v351, %v1693
      %v1772 = vadd.f32 %v352, %v1695
      %v1773 = vadd.f32 %v353, %v1698
      %v1774 = vadd.f32 %v354, %v1700
      %v1775 = vadd.f32 %v355, %v1703
      %v1776 = vadd.f32 %v356, %v1705
      %v1777 = vadd.f32 %v357, %v1708
      %v1778 = vadd.f32 %v358, %v1710
      %v1779 = vadd.f32 %v359, %v1713
      %v1780 = vadd.f32 %v360, %v1715
      %vm1781 = vcmask 523264
      %1782 = vst.msk [vmem:[#allocation2] sm:$0xff] %vm1781, %v1717
      %1783 = vst.msk [vmem:[#allocation2 + $0x8] sm:$0xff] %vm1781, %v1718
      %1784 = vst.msk [vmem:[#allocation2 + $0x10] sm:$0xff] %vm1781, %v1719
      %1785 = vst.msk [vmem:[#allocation2 + $0x18] sm:$0xff] %vm1781, %v1720
      %1786 = vst.msk [vmem:[#allocation2 + $0x20] sm:$0xff] %vm1781, %v1721
      %1787 = vst.msk [vmem:[#allocation2 + $0x28] sm:$0xff] %vm1781, %v1722
      %1788 = vst.msk [vmem:[#allocation2 + $0x30] sm:$0xff] %vm1781, %v1723
      %1789 = vst.msk [vmem:[#allocation2 + $0x38] sm:$0xff] %vm1781, %v1724
      %1790 = vst.msk [vmem:[#allocation2 + $0x40] sm:$0xff] %vm1781, %v1725
      %1791 = vst.msk [vmem:[#allocation2 + $0x48] sm:$0xff] %vm1781, %v1726
      %1792 = vst.msk [vmem:[#allocation2 + $0x50] sm:$0xff] %vm1781, %v1727
      %1793 = vst.msk [vmem:[#allocation2 + $0x58] sm:$0xff] %vm1781, %v1728
      %1794 = vst.msk [vmem:[#allocation2 + $0x60] sm:$0xff] %vm1781, %v1729
      %1795 = vst.msk [vmem:[#allocation2 + $0x68] sm:$0xff] %vm1781, %v1730
      %1796 = vst.msk [vmem:[#allocation2 + $0x70] sm:$0xff] %vm1781, %v1731
      %1797 = vst.msk [vmem:[#allocation2 + $0x78] sm:$0xff] %vm1781, %v1732
      %1798 = vst.msk [vmem:[#allocation2 + $0x80] sm:$0xff] %vm1781, %v1733
      %1799 = vst.msk [vmem:[#allocation2 + $0x88] sm:$0xff] %vm1781, %v1734
      %1800 = vst.msk [vmem:[#allocation2 + $0x90] sm:$0xff] %vm1781, %v1735
      %1801 = vst.msk [vmem:[#allocation2 + $0x98] sm:$0xff] %vm1781, %v1736
      %1802 = vst.msk [vmem:[#allocation2 + $0xa0] sm:$0xff] %vm1781, %v1737
      %1803 = vst.msk [vmem:[#allocation2 + $0xa8] sm:$0xff] %vm1781, %v1738
      %1804 = vst.msk [vmem:[#allocation2 + $0xb0] sm:$0xff] %vm1781, %v1739
      %1805 = vst.msk [vmem:[#allocation2 + $0xb8] sm:$0xff] %vm1781, %v1740
      %1806 = vst.msk [vmem:[#allocation2 + $0xc0] sm:$0xff] %vm1781, %v1741
      %1807 = vst.msk [vmem:[#allocation2 + $0xc8] sm:$0xff] %vm1781, %v1742
      %1808 = vst.msk [vmem:[#allocation2 + $0xd0] sm:$0xff] %vm1781, %v1743
      %1809 = vst.msk [vmem:[#allocation2 + $0xd8] sm:$0xff] %vm1781, %v1744
      %1810 = vst.msk [vmem:[#allocation2 + $0xe0] sm:$0xff] %vm1781, %v1745
      %1811 = vst.msk [vmem:[#allocation2 + $0xe8] sm:$0xff] %vm1781, %v1746
      %1812 = vst.msk [vmem:[#allocation2 + $0xf0] sm:$0xff] %vm1781, %v1747
      %1813 = vst.msk [vmem:[#allocation2 + $0xf8] sm:$0xff] %vm1781, %v1748
      %1814 = vst.msk [vmem:[#allocation2 + $0x100] sm:$0xff] %vm1781, %v1749
      %1815 = vst.msk [vmem:[#allocation2 + $0x108] sm:$0xff] %vm1781, %v1750
      %1816 = vst.msk [vmem:[#allocation2 + $0x110] sm:$0xff] %vm1781, %v1751
      %1817 = vst.msk [vmem:[#allocation2 + $0x118] sm:$0xff] %vm1781, %v1752
      %1818 = vst.msk [vmem:[#allocation2 + $0x120] sm:$0xff] %vm1781, %v1753
      %1819 = vst.msk [vmem:[#allocation2 + $0x128] sm:$0xff] %vm1781, %v1754
      %1820 = vst.msk [vmem:[#allocation2 + $0x130] sm:$0xff] %vm1781, %v1755
      %1821 = vst.msk [vmem:[#allocation2 + $0x138] sm:$0xff] %vm1781, %v1756
      %1822 = vst.msk [vmem:[#allocation2 + $0x140] sm:$0xff] %vm1781, %v1757
      %1823 = vst.msk [vmem:[#allocation2 + $0x148] sm:$0xff] %vm1781, %v1758
      %1824 = vst.msk [vmem:[#allocation2 + $0x150] sm:$0xff] %vm1781, %v1759
      %1825 = vst.msk [vmem:[#allocation2 + $0x158] sm:$0xff] %vm1781, %v1760
      %1826 = vst.msk [vmem:[#allocation2 + $0x160] sm:$0xff] %vm1781, %v1761
      %1827 = vst.msk [vmem:[#allocation2 + $0x168] sm:$0xff] %vm1781, %v1762
      %1828 = vst.msk [vmem:[#allocation2 + $0x170] sm:$0xff] %vm1781, %v1763
      %1829 = vst.msk [vmem:[#allocation2 + $0x178] sm:$0xff] %vm1781, %v1764
      %1830 = vst.msk [vmem:[#allocation2 + $0x180] sm:$0xff] %vm1781, %v1765
      %1831 = vst.msk [vmem:[#allocation2 + $0x188] sm:$0xff] %vm1781, %v1766
      %1832 = vst.msk [vmem:[#allocation2 + $0x190] sm:$0xff] %vm1781, %v1767
      %1833 = vst.msk [vmem:[#allocation2 + $0x198] sm:$0xff] %vm1781, %v1768
      %1834 = vst.msk [vmem:[#allocation2 + $0x1a0] sm:$0xff] %vm1781, %v1769
      %1835 = vst.msk [vmem:[#allocation2 + $0x1a8] sm:$0xff] %vm1781, %v1770
      %1836 = vst.msk [vmem:[#allocation2 + $0x1b0] sm:$0xff] %vm1781, %v1771
      %1837 = vst.msk [vmem:[#allocation2 + $0x1b8] sm:$0xff] %vm1781, %v1772
      %1838 = vst.msk [vmem:[#allocation2 + $0x1c0] sm:$0xff] %vm1781, %v1773
      %1839 = vst.msk [vmem:[#allocation2 + $0x1c8] sm:$0xff] %vm1781, %v1774
      %1840 = vst.msk [vmem:[#allocation2 + $0x1d0] sm:$0xff] %vm1781, %v1775
      %1841 = vst.msk [vmem:[#allocation2 + $0x1d8] sm:$0xff] %vm1781, %v1776
      %1842 = vst.msk [vmem:[#allocation2 + $0x1e0] sm:$0xff] %vm1781, %v1777
      %1843 = vst.msk [vmem:[#allocation2 + $0x1e8] sm:$0xff] %vm1781, %v1778
      %1844 = vst.msk [vmem:[#allocation2 + $0x1f0] sm:$0xff] %vm1781, %v1779
      %1845 = vst.msk [vmem:[#allocation2 + $0x1f8] sm:$0xff] %vm1781, %v1780
      // Predicated region
      $region37: #{crnn_forward.10} parent=31 // pred_check
        %p1846 = pneg %p228
      $region38: #{crnn_forward.10} parent=31 // pred_check_branch
        %1848 = sbr.rel (%p1846) target = $region40
      $region39: #{crnn_forward.10} parent=31 // pred_region
        %v1849 = vld [vmem:[#allocation2] sm:$0xff]
        %v1850 = vld [vmem:[#allocation2 + $0x8] sm:$0xff]
        %v1851 = vld [vmem:[#allocation2 + $0x10] sm:$0xff]
        %v1852 = vld [vmem:[#allocation2 + $0x18] sm:$0xff]
        %v1853 = vld [vmem:[#allocation2 + $0x20] sm:$0xff]
        %v1854 = vld [vmem:[#allocation2 + $0x28] sm:$0xff]
        %v1855 = vld [vmem:[#allocation2 + $0x30] sm:$0xff]
        %v1856 = vld [vmem:[#allocation2 + $0x38] sm:$0xff]
        %v1857 = vld [vmem:[#allocation2 + $0x40] sm:$0xff]
        %v1858 = vld [vmem:[#allocation2 + $0x48] sm:$0xff]
        %v1859 = vld [vmem:[#allocation2 + $0x50] sm:$0xff]
        %v1860 = vld [vmem:[#allocation2 + $0x58] sm:$0xff]
        %v1861 = vld [vmem:[#allocation2 + $0x60] sm:$0xff]
        %v1862 = vld [vmem:[#allocation2 + $0x68] sm:$0xff]
        %v1863 = vld [vmem:[#allocation2 + $0x70] sm:$0xff]
        %v1864 = vld [vmem:[#allocation2 + $0x78] sm:$0xff]
        %v1865 = vld [vmem:[#allocation2 + $0x80] sm:$0xff]
        %v1866 = vld [vmem:[#allocation2 + $0x88] sm:$0xff]
        %v1867 = vld [vmem:[#allocation2 + $0x90] sm:$0xff]
        %v1868 = vld [vmem:[#allocation2 + $0x98] sm:$0xff]
        %v1869 = vld [vmem:[#allocation2 + $0xa0] sm:$0xff]
        %v1870 = vld [vmem:[#allocation2 + $0xa8] sm:$0xff]
        %v1871 = vld [vmem:[#allocation2 + $0xb0] sm:$0xff]
        %v1872 = vld [vmem:[#allocation2 + $0xb8] sm:$0xff]
        %v1873 = vld [vmem:[#allocation2 + $0xc0] sm:$0xff]
        %v1874 = vld [vmem:[#allocation2 + $0xc8] sm:$0xff]
        %v1875 = vld [vmem:[#allocation2 + $0xd0] sm:$0xff]
        %v1876 = vld [vmem:[#allocation2 + $0xd8] sm:$0xff]
        %v1877 = vld [vmem:[#allocation2 + $0xe0] sm:$0xff]
        %v1878 = vld [vmem:[#allocation2 + $0xe8] sm:$0xff]
        %v1879 = vld [vmem:[#allocation2 + $0xf0] sm:$0xff]
        %v1880 = vld [vmem:[#allocation2 + $0xf8] sm:$0xff]
        %v1881 = vld [vmem:[#allocation2 + $0x100] sm:$0xff]
        %v1882 = vld [vmem:[#allocation2 + $0x108] sm:$0xff]
        %v1883 = vld [vmem:[#allocation2 + $0x110] sm:$0xff]
        %v1884 = vld [vmem:[#allocation2 + $0x118] sm:$0xff]
        %v1885 = vld [vmem:[#allocation2 + $0x120] sm:$0xff]
        %v1886 = vld [vmem:[#allocation2 + $0x128] sm:$0xff]
        %v1887 = vld [vmem:[#allocation2 + $0x130] sm:$0xff]
        %v1888 = vld [vmem:[#allocation2 + $0x138] sm:$0xff]
        %v1889 = vld [vmem:[#allocation2 + $0x140] sm:$0xff]
        %v1890 = vld [vmem:[#allocation2 + $0x148] sm:$0xff]
        %v1891 = vld [vmem:[#allocation2 + $0x150] sm:$0xff]
        %v1892 = vld [vmem:[#allocation2 + $0x158] sm:$0xff]
        %v1893 = vld [vmem:[#allocation2 + $0x160] sm:$0xff]
        %v1894 = vld [vmem:[#allocation2 + $0x168] sm:$0xff]
        %v1895 = vld [vmem:[#allocation2 + $0x170] sm:$0xff]
        %v1896 = vld [vmem:[#allocation2 + $0x178] sm:$0xff]
        %v1897 = vld [vmem:[#allocation2 + $0x180] sm:$0xff]
        %v1898 = vld [vmem:[#allocation2 + $0x188] sm:$0xff]
        %v1899 = vld [vmem:[#allocation2 + $0x190] sm:$0xff]
        %v1900 = vld [vmem:[#allocation2 + $0x198] sm:$0xff]
        %v1901 = vld [vmem:[#allocation2 + $0x1a0] sm:$0xff]
        %v1902 = vld [vmem:[#allocation2 + $0x1a8] sm:$0xff]
        %v1903 = vld [vmem:[#allocation2 + $0x1b0] sm:$0xff]
        %v1904 = vld [vmem:[#allocation2 + $0x1b8] sm:$0xff]
        %v1905 = vld [vmem:[#allocation2 + $0x1c0] sm:$0xff]
        %v1906 = vld [vmem:[#allocation2 + $0x1c8] sm:$0xff]
        %v1907 = vld [vmem:[#allocation2 + $0x1d0] sm:$0xff]
        %v1908 = vld [vmem:[#allocation2 + $0x1d8] sm:$0xff]
        %v1909 = vld [vmem:[#allocation2 + $0x1e0] sm:$0xff]
        %v1910 = vld [vmem:[#allocation2 + $0x1e8] sm:$0xff]
        %v1911 = vld [vmem:[#allocation2 + $0x1f0] sm:$0xff]
        %v1912 = vld [vmem:[#allocation2 + $0x1f8] sm:$0xff]
        %v1913 = vld [vmem:[%s2] sm:$0x1]
        %v1915 = vperm.slane %v1913, 0
        %v1917 = vadd.f32 %v1849, %v1915
        %v1918 = vadd.f32 %v1850, %v1915
        %v1919 = vadd.f32 %v1851, %v1915
        %v1920 = vadd.f32 %v1852, %v1915
        %v1921 = vadd.f32 %v1853, %v1915
        %v1922 = vadd.f32 %v1854, %v1915
        %v1923 = vadd.f32 %v1855, %v1915
        %v1924 = vadd.f32 %v1856, %v1915
        %v1925 = vadd.f32 %v1857, %v1915
        %v1926 = vadd.f32 %v1858, %v1915
        %v1927 = vadd.f32 %v1859, %v1915
        %v1928 = vadd.f32 %v1860, %v1915
        %v1929 = vadd.f32 %v1861, %v1915
        %v1930 = vadd.f32 %v1862, %v1915
        %v1931 = vadd.f32 %v1863, %v1915
        %v1932 = vadd.f32 %v1864, %v1915
        %v1933 = vadd.f32 %v1865, %v1915
        %v1934 = vadd.f32 %v1866, %v1915
        %v1935 = vadd.f32 %v1867, %v1915
        %v1936 = vadd.f32 %v1868, %v1915
        %v1937 = vadd.f32 %v1869, %v1915
        %v1938 = vadd.f32 %v1870, %v1915
        %v1939 = vadd.f32 %v1871, %v1915
        %v1940 = vadd.f32 %v1872, %v1915
        %v1941 = vadd.f32 %v1873, %v1915
        %v1942 = vadd.f32 %v1874, %v1915
        %v1943 = vadd.f32 %v1875, %v1915
        %v1944 = vadd.f32 %v1876, %v1915
        %v1945 = vadd.f32 %v1877, %v1915
        %v1946 = vadd.f32 %v1878, %v1915
        %v1947 = vadd.f32 %v1879, %v1915
        %v1948 = vadd.f32 %v1880, %v1915
        %v1949 = vadd.f32 %v1881, %v1915
        %v1950 = vadd.f32 %v1882, %v1915
        %v1951 = vadd.f32 %v1883, %v1915
        %v1952 = vadd.f32 %v1884, %v1915
        %v1953 = vadd.f32 %v1885, %v1915
        %v1954 = vadd.f32 %v1886, %v1915
        %v1955 = vadd.f32 %v1887, %v1915
        %v1956 = vadd.f32 %v1888, %v1915
        %v1957 = vadd.f32 %v1889, %v1915
        %v1958 = vadd.f32 %v1890, %v1915
        %v1959 = vadd.f32 %v1891, %v1915
        %v1960 = vadd.f32 %v1892, %v1915
        %v1961 = vadd.f32 %v1893, %v1915
        %v1962 = vadd.f32 %v1894, %v1915
        %v1963 = vadd.f32 %v1895, %v1915
        %v1964 = vadd.f32 %v1896, %v1915
        %v1965 = vadd.f32 %v1897, %v1915
        %v1966 = vadd.f32 %v1898, %v1915
        %v1967 = vadd.f32 %v1899, %v1915
        %v1968 = vadd.f32 %v1900, %v1915
        %v1969 = vadd.f32 %v1901, %v1915
        %v1970 = vadd.f32 %v1902, %v1915
        %v1971 = vadd.f32 %v1903, %v1915
        %v1972 = vadd.f32 %v1904, %v1915
        %v1973 = vadd.f32 %v1905, %v1915
        %v1974 = vadd.f32 %v1906, %v1915
        %v1975 = vadd.f32 %v1907, %v1915
        %v1976 = vadd.f32 %v1908, %v1915
        %v1977 = vadd.f32 %v1909, %v1915
        %v1978 = vadd.f32 %v1910, %v1915
        %v1979 = vadd.f32 %v1911, %v1915
        %v1980 = vadd.f32 %v1912, %v1915
        %v1981 = vmax.f32 %v1917, 0.0
        %v1982 = vmax.f32 %v1918, 0.0
        %v1983 = vmax.f32 %v1919, 0.0
        %v1984 = vmax.f32 %v1920, 0.0
        %v1985 = vmax.f32 %v1921, 0.0
        %v1986 = vmax.f32 %v1922, 0.0
        %v1987 = vmax.f32 %v1923, 0.0
        %v1988 = vmax.f32 %v1924, 0.0
        %v1989 = vmax.f32 %v1925, 0.0
        %v1990 = vmax.f32 %v1926, 0.0
        %v1991 = vmax.f32 %v1927, 0.0
        %v1992 = vmax.f32 %v1928, 0.0
        %v1993 = vmax.f32 %v1929, 0.0
        %v1994 = vmax.f32 %v1930, 0.0
        %v1995 = vmax.f32 %v1931, 0.0
        %v1996 = vmax.f32 %v1932, 0.0
        %v1997 = vmax.f32 %v1933, 0.0
        %v1998 = vmax.f32 %v1934, 0.0
        %v1999 = vmax.f32 %v1935, 0.0
        %v2000 = vmax.f32 %v1936, 0.0
        %v2001 = vmax.f32 %v1937, 0.0
        %v2002 = vmax.f32 %v1938, 0.0
        %v2003 = vmax.f32 %v1939, 0.0
        %v2004 = vmax.f32 %v1940, 0.0
        %v2005 = vmax.f32 %v1941, 0.0
        %v2006 = vmax.f32 %v1942, 0.0
        %v2007 = vmax.f32 %v1943, 0.0
        %v2008 = vmax.f32 %v1944, 0.0
        %v2009 = vmax.f32 %v1945, 0.0
        %v2010 = vmax.f32 %v1946, 0.0
        %v2011 = vmax.f32 %v1947, 0.0
        %v2012 = vmax.f32 %v1948, 0.0
        %v2013 = vmax.f32 %v1949, 0.0
        %v2014 = vmax.f32 %v1950, 0.0
        %v2015 = vmax.f32 %v1951, 0.0
        %v2016 = vmax.f32 %v1952, 0.0
        %v2017 = vmax.f32 %v1953, 0.0
        %v2018 = vmax.f32 %v1954, 0.0
        %v2019 = vmax.f32 %v1955, 0.0
        %v2020 = vmax.f32 %v1956, 0.0
        %v2021 = vmax.f32 %v1957, 0.0
        %v2022 = vmax.f32 %v1958, 0.0
        %v2023 = vmax.f32 %v1959, 0.0
        %v2024 = vmax.f32 %v1960, 0.0
        %v2025 = vmax.f32 %v1961, 0.0
        %v2026 = vmax.f32 %v1962, 0.0
        %v2027 = vmax.f32 %v1963, 0.0
        %v2028 = vmax.f32 %v1964, 0.0
        %v2029 = vmax.f32 %v1965, 0.0
        %v2030 = vmax.f32 %v1966, 0.0
        %v2031 = vmax.f32 %v1967, 0.0
        %v2032 = vmax.f32 %v1968, 0.0
        %v2033 = vmax.f32 %v1969, 0.0
        %v2034 = vmax.f32 %v1970, 0.0
        %v2035 = vmax.f32 %v1971, 0.0
        %v2036 = vmax.f32 %v1972, 0.0
        %v2037 = vmax.f32 %v1973, 0.0
        %v2038 = vmax.f32 %v1974, 0.0
        %v2039 = vmax.f32 %v1975, 0.0
        %v2040 = vmax.f32 %v1976, 0.0
        %v2041 = vmax.f32 %v1977, 0.0
        %v2042 = vmax.f32 %v1978, 0.0
        %v2043 = vmax.f32 %v1979, 0.0
        %v2044 = vmax.f32 %v1980, 0.0
        %2045 = vst.msk [vmem:[%s225] sm:$0xff] %vm1781, %v1981
        %2046 = vst.msk [vmem:[%s225 + $0x8] sm:$0xff] %vm1781, %v1982
        %2047 = vst.msk [vmem:[%s225 + $0x10] sm:$0xff] %vm1781, %v1983
        %2048 = vst.msk [vmem:[%s225 + $0x18] sm:$0xff] %vm1781, %v1984
        %2049 = vst.msk [vmem:[%s225 + $0x20] sm:$0xff] %vm1781, %v1985
        %2050 = vst.msk [vmem:[%s225 + $0x28] sm:$0xff] %vm1781, %v1986
        %2051 = vst.msk [vmem:[%s225 + $0x30] sm:$0xff] %vm1781, %v1987
        %2052 = vst.msk [vmem:[%s225 + $0x38] sm:$0xff] %vm1781, %v1988
        %2053 = vst.msk [vmem:[%s225 + $0x40] sm:$0xff] %vm1781, %v1989
        %2054 = vst.msk [vmem:[%s225 + $0x48] sm:$0xff] %vm1781, %v1990
        %2055 = vst.msk [vmem:[%s225 + $0x50] sm:$0xff] %vm1781, %v1991
        %2056 = vst.msk [vmem:[%s225 + $0x58] sm:$0xff] %vm1781, %v1992
        %2057 = vst.msk [vmem:[%s225 + $0x60] sm:$0xff] %vm1781, %v1993
        %2058 = vst.msk [vmem:[%s225 + $0x68] sm:$0xff] %vm1781, %v1994
        %2059 = vst.msk [vmem:[%s225 + $0x70] sm:$0xff] %vm1781, %v1995
        %2060 = vst.msk [vmem:[%s225 + $0x78] sm:$0xff] %vm1781, %v1996
        %2061 = vst.msk [vmem:[%s225 + $0x80] sm:$0xff] %vm1781, %v1997
        %2062 = vst.msk [vmem:[%s225 + $0x88] sm:$0xff] %vm1781, %v1998
        %2063 = vst.msk [vmem:[%s225 + $0x90] sm:$0xff] %vm1781, %v1999
        %2064 = vst.msk [vmem:[%s225 + $0x98] sm:$0xff] %vm1781, %v2000
        %2065 = vst.msk [vmem:[%s225 + $0xa0] sm:$0xff] %vm1781, %v2001
        %2066 = vst.msk [vmem:[%s225 + $0xa8] sm:$0xff] %vm1781, %v2002
        %2067 = vst.msk [vmem:[%s225 + $0xb0] sm:$0xff] %vm1781, %v2003
        %2068 = vst.msk [vmem:[%s225 + $0xb8] sm:$0xff] %vm1781, %v2004
        %2069 = vst.msk [vmem:[%s225 + $0xc0] sm:$0xff] %vm1781, %v2005
        %2070 = vst.msk [vmem:[%s225 + $0xc8] sm:$0xff] %vm1781, %v2006
        %2071 = vst.msk [vmem:[%s225 + $0xd0] sm:$0xff] %vm1781, %v2007
        %2072 = vst.msk [vmem:[%s225 + $0xd8] sm:$0xff] %vm1781, %v2008
        %2073 = vst.msk [vmem:[%s225 + $0xe0] sm:$0xff] %vm1781, %v2009
        %2074 = vst.msk [vmem:[%s225 + $0xe8] sm:$0xff] %vm1781, %v2010
        %2075 = vst.msk [vmem:[%s225 + $0xf0] sm:$0xff] %vm1781, %v2011
        %2076 = vst.msk [vmem:[%s225 + $0xf8] sm:$0xff] %vm1781, %v2012
        %2077 = vst.msk [vmem:[%s225 + $0x100] sm:$0xff] %vm1781, %v2013
        %2078 = vst.msk [vmem:[%s225 + $0x108] sm:$0xff] %vm1781, %v2014
        %2079 = vst.msk [vmem:[%s225 + $0x110] sm:$0xff] %vm1781, %v2015
        %2080 = vst.msk [vmem:[%s225 + $0x118] sm:$0xff] %vm1781, %v2016
        %2081 = vst.msk [vmem:[%s225 + $0x120] sm:$0xff] %vm1781, %v2017
        %2082 = vst.msk [vmem:[%s225 + $0x128] sm:$0xff] %vm1781, %v2018
        %2083 = vst.msk [vmem:[%s225 + $0x130] sm:$0xff] %vm1781, %v2019
        %2084 = vst.msk [vmem:[%s225 + $0x138] sm:$0xff] %vm1781, %v2020
        %2085 = vst.msk [vmem:[%s225 + $0x140] sm:$0xff] %vm1781, %v2021
        %2086 = vst.msk [vmem:[%s225 + $0x148] sm:$0xff] %vm1781, %v2022
        %2087 = vst.msk [vmem:[%s225 + $0x150] sm:$0xff] %vm1781, %v2023
        %2088 = vst.msk [vmem:[%s225 + $0x158] sm:$0xff] %vm1781, %v2024
        %2089 = vst.msk [vmem:[%s225 + $0x160] sm:$0xff] %vm1781, %v2025
        %2090 = vst.msk [vmem:[%s225 + $0x168] sm:$0xff] %vm1781, %v2026
        %2091 = vst.msk [vmem:[%s225 + $0x170] sm:$0xff] %vm1781, %v2027
        %2092 = vst.msk [vmem:[%s225 + $0x178] sm:$0xff] %vm1781, %v2028
        %2093 = vst.msk [vmem:[%s225 + $0x180] sm:$0xff] %vm1781, %v2029
        %2094 = vst.msk [vmem:[%s225 + $0x188] sm:$0xff] %vm1781, %v2030
        %2095 = vst.msk [vmem:[%s225 + $0x190] sm:$0xff] %vm1781, %v2031
        %2096 = vst.msk [vmem:[%s225 + $0x198] sm:$0xff] %vm1781, %v2032
        %2097 = vst.msk [vmem:[%s225 + $0x1a0] sm:$0xff] %vm1781, %v2033
        %2098 = vst.msk [vmem:[%s225 + $0x1a8] sm:$0xff] %vm1781, %v2034
        %2099 = vst.msk [vmem:[%s225 + $0x1b0] sm:$0xff] %vm1781, %v2035
        %2100 = vst.msk [vmem:[%s225 + $0x1b8] sm:$0xff] %vm1781, %v2036
        %2101 = vst.msk [vmem:[%s225 + $0x1c0] sm:$0xff] %vm1781, %v2037
        %2102 = vst.msk [vmem:[%s225 + $0x1c8] sm:$0xff] %vm1781, %v2038
        %2103 = vst.msk [vmem:[%s225 + $0x1d0] sm:$0xff] %vm1781, %v2039
        %2104 = vst.msk [vmem:[%s225 + $0x1d8] sm:$0xff] %vm1781, %v2040
        %2105 = vst.msk [vmem:[%s225 + $0x1e0] sm:$0xff] %vm1781, %v2041
        %2106 = vst.msk [vmem:[%s225 + $0x1e8] sm:$0xff] %vm1781, %v2042
        %2107 = vst.msk [vmem:[%s225 + $0x1f0] sm:$0xff] %vm1781, %v2043
        %2108 = vst.msk [vmem:[%s225 + $0x1f8] sm:$0xff] %vm1781, %v2044
      $region40: #{crnn_forward.10} parent=31 // pred_fallthru
        _
      %s2109 = smul.u32 64, %s18
      %p2110 = scmp.lt.s32.totalorder %s2109, 511
      %s2111 = scalar_select %p2110, %s2109, 511
      %s2112 = smul.addr %s2111, 8
      %s2113 = scalar_lea.vmem %s3, %s2112
      // Predicated region
      $region41: #{crnn_forward.10} parent=31 // pred_check
        %p2114 = pneg %p119
      $region42: #{crnn_forward.10} parent=31 // pred_check_branch
        %2116 = sbr.rel (%p2114) target = $region44
      $region43: #{crnn_forward.10} parent=31 // pred_region
        %s2117 = smul.u32 64, %s18
      $region44: #{crnn_forward.10} parent=31 // pred_fallthru
        _
    $region32: #{crnn_forward.10} parent=5 // pred_fallthru
      _
    %p2118 = scmp.le.s32.totalorder 2, %s9
    // Predicated region
    $region45: #{crnn_forward.10} parent=5 // pred_check
      %p2119 = pneg %p2118
    $region46: #{crnn_forward.10} parent=5 // pred_check_branch
      %2121 = sbr.rel (%p2119) target = $region48
    $region47: #{crnn_forward.10} parent=5 // pred_region
      %s2122 = ssub.s32 %s9, 2
      // Predicated region
      $region49: #{crnn_forward.10} parent=47 // pred_check
        %p2123 = pneg %p125
      $region50: #{crnn_forward.10} parent=47 // pred_check_branch
        %2125 = sbr.rel (%p2123) target = $region52
      $region51: #{crnn_forward.10} parent=47 // pred_region
        %s2126 = smul.u32 64, %s20
        %p2127 = scmp.lt.s32.totalorder %s2126, 511
        %s2128 = scalar_select %p2127, %s2126, 511
        %s2129 = smul.addr %s2128, 8
        %s2130 = scalar_lea.vmem %s3, %s2129
      $region52: #{crnn_forward.10} parent=47 // pred_fallthru
        _
    $region48: #{crnn_forward.10} parent=5 // pred_fallthru
      _
  $region6: #{crnn_forward.10} parent=0 // loop_footer
    %s13 = sadd.s32 1, %s9
  $region7: #{crnn_forward.10} parent=0 // loop_footer_branch
    %8 = sbr.rel target = $region3
  $region8: #{crnn_forward.10} parent=0 // loop_exit
    _

// kernel: crnn_forward.11
$region0: #{crnn_forward.11}
  #allocation0 [shape = 'u32[]', space=smem, size = 0x4, offset = 0x4, fixed_abs, tag = 'smem constant byte address 0x4 - core index']
  #allocation1 [shape = 'u32[72,128]{1,0:T(1,128)}', space=vmem, size = 0x9000, scoped, tag = 'internal scratch']
  %s0 = inlined_call_operand.vmem [shape: f32[16,2,128,64], index: 0, kind: input, shape index: {}]
  %s1 = inlined_call_operand.vmem [shape: f32[16,64,64], index: 1, kind: output, shape index: {}]
  %s2 = sld [smem:[#allocation0]]
  $region37: #{crnn_forward.11} parent=0
    _
  %s4 = ssub.s32 1, %s2
  %s5 = scalar_select 0, %s4, %s2
  loop: start=0, step=1, limit=6
  $region2: #{crnn_forward.11} parent=0 // loop_pre_header
    _
  $region3: #{crnn_forward.11} parent=0 // loop_header
    %s7 = sphi 0, %s11
    %p8 = scmp.ge.s32.totalorder %s7, 6
    %s17 = sphi 0, %s19
    %s20 = sphi 0, %s17
    %s21 = sphi 0, %s20
    %s37 = sphi 0, %s21
    %s43 = sphi 0, %s45
    %s46 = sphi 0, %s43
    %s47 = sphi 0, %s46
    %s63 = sphi 0, %s47
  $region4: #{crnn_forward.11} parent=0 // loop_header_branch
    %10 = sbr.rel (%p8) target = $region8
  $region5: #{crnn_forward.11} parent=0 // loop_body
    %s12 = ssub.s32 %s7, 1
    %s13 = ssub.s32 %s7, 2
    %s14 = sadd.s32 %s7, 1
    %s15 = ssub.s32 %s7, %s14
    %p16 = scmp.eq.s32.totalorder %s15, 0
    %s18 = sadd.s32 %s17, 1
    %s19 = scalar_select %p16, %s17, %s18
    %p22 = pneg %p16
    %p23 = scmp.eq.s32.totalorder %s7, 3
    %p24 = por %p22, %p23
    %p25 = scmp.ne.s32.totalorder %s17, %s20
    %p26 = scmp.eq.s32.totalorder %s7, 0
    %p27 = por %p25, %p26
    %p28 = scmp.ne.s32.totalorder %s17, %s20
    %p29 = scmp.eq.s32.totalorder %s12, 3
    %p30 = por %p28, %p29
    %p31 = scmp.ne.s32.totalorder %s20, %s21
    %p32 = scmp.eq.s32.totalorder %s12, 0
    %p33 = por %p31, %p32
    %p34 = scmp.ne.s32.totalorder %s20, %s21
    %p35 = scmp.eq.s32.totalorder %s13, 3
    %p36 = por %p34, %p35
    %p38 = scmp.ne.s32.totalorder %s21, %s37
    %p39 = scmp.eq.s32.totalorder %s13, 0
    %p40 = por %p38, %p39
    %s41 = ssub.s32 %s7, %s14
    %p42 = scmp.eq.s32.totalorder %s41, 0
    %s44 = sadd.s32 %s43, 1
    %s45 = scalar_select %p42, %s43, %s44
    %p48 = pneg %p42
    %p49 = scmp.eq.s32.totalorder %s7, 3
    %p50 = por %p48, %p49
    %p51 = scmp.ne.s32.totalorder %s43, %s46
    %p52 = scmp.eq.s32.totalorder %s7, 0
    %p53 = por %p51, %p52
    %p54 = scmp.ne.s32.totalorder %s43, %s46
    %p55 = scmp.eq.s32.totalorder %s12, 3
    %p56 = por %p54, %p55
    %p57 = scmp.ne.s32.totalorder %s46, %s47
    %p58 = scmp.eq.s32.totalorder %s12, 0
    %p59 = por %p57, %p58
    %p60 = scmp.ne.s32.totalorder %s46, %s47
    %p61 = scmp.eq.s32.totalorder %s13, 3
    %p62 = por %p60, %p61
    %p64 = scmp.ne.s32.totalorder %s47, %s63
    %p65 = scmp.eq.s32.totalorder %s13, 0
    %p66 = por %p64, %p65
    %p67 = scmp.le.s32.totalorder 1, %s7
    %p68 = scmp.lt.s32.totalorder %s7, 5
    %p69 = pnand %p67, %p68
    %p70 = pneg %p69
    // Predicated region
    $region9: #{crnn_forward.11} parent=5 // pred_check
      _
    $region10: #{crnn_forward.11} parent=5 // pred_check_branch
      %72 = sbr.rel (%p69) target = $region12
    $region11: #{crnn_forward.11} parent=5 // pred_region
      %s73 = ssub.s32 %s7, 1
    $region12: #{crnn_forward.11} parent=5 // pred_fallthru
      _
    %p74 = scmp.lt.s32.totalorder %s7, 4
    // Predicated region
    $region13: #{crnn_forward.11} parent=5 // pred_check
      %p75 = pneg %p74
    $region14: #{crnn_forward.11} parent=5 // pred_check_branch
      %77 = sbr.rel (%p75) target = $region16
    $region15: #{crnn_forward.11} parent=5 // pred_region
      // Predicated region
      $region17: #{crnn_forward.11} parent=15 // pred_check
        %p78 = pneg %p27
      $region18: #{crnn_forward.11} parent=15 // pred_check_branch
        %80 = sbr.rel (%p78) target = $region20
      $region19: #{crnn_forward.11} parent=15 // pred_region
        %s81 = smul.u32 4, %s7
        %p82 = scmp.lt.s32.totalorder %s81, 15
        %s83 = scalar_select %p82, %s81, 15
        %s84 = smul.addr %s83, 32
        %s85 = smul.addr %s84, 8
        %s86 = scalar_lea.vmem %s0, %s85
        %s87 = smul.u32 4, %s7
      $region20: #{crnn_forward.11} parent=15 // pred_fallthru
        _
    $region16: #{crnn_forward.11} parent=5 // pred_fallthru
      _
    %p88 = scmp.le.s32.totalorder 1, %s7
    %p89 = scmp.lt.s32.totalorder %s7, 5
    %p90 = pnand %p88, %p89
    %p91 = pneg %p90
    // Predicated region
    $region21: #{crnn_forward.11} parent=5 // pred_check
      _
    $region22: #{crnn_forward.11} parent=5 // pred_check_branch
      %93 = sbr.rel (%p90) target = $region24
    $region23: #{crnn_forward.11} parent=5 // pred_region
      %s94 = ssub.s32 %s7, 1
      %s95 = smul.u32 4, %s12
      %p96 = scmp.lt.s32.totalorder %s95, 15
      %s97 = scalar_select %p96, %s95, 15
      %s98 = smul.addr %s97, 32
      %s99 = smul.addr %s98, 8
      %s100 = scalar_lea.vmem %s0, %s99
      %p101 = pneg %p33
      %p102 = pneg %p30
      %p103 = pneg %p59
      %p104 = pneg %p56
      %s105 = smul.u32 4, %s12
      %p106 = scmp.lt.s32.totalorder %s105, 15
      %s107 = scalar_select %p106, %s105, 15
      %s108 = smul.addr %s107, 8
      %s109 = smul.addr %s108, 8
      %s110 = scalar_lea.vmem %s1, %s109
      %s111 = smul.u32 4, %s12
      %p112 = scmp.lt.s32.totalorder %s111, 15
      %s113 = scalar_select %p112, %s111, 15
      %s114 = smul.addr %s113, 32
      %s115 = smul.addr %s114, 8
      %s116 = scalar_lea.vmem %s0, %s115
      %s117 = smul.u32 4, %s12
      %s118 = smul.u32 4, %s12
      %p119 = scmp.lt.s32.totalorder %s118, 15
      %s120 = scalar_select %p119, %s118, 15
      %s121 = smul.addr %s120, 8
      %s122 = smul.addr %s121, 8
      %s123 = scalar_lea.vmem %s1, %s122
      %s124 = smul.u32 4, %s12
      %v125 = vld [vmem:[%s116] ss:$2 sm:$0xff]
      %s126 = scalar_lea.vmem %s116, 16
      %v127 = vld [vmem:[%s126] ss:$2 sm:$0xff]
      %s128 = scalar_lea.vmem %s116, 32
      %v129 = vld [vmem:[%s128] ss:$2 sm:$0xff]
      %s130 = scalar_lea.vmem %s116, 48
      %v131 = vld [vmem:[%s130] ss:$2 sm:$0xff]
      %s132 = scalar_lea.vmem %s116, 64
      %v133 = vld [vmem:[%s132] ss:$2 sm:$0xff]
      %s134 = scalar_lea.vmem %s116, 80
      %v135 = vld [vmem:[%s134] ss:$2 sm:$0xff]
      %s136 = scalar_lea.vmem %s116, 96
      %v137 = vld [vmem:[%s136] ss:$2 sm:$0xff]
      %s138 = scalar_lea.vmem %s116, 112
      %v139 = vld [vmem:[%s138] ss:$2 sm:$0xff]
      %s140 = scalar_lea.vmem %s116, 128
      %v141 = vld [vmem:[%s140] ss:$2 sm:$0xff]
      %s142 = scalar_lea.vmem %s116, 144
      %v143 = vld [vmem:[%s142] ss:$2 sm:$0xff]
      %s144 = scalar_lea.vmem %s116, 160
      %v145 = vld [vmem:[%s144] ss:$2 sm:$0xff]
      %s146 = scalar_lea.vmem %s116, 176
      %v147 = vld [vmem:[%s146] ss:$2 sm:$0xff]
      %s148 = scalar_lea.vmem %s116, 192
      %v149 = vld [vmem:[%s148] ss:$2 sm:$0xff]
      %s150 = scalar_lea.vmem %s116, 208
      %v151 = vld [vmem:[%s150] ss:$2 sm:$0xff]
      %s152 = scalar_lea.vmem %s116, 224
      %v153 = vld [vmem:[%s152] ss:$2 sm:$0xff]
      %s154 = scalar_lea.vmem %s116, 240
      %v155 = vld [vmem:[%s154] ss:$2 sm:$0xff]
      %s156 = scalar_lea.vmem %s116, 256
      %v157 = vld [vmem:[%s156] ss:$2 sm:$0xff]
      %s158 = scalar_lea.vmem %s116, 272
      %v159 = vld [vmem:[%s158] ss:$2 sm:$0xff]
      %s160 = scalar_lea.vmem %s116, 288
      %v161 = vld [vmem:[%s160] ss:$2 sm:$0xff]
      %s162 = scalar_lea.vmem %s116, 304
      %v163 = vld [vmem:[%s162] ss:$2 sm:$0xff]
      %s164 = scalar_lea.vmem %s116, 320
      %v165 = vld [vmem:[%s164] ss:$2 sm:$0xff]
      %s166 = scalar_lea.vmem %s116, 336
      %v167 = vld [vmem:[%s166] ss:$2 sm:$0xff]
      %s168 = scalar_lea.vmem %s116, 352
      %v169 = vld [vmem:[%s168] ss:$2 sm:$0xff]
      %s170 = scalar_lea.vmem %s116, 368
      %v171 = vld [vmem:[%s170] ss:$2 sm:$0xff]
      %s172 = scalar_lea.vmem %s116, 384
      %v173 = vld [vmem:[%s172] ss:$2 sm:$0xff]
      %s174 = scalar_lea.vmem %s116, 400
      %v175 = vld [vmem:[%s174] ss:$2 sm:$0xff]
      %s176 = scalar_lea.vmem %s116, 416
      %v177 = vld [vmem:[%s176] ss:$2 sm:$0xff]
      %s178 = scalar_lea.vmem %s116, 432
      %v179 = vld [vmem:[%s178] ss:$2 sm:$0xff]
      %s180 = scalar_lea.vmem %s116, 448
      %v181 = vld [vmem:[%s180] ss:$2 sm:$0xff]
      %s182 = scalar_lea.vmem %s116, 464
      %v183 = vld [vmem:[%s182] ss:$2 sm:$0xff]
      %s184 = scalar_lea.vmem %s116, 480
      %v185 = vld [vmem:[%s184] ss:$2 sm:$0xff]
      %s186 = scalar_lea.vmem %s116, 496
      %v187 = vld [vmem:[%s186] ss:$2 sm:$0xff]
      %s188 = scalar_lea.vmem %s116, 512
      %v189 = vld [vmem:[%s188] ss:$2 sm:$0xff]
      %s190 = scalar_lea.vmem %s116, 528
      %v191 = vld [vmem:[%s190] ss:$2 sm:$0xff]
      %s192 = scalar_lea.vmem %s116, 544
      %v193 = vld [vmem:[%s192] ss:$2 sm:$0xff]
      %s194 = scalar_lea.vmem %s116, 560
      %v195 = vld [vmem:[%s194] ss:$2 sm:$0xff]
      %s196 = scalar_lea.vmem %s116, 576
      %v197 = vld [vmem:[%s196] ss:$2 sm:$0xff]
      %s198 = scalar_lea.vmem %s116, 592
      %v199 = vld [vmem:[%s198] ss:$2 sm:$0xff]
      %s200 = scalar_lea.vmem %s116, 608
      %v201 = vld [vmem:[%s200] ss:$2 sm:$0xff]
      %s202 = scalar_lea.vmem %s116, 624
      %v203 = vld [vmem:[%s202] ss:$2 sm:$0xff]
      %s204 = scalar_lea.vmem %s116, 640
      %v205 = vld [vmem:[%s204] ss:$2 sm:$0xff]
      %s206 = scalar_lea.vmem %s116, 656
      %v207 = vld [vmem:[%s206] ss:$2 sm:$0xff]
      %s208 = scalar_lea.vmem %s116, 672
      %v209 = vld [vmem:[%s208] ss:$2 sm:$0xff]
      %s210 = scalar_lea.vmem %s116, 688
      %v211 = vld [vmem:[%s210] ss:$2 sm:$0xff]
      %s212 = scalar_lea.vmem %s116, 704
      %v213 = vld [vmem:[%s212] ss:$2 sm:$0xff]
      %s214 = scalar_lea.vmem %s116, 720
      %v215 = vld [vmem:[%s214] ss:$2 sm:$0xff]
      %s216 = scalar_lea.vmem %s116, 736
      %v217 = vld [vmem:[%s216] ss:$2 sm:$0xff]
      %s218 = scalar_lea.vmem %s116, 752
      %v219 = vld [vmem:[%s218] ss:$2 sm:$0xff]
      %s220 = scalar_lea.vmem %s116, 768
      %v221 = vld [vmem:[%s220] ss:$2 sm:$0xff]
      %s222 = scalar_lea.vmem %s116, 784
      %v223 = vld [vmem:[%s222] ss:$2 sm:$0xff]
      %s224 = scalar_lea.vmem %s116, 800
      %v225 = vld [vmem:[%s224] ss:$2 sm:$0xff]
      %s226 = scalar_lea.vmem %s116, 816
      %v227 = vld [vmem:[%s226] ss:$2 sm:$0xff]
      %s228 = scalar_lea.vmem %s116, 832
      %v229 = vld [vmem:[%s228] ss:$2 sm:$0xff]
      %s230 = scalar_lea.vmem %s116, 848
      %v231 = vld [vmem:[%s230] ss:$2 sm:$0xff]
      %s232 = scalar_lea.vmem %s116, 864
      %v233 = vld [vmem:[%s232] ss:$2 sm:$0xff]
      %s234 = scalar_lea.vmem %s116, 880
      %v235 = vld [vmem:[%s234] ss:$2 sm:$0xff]
      %s236 = scalar_lea.vmem %s116, 896
      %v237 = vld [vmem:[%s236] ss:$2 sm:$0xff]
      %s238 = scalar_lea.vmem %s116, 912
      %v239 = vld [vmem:[%s238] ss:$2 sm:$0xff]
      %s240 = scalar_lea.vmem %s116, 928
      %v241 = vld [vmem:[%s240] ss:$2 sm:$0xff]
      %s242 = scalar_lea.vmem %s116, 944
      %v243 = vld [vmem:[%s242] ss:$2 sm:$0xff]
      %s244 = scalar_lea.vmem %s116, 960
      %v245 = vld [vmem:[%s244] ss:$2 sm:$0xff]
      %s246 = scalar_lea.vmem %s116, 976
      %v247 = vld [vmem:[%s246] ss:$2 sm:$0xff]
      %s248 = scalar_lea.vmem %s116, 992
      %v249 = vld [vmem:[%s248] ss:$2 sm:$0xff]
      %s250 = scalar_lea.vmem %s116, 1008
      %v251 = vld [vmem:[%s250] ss:$2 sm:$0xff]
      %s252 = scalar_lea.vmem %s116, 1
      %v253 = vld [vmem:[%s252] ss:$2 sm:$0xff]
      %s254 = scalar_lea.vmem %s116, 17
      %v255 = vld [vmem:[%s254] ss:$2 sm:$0xff]
      %s256 = scalar_lea.vmem %s116, 33
      %v257 = vld [vmem:[%s256] ss:$2 sm:$0xff]
      %s258 = scalar_lea.vmem %s116, 49
      %v259 = vld [vmem:[%s258] ss:$2 sm:$0xff]
      %s260 = scalar_lea.vmem %s116, 65
      %v261 = vld [vmem:[%s260] ss:$2 sm:$0xff]
      %s262 = scalar_lea.vmem %s116, 81
      %v263 = vld [vmem:[%s262] ss:$2 sm:$0xff]
      %s264 = scalar_lea.vmem %s116, 97
      %v265 = vld [vmem:[%s264] ss:$2 sm:$0xff]
      %s266 = scalar_lea.vmem %s116, 113
      %v267 = vld [vmem:[%s266] ss:$2 sm:$0xff]
      %s268 = scalar_lea.vmem %s116, 129
      %v269 = vld [vmem:[%s268] ss:$2 sm:$0xff]
      %s270 = scalar_lea.vmem %s116, 145
      %v271 = vld [vmem:[%s270] ss:$2 sm:$0xff]
      %s272 = scalar_lea.vmem %s116, 161
      %v273 = vld [vmem:[%s272] ss:$2 sm:$0xff]
      %s274 = scalar_lea.vmem %s116, 177
      %v275 = vld [vmem:[%s274] ss:$2 sm:$0xff]
      %s276 = scalar_lea.vmem %s116, 193
      %v277 = vld [vmem:[%s276] ss:$2 sm:$0xff]
      %s278 = scalar_lea.vmem %s116, 209
      %v279 = vld [vmem:[%s278] ss:$2 sm:$0xff]
      %s280 = scalar_lea.vmem %s116, 225
      %v281 = vld [vmem:[%s280] ss:$2 sm:$0xff]
      %s282 = scalar_lea.vmem %s116, 241
      %v283 = vld [vmem:[%s282] ss:$2 sm:$0xff]
      %s284 = scalar_lea.vmem %s116, 257
      %v285 = vld [vmem:[%s284] ss:$2 sm:$0xff]
      %s286 = scalar_lea.vmem %s116, 273
      %v287 = vld [vmem:[%s286] ss:$2 sm:$0xff]
      %s288 = scalar_lea.vmem %s116, 289
      %v289 = vld [vmem:[%s288] ss:$2 sm:$0xff]
      %s290 = scalar_lea.vmem %s116, 305
      %v291 = vld [vmem:[%s290] ss:$2 sm:$0xff]
      %s292 = scalar_lea.vmem %s116, 321
      %v293 = vld [vmem:[%s292] ss:$2 sm:$0xff]
      %s294 = scalar_lea.vmem %s116, 337
      %v295 = vld [vmem:[%s294] ss:$2 sm:$0xff]
      %s296 = scalar_lea.vmem %s116, 353
      %v297 = vld [vmem:[%s296] ss:$2 sm:$0xff]
      %s298 = scalar_lea.vmem %s116, 369
      %v299 = vld [vmem:[%s298] ss:$2 sm:$0xff]
      %s300 = scalar_lea.vmem %s116, 385
      %v301 = vld [vmem:[%s300] ss:$2 sm:$0xff]
      %s302 = scalar_lea.vmem %s116, 401
      %v303 = vld [vmem:[%s302] ss:$2 sm:$0xff]
      %s304 = scalar_lea.vmem %s116, 417
      %v305 = vld [vmem:[%s304] ss:$2 sm:$0xff]
      %s306 = scalar_lea.vmem %s116, 433
      %v307 = vld [vmem:[%s306] ss:$2 sm:$0xff]
      %s308 = scalar_lea.vmem %s116, 449
      %v309 = vld [vmem:[%s308] ss:$2 sm:$0xff]
      %s310 = scalar_lea.vmem %s116, 465
      %v311 = vld [vmem:[%s310] ss:$2 sm:$0xff]
      %s312 = scalar_lea.vmem %s116, 481
      %v313 = vld [vmem:[%s312] ss:$2 sm:$0xff]
      %s314 = scalar_lea.vmem %s116, 497
      %v315 = vld [vmem:[%s314] ss:$2 sm:$0xff]
      %s316 = scalar_lea.vmem %s116, 513
      %v317 = vld [vmem:[%s316] ss:$2 sm:$0xff]
      %s318 = scalar_lea.vmem %s116, 529
      %v319 = vld [vmem:[%s318] ss:$2 sm:$0xff]
      %s320 = scalar_lea.vmem %s116, 545
      %v321 = vld [vmem:[%s320] ss:$2 sm:$0xff]
      %s322 = scalar_lea.vmem %s116, 561
      %v323 = vld [vmem:[%s322] ss:$2 sm:$0xff]
      %s324 = scalar_lea.vmem %s116, 577
      %v325 = vld [vmem:[%s324] ss:$2 sm:$0xff]
      %s326 = scalar_lea.vmem %s116, 593
      %v327 = vld [vmem:[%s326] ss:$2 sm:$0xff]
      %s328 = scalar_lea.vmem %s116, 609
      %v329 = vld [vmem:[%s328] ss:$2 sm:$0xff]
      %s330 = scalar_lea.vmem %s116, 625
      %v331 = vld [vmem:[%s330] ss:$2 sm:$0xff]
      %s332 = scalar_lea.vmem %s116, 641
      %v333 = vld [vmem:[%s332] ss:$2 sm:$0xff]
      %s334 = scalar_lea.vmem %s116, 657
      %v335 = vld [vmem:[%s334] ss:$2 sm:$0xff]
      %s336 = scalar_lea.vmem %s116, 673
      %v337 = vld [vmem:[%s336] ss:$2 sm:$0xff]
      %s338 = scalar_lea.vmem %s116, 689
      %v339 = vld [vmem:[%s338] ss:$2 sm:$0xff]
      %s340 = scalar_lea.vmem %s116, 705
      %v341 = vld [vmem:[%s340] ss:$2 sm:$0xff]
      %s342 = scalar_lea.vmem %s116, 721
      %v343 = vld [vmem:[%s342] ss:$2 sm:$0xff]
      %s344 = scalar_lea.vmem %s116, 737
      %v345 = vld [vmem:[%s344] ss:$2 sm:$0xff]
      %s346 = scalar_lea.vmem %s116, 753
      %v347 = vld [vmem:[%s346] ss:$2 sm:$0xff]
      %s348 = scalar_lea.vmem %s116, 769
      %v349 = vld [vmem:[%s348] ss:$2 sm:$0xff]
      %s350 = scalar_lea.vmem %s116, 785
      %v351 = vld [vmem:[%s350] ss:$2 sm:$0xff]
      %s352 = scalar_lea.vmem %s116, 801
      %v353 = vld [vmem:[%s352] ss:$2 sm:$0xff]
      %s354 = scalar_lea.vmem %s116, 817
      %v355 = vld [vmem:[%s354] ss:$2 sm:$0xff]
      %s356 = scalar_lea.vmem %s116, 833
      %v357 = vld [vmem:[%s356] ss:$2 sm:$0xff]
      %s358 = scalar_lea.vmem %s116, 849
      %v359 = vld [vmem:[%s358] ss:$2 sm:$0xff]
      %s360 = scalar_lea.vmem %s116, 865
      %v361 = vld [vmem:[%s360] ss:$2 sm:$0xff]
      %s362 = scalar_lea.vmem %s116, 881
      %v363 = vld [vmem:[%s362] ss:$2 sm:$0xff]
      %s364 = scalar_lea.vmem %s116, 897
      %v365 = vld [vmem:[%s364] ss:$2 sm:$0xff]
      %s366 = scalar_lea.vmem %s116, 913
      %v367 = vld [vmem:[%s366] ss:$2 sm:$0xff]
      %s368 = scalar_lea.vmem %s116, 929
      %v369 = vld [vmem:[%s368] ss:$2 sm:$0xff]
      %s370 = scalar_lea.vmem %s116, 945
      %v371 = vld [vmem:[%s370] ss:$2 sm:$0xff]
      %s372 = scalar_lea.vmem %s116, 961
      %v373 = vld [vmem:[%s372] ss:$2 sm:$0xff]
      %s374 = scalar_lea.vmem %s116, 977
      %v375 = vld [vmem:[%s374] ss:$2 sm:$0xff]
      %s376 = scalar_lea.vmem %s116, 993
      %v377 = vld [vmem:[%s376] ss:$2 sm:$0xff]
      %s378 = scalar_lea.vmem %s116, 1009
      %v379 = vld [vmem:[%s378] ss:$2 sm:$0xff]
      %v380 = vmax.f32 %v125, %v253
      %v381 = vmax.f32 %v127, %v255
      %v382 = vmax.f32 %v129, %v257
      %v383 = vmax.f32 %v131, %v259
      %v384 = vmax.f32 %v133, %v261
      %v385 = vmax.f32 %v135, %v263
      %v386 = vmax.f32 %v137, %v265
      %v387 = vmax.f32 %v139, %v267
      %v388 = vmax.f32 %v141, %v269
      %v389 = vmax.f32 %v143, %v271
      %v390 = vmax.f32 %v145, %v273
      %v391 = vmax.f32 %v147, %v275
      %v392 = vmax.f32 %v149, %v277
      %v393 = vmax.f32 %v151, %v279
      %v394 = vmax.f32 %v153, %v281
      %v395 = vmax.f32 %v155, %v283
      %v396 = vmax.f32 %v157, %v285
      %v397 = vmax.f32 %v159, %v287
      %v398 = vmax.f32 %v161, %v289
      %v399 = vmax.f32 %v163, %v291
      %v400 = vmax.f32 %v165, %v293
      %v401 = vmax.f32 %v167, %v295
      %v402 = vmax.f32 %v169, %v297
      %v403 = vmax.f32 %v171, %v299
      %v404 = vmax.f32 %v173, %v301
      %v405 = vmax.f32 %v175, %v303
      %v406 = vmax.f32 %v177, %v305
      %v407 = vmax.f32 %v179, %v307
      %v408 = vmax.f32 %v181, %v309
      %v409 = vmax.f32 %v183, %v311
      %v410 = vmax.f32 %v185, %v313
      %v411 = vmax.f32 %v187, %v315
      %v412 = vmax.f32 %v189, %v317
      %v413 = vmax.f32 %v191, %v319
      %v414 = vmax.f32 %v193, %v321
      %v415 = vmax.f32 %v195, %v323
      %v416 = vmax.f32 %v197, %v325
      %v417 = vmax.f32 %v199, %v327
      %v418 = vmax.f32 %v201, %v329
      %v419 = vmax.f32 %v203, %v331
      %v420 = vmax.f32 %v205, %v333
      %v421 = vmax.f32 %v207, %v335
      %v422 = vmax.f32 %v209, %v337
      %v423 = vmax.f32 %v211, %v339
      %v424 = vmax.f32 %v213, %v341
      %v425 = vmax.f32 %v215, %v343
      %v426 = vmax.f32 %v217, %v345
      %v427 = vmax.f32 %v219, %v347
      %v428 = vmax.f32 %v221, %v349
      %v429 = vmax.f32 %v223, %v351
      %v430 = vmax.f32 %v225, %v353
      %v431 = vmax.f32 %v227, %v355
      %v432 = vmax.f32 %v229, %v357
      %v433 = vmax.f32 %v231, %v359
      %v434 = vmax.f32 %v233, %v361
      %v435 = vmax.f32 %v235, %v363
      %v436 = vmax.f32 %v237, %v365
      %v437 = vmax.f32 %v239, %v367
      %v438 = vmax.f32 %v241, %v369
      %v439 = vmax.f32 %v243, %v371
      %v440 = vmax.f32 %v245, %v373
      %v441 = vmax.f32 %v247, %v375
      %v442 = vmax.f32 %v249, %v377
      %v443 = vmax.f32 %v251, %v379
      %v444 = vmax.f32 %v380, %v388
      %v445 = vmax.f32 %v381, %v389
      %v446 = vmax.f32 %v382, %v390
      %v447 = vmax.f32 %v383, %v391
      %v448 = vmax.f32 %v384, %v392
      %v449 = vmax.f32 %v385, %v393
      %v450 = vmax.f32 %v386, %v394
      %v451 = vmax.f32 %v387, %v395
      %v452 = vmax.f32 %v396, %v404
      %v453 = vmax.f32 %v397, %v405
      %v454 = vmax.f32 %v398, %v406
      %v455 = vmax.f32 %v399, %v407
      %v456 = vmax.f32 %v400, %v408
      %v457 = vmax.f32 %v401, %v409
      %v458 = vmax.f32 %v402, %v410
      %v459 = vmax.f32 %v403, %v411
      %v460 = vmax.f32 %v412, %v420
      %v461 = vmax.f32 %v413, %v421
      %v462 = vmax.f32 %v414, %v422
      %v463 = vmax.f32 %v415, %v423
      %v464 = vmax.f32 %v416, %v424
      %v465 = vmax.f32 %v417, %v425
      %v466 = vmax.f32 %v418, %v426
      %v467 = vmax.f32 %v419, %v427
      %v468 = vmax.f32 %v428, %v436
      %v469 = vmax.f32 %v429, %v437
      %v470 = vmax.f32 %v430, %v438
      %v471 = vmax.f32 %v431, %v439
      %v472 = vmax.f32 %v432, %v440
      %v473 = vmax.f32 %v433, %v441
      %v474 = vmax.f32 %v434, %v442
      %v475 = vmax.f32 %v435, %v443
      %vm476 = vcmask 523264
      %477 = vst.msk [vmem:[%s123] sm:$0xff] %vm476, %v444
      %478 = vst.msk [vmem:[%s123 + $0x8] sm:$0xff] %vm476, %v445
      %479 = vst.msk [vmem:[%s123 + $0x10] sm:$0xff] %vm476, %v446
      %480 = vst.msk [vmem:[%s123 + $0x18] sm:$0xff] %vm476, %v447
      %481 = vst.msk [vmem:[%s123 + $0x20] sm:$0xff] %vm476, %v448
      %482 = vst.msk [vmem:[%s123 + $0x28] sm:$0xff] %vm476, %v449
      %483 = vst.msk [vmem:[%s123 + $0x30] sm:$0xff] %vm476, %v450
      %484 = vst.msk [vmem:[%s123 + $0x38] sm:$0xff] %vm476, %v451
      %485 = vst.msk [vmem:[%s123 + $0x40] sm:$0xff] %vm476, %v452
      %486 = vst.msk [vmem:[%s123 + $0x48] sm:$0xff] %vm476, %v453
      %487 = vst.msk [vmem:[%s123 + $0x50] sm:$0xff] %vm476, %v454
      %488 = vst.msk [vmem:[%s123 + $0x58] sm:$0xff] %vm476, %v455
      %489 = vst.msk [vmem:[%s123 + $0x60] sm:$0xff] %vm476, %v456
      %490 = vst.msk [vmem:[%s123 + $0x68] sm:$0xff] %vm476, %v457
      %491 = vst.msk [vmem:[%s123 + $0x70] sm:$0xff] %vm476, %v458
      %492 = vst.msk [vmem:[%s123 + $0x78] sm:$0xff] %vm476, %v459
      %493 = vst.msk [vmem:[%s123 + $0x80] sm:$0xff] %vm476, %v460
      %494 = vst.msk [vmem:[%s123 + $0x88] sm:$0xff] %vm476, %v461
      %495 = vst.msk [vmem:[%s123 + $0x90] sm:$0xff] %vm476, %v462
      %496 = vst.msk [vmem:[%s123 + $0x98] sm:$0xff] %vm476, %v463
      %497 = vst.msk [vmem:[%s123 + $0xa0] sm:$0xff] %vm476, %v464
      %498 = vst.msk [vmem:[%s123 + $0xa8] sm:$0xff] %vm476, %v465
      %499 = vst.msk [vmem:[%s123 + $0xb0] sm:$0xff] %vm476, %v466
      %500 = vst.msk [vmem:[%s123 + $0xb8] sm:$0xff] %vm476, %v467
      %501 = vst.msk [vmem:[%s123 + $0xc0] sm:$0xff] %vm476, %v468
      %502 = vst.msk [vmem:[%s123 + $0xc8] sm:$0xff] %vm476, %v469
      %503 = vst.msk [vmem:[%s123 + $0xd0] sm:$0xff] %vm476, %v470
      %504 = vst.msk [vmem:[%s123 + $0xd8] sm:$0xff] %vm476, %v471
      %505 = vst.msk [vmem:[%s123 + $0xe0] sm:$0xff] %vm476, %v472
      %506 = vst.msk [vmem:[%s123 + $0xe8] sm:$0xff] %vm476, %v473
      %507 = vst.msk [vmem:[%s123 + $0xf0] sm:$0xff] %vm476, %v474
      %508 = vst.msk [vmem:[%s123 + $0xf8] sm:$0xff] %vm476, %v475
      %s509 = smul.u32 4, %s12
      %p510 = scmp.lt.s32.totalorder %s509, 15
      %s511 = scalar_select %p510, %s509, 15
      %s512 = smul.addr %s511, 8
      %s513 = smul.addr %s512, 8
      %s514 = scalar_lea.vmem %s1, %s513
      // Predicated region
      $region25: #{crnn_forward.11} parent=23 // pred_check
        %p515 = pneg %p56
      $region26: #{crnn_forward.11} parent=23 // pred_check_branch
        %517 = sbr.rel (%p515) target = $region28
      $region27: #{crnn_forward.11} parent=23 // pred_region
        %s518 = smul.u32 4, %s12
      $region28: #{crnn_forward.11} parent=23 // pred_fallthru
        _
    $region24: #{crnn_forward.11} parent=5 // pred_fallthru
      _
    %p519 = scmp.le.s32.totalorder 2, %s7
    // Predicated region
    $region29: #{crnn_forward.11} parent=5 // pred_check
      %p520 = pneg %p519
    $region30: #{crnn_forward.11} parent=5 // pred_check_branch
      %522 = sbr.rel (%p520) target = $region32
    $region31: #{crnn_forward.11} parent=5 // pred_region
      %s523 = ssub.s32 %s7, 2
      // Predicated region
      $region33: #{crnn_forward.11} parent=31 // pred_check
        %p524 = pneg %p62
      $region34: #{crnn_forward.11} parent=31 // pred_check_branch
        %526 = sbr.rel (%p524) target = $region36
      $region35: #{crnn_forward.11} parent=31 // pred_region
        %s527 = smul.u32 4, %s13
        %p528 = scmp.lt.s32.totalorder %s527, 15
        %s529 = scalar_select %p528, %s527, 15
        %s530 = smul.addr %s529, 8
        %s531 = smul.addr %s530, 8
        %s532 = scalar_lea.vmem %s1, %s531
      $region36: #{crnn_forward.11} parent=31 // pred_fallthru
        _
    $region32: #{crnn_forward.11} parent=5 // pred_fallthru
      _
  $region6: #{crnn_forward.11} parent=0 // loop_footer
    %s11 = sadd.s32 1, %s7
  $region7: #{crnn_forward.11} parent=0 // loop_footer_branch
    %6 = sbr.rel target = $region3
  $region8: #{crnn_forward.11} parent=0 // loop_exit
    _

// kernel: crnn_forward.13
$region0: #{crnn_forward.13}
  #allocation0 [shape = 'u32[]', space=smem, size = 0x4, offset = 0x4, fixed_abs, tag = 'smem constant byte address 0x4 - core index']
  #allocation1 [shape = 'u32[72,128]{1,0:T(1,128)}', space=vmem, size = 0x9000, scoped, tag = 'internal scratch']
  %s0 = inlined_call_operand.vmem [shape: f32[8,2,1024], index: 0, kind: input, shape index: {}]
  %s1 = inlined_call_operand.vmem [shape: bf16[128,1024], index: 1, kind: input, shape index: {}]
  %s2 = inlined_call_operand.vmem [shape: f32[8,2,256], index: 2, kind: output, shape index: {}]
  %s3 = sld [smem:[#allocation0]]
  $region139: #{crnn_forward.13} parent=0
    _
  %s5 = ssub.s32 1, %s3
  %s6 = scalar_select 0, %s5, %s3
  $region1: #{crnn_forward.13} parent=0
    #allocation2 [shape = 'u8[65536]{0}', space=vmem, size = 0x10000, scoped, tag = 'input window, operand 0']
    #allocation3 [shape = 'u8[262144]{0}', space=vmem, size = 0x40000, scoped, tag = 'input window, operand 1']
    #allocation4 [shape = 'u8[16384]{0}', space=vmem, size = 0x4000, scoped, tag = 'output window, operand 0']
    loop: start=0, step=1, limit=4
    $region2: #{crnn_forward.13} parent=1 // loop_pre_header
      _
    $region3: #{crnn_forward.13} parent=1 // loop_header
      %s8 = sphi 0, %s12
      %p9 = scmp.ge.s32.totalorder %s8, 4
      %s18 = sphi 0, %s20
      %s21 = sphi 0, %s18
      %s22 = sphi 0, %s21
      %s38 = sphi 0, %s22
      %s44 = sphi 0, %s46
      %s47 = sphi 0, %s44
      %s48 = sphi 0, %s47
      %s64 = sphi 0, %s48
      %s70 = sphi 0, %s72
      %s73 = sphi 0, %s70
      %s74 = sphi 0, %s73
      %s90 = sphi 0, %s74
    $region4: #{crnn_forward.13} parent=1 // loop_header_branch
      %11 = sbr.rel (%p9) target = $region8
    $region5: #{crnn_forward.13} parent=1 // loop_body
      %s13 = ssub.s32 %s8, 1
      %s14 = ssub.s32 %s8, 2
      %s15 = sadd.s32 %s8, 1
      %s16 = ssub.s32 %s8, %s15
      %p17 = scmp.eq.s32.totalorder %s16, 0
      %s19 = sadd.s32 %s18, 1
      %s20 = scalar_select %p17, %s18, %s19
      %p23 = pneg %p17
      %p24 = scmp.eq.s32.totalorder %s8, 1
      %p25 = por %p23, %p24
      %p26 = scmp.ne.s32.totalorder %s18, %s21
      %p27 = scmp.eq.s32.totalorder %s8, 0
      %p28 = por %p26, %p27
      %p29 = scmp.ne.s32.totalorder %s18, %s21
      %p30 = scmp.eq.s32.totalorder %s13, 1
      %p31 = por %p29, %p30
      %p32 = scmp.ne.s32.totalorder %s21, %s22
      %p33 = scmp.eq.s32.totalorder %s13, 0
      %p34 = por %p32, %p33
      %p35 = scmp.ne.s32.totalorder %s21, %s22
      %p36 = scmp.eq.s32.totalorder %s14, 1
      %p37 = por %p35, %p36
      %p39 = scmp.ne.s32.totalorder %s22, %s38
      %p40 = scmp.eq.s32.totalorder %s14, 0
      %p41 = por %p39, %p40
      %s42 = ssub.s32 %s8, %s15
      %p43 = scmp.eq.s32.totalorder %s42, 0
      %s45 = sadd.s32 %s44, 1
      %s46 = scalar_select %p43, %s44, %s45
      %p49 = pneg %p43
      %p50 = scmp.eq.s32.totalorder %s8, 1
      %p51 = por %p49, %p50
      %p52 = scmp.ne.s32.totalorder %s44, %s47
      %p53 = scmp.eq.s32.totalorder %s8, 0
      %p54 = por %p52, %p53
      %p55 = scmp.ne.s32.totalorder %s44, %s47
      %p56 = scmp.eq.s32.totalorder %s13, 1
      %p57 = por %p55, %p56
      %p58 = scmp.ne.s32.totalorder %s47, %s48
      %p59 = scmp.eq.s32.totalorder %s13, 0
      %p60 = por %p58, %p59
      %p61 = scmp.ne.s32.totalorder %s47, %s48
      %p62 = scmp.eq.s32.totalorder %s14, 1
      %p63 = por %p61, %p62
      %p65 = scmp.ne.s32.totalorder %s48, %s64
      %p66 = scmp.eq.s32.totalorder %s14, 0
      %p67 = por %p65, %p66
      %s68 = ssub.s32 %s8, %s15
      %p69 = scmp.eq.s32.totalorder %s68, 0
      %s71 = sadd.s32 %s70, 1
      %s72 = scalar_select %p69, %s70, %s71
      %p75 = pneg %p69
      %p76 = scmp.eq.s32.totalorder %s8, 1
      %p77 = por %p75, %p76
      %p78 = scmp.ne.s32.totalorder %s70, %s73
      %p79 = scmp.eq.s32.totalorder %s8, 0
      %p80 = por %p78, %p79
      %p81 = scmp.ne.s32.totalorder %s70, %s73
      %p82 = scmp.eq.s32.totalorder %s13, 1
      %p83 = por %p81, %p82
      %p84 = scmp.ne.s32.totalorder %s73, %s74
      %p85 = scmp.eq.s32.totalorder %s13, 0
      %p86 = por %p84, %p85
      %p87 = scmp.ne.s32.totalorder %s73, %s74
      %p88 = scmp.eq.s32.totalorder %s14, 1
      %p89 = por %p87, %p88
      %p91 = scmp.ne.s32.totalorder %s74, %s90
      %p92 = scmp.eq.s32.totalorder %s14, 0
      %p93 = por %p91, %p92
      %p94 = scmp.le.s32.totalorder 1, %s8
      %p95 = scmp.lt.s32.totalorder %s8, 3
      %p96 = pnand %p94, %p95
      %p97 = pneg %p96
      // Predicated region
      $region9: #{crnn_forward.13} parent=5 // pred_check
        _
      $region10: #{crnn_forward.13} parent=5 // pred_check_branch
        %99 = sbr.rel (%p96) target = $region12
      $region11: #{crnn_forward.13} parent=5 // pred_region
        %s100 = ssub.s32 %s8, 1
      $region12: #{crnn_forward.13} parent=5 // pred_fallthru
        _
      %p101 = scmp.lt.s32.totalorder %s8, 2
      // Predicated region
      $region13: #{crnn_forward.13} parent=5 // pred_check
        %p102 = pneg %p101
      $region14: #{crnn_forward.13} parent=5 // pred_check_branch
        %104 = sbr.rel (%p102) target = $region16
      $region15: #{crnn_forward.13} parent=5 // pred_region
        // Predicated region
        $region17: #{crnn_forward.13} parent=15 // pred_check
          %p105 = pneg %p28
        $region18: #{crnn_forward.13} parent=15 // pred_check_branch
          %107 = sbr.rel (%p105) target = $region20
        $region19: #{crnn_forward.13} parent=15 // pred_region
          %s108 = sand.u32 %s18, 1
          %s109 = sand.u32 %s18, 1
          %s110 = smul.addr %s109, 64
          %s111 = scalar_lea.vmem [#allocation2], %s110
          %s112 = smul.u32 4, %s8
          %s113 = smul.addr %s112, 2
          %s114 = scalar_lea.vmem %s0, %s113
          // Predicated region
          $region21: #{crnn_forward.13} parent=19 // pred_check
            _
          $region22: #{crnn_forward.13} parent=19 // pred_check_branch
            %116 = sbr.rel (0) target = $region24
          $region23: #{crnn_forward.13} parent=19 // pred_region
            // Predicated region
            $region25: #{crnn_forward.13} parent=23 // pred_check
              _
            $region26: #{crnn_forward.13} parent=23 // pred_check_branch
              %118 = sbr.rel (0) target = $region28
            $region27: #{crnn_forward.13} parent=23 // pred_region
              // Predicated region
              $region40: #{crnn_forward.13} parent=27 // pred_check
                _
              $region41: #{crnn_forward.13} parent=27 // pred_check_branch
                %148 = sbr.rel (0) target = $region43
              $region42: #{crnn_forward.13} parent=27 // pred_region
                loop: start=0, step=1, limit=1
                $region44: #{crnn_forward.13} parent=42 // loop_pre_header
                  _
                $region45: #{crnn_forward.13} parent=42 // loop_header
                  %s150 = sphi 0, %s154
                  %p151 = scmp.ge.s32.totalorder %s150, 1
                  %s155 = sphi %s114, %s114
                  %s156 = sphi %s111, %s111
                $region46: #{crnn_forward.13} parent=42 // loop_header_branch
                  %153 = sbr.rel (%p151) target = $region50
                $region47: #{crnn_forward.13} parent=42 // loop_body
                  %v157 = vld [vmem:[%s155] sm:$0xff]
                  %158 = vst [vmem:[%s156] sm:$0xff] %v157
                  %v159 = vld [vmem:[%s155 + $0x10] sm:$0xff]
                  %160 = vst [vmem:[%s156 + $0x8] sm:$0xff] %v159
                  %v161 = vld [vmem:[%s155 + $0x20] sm:$0xff]
                  %162 = vst [vmem:[%s156 + $0x10] sm:$0xff] %v161
                  %v163 = vld [vmem:[%s155 + $0x30] sm:$0xff]
                  %164 = vst [vmem:[%s156 + $0x18] sm:$0xff] %v163
                  %v165 = vld [vmem:[%s155 + $0x40] sm:$0xff]
                  %166 = vst [vmem:[%s156 + $0x20] sm:$0xff] %v165
                  %v167 = vld [vmem:[%s155 + $0x50] sm:$0xff]
                  %168 = vst [vmem:[%s156 + $0x28] sm:$0xff] %v167
                  %v169 = vld [vmem:[%s155 + $0x60] sm:$0xff]
                  %170 = vst [vmem:[%s156 + $0x30] sm:$0xff] %v169
                  %v171 = vld [vmem:[%s155 + $0x70] sm:$0xff]
                  %172 = vst [vmem:[%s156 + $0x38] sm:$0xff] %v171
                $region48: #{crnn_forward.13} parent=42 // loop_footer
                  %s154 = sadd.s32 1, %s150
                $region49: #{crnn_forward.13} parent=42 // loop_footer_branch
                  %149 = sbr.rel target = $region45
                $region50: #{crnn_forward.13} parent=42 // loop_exit
                  _
              $region43: #{crnn_forward.13} parent=27 // pred_fallthru
                _
              // Predicated region
              $region51: #{crnn_forward.13} parent=27 // pred_check
                _
              $region52: #{crnn_forward.13} parent=27 // pred_check_branch
                %174 = sbr.rel target = $region54
              $region53: #{crnn_forward.13} parent=27 // pred_region
                _
              $region54: #{crnn_forward.13} parent=27 // pred_fallthru
                _
            $region28: #{crnn_forward.13} parent=23 // pred_fallthru
              _
            // Predicated region
            $region29: #{crnn_forward.13} parent=23 // pred_check
              _
            $region30: #{crnn_forward.13} parent=23 // pred_check_branch
              %120 = sbr.rel target = $region32
            $region31: #{crnn_forward.13} parent=23 // pred_region
              %s122 = ssub.s32 256, 1
              loop: start=0, step=1, limit=1
              $region33: #{crnn_forward.13} parent=31 // loop_pre_header
                _
              $region34: #{crnn_forward.13} parent=31 // loop_header
                %s124 = sphi 0, %s128
                %p125 = scmp.ge.s32.totalorder %s124, 1
                %s129 = sphi %s114, %s114
                %s130 = sphi %s111, %s111
              $region35: #{crnn_forward.13} parent=31 // loop_header_branch
                %127 = sbr.rel (%p125) target = $region39
              $region36: #{crnn_forward.13} parent=31 // loop_body
                %v131 = vld [vmem:[%s129] sm:%s122]
                %132 = vst [vmem:[%s130] sm:%s122] %v131
                %v133 = vld [vmem:[%s129 + $0x10] sm:%s122]
                %134 = vst [vmem:[%s130 + $0x8] sm:%s122] %v133
                %v135 = vld [vmem:[%s129 + $0x20] sm:%s122]
                %136 = vst [vmem:[%s130 + $0x10] sm:%s122] %v135
                %v137 = vld [vmem:[%s129 + $0x30] sm:%s122]
                %138 = vst [vmem:[%s130 + $0x18] sm:%s122] %v137
                %v139 = vld [vmem:[%s129 + $0x40] sm:%s122]
                %140 = vst [vmem:[%s130 + $0x20] sm:%s122] %v139
                %v141 = vld [vmem:[%s129 + $0x50] sm:%s122]
                %142 = vst [vmem:[%s130 + $0x28] sm:%s122] %v141
                %v143 = vld [vmem:[%s129 + $0x60] sm:%s122]
                %144 = vst [vmem:[%s130 + $0x30] sm:%s122] %v143
                %v145 = vld [vmem:[%s129 + $0x70] sm:%s122]
                %146 = vst [vmem:[%s130 + $0x38] sm:%s122] %v145
              $region37: #{crnn_forward.13} parent=31 // loop_footer
                %s128 = sadd.s32 1, %s124
              $region38: #{crnn_forward.13} parent=31 // loop_footer_branch
                %123 = sbr.rel target = $region34
              $region39: #{crnn_forward.13} parent=31 // loop_exit
                _
            $region32: #{crnn_forward.13} parent=23 // pred_fallthru
              _
          $region24: #{crnn_forward.13} parent=19 // pred_fallthru
            _
          %175 = vnop
        $region20: #{crnn_forward.13} parent=15 // pred_fallthru
          _
        // Predicated region
        $region55: #{crnn_forward.13} parent=15 // pred_check
          %p176 = pneg %p54
        $region56: #{crnn_forward.13} parent=15 // pred_check_branch
          %178 = sbr.rel (%p176) target = $region58
        $region57: #{crnn_forward.13} parent=15 // pred_region
          %s179 = sand.u32 %s44, 1
          %s180 = sand.u32 %s44, 1
          %s181 = smul.addr %s180, 256
          %s182 = scalar_lea.vmem [#allocation3], %s181
          %s183 = smul.u32 4, %s8
          %s184 = smul.addr %s183, 4
          %s185 = scalar_lea.vmem %s1, %s184
          // Predicated region
          $region59: #{crnn_forward.13} parent=57 // pred_check
            _
          $region60: #{crnn_forward.13} parent=57 // pred_check_branch
            %187 = sbr.rel (0) target = $region62
          $region61: #{crnn_forward.13} parent=57 // pred_region
            // Predicated region
            $region63: #{crnn_forward.13} parent=61 // pred_check
              _
            $region64: #{crnn_forward.13} parent=61 // pred_check_branch
              %189 = sbr.rel (0) target = $region66
            $region65: #{crnn_forward.13} parent=61 // pred_region
              loop: start=0, step=1, limit=1
              $region67: #{crnn_forward.13} parent=65 // loop_pre_header
                _
              $region68: #{crnn_forward.13} parent=65 // loop_header
                %s191 = sphi 0, %s195
                %p192 = scmp.ge.s32.totalorder %s191, 1
                %s196 = sphi %s185, %s185
                %s197 = sphi %s182, %s182
              $region69: #{crnn_forward.13} parent=65 // loop_header_branch
                %194 = sbr.rel (%p192) target = $region73
              $region70: #{crnn_forward.13} parent=65 // loop_body
                %v198 = vld [vmem:[%s196] sm:$0xff]
                %199 = vst [vmem:[%s197] sm:$0xff] %v198
                %v200 = vld [vmem:[%s196 + $0x8] sm:$0xff]
                %201 = vst [vmem:[%s197 + $0x8] sm:$0xff] %v200
                %v202 = vld [vmem:[%s196 + $0x20] sm:$0xff]
                %203 = vst [vmem:[%s197 + $0x10] sm:$0xff] %v202
                %v204 = vld [vmem:[%s196 + $0x28] sm:$0xff]
                %205 = vst [vmem:[%s197 + $0x18] sm:$0xff] %v204
                %v206 = vld [vmem:[%s196 + $0x40] sm:$0xff]
                %207 = vst [vmem:[%s197 + $0x20] sm:$0xff] %v206
                %v208 = vld [vmem:[%s196 + $0x48] sm:$0xff]
                %209 = vst [vmem:[%s197 + $0x28] sm:$0xff] %v208
                %v210 = vld [vmem:[%s196 + $0x60] sm:$0xff]
                %211 = vst [vmem:[%s197 + $0x30] sm:$0xff] %v210
                %v212 = vld [vmem:[%s196 + $0x68] sm:$0xff]
                %213 = vst [vmem:[%s197 + $0x38] sm:$0xff] %v212
                %v214 = vld [vmem:[%s196 + $0x80] sm:$0xff]
                %215 = vst [vmem:[%s197 + $0x40] sm:$0xff] %v214
                %v216 = vld [vmem:[%s196 + $0x88] sm:$0xff]
                %217 = vst [vmem:[%s197 + $0x48] sm:$0xff] %v216
                %v218 = vld [vmem:[%s196 + $0xa0] sm:$0xff]
                %219 = vst [vmem:[%s197 + $0x50] sm:$0xff] %v218
                %v220 = vld [vmem:[%s196 + $0xa8] sm:$0xff]
                %221 = vst [vmem:[%s197 + $0x58] sm:$0xff] %v220
                %v222 = vld [vmem:[%s196 + $0xc0] sm:$0xff]
                %223 = vst [vmem:[%s197 + $0x60] sm:$0xff] %v222
                %v224 = vld [vmem:[%s196 + $0xc8] sm:$0xff]
                %225 = vst [vmem:[%s197 + $0x68] sm:$0xff] %v224
                %v226 = vld [vmem:[%s196 + $0xe0] sm:$0xff]
                %227 = vst [vmem:[%s197 + $0x70] sm:$0xff] %v226
                %v228 = vld [vmem:[%s196 + $0xe8] sm:$0xff]
                %229 = vst [vmem:[%s197 + $0x78] sm:$0xff] %v228
                %v230 = vld [vmem:[%s196 + $0x100] sm:$0xff]
                %231 = vst [vmem:[%s197 + $0x80] sm:$0xff] %v230
                %v232 = vld [vmem:[%s196 + $0x108] sm:$0xff]
                %233 = vst [vmem:[%s197 + $0x88] sm:$0xff] %v232
                %v234 = vld [vmem:[%s196 + $0x120] sm:$0xff]
                %235 = vst [vmem:[%s197 + $0x90] sm:$0xff] %v234
                %v236 = vld [vmem:[%s196 + $0x128] sm:$0xff]
                %237 = vst [vmem:[%s197 + $0x98] sm:$0xff] %v236
                %v238 = vld [vmem:[%s196 + $0x140] sm:$0xff]
                %239 = vst [vmem:[%s197 + $0xa0] sm:$0xff] %v238
                %v240 = vld [vmem:[%s196 + $0x148] sm:$0xff]
                %241 = vst [vmem:[%s197 + $0xa8] sm:$0xff] %v240
                %v242 = vld [vmem:[%s196 + $0x160] sm:$0xff]
                %243 = vst [vmem:[%s197 + $0xb0] sm:$0xff] %v242
                %v244 = vld [vmem:[%s196 + $0x168] sm:$0xff]
                %245 = vst [vmem:[%s197 + $0xb8] sm:$0xff] %v244
                %v246 = vld [vmem:[%s196 + $0x180] sm:$0xff]
                %247 = vst [vmem:[%s197 + $0xc0] sm:$0xff] %v246
                %v248 = vld [vmem:[%s196 + $0x188] sm:$0xff]
                %249 = vst [vmem:[%s197 + $0xc8] sm:$0xff] %v248
                %v250 = vld [vmem:[%s196 + $0x1a0] sm:$0xff]
                %251 = vst [vmem:[%s197 + $0xd0] sm:$0xff] %v250
                %v252 = vld [vmem:[%s196 + $0x1a8] sm:$0xff]
                %253 = vst [vmem:[%s197 + $0xd8] sm:$0xff] %v252
                %v254 = vld [vmem:[%s196 + $0x1c0] sm:$0xff]
                %255 = vst [vmem:[%s197 + $0xe0] sm:$0xff] %v254
                %v256 = vld [vmem:[%s196 + $0x1c8] sm:$0xff]
                %257 = vst [vmem:[%s197 + $0xe8] sm:$0xff] %v256
                %v258 = vld [vmem:[%s196 + $0x1e0] sm:$0xff]
                %259 = vst [vmem:[%s197 + $0xf0] sm:$0xff] %v258
                %v260 = vld [vmem:[%s196 + $0x1e8] sm:$0xff]
                %261 = vst [vmem:[%s197 + $0xf8] sm:$0xff] %v260
              $region71: #{crnn_forward.13} parent=65 // loop_footer
                %s195 = sadd.s32 1, %s191
              $region72: #{crnn_forward.13} parent=65 // loop_footer_branch
                %190 = sbr.rel target = $region68
              $region73: #{crnn_forward.13} parent=65 // loop_exit
                _
            $region66: #{crnn_forward.13} parent=61 // pred_fallthru
              _
            // Predicated region
            $region74: #{crnn_forward.13} parent=61 // pred_check
              _
            $region75: #{crnn_forward.13} parent=61 // pred_check_branch
              %263 = sbr.rel target = $region77
            $region76: #{crnn_forward.13} parent=61 // pred_region
              _
            $region77: #{crnn_forward.13} parent=61 // pred_fallthru
              _
          $region62: #{crnn_forward.13} parent=57 // pred_fallthru
            _
          %264 = vnop
        $region58: #{crnn_forward.13} parent=15 // pred_fallthru
          _
      $region16: #{crnn_forward.13} parent=5 // pred_fallthru
        _
      %p265 = scmp.le.s32.totalorder 1, %s8
      %p266 = scmp.lt.s32.totalorder %s8, 3
      %p267 = pnand %p265, %p266
      %p268 = pneg %p267
      // Predicated region
      $region78: #{crnn_forward.13} parent=5 // pred_check
        _
      $region79: #{crnn_forward.13} parent=5 // pred_check_branch
        %270 = sbr.rel (%p267) target = $region81
      $region80: #{crnn_forward.13} parent=5 // pred_region
        %s271 = ssub.s32 %s8, 1
        %s272 = sand.u32 %s21, 1
        %s273 = sand.u32 %s21, 1
        %s274 = smul.addr %s273, 64
        %s275 = scalar_lea.vmem [#allocation2], %s274
        // Predicated region
        $region82: #{crnn_forward.13} parent=80 // pred_check
          %p276 = pneg %p34
        $region83: #{crnn_forward.13} parent=80 // pred_check_branch
          %278 = sbr.rel (%p276) target = $region85
        $region84: #{crnn_forward.13} parent=80 // pred_region
          _
        $region85: #{crnn_forward.13} parent=80 // pred_fallthru
          _
        %s279 = sand.u32 %s47, 1
        %s280 = sand.u32 %s47, 1
        %s281 = smul.addr %s280, 256
        %s282 = scalar_lea.vmem [#allocation3], %s281
        // Predicated region
        $region86: #{crnn_forward.13} parent=80 // pred_check
          %p283 = pneg %p60
        $region87: #{crnn_forward.13} parent=80 // pred_check_branch
          %285 = sbr.rel (%p283) target = $region89
        $region88: #{crnn_forward.13} parent=80 // pred_region
          _
        $region89: #{crnn_forward.13} parent=80 // pred_fallthru
          _
        %s286 = sand.u32 %s21, 1
        %s287 = sand.u32 %s21, 1
        %s288 = smul.addr %s287, 64
        %s289 = scalar_lea.vmem [#allocation2], %s288
        %p290 = pneg %p34
        %p291 = pneg %p31
        %s292 = sand.u32 %s47, 1
        %s293 = sand.u32 %s47, 1
        %s294 = smul.addr %s293, 256
        %s295 = scalar_lea.vmem [#allocation3], %s294
        %p296 = pneg %p60
        %p297 = pneg %p57
        %p298 = pneg %p86
        %p299 = pneg %p83
        %s300 = sand.u32 %s73, 1
        %s301 = sand.u32 %s73, 1
        %s302 = smul.addr %s301, 16
        %s303 = scalar_lea.vmem [#allocation4], %s302
        %s304 = smul.u32 4, %s13
        %s305 = smul.u32 4, %s13
        %v307 = vld [vmem:[%s282] sm:$0xff]
        %v308 = vld [vmem:[%s282 + $0x8] sm:$0xff]
        %v309 = vld [vmem:[%s282 + $0x10] sm:$0xff]
        %v310 = vld [vmem:[%s282 + $0x18] sm:$0xff]
        %v311 = vld [vmem:[%s282 + $0x20] sm:$0xff]
        %v312 = vld [vmem:[%s282 + $0x28] sm:$0xff]
        %v313 = vld [vmem:[%s282 + $0x30] sm:$0xff]
        %v314 = vld [vmem:[%s282 + $0x38] sm:$0xff]
        %v315 = vld [vmem:[%s282 + $0x40] sm:$0xff]
        %v316 = vld [vmem:[%s282 + $0x48] sm:$0xff]
        %v317 = vld [vmem:[%s282 + $0x50] sm:$0xff]
        %v318 = vld [vmem:[%s282 + $0x58] sm:$0xff]
        %v319 = vld [vmem:[%s282 + $0x60] sm:$0xff]
        %v320 = vld [vmem:[%s282 + $0x68] sm:$0xff]
        %v321 = vld [vmem:[%s282 + $0x70] sm:$0xff]
        %v322 = vld [vmem:[%s282 + $0x78] sm:$0xff]
        %v323 = vld [vmem:[%s282 + $0x80] sm:$0xff]
        %v324 = vld [vmem:[%s282 + $0x88] sm:$0xff]
        %v325 = vld [vmem:[%s282 + $0x90] sm:$0xff]
        %v326 = vld [vmem:[%s282 + $0x98] sm:$0xff]
        %v327 = vld [vmem:[%s282 + $0xa0] sm:$0xff]
        %v328 = vld [vmem:[%s282 + $0xa8] sm:$0xff]
        %v329 = vld [vmem:[%s282 + $0xb0] sm:$0xff]
        %v330 = vld [vmem:[%s282 + $0xb8] sm:$0xff]
        %v331 = vld [vmem:[%s282 + $0xc0] sm:$0xff]
        %v332 = vld [vmem:[%s282 + $0xc8] sm:$0xff]
        %v333 = vld [vmem:[%s282 + $0xd0] sm:$0xff]
        %v334 = vld [vmem:[%s282 + $0xd8] sm:$0xff]
        %v335 = vld [vmem:[%s282 + $0xe0] sm:$0xff]
        %v336 = vld [vmem:[%s282 + $0xe8] sm:$0xff]
        %v337 = vld [vmem:[%s282 + $0xf0] sm:$0xff]
        %v338 = vld [vmem:[%s282 + $0xf8] sm:$0xff]
        %p339 = scmp.eq.s32.totalorder %s13, 0
        %s340 = scalar_select %p339, 0, 7
        %s341 = smul.u32 %s340, 4
        %s342 = smul.addr %s341, 2
        %s343 = scalar_lea.vmem %s275, %s342 [#allocation2]
        %v344 = vld [vmem:[%s343] sm:$0xff]
        %v377 = vunpack.c.l.b16 %v307
        %v378 = vunpack.c.h.b16 %v307
        %v379 = vunpack.c.l.b16 %v308
        %v380 = vunpack.c.h.b16 %v308
        %v381 = vunpack.c.l.b16 %v309
        %v382 = vunpack.c.h.b16 %v309
        %v383 = vunpack.c.l.b16 %v310
        %v384 = vunpack.c.h.b16 %v310
        %v385 = vunpack.c.l.b16 %v311
        %v386 = vunpack.c.h.b16 %v311
        %v387 = vunpack.c.l.b16 %v312
        %v388 = vunpack.c.h.b16 %v312
        %v389 = vunpack.c.l.b16 %v313
        %v390 = vunpack.c.h.b16 %v313
        %v391 = vunpack.c.l.b16 %v314
        %v392 = vunpack.c.h.b16 %v314
        %v393 = vunpack.c.l.b16 %v315
        %v394 = vunpack.c.h.b16 %v315
        %v395 = vunpack.c.l.b16 %v316
        %v396 = vunpack.c.h.b16 %v316
        %v397 = vunpack.c.l.b16 %v317
        %v398 = vunpack.c.h.b16 %v317
        %v399 = vunpack.c.l.b16 %v318
        %v400 = vunpack.c.h.b16 %v318
        %v401 = vunpack.c.l.b16 %v319
        %v402 = vunpack.c.h.b16 %v319
        %v403 = vunpack.c.l.b16 %v320
        %v404 = vunpack.c.h.b16 %v320
        %v405 = vunpack.c.l.b16 %v321
        %v406 = vunpack.c.h.b16 %v321
        %v407 = vunpack.c.l.b16 %v322
        %v408 = vunpack.c.h.b16 %v322
        %v409 = vunpack.c.l.b16 %v323
        %v410 = vunpack.c.h.b16 %v323
        %v411 = vunpack.c.l.b16 %v324
        %v412 = vunpack.c.h.b16 %v324
        %v413 = vunpack.c.l.b16 %v325
        %v414 = vunpack.c.h.b16 %v325
        %v415 = vunpack.c.l.b16 %v326
        %v416 = vunpack.c.h.b16 %v326
        %v417 = vunpack.c.l.b16 %v327
        %v418 = vunpack.c.h.b16 %v327
        %v419 = vunpack.c.l.b16 %v328
        %v420 = vunpack.c.h.b16 %v328
        %v421 = vunpack.c.l.b16 %v329
        %v422 = vunpack.c.h.b16 %v329
        %v423 = vunpack.c.l.b16 %v330
        %v424 = vunpack.c.h.b16 %v330
        %v425 = vunpack.c.l.b16 %v331
        %v426 = vunpack.c.h.b16 %v331
        %v427 = vunpack.c.l.b16 %v332
        %v428 = vunpack.c.h.b16 %v332
        %v429 = vunpack.c.l.b16 %v333
        %v430 = vunpack.c.h.b16 %v333
        %v431 = vunpack.c.l.b16 %v334
        %v432 = vunpack.c.h.b16 %v334
        %v433 = vunpack.c.l.b16 %v335
        %v434 = vunpack.c.h.b16 %v335
        %v435 = vunpack.c.l.b16 %v336
        %v436 = vunpack.c.h.b16 %v336
        %v437 = vunpack.c.l.b16 %v337
        %v438 = vunpack.c.h.b16 %v337
        %v439 = vunpack.c.l.b16 %v338
        %v440 = vunpack.c.h.b16 %v338
        %v441 = vpack.c.b16 %v381, %v377
        %v442 = vpack.c.b16 %v382, %v378
        %v443 = vpack.c.b16 %v383, %v379
        %v444 = vpack.c.b16 %v384, %v380
        %v445 = vpack.c.b16 %v389, %v385
        %v446 = vpack.c.b16 %v390, %v386
        %v447 = vpack.c.b16 %v391, %v387
        %v448 = vpack.c.b16 %v392, %v388
        %v449 = vpack.c.b16 %v397, %v393
        %v450 = vpack.c.b16 %v398, %v394
        %v451 = vpack.c.b16 %v399, %v395
        %v452 = vpack.c.b16 %v400, %v396
        %v453 = vpack.c.b16 %v405, %v401
        %v454 = vpack.c.b16 %v406, %v402
        %v455 = vpack.c.b16 %v407, %v403
        %v456 = vpack.c.b16 %v408, %v404
        %v457 = vpack.c.b16 %v413, %v409
        %v458 = vpack.c.b16 %v414, %v410
        %v459 = vpack.c.b16 %v415, %v411
        %v460 = vpack.c.b16 %v416, %v412
        %v461 = vpack.c.b16 %v421, %v417
        %v462 = vpack.c.b16 %v422, %v418
        %v463 = vpack.c.b16 %v423, %v419
        %v464 = vpack.c.b16 %v424, %v420
        %v465 = vpack.c.b16 %v429, %v425
        %v466 = vpack.c.b16 %v430, %v426
        %v467 = vpack.c.b16 %v431, %v427
        %v468 = vpack.c.b16 %v432, %v428
        %v469 = vpack.c.b16 %v437, %v433
        %v470 = vpack.c.b16 %v438, %v434
        %v471 = vpack.c.b16 %v439, %v435
        %v472 = vpack.c.b16 %v440, %v436
        %505 = vmatpush.bf16.msra.mxu0 %v469
        %506 = vmatpush.bf16.msra.mxu0 %v465
        %507 = vmatpush.bf16.msra.mxu0 %v461
        %508 = vmatpush.bf16.msra.mxu0 %v457
        %509 = vmatpush.bf16.msra.mxu0 %v453
        %510 = vmatpush.bf16.msra.mxu0 %v449
        %511 = vmatpush.bf16.msra.mxu0 %v445
        %512 = vmatpush.bf16.msra.mxu0 %v441
        %513 = vmatmul.bf16.gmra.mxu0 0
        %v514 = vpop.f32.mrf.mxu0
        %v515 = vadd.f32 0.0, %v514
        %v516 = vpop.f32.mrf.mxu0
        %517 = vdwg.mxu0
        %518 = vmatpush.bf16.msra.mxu0 %v470
        %519 = vmatpush.bf16.msra.mxu0 %v466
        %520 = vmatpush.bf16.msra.mxu0 %v462
        %521 = vmatpush.bf16.msra.mxu0 %v458
        %522 = vmatpush.bf16.msra.mxu0 %v454
        %523 = vmatpush.bf16.msra.mxu0 %v450
        %524 = vmatpush.bf16.msra.mxu0 %v446
        %525 = vmatpush.bf16.msra.mxu0 %v442
        %526 = vmatmul.bf16.gmra.mxu0 0
        %v527 = vpop.f32.mrf.mxu0
        %v528 = vadd.f32 0.0, %v527
        %v529 = vpop.f32.mrf.mxu0
        %530 = vdwg.mxu0
        %531 = vmatpush.bf16.msra.mxu0 %v471
        %532 = vmatpush.bf16.msra.mxu0 %v467
        %533 = vmatpush.bf16.msra.mxu0 %v463
        %534 = vmatpush.bf16.msra.mxu0 %v459
        %535 = vmatpush.bf16.msra.mxu0 %v455
        %536 = vmatpush.bf16.msra.mxu0 %v451
        %537 = vmatpush.bf16.msra.mxu0 %v447
        %538 = vmatpush.bf16.msra.mxu0 %v443
        %539 = vmatmul.bf16.gmra.mxu0 0
        %v540 = vpop.f32.mrf.mxu0
        %v541 = vadd.f32 0.0, %v540
        %v542 = vpop.f32.mrf.mxu0
        %543 = vdwg.mxu0
        %544 = vmatpush.bf16.msra.mxu0 %v472
        %545 = vmatpush.bf16.msra.mxu0 %v468
        %546 = vmatpush.bf16.msra.mxu0 %v464
        %547 = vmatpush.bf16.msra.mxu0 %v460
        %548 = vmatpush.bf16.msra.mxu0 %v456
        %549 = vmatpush.bf16.msra.mxu0 %v452
        %550 = vmatpush.bf16.msra.mxu0 %v448
        %551 = vmatpush.bf16.msra.mxu0 %v444
        %552 = vmatmul.bf16.gmra.mxu0 0
        %v553 = vpop.f32.mrf.mxu0
        %v554 = vadd.f32 0.0, %v553
        %v555 = vpop.f32.mrf.mxu0
        %556 = vdwg.mxu0
        %v561 = vrot.slane %v528, 6
        %v562 = vrot.slane %v541, 4
        %v563 = vrot.slane %v554, 2
        %vm564 = vcmask 1041408
        %v565 = vsel %vm564, %v515, %v561
        %vm566 = vcmask 1045508
        %v567 = vsel %vm566, %v562, %v563
        %vm568 = vcmask 1043456
        %v569 = vsel %vm568, %v565, %v567
        %v571 = vadd.f32 %v344, %v569
        %v572 = vxor.u32 %v571, 2147483648
        %v573 = vmul.f32 %v572, 1.442695
        %v574 = vpow.pop %v573
        %v575 = vadd.f32 %v574, 1.0
        %v576 = vrcp.pop %v575
        %v577 = vmul.f32 %v575, %v576
        %v578 = vsub.f32 1.0, %v577
        %v579 = vmul.f32 %v576, %v578
        %v580 = vadd.f32 %v576, %v579
        %vm581 = vweird.f32 %v575
        %vm582 = vweird.f32 %v576
        %vm583 = vmor %vm581, %vm582
        %v584 = vsel %vm583, %v576, %v580
        %v585 = vand.u32 2147483647, %v575
        %vm586 = vcmp.eq.f32.partialorder %v585, 8.507059e+37
        %v587 = vand.u32 %v575, 2147483648
        %v588 = vor.u32 1.1754944e-38, %v587
        %v589 = vsel %vm586, %v588, %v584
        %v590 = vmul.f32 1.0, %v589
        %v592 = vrot.slane %v571, 2
        %v594 = vxor.u32 %v592, 2147483648
        %v595 = vmul.f32 %v594, 1.442695
        %v596 = vpow.pop %v595
        %v597 = vadd.f32 %v596, 1.0
        %v598 = vrcp.pop %v597
        %v599 = vmul.f32 %v597, %v598
        %v600 = vsub.f32 1.0, %v599
        %v601 = vmul.f32 %v598, %v600
        %v602 = vadd.f32 %v598, %v601
        %vm603 = vweird.f32 %v597
        %vm604 = vweird.f32 %v598
        %vm605 = vmor %vm603, %vm604
        %v606 = vsel %vm605, %v598, %v602
        %v607 = vand.u32 2147483647, %v597
        %vm608 = vcmp.eq.f32.partialorder %v607, 8.507059e+37
        %v609 = vand.u32 %v597, 2147483648
        %v610 = vor.u32 1.1754944e-38, %v609
        %v611 = vsel %vm608, %v610, %v606
        %v612 = vmul.f32 1.0, %v611
        %v613 = vrot.slane %v571, 4
        %v615 = vtanh.pop %v613
        %v616 = vrot.slane %v571, 6
        %v618 = vxor.u32 %v616, 2147483648
        %v619 = vmul.f32 %v618, 1.442695
        %v620 = vpow.pop %v619
        %v621 = vadd.f32 %v620, 1.0
        %v622 = vrcp.pop %v621
        %v623 = vmul.f32 %v621, %v622
        %v624 = vsub.f32 1.0, %v623
        %v625 = vmul.f32 %v622, %v624
        %v626 = vadd.f32 %v622, %v625
        %vm627 = vweird.f32 %v621
        %vm628 = vweird.f32 %v622
        %vm629 = vmor %vm627, %vm628
        %v630 = vsel %vm629, %v622, %v626
        %v631 = vand.u32 2147483647, %v621
        %vm632 = vcmp.eq.f32.partialorder %v631, 8.507059e+37
        %v633 = vand.u32 %v621, 2147483648
        %v634 = vor.u32 1.1754944e-38, %v633
        %v635 = vsel %vm632, %v634, %v630
        %v636 = vmul.f32 1.0, %v635
        %v637 = vmul.f32 %v612, 0.0
        %v638 = vmul.f32 %v590, %v615
        %v639 = vadd.f32 %v637, %v638
        %v640 = vtanh.pop %v639
        %v641 = vmul.f32 %v636, %v640
        %s642 = smul.u32 %s340, 2
        %s643 = scalar_lea.vmem %s303, %s642 [#allocation4]
        %644 = vst [vmem:[%s643] sm:$0x3] %v641
        %s645 = scalar_select %p339, 1, 6
        %s646 = smul.u32 %s645, 4
        %s647 = smul.addr %s646, 2
        %s648 = scalar_lea.vmem %s275, %s647 [#allocation2]
        %v649 = vld [vmem:[%s648] sm:$0xff]
        %v650 = vpack.c.bf16 %v641, %v641
        %651 = vmatpush.bf16.msra.mxu0 %v469
        %652 = vmatpush.bf16.msra.mxu0 %v465
        %653 = vmatpush.bf16.msra.mxu0 %v461
        %654 = vmatpush.bf16.msra.mxu0 %v457
        %655 = vmatpush.bf16.msra.mxu0 %v453
        %656 = vmatpush.bf16.msra.mxu0 %v449
        %657 = vmatpush.bf16.msra.mxu0 %v445
        %658 = vmatpush.bf16.msra.mxu0 %v441
        %659 = vmatmul.bf16.gmra.mxu0 %v650
        %v660 = vpop.f32.mrf.mxu0
        %v661 = vadd.f32 0.0, %v660
        %v662 = vpop.f32.mrf.mxu0
        %663 = vdwg.mxu0
        %664 = vmatpush.bf16.msra.mxu0 %v470
        %665 = vmatpush.bf16.msra.mxu0 %v466
        %666 = vmatpush.bf16.msra.mxu0 %v462
        %667 = vmatpush.bf16.msra.mxu0 %v458
        %668 = vmatpush.bf16.msra.mxu0 %v454
        %669 = vmatpush.bf16.msra.mxu0 %v450
        %670 = vmatpush.bf16.msra.mxu0 %v446
        %671 = vmatpush.bf16.msra.mxu0 %v442
        %672 = vmatmul.bf16.gmra.mxu0 %v650
        %v673 = vpop.f32.mrf.mxu0
        %v674 = vadd.f32 0.0, %v673
        %v675 = vpop.f32.mrf.mxu0
        %676 = vdwg.mxu0
        %677 = vmatpush.bf16.msra.mxu0 %v471
        %678 = vmatpush.bf16.msra.mxu0 %v467
        %679 = vmatpush.bf16.msra.mxu0 %v463
        %680 = vmatpush.bf16.msra.mxu0 %v459
        %681 = vmatpush.bf16.msra.mxu0 %v455
        %682 = vmatpush.bf16.msra.mxu0 %v451
        %683 = vmatpush.bf16.msra.mxu0 %v447
        %684 = vmatpush.bf16.msra.mxu0 %v443
        %685 = vmatmul.bf16.gmra.mxu0 %v650
        %v686 = vpop.f32.mrf.mxu0
        %v687 = vadd.f32 0.0, %v686
        %v688 = vpop.f32.mrf.mxu0
        %689 = vdwg.mxu0
        %690 = vmatpush.bf16.msra.mxu0 %v472
        %691 = vmatpush.bf16.msra.mxu0 %v468
        %692 = vmatpush.bf16.msra.mxu0 %v464
        %693 = vmatpush.bf16.msra.mxu0 %v460
        %694 = vmatpush.bf16.msra.mxu0 %v456
        %695 = vmatpush.bf16.msra.mxu0 %v452
        %696 = vmatpush.bf16.msra.mxu0 %v448
        %697 = vmatpush.bf16.msra.mxu0 %v444
        %698 = vmatmul.bf16.gmra.mxu0 %v650
        %v699 = vpop.f32.mrf.mxu0
        %v700 = vadd.f32 0.0, %v699
        %v701 = vpop.f32.mrf.mxu0
        %702 = vdwg.mxu0
        %v707 = vrot.slane %v674, 6
        %v708 = vrot.slane %v687, 4
        %v709 = vrot.slane %v700, 2
        %v710 = vsel %vm564, %v661, %v707
        %v711 = vsel %vm566, %v708, %v709
        %v712 = vsel %vm568, %v710, %v711
        %v714 = vadd.f32 %v649, %v712
        %v715 = vxor.u32 %v714, 2147483648
        %v716 = vmul.f32 %v715, 1.442695
        %v717 = vpow.pop %v716
        %v718 = vadd.f32 %v717, 1.0
        %v719 = vrcp.pop %v718
        %v720 = vmul.f32 %v718, %v719
        %v721 = vsub.f32 1.0, %v720
        %v722 = vmul.f32 %v719, %v721
        %v723 = vadd.f32 %v719, %v722
        %vm724 = vweird.f32 %v718
        %vm725 = vweird.f32 %v719
        %vm726 = vmor %vm724, %vm725
        %v727 = vsel %vm726, %v719, %v723
        %v728 = vand.u32 2147483647, %v718
        %vm729 = vcmp.eq.f32.partialorder %v728, 8.507059e+37
        %v730 = vand.u32 %v718, 2147483648
        %v731 = vor.u32 1.1754944e-38, %v730
        %v732 = vsel %vm729, %v731, %v727
        %v733 = vmul.f32 1.0, %v732
        %v735 = vrot.slane %v714, 2
        %v737 = vxor.u32 %v735, 2147483648
        %v738 = vmul.f32 %v737, 1.442695
        %v739 = vpow.pop %v738
        %v740 = vadd.f32 %v739, 1.0
        %v741 = vrcp.pop %v740
        %v742 = vmul.f32 %v740, %v741
        %v743 = vsub.f32 1.0, %v742
        %v744 = vmul.f32 %v741, %v743
        %v745 = vadd.f32 %v741, %v744
        %vm746 = vweird.f32 %v740
        %vm747 = vweird.f32 %v741
        %vm748 = vmor %vm746, %vm747
        %v749 = vsel %vm748, %v741, %v745
        %v750 = vand.u32 2147483647, %v740
        %vm751 = vcmp.eq.f32.partialorder %v750, 8.507059e+37
        %v752 = vand.u32 %v740, 2147483648
        %v753 = vor.u32 1.1754944e-38, %v752
        %v754 = vsel %vm751, %v753, %v749
        %v755 = vmul.f32 1.0, %v754
        %v756 = vrot.slane %v714, 4
        %v758 = vtanh.pop %v756
        %v759 = vrot.slane %v714, 6
        %v761 = vxor.u32 %v759, 2147483648
        %v762 = vmul.f32 %v761, 1.442695
        %v763 = vpow.pop %v762
        %v764 = vadd.f32 %v763, 1.0
        %v765 = vrcp.pop %v764
        %v766 = vmul.f32 %v764, %v765
        %v767 = vsub.f32 1.0, %v766
        %v768 = vmul.f32 %v765, %v767
        %v769 = vadd.f32 %v765, %v768
        %vm770 = vweird.f32 %v764
        %vm771 = vweird.f32 %v765
        %vm772 = vmor %vm770, %vm771
        %v773 = vsel %vm772, %v765, %v769
        %v774 = vand.u32 2147483647, %v764
        %vm775 = vcmp.eq.f32.partialorder %v774, 8.507059e+37
        %v776 = vand.u32 %v764, 2147483648
        %v777 = vor.u32 1.1754944e-38, %v776
        %v778 = vsel %vm775, %v777, %v773
        %v779 = vmul.f32 1.0, %v778
        %v780 = vmul.f32 %v755, %v639
        %v781 = vmul.f32 %v733, %v758
        %v782 = vadd.f32 %v780, %v781
        %v783 = vtanh.pop %v782
        %v784 = vmul.f32 %v779, %v783
        %s785 = smul.u32 %s645, 2
        %s786 = scalar_lea.vmem %s303, %s785 [#allocation4]
        %787 = vst [vmem:[%s786] sm:$0x3] %v784
        %s788 = scalar_select %p339, 2, 5
        %s789 = smul.u32 %s788, 4
        %s790 = smul.addr %s789, 2
        %s791 = scalar_lea.vmem %s275, %s790 [#allocation2]
        %v792 = vld [vmem:[%s791] sm:$0xff]
        %v793 = vpack.c.bf16 %v784, %v784
        %794 = vmatpush.bf16.msra.mxu0 %v469
        %795 = vmatpush.bf16.msra.mxu0 %v465
        %796 = vmatpush.bf16.msra.mxu0 %v461
        %797 = vmatpush.bf16.msra.mxu0 %v457
        %798 = vmatpush.bf16.msra.mxu0 %v453
        %799 = vmatpush.bf16.msra.mxu0 %v449
        %800 = vmatpush.bf16.msra.mxu0 %v445
        %801 = vmatpush.bf16.msra.mxu0 %v441
        %802 = vmatmul.bf16.gmra.mxu0 %v793
        %v803 = vpop.f32.mrf.mxu0
        %v804 = vadd.f32 0.0, %v803
        %v805 = vpop.f32.mrf.mxu0
        %806 = vdwg.mxu0
        %807 = vmatpush.bf16.msra.mxu0 %v470
        %808 = vmatpush.bf16.msra.mxu0 %v466
        %809 = vmatpush.bf16.msra.mxu0 %v462
        %810 = vmatpush.bf16.msra.mxu0 %v458
        %811 = vmatpush.bf16.msra.mxu0 %v454
        %812 = vmatpush.bf16.msra.mxu0 %v450
        %813 = vmatpush.bf16.msra.mxu0 %v446
        %814 = vmatpush.bf16.msra.mxu0 %v442
        %815 = vmatmul.bf16.gmra.mxu0 %v793
        %v816 = vpop.f32.mrf.mxu0
        %v817 = vadd.f32 0.0, %v816
        %v818 = vpop.f32.mrf.mxu0
        %819 = vdwg.mxu0
        %820 = vmatpush.bf16.msra.mxu0 %v471
        %821 = vmatpush.bf16.msra.mxu0 %v467
        %822 = vmatpush.bf16.msra.mxu0 %v463
        %823 = vmatpush.bf16.msra.mxu0 %v459
        %824 = vmatpush.bf16.msra.mxu0 %v455
        %825 = vmatpush.bf16.msra.mxu0 %v451
        %826 = vmatpush.bf16.msra.mxu0 %v447
        %827 = vmatpush.bf16.msra.mxu0 %v443
        %828 = vmatmul.bf16.gmra.mxu0 %v793
        %v829 = vpop.f32.mrf.mxu0
        %v830 = vadd.f32 0.0, %v829
        %v831 = vpop.f32.mrf.mxu0
        %832 = vdwg.mxu0
        %833 = vmatpush.bf16.msra.mxu0 %v472
        %834 = vmatpush.bf16.msra.mxu0 %v468
        %835 = vmatpush.bf16.msra.mxu0 %v464
        %836 = vmatpush.bf16.msra.mxu0 %v460
        %837 = vmatpush.bf16.msra.mxu0 %v456
        %838 = vmatpush.bf16.msra.mxu0 %v452
        %839 = vmatpush.bf16.msra.mxu0 %v448
        %840 = vmatpush.bf16.msra.mxu0 %v444
        %841 = vmatmul.bf16.gmra.mxu0 %v793
        %v842 = vpop.f32.mrf.mxu0
        %v843 = vadd.f32 0.0, %v842
        %v844 = vpop.f32.mrf.mxu0
        %845 = vdwg.mxu0
        %v850 = vrot.slane %v817, 6
        %v851 = vrot.slane %v830, 4
        %v852 = vrot.slane %v843, 2
        %v853 = vsel %vm564, %v804, %v850
        %v854 = vsel %vm566, %v851, %v852
        %v855 = vsel %vm568, %v853, %v854
        %v857 = vadd.f32 %v792, %v855
        %v858 = vxor.u32 %v857, 2147483648
        %v859 = vmul.f32 %v858, 1.442695
        %v860 = vpow.pop %v859
        %v861 = vadd.f32 %v860, 1.0
        %v862 = vrcp.pop %v861
        %v863 = vmul.f32 %v861, %v862
        %v864 = vsub.f32 1.0, %v863
        %v865 = vmul.f32 %v862, %v864
        %v866 = vadd.f32 %v862, %v865
        %vm867 = vweird.f32 %v861
        %vm868 = vweird.f32 %v862
        %vm869 = vmor %vm867, %vm868
        %v870 = vsel %vm869, %v862, %v866
        %v871 = vand.u32 2147483647, %v861
        %vm872 = vcmp.eq.f32.partialorder %v871, 8.507059e+37
        %v873 = vand.u32 %v861, 2147483648
        %v874 = vor.u32 1.1754944e-38, %v873
        %v875 = vsel %vm872, %v874, %v870
        %v876 = vmul.f32 1.0, %v875
        %v878 = vrot.slane %v857, 2
        %v880 = vxor.u32 %v878, 2147483648
        %v881 = vmul.f32 %v880, 1.442695
        %v882 = vpow.pop %v881
        %v883 = vadd.f32 %v882, 1.0
        %v884 = vrcp.pop %v883
        %v885 = vmul.f32 %v883, %v884
        %v886 = vsub.f32 1.0, %v885
        %v887 = vmul.f32 %v884, %v886
        %v888 = vadd.f32 %v884, %v887
        %vm889 = vweird.f32 %v883
        %vm890 = vweird.f32 %v884
        %vm891 = vmor %vm889, %vm890
        %v892 = vsel %vm891, %v884, %v888
        %v893 = vand.u32 2147483647, %v883
        %vm894 = vcmp.eq.f32.partialorder %v893, 8.507059e+37
        %v895 = vand.u32 %v883, 2147483648
        %v896 = vor.u32 1.1754944e-38, %v895
        %v897 = vsel %vm894, %v896, %v892
        %v898 = vmul.f32 1.0, %v897
        %v899 = vrot.slane %v857, 4
        %v901 = vtanh.pop %v899
        %v902 = vrot.slane %v857, 6
        %v904 = vxor.u32 %v902, 2147483648
        %v905 = vmul.f32 %v904, 1.442695
        %v906 = vpow.pop %v905
        %v907 = vadd.f32 %v906, 1.0
        %v908 = vrcp.pop %v907
        %v909 = vmul.f32 %v907, %v908
        %v910 = vsub.f32 1.0, %v909
        %v911 = vmul.f32 %v908, %v910
        %v912 = vadd.f32 %v908, %v911
        %vm913 = vweird.f32 %v907
        %vm914 = vweird.f32 %v908
        %vm915 = vmor %vm913, %vm914
        %v916 = vsel %vm915, %v908, %v912
        %v917 = vand.u32 2147483647, %v907
        %vm918 = vcmp.eq.f32.partialorder %v917, 8.507059e+37
        %v919 = vand.u32 %v907, 2147483648
        %v920 = vor.u32 1.1754944e-38, %v919
        %v921 = vsel %vm918, %v920, %v916
        %v922 = vmul.f32 1.0, %v921
        %v923 = vmul.f32 %v898, %v782
        %v924 = vmul.f32 %v876, %v901
        %v925 = vadd.f32 %v923, %v924
        %v926 = vtanh.pop %v925
        %v927 = vmul.f32 %v922, %v926
        %s928 = smul.u32 %s788, 2
        %s929 = scalar_lea.vmem %s303, %s928 [#allocation4]
        %930 = vst [vmem:[%s929] sm:$0x3] %v927
        %s931 = scalar_select %p339, 3, 4
        %s932 = smul.u32 %s931, 4
        %s933 = smul.addr %s932, 2
        %s934 = scalar_lea.vmem %s275, %s933 [#allocation2]
        %v935 = vld [vmem:[%s934] sm:$0xff]
        %v936 = vpack.c.bf16 %v927, %v927
        %937 = vmatpush.bf16.msra.mxu0 %v469
        %938 = vmatpush.bf16.msra.mxu0 %v465
        %939 = vmatpush.bf16.msra.mxu0 %v461
        %940 = vmatpush.bf16.msra.mxu0 %v457
        %941 = vmatpush.bf16.msra.mxu0 %v453
        %942 = vmatpush.bf16.msra.mxu0 %v449
        %943 = vmatpush.bf16.msra.mxu0 %v445
        %944 = vmatpush.bf16.msra.mxu0 %v441
        %945 = vmatmul.bf16.gmra.mxu0 %v936
        %v946 = vpop.f32.mrf.mxu0
        %v947 = vadd.f32 0.0, %v946
        %v948 = vpop.f32.mrf.mxu0
        %949 = vdwg.mxu0
        %950 = vmatpush.bf16.msra.mxu0 %v470
        %951 = vmatpush.bf16.msra.mxu0 %v466
        %952 = vmatpush.bf16.msra.mxu0 %v462
        %953 = vmatpush.bf16.msra.mxu0 %v458
        %954 = vmatpush.bf16.msra.mxu0 %v454
        %955 = vmatpush.bf16.msra.mxu0 %v450
        %956 = vmatpush.bf16.msra.mxu0 %v446
        %957 = vmatpush.bf16.msra.mxu0 %v442
        %958 = vmatmul.bf16.gmra.mxu0 %v936
        %v959 = vpop.f32.mrf.mxu0
        %v960 = vadd.f32 0.0, %v959
        %v961 = vpop.f32.mrf.mxu0
        %962 = vdwg.mxu0
        %963 = vmatpush.bf16.msra.mxu0 %v471
        %964 = vmatpush.bf16.msra.mxu0 %v467
        %965 = vmatpush.bf16.msra.mxu0 %v463
        %966 = vmatpush.bf16.msra.mxu0 %v459
        %967 = vmatpush.bf16.msra.mxu0 %v455
        %968 = vmatpush.bf16.msra.mxu0 %v451
        %969 = vmatpush.bf16.msra.mxu0 %v447
        %970 = vmatpush.bf16.msra.mxu0 %v443
        %971 = vmatmul.bf16.gmra.mxu0 %v936
        %v972 = vpop.f32.mrf.mxu0
        %v973 = vadd.f32 0.0, %v972
        %v974 = vpop.f32.mrf.mxu0
        %975 = vdwg.mxu0
        %976 = vmatpush.bf16.msra.mxu0 %v472
        %977 = vmatpush.bf16.msra.mxu0 %v468
        %978 = vmatpush.bf16.msra.mxu0 %v464
        %979 = vmatpush.bf16.msra.mxu0 %v460
        %980 = vmatpush.bf16.msra.mxu0 %v456
        %981 = vmatpush.bf16.msra.mxu0 %v452
        %982 = vmatpush.bf16.msra.mxu0 %v448
        %983 = vmatpush.bf16.msra.mxu0 %v444
        %984 = vmatmul.bf16.gmra.mxu0 %v936
        %v985 = vpop.f32.mrf.mxu0
        %v986 = vadd.f32 0.0, %v985
        %v987 = vpop.f32.mrf.mxu0
        %988 = vdwg.mxu0
        %v993 = vrot.slane %v960, 6
        %v994 = vrot.slane %v973, 4
        %v995 = vrot.slane %v986, 2
        %v996 = vsel %vm564, %v947, %v993
        %v997 = vsel %vm566, %v994, %v995
        %v998 = vsel %vm568, %v996, %v997
        %v1000 = vadd.f32 %v935, %v998
        %v1001 = vxor.u32 %v1000, 2147483648
        %v1002 = vmul.f32 %v1001, 1.442695
        %v1003 = vpow.pop %v1002
        %v1004 = vadd.f32 %v1003, 1.0
        %v1005 = vrcp.pop %v1004
        %v1006 = vmul.f32 %v1004, %v1005
        %v1007 = vsub.f32 1.0, %v1006
        %v1008 = vmul.f32 %v1005, %v1007
        %v1009 = vadd.f32 %v1005, %v1008
        %vm1010 = vweird.f32 %v1004
        %vm1011 = vweird.f32 %v1005
        %vm1012 = vmor %vm1010, %vm1011
        %v1013 = vsel %vm1012, %v1005, %v1009
        %v1014 = vand.u32 2147483647, %v1004
        %vm1015 = vcmp.eq.f32.partialorder %v1014, 8.507059e+37
        %v1016 = vand.u32 %v1004, 2147483648
        %v1017 = vor.u32 1.1754944e-38, %v1016
        %v1018 = vsel %vm1015, %v1017, %v1013
        %v1019 = vmul.f32 1.0, %v1018
        %v1021 = vrot.slane %v1000, 2
        %v1023 = vxor.u32 %v1021, 2147483648
        %v1024 = vmul.f32 %v1023, 1.442695
        %v1025 = vpow.pop %v1024
        %v1026 = vadd.f32 %v1025, 1.0
        %v1027 = vrcp.pop %v1026
        %v1028 = vmul.f32 %v1026, %v1027
        %v1029 = vsub.f32 1.0, %v1028
        %v1030 = vmul.f32 %v1027, %v1029
        %v1031 = vadd.f32 %v1027, %v1030
        %vm1032 = vweird.f32 %v1026
        %vm1033 = vweird.f32 %v1027
        %vm1034 = vmor %vm1032, %vm1033
        %v1035 = vsel %vm1034, %v1027, %v1031
        %v1036 = vand.u32 2147483647, %v1026
        %vm1037 = vcmp.eq.f32.partialorder %v1036, 8.507059e+37
        %v1038 = vand.u32 %v1026, 2147483648
        %v1039 = vor.u32 1.1754944e-38, %v1038
        %v1040 = vsel %vm1037, %v1039, %v1035
        %v1041 = vmul.f32 1.0, %v1040
        %v1042 = vrot.slane %v1000, 4
        %v1044 = vtanh.pop %v1042
        %v1045 = vrot.slane %v1000, 6
        %v1047 = vxor.u32 %v1045, 2147483648
        %v1048 = vmul.f32 %v1047, 1.442695
        %v1049 = vpow.pop %v1048
        %v1050 = vadd.f32 %v1049, 1.0
        %v1051 = vrcp.pop %v1050
        %v1052 = vmul.f32 %v1050, %v1051
        %v1053 = vsub.f32 1.0, %v1052
        %v1054 = vmul.f32 %v1051, %v1053
        %v1055 = vadd.f32 %v1051, %v1054
        %vm1056 = vweird.f32 %v1050
        %vm1057 = vweird.f32 %v1051
        %vm1058 = vmor %vm1056, %vm1057
        %v1059 = vsel %vm1058, %v1051, %v1055
        %v1060 = vand.u32 2147483647, %v1050
        %vm1061 = vcmp.eq.f32.partialorder %v1060, 8.507059e+37
        %v1062 = vand.u32 %v1050, 2147483648
        %v1063 = vor.u32 1.1754944e-38, %v1062
        %v1064 = vsel %vm1061, %v1063, %v1059
        %v1065 = vmul.f32 1.0, %v1064
        %v1066 = vmul.f32 %v1041, %v925
        %v1067 = vmul.f32 %v1019, %v1044
        %v1068 = vadd.f32 %v1066, %v1067
        %v1069 = vtanh.pop %v1068
        %v1070 = vmul.f32 %v1065, %v1069
        %s1071 = smul.u32 %s931, 2
        %s1072 = scalar_lea.vmem %s303, %s1071 [#allocation4]
        %1073 = vst [vmem:[%s1072] sm:$0x3] %v1070
        %s1074 = scalar_select %p339, 4, 3
        %s1075 = smul.u32 %s1074, 4
        %s1076 = smul.addr %s1075, 2
        %s1077 = scalar_lea.vmem %s275, %s1076 [#allocation2]
        %v1078 = vld [vmem:[%s1077] sm:$0xff]
        %v1079 = vpack.c.bf16 %v1070, %v1070
        %1080 = vmatpush.bf16.msra.mxu0 %v469
        %1081 = vmatpush.bf16.msra.mxu0 %v465
        %1082 = vmatpush.bf16.msra.mxu0 %v461
        %1083 = vmatpush.bf16.msra.mxu0 %v457
        %1084 = vmatpush.bf16.msra.mxu0 %v453
        %1085 = vmatpush.bf16.msra.mxu0 %v449
        %1086 = vmatpush.bf16.msra.mxu0 %v445
        %1087 = vmatpush.bf16.msra.mxu0 %v441
        %1088 = vmatmul.bf16.gmra.mxu0 %v1079
        %v1089 = vpop.f32.mrf.mxu0
        %v1090 = vadd.f32 0.0, %v1089
        %v1091 = vpop.f32.mrf.mxu0
        %1092 = vdwg.mxu0
        %1093 = vmatpush.bf16.msra.mxu0 %v470
        %1094 = vmatpush.bf16.msra.mxu0 %v466
        %1095 = vmatpush.bf16.msra.mxu0 %v462
        %1096 = vmatpush.bf16.msra.mxu0 %v458
        %1097 = vmatpush.bf16.msra.mxu0 %v454
        %1098 = vmatpush.bf16.msra.mxu0 %v450
        %1099 = vmatpush.bf16.msra.mxu0 %v446
        %1100 = vmatpush.bf16.msra.mxu0 %v442
        %1101 = vmatmul.bf16.gmra.mxu0 %v1079
        %v1102 = vpop.f32.mrf.mxu0
        %v1103 = vadd.f32 0.0, %v1102
        %v1104 = vpop.f32.mrf.mxu0
        %1105 = vdwg.mxu0
        %1106 = vmatpush.bf16.msra.mxu0 %v471
        %1107 = vmatpush.bf16.msra.mxu0 %v467
        %1108 = vmatpush.bf16.msra.mxu0 %v463
        %1109 = vmatpush.bf16.msra.mxu0 %v459
        %1110 = vmatpush.bf16.msra.mxu0 %v455
        %1111 = vmatpush.bf16.msra.mxu0 %v451
        %1112 = vmatpush.bf16.msra.mxu0 %v447
        %1113 = vmatpush.bf16.msra.mxu0 %v443
        %1114 = vmatmul.bf16.gmra.mxu0 %v1079
        %v1115 = vpop.f32.mrf.mxu0
        %v1116 = vadd.f32 0.0, %v1115
        %v1117 = vpop.f32.mrf.mxu0
        %1118 = vdwg.mxu0
        %1119 = vmatpush.bf16.msra.mxu0 %v472
        %1120 = vmatpush.bf16.msra.mxu0 %v468
        %1121 = vmatpush.bf16.msra.mxu0 %v464
        %1122 = vmatpush.bf16.msra.mxu0 %v460
        %1123 = vmatpush.bf16.msra.mxu0 %v456
        %1124 = vmatpush.bf16.msra.mxu0 %v452
        %1125 = vmatpush.bf16.msra.mxu0 %v448
        %1126 = vmatpush.bf16.msra.mxu0 %v444
        %1127 = vmatmul.bf16.gmra.mxu0 %v1079
        %v1128 = vpop.f32.mrf.mxu0
        %v1129 = vadd.f32 0.0, %v1128
        %v1130 = vpop.f32.mrf.mxu0
        %1131 = vdwg.mxu0
        %v1136 = vrot.slane %v1103, 6
        %v1137 = vrot.slane %v1116, 4
        %v1138 = vrot.slane %v1129, 2
        %v1139 = vsel %vm564, %v1090, %v1136
        %v1140 = vsel %vm566, %v1137, %v1138
        %v1141 = vsel %vm568, %v1139, %v1140
        %v1143 = vadd.f32 %v1078, %v1141
        %v1144 = vxor.u32 %v1143, 2147483648
        %v1145 = vmul.f32 %v1144, 1.442695
        %v1146 = vpow.pop %v1145
        %v1147 = vadd.f32 %v1146, 1.0
        %v1148 = vrcp.pop %v1147
        %v1149 = vmul.f32 %v1147, %v1148
        %v1150 = vsub.f32 1.0, %v1149
        %v1151 = vmul.f32 %v1148, %v1150
        %v1152 = vadd.f32 %v1148, %v1151
        %vm1153 = vweird.f32 %v1147
        %vm1154 = vweird.f32 %v1148
        %vm1155 = vmor %vm1153, %vm1154
        %v1156 = vsel %vm1155, %v1148, %v1152
        %v1157 = vand.u32 2147483647, %v1147
        %vm1158 = vcmp.eq.f32.partialorder %v1157, 8.507059e+37
        %v1159 = vand.u32 %v1147, 2147483648
        %v1160 = vor.u32 1.1754944e-38, %v1159
        %v1161 = vsel %vm1158, %v1160, %v1156
        %v1162 = vmul.f32 1.0, %v1161
        %v1164 = vrot.slane %v1143, 2
        %v1166 = vxor.u32 %v1164, 2147483648
        %v1167 = vmul.f32 %v1166, 1.442695
        %v1168 = vpow.pop %v1167
        %v1169 = vadd.f32 %v1168, 1.0
        %v1170 = vrcp.pop %v1169
        %v1171 = vmul.f32 %v1169, %v1170
        %v1172 = vsub.f32 1.0, %v1171
        %v1173 = vmul.f32 %v1170, %v1172
        %v1174 = vadd.f32 %v1170, %v1173
        %vm1175 = vweird.f32 %v1169
        %vm1176 = vweird.f32 %v1170
        %vm1177 = vmor %vm1175, %vm1176
        %v1178 = vsel %vm1177, %v1170, %v1174
        %v1179 = vand.u32 2147483647, %v1169
        %vm1180 = vcmp.eq.f32.partialorder %v1179, 8.507059e+37
        %v1181 = vand.u32 %v1169, 2147483648
        %v1182 = vor.u32 1.1754944e-38, %v1181
        %v1183 = vsel %vm1180, %v1182, %v1178
        %v1184 = vmul.f32 1.0, %v1183
        %v1185 = vrot.slane %v1143, 4
        %v1187 = vtanh.pop %v1185
        %v1188 = vrot.slane %v1143, 6
        %v1190 = vxor.u32 %v1188, 2147483648
        %v1191 = vmul.f32 %v1190, 1.442695
        %v1192 = vpow.pop %v1191
        %v1193 = vadd.f32 %v1192, 1.0
        %v1194 = vrcp.pop %v1193
        %v1195 = vmul.f32 %v1193, %v1194
        %v1196 = vsub.f32 1.0, %v1195
        %v1197 = vmul.f32 %v1194, %v1196
        %v1198 = vadd.f32 %v1194, %v1197
        %vm1199 = vweird.f32 %v1193
        %vm1200 = vweird.f32 %v1194
        %vm1201 = vmor %vm1199, %vm1200
        %v1202 = vsel %vm1201, %v1194, %v1198
        %v1203 = vand.u32 2147483647, %v1193
        %vm1204 = vcmp.eq.f32.partialorder %v1203, 8.507059e+37
        %v1205 = vand.u32 %v1193, 2147483648
        %v1206 = vor.u32 1.1754944e-38, %v1205
        %v1207 = vsel %vm1204, %v1206, %v1202
        %v1208 = vmul.f32 1.0, %v1207
        %v1209 = vmul.f32 %v1184, %v1068
        %v1210 = vmul.f32 %v1162, %v1187
        %v1211 = vadd.f32 %v1209, %v1210
        %v1212 = vtanh.pop %v1211
        %v1213 = vmul.f32 %v1208, %v1212
        %s1214 = smul.u32 %s1074, 2
        %s1215 = scalar_lea.vmem %s303, %s1214 [#allocation4]
        %1216 = vst [vmem:[%s1215] sm:$0x3] %v1213
        %s1217 = scalar_select %p339, 5, 2
        %s1218 = smul.u32 %s1217, 4
        %s1219 = smul.addr %s1218, 2
        %s1220 = scalar_lea.vmem %s275, %s1219 [#allocation2]
        %v1221 = vld [vmem:[%s1220] sm:$0xff]
        %v1222 = vpack.c.bf16 %v1213, %v1213
        %1223 = vmatpush.bf16.msra.mxu0 %v469
        %1224 = vmatpush.bf16.msra.mxu0 %v465
        %1225 = vmatpush.bf16.msra.mxu0 %v461
        %1226 = vmatpush.bf16.msra.mxu0 %v457
        %1227 = vmatpush.bf16.msra.mxu0 %v453
        %1228 = vmatpush.bf16.msra.mxu0 %v449
        %1229 = vmatpush.bf16.msra.mxu0 %v445
        %1230 = vmatpush.bf16.msra.mxu0 %v441
        %1231 = vmatmul.bf16.gmra.mxu0 %v1222
        %v1232 = vpop.f32.mrf.mxu0
        %v1233 = vadd.f32 0.0, %v1232
        %v1234 = vpop.f32.mrf.mxu0
        %1235 = vdwg.mxu0
        %1236 = vmatpush.bf16.msra.mxu0 %v470
        %1237 = vmatpush.bf16.msra.mxu0 %v466
        %1238 = vmatpush.bf16.msra.mxu0 %v462
        %1239 = vmatpush.bf16.msra.mxu0 %v458
        %1240 = vmatpush.bf16.msra.mxu0 %v454
        %1241 = vmatpush.bf16.msra.mxu0 %v450
        %1242 = vmatpush.bf16.msra.mxu0 %v446
        %1243 = vmatpush.bf16.msra.mxu0 %v442
        %1244 = vmatmul.bf16.gmra.mxu0 %v1222
        %v1245 = vpop.f32.mrf.mxu0
        %v1246 = vadd.f32 0.0, %v1245
        %v1247 = vpop.f32.mrf.mxu0
        %1248 = vdwg.mxu0
        %1249 = vmatpush.bf16.msra.mxu0 %v471
        %1250 = vmatpush.bf16.msra.mxu0 %v467
        %1251 = vmatpush.bf16.msra.mxu0 %v463
        %1252 = vmatpush.bf16.msra.mxu0 %v459
        %1253 = vmatpush.bf16.msra.mxu0 %v455
        %1254 = vmatpush.bf16.msra.mxu0 %v451
        %1255 = vmatpush.bf16.msra.mxu0 %v447
        %1256 = vmatpush.bf16.msra.mxu0 %v443
        %1257 = vmatmul.bf16.gmra.mxu0 %v1222
        %v1258 = vpop.f32.mrf.mxu0
        %v1259 = vadd.f32 0.0, %v1258
        %v1260 = vpop.f32.mrf.mxu0
        %1261 = vdwg.mxu0
        %1262 = vmatpush.bf16.msra.mxu0 %v472
        %1263 = vmatpush.bf16.msra.mxu0 %v468
        %1264 = vmatpush.bf16.msra.mxu0 %v464
        %1265 = vmatpush.bf16.msra.mxu0 %v460
        %1266 = vmatpush.bf16.msra.mxu0 %v456
        %1267 = vmatpush.bf16.msra.mxu0 %v452
        %1268 = vmatpush.bf16.msra.mxu0 %v448
        %1269 = vmatpush.bf16.msra.mxu0 %v444
        %1270 = vmatmul.bf16.gmra.mxu0 %v1222
        %v1271 = vpop.f32.mrf.mxu0
        %v1272 = vadd.f32 0.0, %v1271
        %v1273 = vpop.f32.mrf.mxu0
        %1274 = vdwg.mxu0
        %v1279 = vrot.slane %v1246, 6
        %v1280 = vrot.slane %v1259, 4
        %v1281 = vrot.slane %v1272, 2
        %v1282 = vsel %vm564, %v1233, %v1279
        %v1283 = vsel %vm566, %v1280, %v1281
        %v1284 = vsel %vm568, %v1282, %v1283
        %v1286 = vadd.f32 %v1221, %v1284
        %v1287 = vxor.u32 %v1286, 2147483648
        %v1288 = vmul.f32 %v1287, 1.442695
        %v1289 = vpow.pop %v1288
        %v1290 = vadd.f32 %v1289, 1.0
        %v1291 = vrcp.pop %v1290
        %v1292 = vmul.f32 %v1290, %v1291
        %v1293 = vsub.f32 1.0, %v1292
        %v1294 = vmul.f32 %v1291, %v1293
        %v1295 = vadd.f32 %v1291, %v1294
        %vm1296 = vweird.f32 %v1290
        %vm1297 = vweird.f32 %v1291
        %vm1298 = vmor %vm1296, %vm1297
        %v1299 = vsel %vm1298, %v1291, %v1295
        %v1300 = vand.u32 2147483647, %v1290
        %vm1301 = vcmp.eq.f32.partialorder %v1300, 8.507059e+37
        %v1302 = vand.u32 %v1290, 2147483648
        %v1303 = vor.u32 1.1754944e-38, %v1302
        %v1304 = vsel %vm1301, %v1303, %v1299
        %v1305 = vmul.f32 1.0, %v1304
        %v1307 = vrot.slane %v1286, 2
        %v1309 = vxor.u32 %v1307, 2147483648
        %v1310 = vmul.f32 %v1309, 1.442695
        %v1311 = vpow.pop %v1310
        %v1312 = vadd.f32 %v1311, 1.0
        %v1313 = vrcp.pop %v1312
        %v1314 = vmul.f32 %v1312, %v1313
        %v1315 = vsub.f32 1.0, %v1314
        %v1316 = vmul.f32 %v1313, %v1315
        %v1317 = vadd.f32 %v1313, %v1316
        %vm1318 = vweird.f32 %v1312
        %vm1319 = vweird.f32 %v1313
        %vm1320 = vmor %vm1318, %vm1319
        %v1321 = vsel %vm1320, %v1313, %v1317
        %v1322 = vand.u32 2147483647, %v1312
        %vm1323 = vcmp.eq.f32.partialorder %v1322, 8.507059e+37
        %v1324 = vand.u32 %v1312, 2147483648
        %v1325 = vor.u32 1.1754944e-38, %v1324
        %v1326 = vsel %vm1323, %v1325, %v1321
        %v1327 = vmul.f32 1.0, %v1326
        %v1328 = vrot.slane %v1286, 4
        %v1330 = vtanh.pop %v1328
        %v1331 = vrot.slane %v1286, 6
        %v1333 = vxor.u32 %v1331, 2147483648
        %v1334 = vmul.f32 %v1333, 1.442695
        %v1335 = vpow.pop %v1334
        %v1336 = vadd.f32 %v1335, 1.0
        %v1337 = vrcp.pop %v1336
        %v1338 = vmul.f32 %v1336, %v1337
        %v1339 = vsub.f32 1.0, %v1338
        %v1340 = vmul.f32 %v1337, %v1339
        %v1341 = vadd.f32 %v1337, %v1340
        %vm1342 = vweird.f32 %v1336
        %vm1343 = vweird.f32 %v1337
        %vm1344 = vmor %vm1342, %vm1343
        %v1345 = vsel %vm1344, %v1337, %v1341
        %v1346 = vand.u32 2147483647, %v1336
        %vm1347 = vcmp.eq.f32.partialorder %v1346, 8.507059e+37
        %v1348 = vand.u32 %v1336, 2147483648
        %v1349 = vor.u32 1.1754944e-38, %v1348
        %v1350 = vsel %vm1347, %v1349, %v1345
        %v1351 = vmul.f32 1.0, %v1350
        %v1352 = vmul.f32 %v1327, %v1211
        %v1353 = vmul.f32 %v1305, %v1330
        %v1354 = vadd.f32 %v1352, %v1353
        %v1355 = vtanh.pop %v1354
        %v1356 = vmul.f32 %v1351, %v1355
        %s1357 = smul.u32 %s1217, 2
        %s1358 = scalar_lea.vmem %s303, %s1357 [#allocation4]
        %1359 = vst [vmem:[%s1358] sm:$0x3] %v1356
        %s1360 = scalar_select %p339, 6, 1
        %s1361 = smul.u32 %s1360, 4
        %s1362 = smul.addr %s1361, 2
        %s1363 = scalar_lea.vmem %s275, %s1362 [#allocation2]
        %v1364 = vld [vmem:[%s1363] sm:$0xff]
        %v1365 = vpack.c.bf16 %v1356, %v1356
        %1366 = vmatpush.bf16.msra.mxu0 %v469
        %1367 = vmatpush.bf16.msra.mxu0 %v465
        %1368 = vmatpush.bf16.msra.mxu0 %v461
        %1369 = vmatpush.bf16.msra.mxu0 %v457
        %1370 = vmatpush.bf16.msra.mxu0 %v453
        %1371 = vmatpush.bf16.msra.mxu0 %v449
        %1372 = vmatpush.bf16.msra.mxu0 %v445
        %1373 = vmatpush.bf16.msra.mxu0 %v441
        %1374 = vmatmul.bf16.gmra.mxu0 %v1365
        %v1375 = vpop.f32.mrf.mxu0
        %v1376 = vadd.f32 0.0, %v1375
        %v1377 = vpop.f32.mrf.mxu0
        %1378 = vdwg.mxu0
        %1379 = vmatpush.bf16.msra.mxu0 %v470
        %1380 = vmatpush.bf16.msra.mxu0 %v466
        %1381 = vmatpush.bf16.msra.mxu0 %v462
        %1382 = vmatpush.bf16.msra.mxu0 %v458
        %1383 = vmatpush.bf16.msra.mxu0 %v454
        %1384 = vmatpush.bf16.msra.mxu0 %v450
        %1385 = vmatpush.bf16.msra.mxu0 %v446
        %1386 = vmatpush.bf16.msra.mxu0 %v442
        %1387 = vmatmul.bf16.gmra.mxu0 %v1365
        %v1388 = vpop.f32.mrf.mxu0
        %v1389 = vadd.f32 0.0, %v1388
        %v1390 = vpop.f32.mrf.mxu0
        %1391 = vdwg.mxu0
        %1392 = vmatpush.bf16.msra.mxu0 %v471
        %1393 = vmatpush.bf16.msra.mxu0 %v467
        %1394 = vmatpush.bf16.msra.mxu0 %v463
        %1395 = vmatpush.bf16.msra.mxu0 %v459
        %1396 = vmatpush.bf16.msra.mxu0 %v455
        %1397 = vmatpush.bf16.msra.mxu0 %v451
        %1398 = vmatpush.bf16.msra.mxu0 %v447
        %1399 = vmatpush.bf16.msra.mxu0 %v443
        %1400 = vmatmul.bf16.gmra.mxu0 %v1365
        %v1401 = vpop.f32.mrf.mxu0
        %v1402 = vadd.f32 0.0, %v1401
        %v1403 = vpop.f32.mrf.mxu0
        %1404 = vdwg.mxu0
        %1405 = vmatpush.bf16.msra.mxu0 %v472
        %1406 = vmatpush.bf16.msra.mxu0 %v468
        %1407 = vmatpush.bf16.msra.mxu0 %v464
        %1408 = vmatpush.bf16.msra.mxu0 %v460
        %1409 = vmatpush.bf16.msra.mxu0 %v456
        %1410 = vmatpush.bf16.msra.mxu0 %v452
        %1411 = vmatpush.bf16.msra.mxu0 %v448
        %1412 = vmatpush.bf16.msra.mxu0 %v444
        %1413 = vmatmul.bf16.gmra.mxu0 %v1365
        %v1414 = vpop.f32.mrf.mxu0
        %v1415 = vadd.f32 0.0, %v1414
        %v1416 = vpop.f32.mrf.mxu0
        %1417 = vdwg.mxu0
        %v1422 = vrot.slane %v1389, 6
        %v1423 = vrot.slane %v1402, 4
        %v1424 = vrot.slane %v1415, 2
        %v1425 = vsel %vm564, %v1376, %v1422
        %v1426 = vsel %vm566, %v1423, %v1424
        %v1427 = vsel %vm568, %v1425, %v1426
        %v1429 = vadd.f32 %v1364, %v1427
        %v1430 = vxor.u32 %v1429, 2147483648
        %v1431 = vmul.f32 %v1430, 1.442695
        %v1432 = vpow.pop %v1431
        %v1433 = vadd.f32 %v1432, 1.0
        %v1434 = vrcp.pop %v1433
        %v1435 = vmul.f32 %v1433, %v1434
        %v1436 = vsub.f32 1.0, %v1435
        %v1437 = vmul.f32 %v1434, %v1436
        %v1438 = vadd.f32 %v1434, %v1437
        %vm1439 = vweird.f32 %v1433
        %vm1440 = vweird.f32 %v1434
        %vm1441 = vmor %vm1439, %vm1440
        %v1442 = vsel %vm1441, %v1434, %v1438
        %v1443 = vand.u32 2147483647, %v1433
        %vm1444 = vcmp.eq.f32.partialorder %v1443, 8.507059e+37
        %v1445 = vand.u32 %v1433, 2147483648
        %v1446 = vor.u32 1.1754944e-38, %v1445
        %v1447 = vsel %vm1444, %v1446, %v1442
        %v1448 = vmul.f32 1.0, %v1447
        %v1450 = vrot.slane %v1429, 2
        %v1452 = vxor.u32 %v1450, 2147483648
        %v1453 = vmul.f32 %v1452, 1.442695
        %v1454 = vpow.pop %v1453
        %v1455 = vadd.f32 %v1454, 1.0
        %v1456 = vrcp.pop %v1455
        %v1457 = vmul.f32 %v1455, %v1456
        %v1458 = vsub.f32 1.0, %v1457
        %v1459 = vmul.f32 %v1456, %v1458
        %v1460 = vadd.f32 %v1456, %v1459
        %vm1461 = vweird.f32 %v1455
        %vm1462 = vweird.f32 %v1456
        %vm1463 = vmor %vm1461, %vm1462
        %v1464 = vsel %vm1463, %v1456, %v1460
        %v1465 = vand.u32 2147483647, %v1455
        %vm1466 = vcmp.eq.f32.partialorder %v1465, 8.507059e+37
        %v1467 = vand.u32 %v1455, 2147483648
        %v1468 = vor.u32 1.1754944e-38, %v1467
        %v1469 = vsel %vm1466, %v1468, %v1464
        %v1470 = vmul.f32 1.0, %v1469
        %v1471 = vrot.slane %v1429, 4
        %v1473 = vtanh.pop %v1471
        %v1474 = vrot.slane %v1429, 6
        %v1476 = vxor.u32 %v1474, 2147483648
        %v1477 = vmul.f32 %v1476, 1.442695
        %v1478 = vpow.pop %v1477
        %v1479 = vadd.f32 %v1478, 1.0
        %v1480 = vrcp.pop %v1479
        %v1481 = vmul.f32 %v1479, %v1480
        %v1482 = vsub.f32 1.0, %v1481
        %v1483 = vmul.f32 %v1480, %v1482
        %v1484 = vadd.f32 %v1480, %v1483
        %vm1485 = vweird.f32 %v1479
        %vm1486 = vweird.f32 %v1480
        %vm1487 = vmor %vm1485, %vm1486
        %v1488 = vsel %vm1487, %v1480, %v1484
        %v1489 = vand.u32 2147483647, %v1479
        %vm1490 = vcmp.eq.f32.partialorder %v1489, 8.507059e+37
        %v1491 = vand.u32 %v1479, 2147483648
        %v1492 = vor.u32 1.1754944e-38, %v1491
        %v1493 = vsel %vm1490, %v1492, %v1488
        %v1494 = vmul.f32 1.0, %v1493
        %v1495 = vmul.f32 %v1470, %v1354
        %v1496 = vmul.f32 %v1448, %v1473
        %v1497 = vadd.f32 %v1495, %v1496
        %v1498 = vtanh.pop %v1497
        %v1499 = vmul.f32 %v1494, %v1498
        %s1500 = smul.u32 %s1360, 2
        %s1501 = scalar_lea.vmem %s303, %s1500 [#allocation4]
        %1502 = vst [vmem:[%s1501] sm:$0x3] %v1499
        %s1503 = scalar_select %p339, 7, 0
        %s1504 = smul.u32 %s1503, 4
        %s1505 = smul.addr %s1504, 2
        %s1506 = scalar_lea.vmem %s275, %s1505 [#allocation2]
        %v1507 = vld [vmem:[%s1506] sm:$0xff]
        %v1508 = vpack.c.bf16 %v1499, %v1499
        %1509 = vmatpush.bf16.msra.mxu0 %v469
        %1510 = vmatpush.bf16.msra.mxu0 %v465
        %1511 = vmatpush.bf16.msra.mxu0 %v461
        %1512 = vmatpush.bf16.msra.mxu0 %v457
        %1513 = vmatpush.bf16.msra.mxu0 %v453
        %1514 = vmatpush.bf16.msra.mxu0 %v449
        %1515 = vmatpush.bf16.msra.mxu0 %v445
        %1516 = vmatpush.bf16.msra.mxu0 %v441
        %1517 = vmatmul.bf16.gmra.mxu0 %v1508
        %v1518 = vpop.f32.mrf.mxu0
        %v1519 = vadd.f32 0.0, %v1518
        %v1520 = vpop.f32.mrf.mxu0
        %1521 = vdwg.mxu0
        %1522 = vmatpush.bf16.msra.mxu0 %v470
        %1523 = vmatpush.bf16.msra.mxu0 %v466
        %1524 = vmatpush.bf16.msra.mxu0 %v462
        %1525 = vmatpush.bf16.msra.mxu0 %v458
        %1526 = vmatpush.bf16.msra.mxu0 %v454
        %1527 = vmatpush.bf16.msra.mxu0 %v450
        %1528 = vmatpush.bf16.msra.mxu0 %v446
        %1529 = vmatpush.bf16.msra.mxu0 %v442
        %1530 = vmatmul.bf16.gmra.mxu0 %v1508
        %v1531 = vpop.f32.mrf.mxu0
        %v1532 = vadd.f32 0.0, %v1531
        %v1533 = vpop.f32.mrf.mxu0
        %1534 = vdwg.mxu0
        %1535 = vmatpush.bf16.msra.mxu0 %v471
        %1536 = vmatpush.bf16.msra.mxu0 %v467
        %1537 = vmatpush.bf16.msra.mxu0 %v463
        %1538 = vmatpush.bf16.msra.mxu0 %v459
        %1539 = vmatpush.bf16.msra.mxu0 %v455
        %1540 = vmatpush.bf16.msra.mxu0 %v451
        %1541 = vmatpush.bf16.msra.mxu0 %v447
        %1542 = vmatpush.bf16.msra.mxu0 %v443
        %1543 = vmatmul.bf16.gmra.mxu0 %v1508
        %v1544 = vpop.f32.mrf.mxu0
        %v1545 = vadd.f32 0.0, %v1544
        %v1546 = vpop.f32.mrf.mxu0
        %1547 = vdwg.mxu0
        %1548 = vmatpush.bf16.msra.mxu0 %v472
        %1549 = vmatpush.bf16.msra.mxu0 %v468
        %1550 = vmatpush.bf16.msra.mxu0 %v464
        %1551 = vmatpush.bf16.msra.mxu0 %v460
        %1552 = vmatpush.bf16.msra.mxu0 %v456
        %1553 = vmatpush.bf16.msra.mxu0 %v452
        %1554 = vmatpush.bf16.msra.mxu0 %v448
        %1555 = vmatpush.bf16.msra.mxu0 %v444
        %1556 = vmatmul.bf16.gmra.mxu0 %v1508
        %v1557 = vpop.f32.mrf.mxu0
        %v1558 = vadd.f32 0.0, %v1557
        %v1559 = vpop.f32.mrf.mxu0
        %1560 = vdwg.mxu0
        %v1565 = vrot.slane %v1532, 6
        %v1566 = vrot.slane %v1545, 4
        %v1567 = vrot.slane %v1558, 2
        %v1568 = vsel %vm564, %v1519, %v1565
        %v1569 = vsel %vm566, %v1566, %v1567
        %v1570 = vsel %vm568, %v1568, %v1569
        %v1572 = vadd.f32 %v1507, %v1570
        %v1573 = vxor.u32 %v1572, 2147483648
        %v1574 = vmul.f32 %v1573, 1.442695
        %v1575 = vpow.pop %v1574
        %v1576 = vadd.f32 %v1575, 1.0
        %v1577 = vrcp.pop %v1576
        %v1578 = vmul.f32 %v1576, %v1577
        %v1579 = vsub.f32 1.0, %v1578
        %v1580 = vmul.f32 %v1577, %v1579
        %v1581 = vadd.f32 %v1577, %v1580
        %vm1582 = vweird.f32 %v1576
        %vm1583 = vweird.f32 %v1577
        %vm1584 = vmor %vm1582, %vm1583
        %v1585 = vsel %vm1584, %v1577, %v1581
        %v1586 = vand.u32 2147483647, %v1576
        %vm1587 = vcmp.eq.f32.partialorder %v1586, 8.507059e+37
        %v1588 = vand.u32 %v1576, 2147483648
        %v1589 = vor.u32 1.1754944e-38, %v1588
        %v1590 = vsel %vm1587, %v1589, %v1585
        %v1591 = vmul.f32 1.0, %v1590
        %v1593 = vrot.slane %v1572, 2
        %v1595 = vxor.u32 %v1593, 2147483648
        %v1596 = vmul.f32 %v1595, 1.442695
        %v1597 = vpow.pop %v1596
        %v1598 = vadd.f32 %v1597, 1.0
        %v1599 = vrcp.pop %v1598
        %v1600 = vmul.f32 %v1598, %v1599
        %v1601 = vsub.f32 1.0, %v1600
        %v1602 = vmul.f32 %v1599, %v1601
        %v1603 = vadd.f32 %v1599, %v1602
        %vm1604 = vweird.f32 %v1598
        %vm1605 = vweird.f32 %v1599
        %vm1606 = vmor %vm1604, %vm1605
        %v1607 = vsel %vm1606, %v1599, %v1603
        %v1608 = vand.u32 2147483647, %v1598
        %vm1609 = vcmp.eq.f32.partialorder %v1608, 8.507059e+37
        %v1610 = vand.u32 %v1598, 2147483648
        %v1611 = vor.u32 1.1754944e-38, %v1610
        %v1612 = vsel %vm1609, %v1611, %v1607
        %v1613 = vmul.f32 1.0, %v1612
        %v1614 = vrot.slane %v1572, 4
        %v1616 = vtanh.pop %v1614
        %v1617 = vrot.slane %v1572, 6
        %v1619 = vxor.u32 %v1617, 2147483648
        %v1620 = vmul.f32 %v1619, 1.442695
        %v1621 = vpow.pop %v1620
        %v1622 = vadd.f32 %v1621, 1.0
        %v1623 = vrcp.pop %v1622
        %v1624 = vmul.f32 %v1622, %v1623
        %v1625 = vsub.f32 1.0, %v1624
        %v1626 = vmul.f32 %v1623, %v1625
        %v1627 = vadd.f32 %v1623, %v1626
        %vm1628 = vweird.f32 %v1622
        %vm1629 = vweird.f32 %v1623
        %vm1630 = vmor %vm1628, %vm1629
        %v1631 = vsel %vm1630, %v1623, %v1627
        %v1632 = vand.u32 2147483647, %v1622
        %vm1633 = vcmp.eq.f32.partialorder %v1632, 8.507059e+37
        %v1634 = vand.u32 %v1622, 2147483648
        %v1635 = vor.u32 1.1754944e-38, %v1634
        %v1636 = vsel %vm1633, %v1635, %v1631
        %v1637 = vmul.f32 1.0, %v1636
        %v1638 = vmul.f32 %v1613, %v1497
        %v1639 = vmul.f32 %v1591, %v1616
        %v1640 = vadd.f32 %v1638, %v1639
        %v1641 = vtanh.pop %v1640
        %v1642 = vmul.f32 %v1637, %v1641
        %s1643 = smul.u32 %s1503, 2
        %s1644 = scalar_lea.vmem %s303, %s1643 [#allocation4]
        %1645 = vst [vmem:[%s1644] sm:$0x3] %v1642
        %s1646 = sand.u32 %s73, 1
        %s1647 = sand.u32 %s73, 1
        %s1648 = smul.addr %s1647, 16
        %s1649 = scalar_lea.vmem [#allocation4], %s1648
        // Predicated region
        $region90: #{crnn_forward.13} parent=80 // pred_check
          %p1650 = pneg %p83
        $region91: #{crnn_forward.13} parent=80 // pred_check_branch
          %1652 = sbr.rel (%p1650) target = $region93
        $region92: #{crnn_forward.13} parent=80 // pred_region
          %s1653 = smul.addr %s13, 2
          %s1654 = scalar_lea.vmem %s2, %s1653
          // Predicated region
          $region94: #{crnn_forward.13} parent=92 // pred_check
            _
          $region95: #{crnn_forward.13} parent=92 // pred_check_branch
            %1656 = sbr.rel (0) target = $region97
          $region96: #{crnn_forward.13} parent=92 // pred_region
            // Predicated region
            $region98: #{crnn_forward.13} parent=96 // pred_check
              _
            $region99: #{crnn_forward.13} parent=96 // pred_check_branch
              %1658 = sbr.rel target = $region101
            $region100: #{crnn_forward.13} parent=96 // pred_region
              // Predicated region
              $region113: #{crnn_forward.13} parent=100 // pred_check
                _
              $region114: #{crnn_forward.13} parent=100 // pred_check_branch
                %1688 = sbr.rel (0) target = $region116
              $region115: #{crnn_forward.13} parent=100 // pred_region
                loop: start=0, step=1, limit=1
                $region117: #{crnn_forward.13} parent=115 // loop_pre_header
                  _
                $region118: #{crnn_forward.13} parent=115 // loop_header
                  %s1690 = sphi 0, %s1694
                  %p1691 = scmp.ge.s32.totalorder %s1690, 1
                  %s1695 = sphi %s1649, %s1649
                  %s1696 = sphi %s1654, %s1654
                $region119: #{crnn_forward.13} parent=115 // loop_header_branch
                  %1693 = sbr.rel (%p1691) target = $region123
                $region120: #{crnn_forward.13} parent=115 // loop_body
                  _
                $region121: #{crnn_forward.13} parent=115 // loop_footer
                  %s1694 = sadd.s32 1, %s1690
                $region122: #{crnn_forward.13} parent=115 // loop_footer_branch
                  %1689 = sbr.rel target = $region118
                $region123: #{crnn_forward.13} parent=115 // loop_exit
                  _
                %s1698 = ssub.s32 4, 1
                loop: start=0, step=1, limit=1
                $region124: #{crnn_forward.13} parent=115 // loop_pre_header
                  _
                $region125: #{crnn_forward.13} parent=115 // loop_header
                  %s1700 = sphi 0, %s1704
                  %p1701 = scmp.ge.s32.totalorder %s1700, 1
                  %s1705 = sphi %s1649, %s1649
                  %s1706 = sphi %s1654, %s1654
                $region126: #{crnn_forward.13} parent=115 // loop_header_branch
                  %1703 = sbr.rel (%p1701) target = $region130
                $region127: #{crnn_forward.13} parent=115 // loop_body
                  %v1707 = vld [vmem:[%s1705] sm:%s1698]
                  %1708 = vst [vmem:[%s1706] sm:%s1698] %v1707
                  %v1709 = vld [vmem:[%s1705 + $0x2] sm:%s1698]
                  %1710 = vst [vmem:[%s1706 + $0x4] sm:%s1698] %v1709
                  %v1711 = vld [vmem:[%s1705 + $0x4] sm:%s1698]
                  %1712 = vst [vmem:[%s1706 + $0x8] sm:%s1698] %v1711
                  %v1713 = vld [vmem:[%s1705 + $0x6] sm:%s1698]
                  %1714 = vst [vmem:[%s1706 + $0xc] sm:%s1698] %v1713
                  %v1715 = vld [vmem:[%s1705 + $0x8] sm:%s1698]
                  %1716 = vst [vmem:[%s1706 + $0x10] sm:%s1698] %v1715
                  %v1717 = vld [vmem:[%s1705 + $0xa] sm:%s1698]
                  %1718 = vst [vmem:[%s1706 + $0x14] sm:%s1698] %v1717
                  %v1719 = vld [vmem:[%s1705 + $0xc] sm:%s1698]
                  %1720 = vst [vmem:[%s1706 + $0x18] sm:%s1698] %v1719
                  %v1721 = vld [vmem:[%s1705 + $0xe] sm:%s1698]
                  %1722 = vst [vmem:[%s1706 + $0x1c] sm:%s1698] %v1721
                $region128: #{crnn_forward.13} parent=115 // loop_footer
                  %s1704 = sadd.s32 1, %s1700
                $region129: #{crnn_forward.13} parent=115 // loop_footer_branch
                  %1699 = sbr.rel target = $region125
                $region130: #{crnn_forward.13} parent=115 // loop_exit
                  _
              $region116: #{crnn_forward.13} parent=100 // pred_fallthru
                _
            $region101: #{crnn_forward.13} parent=96 // pred_fallthru
              _
            // Predicated region
            $region102: #{crnn_forward.13} parent=96 // pred_check
              _
            $region103: #{crnn_forward.13} parent=96 // pred_check_branch
              %1660 = sbr.rel (0) target = $region105
            $region104: #{crnn_forward.13} parent=96 // pred_region
              %s1662 = ssub.s32 4, 1
              loop: start=0, step=1, limit=1
              $region106: #{crnn_forward.13} parent=104 // loop_pre_header
                _
              $region107: #{crnn_forward.13} parent=104 // loop_header
                %s1664 = sphi 0, %s1668
                %p1665 = scmp.ge.s32.totalorder %s1664, 1
                %s1669 = sphi %s1649, %s1649
                %s1670 = sphi %s1654, %s1654
              $region108: #{crnn_forward.13} parent=104 // loop_header_branch
                %1667 = sbr.rel (%p1665) target = $region112
              $region109: #{crnn_forward.13} parent=104 // loop_body
                %v1671 = vld [vmem:[%s1669] sm:%s1662]
                %1672 = vst [vmem:[%s1670] sm:%s1662] %v1671
                %v1673 = vld [vmem:[%s1669 + $0x2] sm:%s1662]
                %1674 = vst [vmem:[%s1670 + $0x4] sm:%s1662] %v1673
                %v1675 = vld [vmem:[%s1669 + $0x4] sm:%s1662]
                %1676 = vst [vmem:[%s1670 + $0x8] sm:%s1662] %v1675
                %v1677 = vld [vmem:[%s1669 + $0x6] sm:%s1662]
                %1678 = vst [vmem:[%s1670 + $0xc] sm:%s1662] %v1677
                %v1679 = vld [vmem:[%s1669 + $0x8] sm:%s1662]
                %1680 = vst [vmem:[%s1670 + $0x10] sm:%s1662] %v1679
                %v1681 = vld [vmem:[%s1669 + $0xa] sm:%s1662]
                %1682 = vst [vmem:[%s1670 + $0x14] sm:%s1662] %v1681
                %v1683 = vld [vmem:[%s1669 + $0xc] sm:%s1662]
                %1684 = vst [vmem:[%s1670 + $0x18] sm:%s1662] %v1683
                %v1685 = vld [vmem:[%s1669 + $0xe] sm:%s1662]
                %1686 = vst [vmem:[%s1670 + $0x1c] sm:%s1662] %v1685
              $region110: #{crnn_forward.13} parent=104 // loop_footer
                %s1668 = sadd.s32 1, %s1664
              $region111: #{crnn_forward.13} parent=104 // loop_footer_branch
                %1663 = sbr.rel target = $region107
              $region112: #{crnn_forward.13} parent=104 // loop_exit
                _
            $region105: #{crnn_forward.13} parent=96 // pred_fallthru
              _
          $region97: #{crnn_forward.13} parent=92 // pred_fallthru
            _
          %1723 = vnop
        $region93: #{crnn_forward.13} parent=80 // pred_fallthru
          _
      $region81: #{crnn_forward.13} parent=5 // pred_fallthru
        _
      %p1724 = scmp.le.s32.totalorder 2, %s8
      // Predicated region
      $region131: #{crnn_forward.13} parent=5 // pred_check
        %p1725 = pneg %p1724
      $region132: #{crnn_forward.13} parent=5 // pred_check_branch
        %1727 = sbr.rel (%p1725) target = $region134
      $region133: #{crnn_forward.13} parent=5 // pred_region
        %s1728 = ssub.s32 %s8, 2
        // Predicated region
        $region135: #{crnn_forward.13} parent=133 // pred_check
          %p1729 = pneg %p89
        $region136: #{crnn_forward.13} parent=133 // pred_check_branch
          %1731 = sbr.rel (%p1729) target = $region138
        $region137: #{crnn_forward.13} parent=133 // pred_region
          %s1732 = sand.u32 %s74, 1
          %s1733 = sand.u32 %s74, 1
          %s1734 = smul.addr %s1733, 16
          %s1735 = scalar_lea.vmem [#allocation4], %s1734
        $region138: #{crnn_forward.13} parent=133 // pred_fallthru
          _
      $region134: #{crnn_forward.13} parent=5 // pred_fallthru
        _
    $region6: #{crnn_forward.13} parent=1 // loop_footer
      %s12 = sadd.s32 1, %s8
    $region7: #{crnn_forward.13} parent=1 // loop_footer_branch
      %7 = sbr.rel target = $region3
    $region8: #{crnn_forward.13} parent=1 // loop_exit
      _

// kernel: crnn_forward.12
$region0: #{crnn_forward.12}
  #allocation0 [shape = 'u32[]', space=smem, size = 0x4, offset = 0x4, fixed_abs, tag = 'smem constant byte address 0x4 - core index']
  #allocation1 [shape = 'u32[72,128]{1,0:T(1,128)}', space=vmem, size = 0x9000, scoped, tag = 'internal scratch']
  #allocation2 [shape = 'f32[16,1024]{1,0:T(8,128)}', space=vmem, size = 0x10000, scoped, tag = 'scratch operand']
  %s0 = inlined_call_operand.vmem [shape: f32[16,4096], index: 0, kind: input, shape index: {}]
  %s1 = inlined_call_operand.vmem [shape: bf16[4096,1024], index: 1, kind: input, shape index: {}]
  %s2 = inlined_call_operand.vmem [shape: f32[1,1024], index: 2, kind: input, shape index: {}]
  %s3 = inlined_call_operand.vmem [shape: f32[16,1024], index: 3, kind: output, shape index: {}]
  %s4 = sld [smem:[#allocation0]]
  $region76: #{crnn_forward.12} parent=0
    _
  %s6 = ssub.s32 1, %s4
  %s7 = scalar_select 0, %s6, %s4
  $region1: #{crnn_forward.12} parent=0
    #allocation3 [shape = 'u8[65536]{0}', space=vmem, size = 0x10000, scoped, tag = 'input window, operand 0']
    loop: start=0, step=1, limit=10
    $region2: #{crnn_forward.12} parent=1 // loop_pre_header
      _
    $region3: #{crnn_forward.12} parent=1 // loop_header
      %s9 = sphi 0, %s13
      %p10 = scmp.ge.s32.totalorder %s9, 10
      %s16 = sphi 0, %s28
      %s17 = sphi 0, %s24
      %s18 = sphi 0, %s16
      %s19 = sphi 0, %s17
      %s20 = sphi 0, %s18
      %s21 = sphi 0, %s19
      %s33 = sphi 0, %s35
      %s36 = sphi 0, %s33
      %s37 = sphi 0, %s36
      %s53 = sphi 0, %s37
      %s59 = sphi 0, %s61
      %s62 = sphi 0, %s59
      %s63 = sphi 0, %s62
      %s79 = sphi 0, %s63
      %s83 = sphi 0, %s83
      %s85 = sphi 0, %s83
      %s86 = sphi 0, %s85
      %s100 = sphi 0, %s86
      %s106 = sphi 0, %s108
      %s109 = sphi 0, %s106
      %s110 = sphi 0, %s109
      %s126 = sphi 0, %s110
    $region4: #{crnn_forward.12} parent=1 // loop_header_branch
      %12 = sbr.rel (%p10) target = $region8
    $region5: #{crnn_forward.12} parent=1 // loop_body
      %s14 = ssub.s32 %s9, 1
      %s15 = ssub.s32 %s9, 2
      %s22 = sadd.s32 1, %s17
      %p23 = scmp.ge.s32.totalorder %s22, 8
      %s24 = scalar_select %p23, 0, %s22
      %s25 = sadd.s32 1, %s16
      %s26 = scalar_select %p23, %s25, %s16
      %p27 = scmp.ge.s32.totalorder %s26, 1
      %s28 = scalar_select %p27, 0, %s26
      %s29 = ssub.s32 %s16, %s28
      %s30 = ssub.s32 %s17, %s24
      %s31 = sor.u32 %s29, %s30
      %p32 = scmp.eq.s32.totalorder %s31, 0
      %s34 = sadd.s32 %s33, 1
      %s35 = scalar_select %p32, %s33, %s34
      %p38 = pneg %p32
      %p39 = scmp.eq.s32.totalorder %s9, 7
      %p40 = por %p38, %p39
      %p41 = scmp.ne.s32.totalorder %s33, %s36
      %p42 = scmp.eq.s32.totalorder %s9, 0
      %p43 = por %p41, %p42
      %p44 = scmp.ne.s32.totalorder %s33, %s36
      %p45 = scmp.eq.s32.totalorder %s14, 7
      %p46 = por %p44, %p45
      %p47 = scmp.ne.s32.totalorder %s36, %s37
      %p48 = scmp.eq.s32.totalorder %s14, 0
      %p49 = por %p47, %p48
      %p50 = scmp.ne.s32.totalorder %s36, %s37
      %p51 = scmp.eq.s32.totalorder %s15, 7
      %p52 = por %p50, %p51
      %p54 = scmp.ne.s32.totalorder %s37, %s53
      %p55 = scmp.eq.s32.totalorder %s15, 0
      %p56 = por %p54, %p55
      %s57 = ssub.s32 %s17, %s24
      %p58 = scmp.eq.s32.totalorder %s57, 0
      %s60 = sadd.s32 %s59, 1
      %s61 = scalar_select %p58, %s59, %s60
      %p64 = pneg %p58
      %p65 = scmp.eq.s32.totalorder %s9, 7
      %p66 = por %p64, %p65
      %p67 = scmp.ne.s32.totalorder %s59, %s62
      %p68 = scmp.eq.s32.totalorder %s9, 0
      %p69 = por %p67, %p68
      %p70 = scmp.ne.s32.totalorder %s59, %s62
      %p71 = scmp.eq.s32.totalorder %s14, 7
      %p72 = por %p70, %p71
      %p73 = scmp.ne.s32.totalorder %s62, %s63
      %p74 = scmp.eq.s32.totalorder %s14, 0
      %p75 = por %p73, %p74
      %p76 = scmp.ne.s32.totalorder %s62, %s63
      %p77 = scmp.eq.s32.totalorder %s15, 7
      %p78 = por %p76, %p77
      %p80 = scmp.ne.s32.totalorder %s63, %s79
      %p81 = scmp.eq.s32.totalorder %s15, 0
      %p82 = por %p80, %p81
      %s84 = sadd.s32 %s83, 1
      %p87 = scmp.eq.s32.totalorder %s9, 7
      %p88 = scmp.ne.s32.totalorder %s83, %s85
      %p89 = scmp.eq.s32.totalorder %s9, 0
      %p90 = por %p88, %p89
      %p91 = scmp.ne.s32.totalorder %s83, %s85
      %p92 = scmp.eq.s32.totalorder %s14, 7
      %p93 = por %p91, %p92
      %p94 = scmp.ne.s32.totalorder %s85, %s86
      %p95 = scmp.eq.s32.totalorder %s14, 0
      %p96 = por %p94, %p95
      %p97 = scmp.ne.s32.totalorder %s85, %s86
      %p98 = scmp.eq.s32.totalorder %s15, 7
      %p99 = por %p97, %p98
      %p101 = scmp.ne.s32.totalorder %s86, %s100
      %p102 = scmp.eq.s32.totalorder %s15, 0
      %p103 = por %p101, %p102
      %s104 = ssub.s32 %s16, %s28
      %p105 = scmp.eq.s32.totalorder %s104, 0
      %s107 = sadd.s32 %s106, 1
      %s108 = scalar_select %p105, %s106, %s107
      %p111 = pneg %p105
      %p112 = scmp.eq.s32.totalorder %s9, 7
      %p113 = por %p111, %p112
      %p114 = scmp.ne.s32.totalorder %s106, %s109
      %p115 = scmp.eq.s32.totalorder %s9, 0
      %p116 = por %p114, %p115
      %p117 = scmp.ne.s32.totalorder %s106, %s109
      %p118 = scmp.eq.s32.totalorder %s14, 7
      %p119 = por %p117, %p118
      %p120 = scmp.ne.s32.totalorder %s109, %s110
      %p121 = scmp.eq.s32.totalorder %s14, 0
      %p122 = por %p120, %p121
      %p123 = scmp.ne.s32.totalorder %s109, %s110
      %p124 = scmp.eq.s32.totalorder %s15, 7
      %p125 = por %p123, %p124
      %p127 = scmp.ne.s32.totalorder %s110, %s126
      %p128 = scmp.eq.s32.totalorder %s15, 0
      %p129 = por %p127, %p128
      %p130 = scmp.le.s32.totalorder 1, %s9
      %p131 = scmp.lt.s32.totalorder %s9, 9
      %p132 = pnand %p130, %p131
      %p133 = pneg %p132
      // Predicated region
      $region9: #{crnn_forward.12} parent=5 // pred_check
        _
      $region10: #{crnn_forward.12} parent=5 // pred_check_branch
        %135 = sbr.rel (%p132) target = $region12
      $region11: #{crnn_forward.12} parent=5 // pred_region
        %s136 = ssub.s32 %s9, 1
        // Predicated region
        $region13: #{crnn_forward.12} parent=11 // pred_check
          %p137 = pneg %p96
        $region14: #{crnn_forward.12} parent=11 // pred_check_branch
          %139 = sbr.rel (%p137) target = $region16
        $region15: #{crnn_forward.12} parent=11 // pred_region
          _
        $region16: #{crnn_forward.12} parent=11 // pred_fallthru
          _
      $region12: #{crnn_forward.12} parent=5 // pred_fallthru
        _
      %p140 = scmp.lt.s32.totalorder %s9, 8
      // Predicated region
      $region17: #{crnn_forward.12} parent=5 // pred_check
        %p141 = pneg %p140
      $region18: #{crnn_forward.12} parent=5 // pred_check_branch
        %143 = sbr.rel (%p141) target = $region20
      $region19: #{crnn_forward.12} parent=5 // pred_region
        // Predicated region
        $region21: #{crnn_forward.12} parent=19 // pred_check
          %p144 = pneg %p43
        $region22: #{crnn_forward.12} parent=19 // pred_check_branch
          %146 = sbr.rel (%p144) target = $region24
        $region23: #{crnn_forward.12} parent=19 // pred_region
          %s147 = sand.u32 %s33, 1
          %s148 = sand.u32 %s33, 1
          %s149 = smul.addr %s148, 64
          %s150 = scalar_lea.vmem [#allocation3], %s149
          %s151 = smul.u32 2, %s16
          %s152 = smul.u32 4, %s17
          %s153 = smul.addr %s151, 32
          %s154 = sadd.s32 %s152, %s153
          %s155 = smul.addr %s154, 8
          %s156 = scalar_lea.vmem %s0, %s155
          // Predicated region
          $region25: #{crnn_forward.12} parent=23 // pred_check
            _
          $region26: #{crnn_forward.12} parent=23 // pred_check_branch
            %158 = sbr.rel (0) target = $region28
          $region27: #{crnn_forward.12} parent=23 // pred_region
            // Predicated region
            $region29: #{crnn_forward.12} parent=27 // pred_check
              _
            $region30: #{crnn_forward.12} parent=27 // pred_check_branch
              %160 = sbr.rel (0) target = $region32
            $region31: #{crnn_forward.12} parent=27 // pred_region
              loop: start=0, step=1, limit=1
              $region33: #{crnn_forward.12} parent=31 // loop_pre_header
                _
              $region34: #{crnn_forward.12} parent=31 // loop_header
                %s162 = sphi 0, %s166
                %p163 = scmp.ge.s32.totalorder %s162, 1
                %s167 = sphi %s156, %s156
                %s168 = sphi %s150, %s150
              $region35: #{crnn_forward.12} parent=31 // loop_header_branch
                %165 = sbr.rel (%p163) target = $region39
              $region36: #{crnn_forward.12} parent=31 // loop_body
                %v169 = vld [vmem:[%s167] sm:$0xff]
                %170 = vst [vmem:[%s168] sm:$0xff] %v169
                %v171 = vld [vmem:[%s167 + $0x8] sm:$0xff]
                %172 = vst [vmem:[%s168 + $0x8] sm:$0xff] %v171
                %v173 = vld [vmem:[%s167 + $0x10] sm:$0xff]
                %174 = vst [vmem:[%s168 + $0x10] sm:$0xff] %v173
                %v175 = vld [vmem:[%s167 + $0x18] sm:$0xff]
                %176 = vst [vmem:[%s168 + $0x18] sm:$0xff] %v175
                %v177 = vld [vmem:[%s167 + $0x100] sm:$0xff]
                %178 = vst [vmem:[%s168 + $0x20] sm:$0xff] %v177
                %v179 = vld [vmem:[%s167 + $0x108] sm:$0xff]
                %180 = vst [vmem:[%s168 + $0x28] sm:$0xff] %v179
                %v181 = vld [vmem:[%s167 + $0x110] sm:$0xff]
                %182 = vst [vmem:[%s168 + $0x30] sm:$0xff] %v181
                %v183 = vld [vmem:[%s167 + $0x118] sm:$0xff]
                %184 = vst [vmem:[%s168 + $0x38] sm:$0xff] %v183
              $region37: #{crnn_forward.12} parent=31 // loop_footer
                %s166 = sadd.s32 1, %s162
              $region38: #{crnn_forward.12} parent=31 // loop_footer_branch
                %161 = sbr.rel target = $region34
              $region39: #{crnn_forward.12} parent=31 // loop_exit
                _
            $region32: #{crnn_forward.12} parent=27 // pred_fallthru
              _
            // Predicated region
            $region40: #{crnn_forward.12} parent=27 // pred_check
              _
            $region41: #{crnn_forward.12} parent=27 // pred_check_branch
              %186 = sbr.rel target = $region43
            $region42: #{crnn_forward.12} parent=27 // pred_region
              _
            $region43: #{crnn_forward.12} parent=27 // pred_fallthru
              _
          $region28: #{crnn_forward.12} parent=23 // pred_fallthru
            _
          %187 = vnop
        $region24: #{crnn_forward.12} parent=19 // pred_fallthru
          _
        // Predicated region
        $region44: #{crnn_forward.12} parent=19 // pred_check
          %p188 = pneg %p69
        $region45: #{crnn_forward.12} parent=19 // pred_check_branch
          %190 = sbr.rel (%p188) target = $region47
        $region46: #{crnn_forward.12} parent=19 // pred_region
          %s191 = smul.u32 64, %s17
          %p192 = scmp.lt.s32.totalorder %s191, 511
          %s193 = scalar_select %p192, %s191, 511
          %s194 = smul.addr %s193, 8
          %s195 = smul.addr %s194, 4
          %s196 = scalar_lea.vmem %s1, %s195
          %s197 = smul.u32 64, %s17
        $region47: #{crnn_forward.12} parent=19 // pred_fallthru
          _
      $region20: #{crnn_forward.12} parent=5 // pred_fallthru
        _
      %p198 = scmp.le.s32.totalorder 1, %s9
      %p199 = scmp.lt.s32.totalorder %s9, 9
      %p200 = pnand %p198, %p199
      %p201 = pneg %p200
      // Predicated region
      $region48: #{crnn_forward.12} parent=5 // pred_check
        _
      $region49: #{crnn_forward.12} parent=5 // pred_check_branch
        %203 = sbr.rel (%p200) target = $region51
      $region50: #{crnn_forward.12} parent=5 // pred_region
        %s204 = ssub.s32 %s9, 1
        %s205 = sand.u32 %s36, 1
        %s206 = sand.u32 %s36, 1
        %s207 = smul.addr %s206, 64
        %s208 = scalar_lea.vmem [#allocation3], %s207
        // Predicated region
        $region52: #{crnn_forward.12} parent=50 // pred_check
          %p209 = pneg %p49
        $region53: #{crnn_forward.12} parent=50 // pred_check_branch
          %211 = sbr.rel (%p209) target = $region55
        $region54: #{crnn_forward.12} parent=50 // pred_region
          _
        $region55: #{crnn_forward.12} parent=50 // pred_fallthru
          _
        %s212 = sand.u32 %s36, 1
        %s213 = sand.u32 %s36, 1
        %s214 = smul.addr %s213, 64
        %s215 = scalar_lea.vmem [#allocation3], %s214
        %p216 = pneg %p49
        %p217 = pneg %p46
        %s218 = smul.u32 64, %s19
        %p219 = scmp.lt.s32.totalorder %s218, 511
        %s220 = scalar_select %p219, %s218, 511
        %s221 = smul.addr %s220, 8
        %s222 = smul.addr %s221, 4
        %s223 = scalar_lea.vmem %s1, %s222
        %p224 = pneg %p75
        %p225 = pneg %p72
        %p226 = pneg %p96
        %p227 = pneg %p93
        %p228 = pneg %p122
        %p229 = pneg %p119
        %s230 = smul.u32 2, %s18
        %p231 = scmp.lt.s32.totalorder %s230, 1
        %s232 = scalar_select %p231, %s230, 1
        %s233 = smul.addr %s232, 8
        %s234 = smul.addr %s233, 8
        %s235 = scalar_lea.vmem %s3, %s234
        %s236 = smul.u32 2, %s18
        %s237 = smul.u32 4, %s19
        %s238 = smul.u32 64, %s19
        %p239 = scmp.lt.s32.totalorder %s238, 511
        %s240 = scalar_select %p239, %s238, 511
        %s241 = smul.addr %s240, 8
        %s242 = smul.addr %s241, 4
        %s243 = scalar_lea.vmem %s1, %s242
        %s244 = smul.u32 64, %s19
        %s245 = smul.u32 2, %s18
        %p246 = scmp.lt.s32.totalorder %s245, 1
        %s247 = scalar_select %p246, %s245, 1
        %s248 = smul.addr %s247, 8
        %s249 = smul.addr %s248, 8
        %s250 = scalar_lea.vmem %s3, %s249
        %s251 = smul.u32 2, %s18
        %p252 = scmp.eq.s32.totalorder %s19, 0
        // Predicated region
        $region56: #{crnn_forward.12} parent=50 // pred_check
          %p253 = pneg %p252
        $region57: #{crnn_forward.12} parent=50 // pred_check_branch
          %255 = sbr.rel (%p253) target = $region59
        $region58: #{crnn_forward.12} parent=50 // pred_region
          %256 = vst [vmem:[#allocation2] sm:$0xff] 0.0
          %257 = vst [vmem:[#allocation2 + $0x8] sm:$0xff] 0.0
          %258 = vst [vmem:[#allocation2 + $0x10] sm:$0xff] 0.0
          %259 = vst [vmem:[#allocation2 + $0x18] sm:$0xff] 0.0
          %260 = vst [vmem:[#allocation2 + $0x20] sm:$0xff] 0.0
          %261 = vst [vmem:[#allocation2 + $0x28] sm:$0xff] 0.0
          %262 = vst [vmem:[#allocation2 + $0x30] sm:$0xff] 0.0
          %263 = vst [vmem:[#allocation2 + $0x38] sm:$0xff] 0.0
          %264 = vst [vmem:[#allocation2 + $0x40] sm:$0xff] 0.0
          %265 = vst [vmem:[#allocation2 + $0x48] sm:$0xff] 0.0
          %266 = vst [vmem:[#allocation2 + $0x50] sm:$0xff] 0.0
          %267 = vst [vmem:[#allocation2 + $0x58] sm:$0xff] 0.0
          %268 = vst [vmem:[#allocation2 + $0x60] sm:$0xff] 0.0
          %269 = vst [vmem:[#allocation2 + $0x68] sm:$0xff] 0.0
          %270 = vst [vmem:[#allocation2 + $0x70] sm:$0xff] 0.0
          %271 = vst [vmem:[#allocation2 + $0x78] sm:$0xff] 0.0
        $region59: #{crnn_forward.12} parent=50 // pred_fallthru
          _
        %v272 = vld [vmem:[#allocation2] sm:$0xff]
        %v273 = vld [vmem:[#allocation2 + $0x8] sm:$0xff]
        %v274 = vld [vmem:[#allocation2 + $0x10] sm:$0xff]
        %v275 = vld [vmem:[#allocation2 + $0x18] sm:$0xff]
        %v276 = vld [vmem:[#allocation2 + $0x20] sm:$0xff]
        %v277 = vld [vmem:[#allocation2 + $0x28] sm:$0xff]
        %v278 = vld [vmem:[#allocation2 + $0x30] sm:$0xff]
        %v279 = vld [vmem:[#allocation2 + $0x38] sm:$0xff]
        %v280 = vld [vmem:[#allocation2 + $0x40] sm:$0xff]
        %v281 = vld [vmem:[#allocation2 + $0x48] sm:$0xff]
        %v282 = vld [vmem:[#allocation2 + $0x50] sm:$0xff]
        %v283 = vld [vmem:[#allocation2 + $0x58] sm:$0xff]
        %v284 = vld [vmem:[#allocation2 + $0x60] sm:$0xff]
        %v285 = vld [vmem:[#allocation2 + $0x68] sm:$0xff]
        %v286 = vld [vmem:[#allocation2 + $0x70] sm:$0xff]
        %v287 = vld [vmem:[#allocation2 + $0x78] sm:$0xff]
        %v288 = vld [vmem:[%s208] sm:$0xff]
        %v289 = vld [vmem:[%s208 + $0x8] sm:$0xff]
        %v290 = vld [vmem:[%s208 + $0x10] sm:$0xff]
        %v291 = vld [vmem:[%s208 + $0x18] sm:$0xff]
        %v292 = vld [vmem:[%s208 + $0x20] sm:$0xff]
        %v293 = vld [vmem:[%s208 + $0x28] sm:$0xff]
        %v294 = vld [vmem:[%s208 + $0x30] sm:$0xff]
        %v295 = vld [vmem:[%s208 + $0x38] sm:$0xff]
        %v296 = vpack.c.bf16 %v292, %v288
        %v297 = vpack.c.bf16 %v293, %v289
        %v298 = vpack.c.bf16 %v294, %v290
        %v299 = vpack.c.bf16 %v295, %v291
        %v300 = vld [vmem:[%s243] sm:$0xff]
        %v301 = vld [vmem:[%s243 + $0x8] sm:$0xff]
        %v302 = vld [vmem:[%s243 + $0x10] sm:$0xff]
        %v303 = vld [vmem:[%s243 + $0x18] sm:$0xff]
        %v304 = vld [vmem:[%s243 + $0x20] sm:$0xff]
        %v305 = vld [vmem:[%s243 + $0x28] sm:$0xff]
        %v306 = vld [vmem:[%s243 + $0x30] sm:$0xff]
        %v307 = vld [vmem:[%s243 + $0x38] sm:$0xff]
        %v308 = vld [vmem:[%s243 + $0x40] sm:$0xff]
        %v309 = vld [vmem:[%s243 + $0x48] sm:$0xff]
        %v310 = vld [vmem:[%s243 + $0x50] sm:$0xff]
        %v311 = vld [vmem:[%s243 + $0x58] sm:$0xff]
        %v312 = vld [vmem:[%s243 + $0x60] sm:$0xff]
        %v313 = vld [vmem:[%s243 + $0x68] sm:$0xff]
        %v314 = vld [vmem:[%s243 + $0x70] sm:$0xff]
        %v315 = vld [vmem:[%s243 + $0x78] sm:$0xff]
        %v316 = vld [vmem:[%s243 + $0x80] sm:$0xff]
        %v317 = vld [vmem:[%s243 + $0x88] sm:$0xff]
        %v318 = vld [vmem:[%s243 + $0x90] sm:$0xff]
        %v319 = vld [vmem:[%s243 + $0x98] sm:$0xff]
        %v320 = vld [vmem:[%s243 + $0xa0] sm:$0xff]
        %v321 = vld [vmem:[%s243 + $0xa8] sm:$0xff]
        %v322 = vld [vmem:[%s243 + $0xb0] sm:$0xff]
        %v323 = vld [vmem:[%s243 + $0xb8] sm:$0xff]
        %v324 = vld [vmem:[%s243 + $0xc0] sm:$0xff]
        %v325 = vld [vmem:[%s243 + $0xc8] sm:$0xff]
        %v326 = vld [vmem:[%s243 + $0xd0] sm:$0xff]
        %v327 = vld [vmem:[%s243 + $0xd8] sm:$0xff]
        %v328 = vld [vmem:[%s243 + $0xe0] sm:$0xff]
        %v329 = vld [vmem:[%s243 + $0xe8] sm:$0xff]
        %v330 = vld [vmem:[%s243 + $0xf0] sm:$0xff]
        %v331 = vld [vmem:[%s243 + $0xf8] sm:$0xff]
        %v332 = vld [vmem:[%s243 + $0x100] sm:$0xff]
        %v333 = vld [vmem:[%s243 + $0x108] sm:$0xff]
        %v334 = vld [vmem:[%s243 + $0x110] sm:$0xff]
        %v335 = vld [vmem:[%s243 + $0x118] sm:$0xff]
        %v336 = vld [vmem:[%s243 + $0x120] sm:$0xff]
        %v337 = vld [vmem:[%s243 + $0x128] sm:$0xff]
        %v338 = vld [vmem:[%s243 + $0x130] sm:$0xff]
        %v339 = vld [vmem:[%s243 + $0x138] sm:$0xff]
        %v340 = vld [vmem:[%s243 + $0x140] sm:$0xff]
        %v341 = vld [vmem:[%s243 + $0x148] sm:$0xff]
        %v342 = vld [vmem:[%s243 + $0x150] sm:$0xff]
        %v343 = vld [vmem:[%s243 + $0x158] sm:$0xff]
        %v344 = vld [vmem:[%s243 + $0x160] sm:$0xff]
        %v345 = vld [vmem:[%s243 + $0x168] sm:$0xff]
        %v346 = vld [vmem:[%s243 + $0x170] sm:$0xff]
        %v347 = vld [vmem:[%s243 + $0x178] sm:$0xff]
        %v348 = vld [vmem:[%s243 + $0x180] sm:$0xff]
        %v349 = vld [vmem:[%s243 + $0x188] sm:$0xff]
        %v350 = vld [vmem:[%s243 + $0x190] sm:$0xff]
        %v351 = vld [vmem:[%s243 + $0x198] sm:$0xff]
        %v352 = vld [vmem:[%s243 + $0x1a0] sm:$0xff]
        %v353 = vld [vmem:[%s243 + $0x1a8] sm:$0xff]
        %v354 = vld [vmem:[%s243 + $0x1b0] sm:$0xff]
        %v355 = vld [vmem:[%s243 + $0x1b8] sm:$0xff]
        %v356 = vld [vmem:[%s243 + $0x1c0] sm:$0xff]
        %v357 = vld [vmem:[%s243 + $0x1c8] sm:$0xff]
        %v358 = vld [vmem:[%s243 + $0x1d0] sm:$0xff]
        %v359 = vld [vmem:[%s243 + $0x1d8] sm:$0xff]
        %v360 = vld [vmem:[%s243 + $0x1e0] sm:$0xff]
        %v361 = vld [vmem:[%s243 + $0x1e8] sm:$0xff]
        %v362 = vld [vmem:[%s243 + $0x1f0] sm:$0xff]
        %v363 = vld [vmem:[%s243 + $0x1f8] sm:$0xff]
        %v364 = vld [vmem:[%s243 + $0x200] sm:$0xff]
        %v365 = vld [vmem:[%s243 + $0x208] sm:$0xff]
        %v366 = vld [vmem:[%s243 + $0x210] sm:$0xff]
        %v367 = vld [vmem:[%s243 + $0x218] sm:$0xff]
        %v368 = vld [vmem:[%s243 + $0x220] sm:$0xff]
        %v369 = vld [vmem:[%s243 + $0x228] sm:$0xff]
        %v370 = vld [vmem:[%s243 + $0x230] sm:$0xff]
        %v371 = vld [vmem:[%s243 + $0x238] sm:$0xff]
        %v372 = vld [vmem:[%s243 + $0x240] sm:$0xff]
        %v373 = vld [vmem:[%s243 + $0x248] sm:$0xff]
        %v374 = vld [vmem:[%s243 + $0x250] sm:$0xff]
        %v375 = vld [vmem:[%s243 + $0x258] sm:$0xff]
        %v376 = vld [vmem:[%s243 + $0x260] sm:$0xff]
        %v377 = vld [vmem:[%s243 + $0x268] sm:$0xff]
        %v378 = vld [vmem:[%s243 + $0x270] sm:$0xff]
        %v379 = vld [vmem:[%s243 + $0x278] sm:$0xff]
        %v380 = vld [vmem:[%s243 + $0x280] sm:$0xff]
        %v381 = vld [vmem:[%s243 + $0x288] sm:$0xff]
        %v382 = vld [vmem:[%s243 + $0x290] sm:$0xff]
        %v383 = vld [vmem:[%s243 + $0x298] sm:$0xff]
        %v384 = vld [vmem:[%s243 + $0x2a0] sm:$0xff]
        %v385 = vld [vmem:[%s243 + $0x2a8] sm:$0xff]
        %v386 = vld [vmem:[%s243 + $0x2b0] sm:$0xff]
        %v387 = vld [vmem:[%s243 + $0x2b8] sm:$0xff]
        %v388 = vld [vmem:[%s243 + $0x2c0] sm:$0xff]
        %v389 = vld [vmem:[%s243 + $0x2c8] sm:$0xff]
        %v390 = vld [vmem:[%s243 + $0x2d0] sm:$0xff]
        %v391 = vld [vmem:[%s243 + $0x2d8] sm:$0xff]
        %v392 = vld [vmem:[%s243 + $0x2e0] sm:$0xff]
        %v393 = vld [vmem:[%s243 + $0x2e8] sm:$0xff]
        %v394 = vld [vmem:[%s243 + $0x2f0] sm:$0xff]
        %v395 = vld [vmem:[%s243 + $0x2f8] sm:$0xff]
        %v396 = vld [vmem:[%s243 + $0x300] sm:$0xff]
        %v397 = vld [vmem:[%s243 + $0x308] sm:$0xff]
        %v398 = vld [vmem:[%s243 + $0x310] sm:$0xff]
        %v399 = vld [vmem:[%s243 + $0x318] sm:$0xff]
        %v400 = vld [vmem:[%s243 + $0x320] sm:$0xff]
        %v401 = vld [vmem:[%s243 + $0x328] sm:$0xff]
        %v402 = vld [vmem:[%s243 + $0x330] sm:$0xff]
        %v403 = vld [vmem:[%s243 + $0x338] sm:$0xff]
        %v404 = vld [vmem:[%s243 + $0x340] sm:$0xff]
        %v405 = vld [vmem:[%s243 + $0x348] sm:$0xff]
        %v406 = vld [vmem:[%s243 + $0x350] sm:$0xff]
        %v407 = vld [vmem:[%s243 + $0x358] sm:$0xff]
        %v408 = vld [vmem:[%s243 + $0x360] sm:$0xff]
        %v409 = vld [vmem:[%s243 + $0x368] sm:$0xff]
        %v410 = vld [vmem:[%s243 + $0x370] sm:$0xff]
        %v411 = vld [vmem:[%s243 + $0x378] sm:$0xff]
        %v412 = vld [vmem:[%s243 + $0x380] sm:$0xff]
        %v413 = vld [vmem:[%s243 + $0x388] sm:$0xff]
        %v414 = vld [vmem:[%s243 + $0x390] sm:$0xff]
        %v415 = vld [vmem:[%s243 + $0x398] sm:$0xff]
        %v416 = vld [vmem:[%s243 + $0x3a0] sm:$0xff]
        %v417 = vld [vmem:[%s243 + $0x3a8] sm:$0xff]
        %v418 = vld [vmem:[%s243 + $0x3b0] sm:$0xff]
        %v419 = vld [vmem:[%s243 + $0x3b8] sm:$0xff]
        %v420 = vld [vmem:[%s243 + $0x3c0] sm:$0xff]
        %v421 = vld [vmem:[%s243 + $0x3c8] sm:$0xff]
        %v422 = vld [vmem:[%s243 + $0x3d0] sm:$0xff]
        %v423 = vld [vmem:[%s243 + $0x3d8] sm:$0xff]
        %v424 = vld [vmem:[%s243 + $0x3e0] sm:$0xff]
        %v425 = vld [vmem:[%s243 + $0x3e8] sm:$0xff]
        %v426 = vld [vmem:[%s243 + $0x3f0] sm:$0xff]
        %v427 = vld [vmem:[%s243 + $0x3f8] sm:$0xff]
        %v428 = vld [vmem:[%s243 + $0x400] sm:$0xff]
        %v429 = vld [vmem:[%s243 + $0x408] sm:$0xff]
        %v430 = vld [vmem:[%s243 + $0x410] sm:$0xff]
        %v431 = vld [vmem:[%s243 + $0x418] sm:$0xff]
        %v432 = vld [vmem:[%s243 + $0x420] sm:$0xff]
        %v433 = vld [vmem:[%s243 + $0x428] sm:$0xff]
        %v434 = vld [vmem:[%s243 + $0x430] sm:$0xff]
        %v435 = vld [vmem:[%s243 + $0x438] sm:$0xff]
        %v436 = vld [vmem:[%s243 + $0x440] sm:$0xff]
        %v437 = vld [vmem:[%s243 + $0x448] sm:$0xff]
        %v438 = vld [vmem:[%s243 + $0x450] sm:$0xff]
        %v439 = vld [vmem:[%s243 + $0x458] sm:$0xff]
        %v440 = vld [vmem:[%s243 + $0x460] sm:$0xff]
        %v441 = vld [vmem:[%s243 + $0x468] sm:$0xff]
        %v442 = vld [vmem:[%s243 + $0x470] sm:$0xff]
        %v443 = vld [vmem:[%s243 + $0x478] sm:$0xff]
        %v444 = vld [vmem:[%s243 + $0x480] sm:$0xff]
        %v445 = vld [vmem:[%s243 + $0x488] sm:$0xff]
        %v446 = vld [vmem:[%s243 + $0x490] sm:$0xff]
        %v447 = vld [vmem:[%s243 + $0x498] sm:$0xff]
        %v448 = vld [vmem:[%s243 + $0x4a0] sm:$0xff]
        %v449 = vld [vmem:[%s243 + $0x4a8] sm:$0xff]
        %v450 = vld [vmem:[%s243 + $0x4b0] sm:$0xff]
        %v451 = vld [vmem:[%s243 + $0x4b8] sm:$0xff]
        %v452 = vld [vmem:[%s243 + $0x4c0] sm:$0xff]
        %v453 = vld [vmem:[%s243 + $0x4c8] sm:$0xff]
        %v454 = vld [vmem:[%s243 + $0x4d0] sm:$0xff]
        %v455 = vld [vmem:[%s243 + $0x4d8] sm:$0xff]
        %v456 = vld [vmem:[%s243 + $0x4e0] sm:$0xff]
        %v457 = vld [vmem:[%s243 + $0x4e8] sm:$0xff]
        %v458 = vld [vmem:[%s243 + $0x4f0] sm:$0xff]
        %v459 = vld [vmem:[%s243 + $0x4f8] sm:$0xff]
        %v460 = vld [vmem:[%s243 + $0x500] sm:$0xff]
        %v461 = vld [vmem:[%s243 + $0x508] sm:$0xff]
        %v462 = vld [vmem:[%s243 + $0x510] sm:$0xff]
        %v463 = vld [vmem:[%s243 + $0x518] sm:$0xff]
        %v464 = vld [vmem:[%s243 + $0x520] sm:$0xff]
        %v465 = vld [vmem:[%s243 + $0x528] sm:$0xff]
        %v466 = vld [vmem:[%s243 + $0x530] sm:$0xff]
        %v467 = vld [vmem:[%s243 + $0x538] sm:$0xff]
        %v468 = vld [vmem:[%s243 + $0x540] sm:$0xff]
        %v469 = vld [vmem:[%s243 + $0x548] sm:$0xff]
        %v470 = vld [vmem:[%s243 + $0x550] sm:$0xff]
        %v471 = vld [vmem:[%s243 + $0x558] sm:$0xff]
        %v472 = vld [vmem:[%s243 + $0x560] sm:$0xff]
        %v473 = vld [vmem:[%s243 + $0x568] sm:$0xff]
        %v474 = vld [vmem:[%s243 + $0x570] sm:$0xff]
        %v475 = vld [vmem:[%s243 + $0x578] sm:$0xff]
        %v476 = vld [vmem:[%s243 + $0x580] sm:$0xff]
        %v477 = vld [vmem:[%s243 + $0x588] sm:$0xff]
        %v478 = vld [vmem:[%s243 + $0x590] sm:$0xff]
        %v479 = vld [vmem:[%s243 + $0x598] sm:$0xff]
        %v480 = vld [vmem:[%s243 + $0x5a0] sm:$0xff]
        %v481 = vld [vmem:[%s243 + $0x5a8] sm:$0xff]
        %v482 = vld [vmem:[%s243 + $0x5b0] sm:$0xff]
        %v483 = vld [vmem:[%s243 + $0x5b8] sm:$0xff]
        %v484 = vld [vmem:[%s243 + $0x5c0] sm:$0xff]
        %v485 = vld [vmem:[%s243 + $0x5c8] sm:$0xff]
        %v486 = vld [vmem:[%s243 + $0x5d0] sm:$0xff]
        %v487 = vld [vmem:[%s243 + $0x5d8] sm:$0xff]
        %v488 = vld [vmem:[%s243 + $0x5e0] sm:$0xff]
        %v489 = vld [vmem:[%s243 + $0x5e8] sm:$0xff]
        %v490 = vld [vmem:[%s243 + $0x5f0] sm:$0xff]
        %v491 = vld [vmem:[%s243 + $0x5f8] sm:$0xff]
        %v492 = vld [vmem:[%s243 + $0x600] sm:$0xff]
        %v493 = vld [vmem:[%s243 + $0x608] sm:$0xff]
        %v494 = vld [vmem:[%s243 + $0x610] sm:$0xff]
        %v495 = vld [vmem:[%s243 + $0x618] sm:$0xff]
        %v496 = vld [vmem:[%s243 + $0x620] sm:$0xff]
        %v497 = vld [vmem:[%s243 + $0x628] sm:$0xff]
        %v498 = vld [vmem:[%s243 + $0x630] sm:$0xff]
        %v499 = vld [vmem:[%s243 + $0x638] sm:$0xff]
        %v500 = vld [vmem:[%s243 + $0x640] sm:$0xff]
        %v501 = vld [vmem:[%s243 + $0x648] sm:$0xff]
        %v502 = vld [vmem:[%s243 + $0x650] sm:$0xff]
        %v503 = vld [vmem:[%s243 + $0x658] sm:$0xff]
        %v504 = vld [vmem:[%s243 + $0x660] sm:$0xff]
        %v505 = vld [vmem:[%s243 + $0x668] sm:$0xff]
        %v506 = vld [vmem:[%s243 + $0x670] sm:$0xff]
        %v507 = vld [vmem:[%s243 + $0x678] sm:$0xff]
        %v508 = vld [vmem:[%s243 + $0x680] sm:$0xff]
        %v509 = vld [vmem:[%s243 + $0x688] sm:$0xff]
        %v510 = vld [vmem:[%s243 + $0x690] sm:$0xff]
        %v511 = vld [vmem:[%s243 + $0x698] sm:$0xff]
        %v512 = vld [vmem:[%s243 + $0x6a0] sm:$0xff]
        %v513 = vld [vmem:[%s243 + $0x6a8] sm:$0xff]
        %v514 = vld [vmem:[%s243 + $0x6b0] sm:$0xff]
        %v515 = vld [vmem:[%s243 + $0x6b8] sm:$0xff]
        %v516 = vld [vmem:[%s243 + $0x6c0] sm:$0xff]
        %v517 = vld [vmem:[%s243 + $0x6c8] sm:$0xff]
        %v518 = vld [vmem:[%s243 + $0x6d0] sm:$0xff]
        %v519 = vld [vmem:[%s243 + $0x6d8] sm:$0xff]
        %v520 = vld [vmem:[%s243 + $0x6e0] sm:$0xff]
        %v521 = vld [vmem:[%s243 + $0x6e8] sm:$0xff]
        %v522 = vld [vmem:[%s243 + $0x6f0] sm:$0xff]
        %v523 = vld [vmem:[%s243 + $0x6f8] sm:$0xff]
        %v524 = vld [vmem:[%s243 + $0x700] sm:$0xff]
        %v525 = vld [vmem:[%s243 + $0x708] sm:$0xff]
        %v526 = vld [vmem:[%s243 + $0x710] sm:$0xff]
        %v527 = vld [vmem:[%s243 + $0x718] sm:$0xff]
        %v528 = vld [vmem:[%s243 + $0x720] sm:$0xff]
        %v529 = vld [vmem:[%s243 + $0x728] sm:$0xff]
        %v530 = vld [vmem:[%s243 + $0x730] sm:$0xff]
        %v531 = vld [vmem:[%s243 + $0x738] sm:$0xff]
        %v532 = vld [vmem:[%s243 + $0x740] sm:$0xff]
        %v533 = vld [vmem:[%s243 + $0x748] sm:$0xff]
        %v534 = vld [vmem:[%s243 + $0x750] sm:$0xff]
        %v535 = vld [vmem:[%s243 + $0x758] sm:$0xff]
        %v536 = vld [vmem:[%s243 + $0x760] sm:$0xff]
        %v537 = vld [vmem:[%s243 + $0x768] sm:$0xff]
        %v538 = vld [vmem:[%s243 + $0x770] sm:$0xff]
        %v539 = vld [vmem:[%s243 + $0x778] sm:$0xff]
        %v540 = vld [vmem:[%s243 + $0x780] sm:$0xff]
        %v541 = vld [vmem:[%s243 + $0x788] sm:$0xff]
        %v542 = vld [vmem:[%s243 + $0x790] sm:$0xff]
        %v543 = vld [vmem:[%s243 + $0x798] sm:$0xff]
        %v544 = vld [vmem:[%s243 + $0x7a0] sm:$0xff]
        %v545 = vld [vmem:[%s243 + $0x7a8] sm:$0xff]
        %v546 = vld [vmem:[%s243 + $0x7b0] sm:$0xff]
        %v547 = vld [vmem:[%s243 + $0x7b8] sm:$0xff]
        %v548 = vld [vmem:[%s243 + $0x7c0] sm:$0xff]
        %v549 = vld [vmem:[%s243 + $0x7c8] sm:$0xff]
        %v550 = vld [vmem:[%s243 + $0x7d0] sm:$0xff]
        %v551 = vld [vmem:[%s243 + $0x7d8] sm:$0xff]
        %v552 = vld [vmem:[%s243 + $0x7e0] sm:$0xff]
        %v553 = vld [vmem:[%s243 + $0x7e8] sm:$0xff]
        %v554 = vld [vmem:[%s243 + $0x7f0] sm:$0xff]
        %v555 = vld [vmem:[%s243 + $0x7f8] sm:$0xff]
        %v812 = vunpack.c.l.b16 %v300
        %v813 = vunpack.c.h.b16 %v300
        %v814 = vunpack.c.l.b16 %v301
        %v815 = vunpack.c.h.b16 %v301
        %v816 = vunpack.c.l.b16 %v302
        %v817 = vunpack.c.h.b16 %v302
        %v818 = vunpack.c.l.b16 %v303
        %v819 = vunpack.c.h.b16 %v303
        %v820 = vunpack.c.l.b16 %v304
        %v821 = vunpack.c.h.b16 %v304
        %v822 = vunpack.c.l.b16 %v305
        %v823 = vunpack.c.h.b16 %v305
        %v824 = vunpack.c.l.b16 %v306
        %v825 = vunpack.c.h.b16 %v306
        %v826 = vunpack.c.l.b16 %v307
        %v827 = vunpack.c.h.b16 %v307
        %v828 = vunpack.c.l.b16 %v308
        %v829 = vunpack.c.h.b16 %v308
        %v830 = vunpack.c.l.b16 %v309
        %v831 = vunpack.c.h.b16 %v309
        %v832 = vunpack.c.l.b16 %v310
        %v833 = vunpack.c.h.b16 %v310
        %v834 = vunpack.c.l.b16 %v311
        %v835 = vunpack.c.h.b16 %v311
        %v836 = vunpack.c.l.b16 %v312
        %v837 = vunpack.c.h.b16 %v312
        %v838 = vunpack.c.l.b16 %v313
        %v839 = vunpack.c.h.b16 %v313
        %v840 = vunpack.c.l.b16 %v314
        %v841 = vunpack.c.h.b16 %v314
        %v842 = vunpack.c.l.b16 %v315
        %v843 = vunpack.c.h.b16 %v315
        %v844 = vunpack.c.l.b16 %v316
        %v845 = vunpack.c.h.b16 %v316
        %v846 = vunpack.c.l.b16 %v317
        %v847 = vunpack.c.h.b16 %v317
        %v848 = vunpack.c.l.b16 %v318
        %v849 = vunpack.c.h.b16 %v318
        %v850 = vunpack.c.l.b16 %v319
        %v851 = vunpack.c.h.b16 %v319
        %v852 = vunpack.c.l.b16 %v320
        %v853 = vunpack.c.h.b16 %v320
        %v854 = vunpack.c.l.b16 %v321
        %v855 = vunpack.c.h.b16 %v321
        %v856 = vunpack.c.l.b16 %v322
        %v857 = vunpack.c.h.b16 %v322
        %v858 = vunpack.c.l.b16 %v323
        %v859 = vunpack.c.h.b16 %v323
        %v860 = vunpack.c.l.b16 %v324
        %v861 = vunpack.c.h.b16 %v324
        %v862 = vunpack.c.l.b16 %v325
        %v863 = vunpack.c.h.b16 %v325
        %v864 = vunpack.c.l.b16 %v326
        %v865 = vunpack.c.h.b16 %v326
        %v866 = vunpack.c.l.b16 %v327
        %v867 = vunpack.c.h.b16 %v327
        %v868 = vunpack.c.l.b16 %v328
        %v869 = vunpack.c.h.b16 %v328
        %v870 = vunpack.c.l.b16 %v329
        %v871 = vunpack.c.h.b16 %v329
        %v872 = vunpack.c.l.b16 %v330
        %v873 = vunpack.c.h.b16 %v330
        %v874 = vunpack.c.l.b16 %v331
        %v875 = vunpack.c.h.b16 %v331
        %v876 = vunpack.c.l.b16 %v332
        %v877 = vunpack.c.h.b16 %v332
        %v878 = vunpack.c.l.b16 %v333
        %v879 = vunpack.c.h.b16 %v333
        %v880 = vunpack.c.l.b16 %v334
        %v881 = vunpack.c.h.b16 %v334
        %v882 = vunpack.c.l.b16 %v335
        %v883 = vunpack.c.h.b16 %v335
        %v884 = vunpack.c.l.b16 %v336
        %v885 = vunpack.c.h.b16 %v336
        %v886 = vunpack.c.l.b16 %v337
        %v887 = vunpack.c.h.b16 %v337
        %v888 = vunpack.c.l.b16 %v338
        %v889 = vunpack.c.h.b16 %v338
        %v890 = vunpack.c.l.b16 %v339
        %v891 = vunpack.c.h.b16 %v339
        %v892 = vunpack.c.l.b16 %v340
        %v893 = vunpack.c.h.b16 %v340
        %v894 = vunpack.c.l.b16 %v341
        %v895 = vunpack.c.h.b16 %v341
        %v896 = vunpack.c.l.b16 %v342
        %v897 = vunpack.c.h.b16 %v342
        %v898 = vunpack.c.l.b16 %v343
        %v899 = vunpack.c.h.b16 %v343
        %v900 = vunpack.c.l.b16 %v344
        %v901 = vunpack.c.h.b16 %v344
        %v902 = vunpack.c.l.b16 %v345
        %v903 = vunpack.c.h.b16 %v345
        %v904 = vunpack.c.l.b16 %v346
        %v905 = vunpack.c.h.b16 %v346
        %v906 = vunpack.c.l.b16 %v347
        %v907 = vunpack.c.h.b16 %v347
        %v908 = vunpack.c.l.b16 %v348
        %v909 = vunpack.c.h.b16 %v348
        %v910 = vunpack.c.l.b16 %v349
        %v911 = vunpack.c.h.b16 %v349
        %v912 = vunpack.c.l.b16 %v350
        %v913 = vunpack.c.h.b16 %v350
        %v914 = vunpack.c.l.b16 %v351
        %v915 = vunpack.c.h.b16 %v351
        %v916 = vunpack.c.l.b16 %v352
        %v917 = vunpack.c.h.b16 %v352
        %v918 = vunpack.c.l.b16 %v353
        %v919 = vunpack.c.h.b16 %v353
        %v920 = vunpack.c.l.b16 %v354
        %v921 = vunpack.c.h.b16 %v354
        %v922 = vunpack.c.l.b16 %v355
        %v923 = vunpack.c.h.b16 %v355
        %v924 = vunpack.c.l.b16 %v356
        %v925 = vunpack.c.h.b16 %v356
        %v926 = vunpack.c.l.b16 %v357
        %v927 = vunpack.c.h.b16 %v357
        %v928 = vunpack.c.l.b16 %v358
        %v929 = vunpack.c.h.b16 %v358
        %v930 = vunpack.c.l.b16 %v359
        %v931 = vunpack.c.h.b16 %v359
        %v932 = vunpack.c.l.b16 %v360
        %v933 = vunpack.c.h.b16 %v360
        %v934 = vunpack.c.l.b16 %v361
        %v935 = vunpack.c.h.b16 %v361
        %v936 = vunpack.c.l.b16 %v362
        %v937 = vunpack.c.h.b16 %v362
        %v938 = vunpack.c.l.b16 %v363
        %v939 = vunpack.c.h.b16 %v363
        %v940 = vunpack.c.l.b16 %v364
        %v941 = vunpack.c.h.b16 %v364
        %v942 = vunpack.c.l.b16 %v365
        %v943 = vunpack.c.h.b16 %v365
        %v944 = vunpack.c.l.b16 %v366
        %v945 = vunpack.c.h.b16 %v366
        %v946 = vunpack.c.l.b16 %v367
        %v947 = vunpack.c.h.b16 %v367
        %v948 = vunpack.c.l.b16 %v368
        %v949 = vunpack.c.h.b16 %v368
        %v950 = vunpack.c.l.b16 %v369
        %v951 = vunpack.c.h.b16 %v369
        %v952 = vunpack.c.l.b16 %v370
        %v953 = vunpack.c.h.b16 %v370
        %v954 = vunpack.c.l.b16 %v371
        %v955 = vunpack.c.h.b16 %v371
        %v956 = vunpack.c.l.b16 %v372
        %v957 = vunpack.c.h.b16 %v372
        %v958 = vunpack.c.l.b16 %v373
        %v959 = vunpack.c.h.b16 %v373
        %v960 = vunpack.c.l.b16 %v374
        %v961 = vunpack.c.h.b16 %v374
        %v962 = vunpack.c.l.b16 %v375
        %v963 = vunpack.c.h.b16 %v375
        %v964 = vunpack.c.l.b16 %v376
        %v965 = vunpack.c.h.b16 %v376
        %v966 = vunpack.c.l.b16 %v377
        %v967 = vunpack.c.h.b16 %v377
        %v968 = vunpack.c.l.b16 %v378
        %v969 = vunpack.c.h.b16 %v378
        %v970 = vunpack.c.l.b16 %v379
        %v971 = vunpack.c.h.b16 %v379
        %v972 = vunpack.c.l.b16 %v380
        %v973 = vunpack.c.h.b16 %v380
        %v974 = vunpack.c.l.b16 %v381
        %v975 = vunpack.c.h.b16 %v381
        %v976 = vunpack.c.l.b16 %v382
        %v977 = vunpack.c.h.b16 %v382
        %v978 = vunpack.c.l.b16 %v383
        %v979 = vunpack.c.h.b16 %v383
        %v980 = vunpack.c.l.b16 %v384
        %v981 = vunpack.c.h.b16 %v384
        %v982 = vunpack.c.l.b16 %v385
        %v983 = vunpack.c.h.b16 %v385
        %v984 = vunpack.c.l.b16 %v386
        %v985 = vunpack.c.h.b16 %v386
        %v986 = vunpack.c.l.b16 %v387
        %v987 = vunpack.c.h.b16 %v387
        %v988 = vunpack.c.l.b16 %v388
        %v989 = vunpack.c.h.b16 %v388
        %v990 = vunpack.c.l.b16 %v389
        %v991 = vunpack.c.h.b16 %v389
        %v992 = vunpack.c.l.b16 %v390
        %v993 = vunpack.c.h.b16 %v390
        %v994 = vunpack.c.l.b16 %v391
        %v995 = vunpack.c.h.b16 %v391
        %v996 = vunpack.c.l.b16 %v392
        %v997 = vunpack.c.h.b16 %v392
        %v998 = vunpack.c.l.b16 %v393
        %v999 = vunpack.c.h.b16 %v393
        %v1000 = vunpack.c.l.b16 %v394
        %v1001 = vunpack.c.h.b16 %v394
        %v1002 = vunpack.c.l.b16 %v395
        %v1003 = vunpack.c.h.b16 %v395
        %v1004 = vunpack.c.l.b16 %v396
        %v1005 = vunpack.c.h.b16 %v396
        %v1006 = vunpack.c.l.b16 %v397
        %v1007 = vunpack.c.h.b16 %v397
        %v1008 = vunpack.c.l.b16 %v398
        %v1009 = vunpack.c.h.b16 %v398
        %v1010 = vunpack.c.l.b16 %v399
        %v1011 = vunpack.c.h.b16 %v399
        %v1012 = vunpack.c.l.b16 %v400
        %v1013 = vunpack.c.h.b16 %v400
        %v1014 = vunpack.c.l.b16 %v401
        %v1015 = vunpack.c.h.b16 %v401
        %v1016 = vunpack.c.l.b16 %v402
        %v1017 = vunpack.c.h.b16 %v402
        %v1018 = vunpack.c.l.b16 %v403
        %v1019 = vunpack.c.h.b16 %v403
        %v1020 = vunpack.c.l.b16 %v404
        %v1021 = vunpack.c.h.b16 %v404
        %v1022 = vunpack.c.l.b16 %v405
        %v1023 = vunpack.c.h.b16 %v405
        %v1024 = vunpack.c.l.b16 %v406
        %v1025 = vunpack.c.h.b16 %v406
        %v1026 = vunpack.c.l.b16 %v407
        %v1027 = vunpack.c.h.b16 %v407
        %v1028 = vunpack.c.l.b16 %v408
        %v1029 = vunpack.c.h.b16 %v408
        %v1030 = vunpack.c.l.b16 %v409
        %v1031 = vunpack.c.h.b16 %v409
        %v1032 = vunpack.c.l.b16 %v410
        %v1033 = vunpack.c.h.b16 %v410
        %v1034 = vunpack.c.l.b16 %v411
        %v1035 = vunpack.c.h.b16 %v411
        %v1036 = vunpack.c.l.b16 %v412
        %v1037 = vunpack.c.h.b16 %v412
        %v1038 = vunpack.c.l.b16 %v413
        %v1039 = vunpack.c.h.b16 %v413
        %v1040 = vunpack.c.l.b16 %v414
        %v1041 = vunpack.c.h.b16 %v414
        %v1042 = vunpack.c.l.b16 %v415
        %v1043 = vunpack.c.h.b16 %v415
        %v1044 = vunpack.c.l.b16 %v416
        %v1045 = vunpack.c.h.b16 %v416
        %v1046 = vunpack.c.l.b16 %v417
        %v1047 = vunpack.c.h.b16 %v417
        %v1048 = vunpack.c.l.b16 %v418
        %v1049 = vunpack.c.h.b16 %v418
        %v1050 = vunpack.c.l.b16 %v419
        %v1051 = vunpack.c.h.b16 %v419
        %v1052 = vunpack.c.l.b16 %v420
        %v1053 = vunpack.c.h.b16 %v420
        %v1054 = vunpack.c.l.b16 %v421
        %v1055 = vunpack.c.h.b16 %v421
        %v1056 = vunpack.c.l.b16 %v422
        %v1057 = vunpack.c.h.b16 %v422
        %v1058 = vunpack.c.l.b16 %v423
        %v1059 = vunpack.c.h.b16 %v423
        %v1060 = vunpack.c.l.b16 %v424
        %v1061 = vunpack.c.h.b16 %v424
        %v1062 = vunpack.c.l.b16 %v425
        %v1063 = vunpack.c.h.b16 %v425
        %v1064 = vunpack.c.l.b16 %v426
        %v1065 = vunpack.c.h.b16 %v426
        %v1066 = vunpack.c.l.b16 %v427
        %v1067 = vunpack.c.h.b16 %v427
        %v1068 = vunpack.c.l.b16 %v428
        %v1069 = vunpack.c.h.b16 %v428
        %v1070 = vunpack.c.l.b16 %v429
        %v1071 = vunpack.c.h.b16 %v429
        %v1072 = vunpack.c.l.b16 %v430
        %v1073 = vunpack.c.h.b16 %v430
        %v1074 = vunpack.c.l.b16 %v431
        %v1075 = vunpack.c.h.b16 %v431
        %v1076 = vunpack.c.l.b16 %v432
        %v1077 = vunpack.c.h.b16 %v432
        %v1078 = vunpack.c.l.b16 %v433
        %v1079 = vunpack.c.h.b16 %v433
        %v1080 = vunpack.c.l.b16 %v434
        %v1081 = vunpack.c.h.b16 %v434
        %v1082 = vunpack.c.l.b16 %v435
        %v1083 = vunpack.c.h.b16 %v435
        %v1084 = vunpack.c.l.b16 %v436
        %v1085 = vunpack.c.h.b16 %v436
        %v1086 = vunpack.c.l.b16 %v437
        %v1087 = vunpack.c.h.b16 %v437
        %v1088 = vunpack.c.l.b16 %v438
        %v1089 = vunpack.c.h.b16 %v438
        %v1090 = vunpack.c.l.b16 %v439
        %v1091 = vunpack.c.h.b16 %v439
        %v1092 = vunpack.c.l.b16 %v440
        %v1093 = vunpack.c.h.b16 %v440
        %v1094 = vunpack.c.l.b16 %v441
        %v1095 = vunpack.c.h.b16 %v441
        %v1096 = vunpack.c.l.b16 %v442
        %v1097 = vunpack.c.h.b16 %v442
        %v1098 = vunpack.c.l.b16 %v443
        %v1099 = vunpack.c.h.b16 %v443
        %v1100 = vunpack.c.l.b16 %v444
        %v1101 = vunpack.c.h.b16 %v444
        %v1102 = vunpack.c.l.b16 %v445
        %v1103 = vunpack.c.h.b16 %v445
        %v1104 = vunpack.c.l.b16 %v446
        %v1105 = vunpack.c.h.b16 %v446
        %v1106 = vunpack.c.l.b16 %v447
        %v1107 = vunpack.c.h.b16 %v447
        %v1108 = vunpack.c.l.b16 %v448
        %v1109 = vunpack.c.h.b16 %v448
        %v1110 = vunpack.c.l.b16 %v449
        %v1111 = vunpack.c.h.b16 %v449
        %v1112 = vunpack.c.l.b16 %v450
        %v1113 = vunpack.c.h.b16 %v450
        %v1114 = vunpack.c.l.b16 %v451
        %v1115 = vunpack.c.h.b16 %v451
        %v1116 = vunpack.c.l.b16 %v452
        %v1117 = vunpack.c.h.b16 %v452
        %v1118 = vunpack.c.l.b16 %v453
        %v1119 = vunpack.c.h.b16 %v453
        %v1120 = vunpack.c.l.b16 %v454
        %v1121 = vunpack.c.h.b16 %v454
        %v1122 = vunpack.c.l.b16 %v455
        %v1123 = vunpack.c.h.b16 %v455
        %v1124 = vunpack.c.l.b16 %v456
        %v1125 = vunpack.c.h.b16 %v456
        %v1126 = vunpack.c.l.b16 %v457
        %v1127 = vunpack.c.h.b16 %v457
        %v1128 = vunpack.c.l.b16 %v458
        %v1129 = vunpack.c.h.b16 %v458
        %v1130 = vunpack.c.l.b16 %v459
        %v1131 = vunpack.c.h.b16 %v459
        %v1132 = vunpack.c.l.b16 %v460
        %v1133 = vunpack.c.h.b16 %v460
        %v1134 = vunpack.c.l.b16 %v461
        %v1135 = vunpack.c.h.b16 %v461
        %v1136 = vunpack.c.l.b16 %v462
        %v1137 = vunpack.c.h.b16 %v462
        %v1138 = vunpack.c.l.b16 %v463
        %v1139 = vunpack.c.h.b16 %v463
        %v1140 = vunpack.c.l.b16 %v464
        %v1141 = vunpack.c.h.b16 %v464
        %v1142 = vunpack.c.l.b16 %v465
        %v1143 = vunpack.c.h.b16 %v465
        %v1144 = vunpack.c.l.b16 %v466
        %v1145 = vunpack.c.h.b16 %v466
        %v1146 = vunpack.c.l.b16 %v467
        %v1147 = vunpack.c.h.b16 %v467
        %v1148 = vunpack.c.l.b16 %v468
        %v1149 = vunpack.c.h.b16 %v468
        %v1150 = vunpack.c.l.b16 %v469
        %v1151 = vunpack.c.h.b16 %v469
        %v1152 = vunpack.c.l.b16 %v470
        %v1153 = vunpack.c.h.b16 %v470
        %v1154 = vunpack.c.l.b16 %v471
        %v1155 = vunpack.c.h.b16 %v471
        %v1156 = vunpack.c.l.b16 %v472
        %v1157 = vunpack.c.h.b16 %v472
        %v1158 = vunpack.c.l.b16 %v473
        %v1159 = vunpack.c.h.b16 %v473
        %v1160 = vunpack.c.l.b16 %v474
        %v1161 = vunpack.c.h.b16 %v474
        %v1162 = vunpack.c.l.b16 %v475
        %v1163 = vunpack.c.h.b16 %v475
        %v1164 = vunpack.c.l.b16 %v476
        %v1165 = vunpack.c.h.b16 %v476
        %v1166 = vunpack.c.l.b16 %v477
        %v1167 = vunpack.c.h.b16 %v477
        %v1168 = vunpack.c.l.b16 %v478
        %v1169 = vunpack.c.h.b16 %v478
        %v1170 = vunpack.c.l.b16 %v479
        %v1171 = vunpack.c.h.b16 %v479
        %v1172 = vunpack.c.l.b16 %v480
        %v1173 = vunpack.c.h.b16 %v480
        %v1174 = vunpack.c.l.b16 %v481
        %v1175 = vunpack.c.h.b16 %v481
        %v1176 = vunpack.c.l.b16 %v482
        %v1177 = vunpack.c.h.b16 %v482
        %v1178 = vunpack.c.l.b16 %v483
        %v1179 = vunpack.c.h.b16 %v483
        %v1180 = vunpack.c.l.b16 %v484
        %v1181 = vunpack.c.h.b16 %v484
        %v1182 = vunpack.c.l.b16 %v485
        %v1183 = vunpack.c.h.b16 %v485
        %v1184 = vunpack.c.l.b16 %v486
        %v1185 = vunpack.c.h.b16 %v486
        %v1186 = vunpack.c.l.b16 %v487
        %v1187 = vunpack.c.h.b16 %v487
        %v1188 = vunpack.c.l.b16 %v488
        %v1189 = vunpack.c.h.b16 %v488
        %v1190 = vunpack.c.l.b16 %v489
        %v1191 = vunpack.c.h.b16 %v489
        %v1192 = vunpack.c.l.b16 %v490
        %v1193 = vunpack.c.h.b16 %v490
        %v1194 = vunpack.c.l.b16 %v491
        %v1195 = vunpack.c.h.b16 %v491
        %v1196 = vunpack.c.l.b16 %v492
        %v1197 = vunpack.c.h.b16 %v492
        %v1198 = vunpack.c.l.b16 %v493
        %v1199 = vunpack.c.h.b16 %v493
        %v1200 = vunpack.c.l.b16 %v494
        %v1201 = vunpack.c.h.b16 %v494
        %v1202 = vunpack.c.l.b16 %v495
        %v1203 = vunpack.c.h.b16 %v495
        %v1204 = vunpack.c.l.b16 %v496
        %v1205 = vunpack.c.h.b16 %v496
        %v1206 = vunpack.c.l.b16 %v497
        %v1207 = vunpack.c.h.b16 %v497
        %v1208 = vunpack.c.l.b16 %v498
        %v1209 = vunpack.c.h.b16 %v498
        %v1210 = vunpack.c.l.b16 %v499
        %v1211 = vunpack.c.h.b16 %v499
        %v1212 = vunpack.c.l.b16 %v500
        %v1213 = vunpack.c.h.b16 %v500
        %v1214 = vunpack.c.l.b16 %v501
        %v1215 = vunpack.c.h.b16 %v501
        %v1216 = vunpack.c.l.b16 %v502
        %v1217 = vunpack.c.h.b16 %v502
        %v1218 = vunpack.c.l.b16 %v503
        %v1219 = vunpack.c.h.b16 %v503
        %v1220 = vunpack.c.l.b16 %v504
        %v1221 = vunpack.c.h.b16 %v504
        %v1222 = vunpack.c.l.b16 %v505
        %v1223 = vunpack.c.h.b16 %v505
        %v1224 = vunpack.c.l.b16 %v506
        %v1225 = vunpack.c.h.b16 %v506
        %v1226 = vunpack.c.l.b16 %v507
        %v1227 = vunpack.c.h.b16 %v507
        %v1228 = vunpack.c.l.b16 %v508
        %v1229 = vunpack.c.h.b16 %v508
        %v1230 = vunpack.c.l.b16 %v509
        %v1231 = vunpack.c.h.b16 %v509
        %v1232 = vunpack.c.l.b16 %v510
        %v1233 = vunpack.c.h.b16 %v510
        %v1234 = vunpack.c.l.b16 %v511
        %v1235 = vunpack.c.h.b16 %v511
        %v1236 = vunpack.c.l.b16 %v512
        %v1237 = vunpack.c.h.b16 %v512
        %v1238 = vunpack.c.l.b16 %v513
        %v1239 = vunpack.c.h.b16 %v513
        %v1240 = vunpack.c.l.b16 %v514
        %v1241 = vunpack.c.h.b16 %v514
        %v1242 = vunpack.c.l.b16 %v515
        %v1243 = vunpack.c.h.b16 %v515
        %v1244 = vunpack.c.l.b16 %v516
        %v1245 = vunpack.c.h.b16 %v516
        %v1246 = vunpack.c.l.b16 %v517
        %v1247 = vunpack.c.h.b16 %v517
        %v1248 = vunpack.c.l.b16 %v518
        %v1249 = vunpack.c.h.b16 %v518
        %v1250 = vunpack.c.l.b16 %v519
        %v1251 = vunpack.c.h.b16 %v519
        %v1252 = vunpack.c.l.b16 %v520
        %v1253 = vunpack.c.h.b16 %v520
        %v1254 = vunpack.c.l.b16 %v521
        %v1255 = vunpack.c.h.b16 %v521
        %v1256 = vunpack.c.l.b16 %v522
        %v1257 = vunpack.c.h.b16 %v522
        %v1258 = vunpack.c.l.b16 %v523
        %v1259 = vunpack.c.h.b16 %v523
        %v1260 = vunpack.c.l.b16 %v524
        %v1261 = vunpack.c.h.b16 %v524
        %v1262 = vunpack.c.l.b16 %v525
        %v1263 = vunpack.c.h.b16 %v525
        %v1264 = vunpack.c.l.b16 %v526
        %v1265 = vunpack.c.h.b16 %v526
        %v1266 = vunpack.c.l.b16 %v527
        %v1267 = vunpack.c.h.b16 %v527
        %v1268 = vunpack.c.l.b16 %v528
        %v1269 = vunpack.c.h.b16 %v528
        %v1270 = vunpack.c.l.b16 %v529
        %v1271 = vunpack.c.h.b16 %v529
        %v1272 = vunpack.c.l.b16 %v530
        %v1273 = vunpack.c.h.b16 %v530
        %v1274 = vunpack.c.l.b16 %v531
        %v1275 = vunpack.c.h.b16 %v531
        %v1276 = vunpack.c.l.b16 %v532
        %v1277 = vunpack.c.h.b16 %v532
        %v1278 = vunpack.c.l.b16 %v533
        %v1279 = vunpack.c.h.b16 %v533
        %v1280 = vunpack.c.l.b16 %v534
        %v1281 = vunpack.c.h.b16 %v534
        %v1282 = vunpack.c.l.b16 %v535
        %v1283 = vunpack.c.h.b16 %v535
        %v1284 = vunpack.c.l.b16 %v536
        %v1285 = vunpack.c.h.b16 %v536
        %v1286 = vunpack.c.l.b16 %v537
        %v1287 = vunpack.c.h.b16 %v537
        %v1288 = vunpack.c.l.b16 %v538
        %v1289 = vunpack.c.h.b16 %v538
        %v1290 = vunpack.c.l.b16 %v539
        %v1291 = vunpack.c.h.b16 %v539
        %v1292 = vunpack.c.l.b16 %v540
        %v1293 = vunpack.c.h.b16 %v540
        %v1294 = vunpack.c.l.b16 %v541
        %v1295 = vunpack.c.h.b16 %v541
        %v1296 = vunpack.c.l.b16 %v542
        %v1297 = vunpack.c.h.b16 %v542
        %v1298 = vunpack.c.l.b16 %v543
        %v1299 = vunpack.c.h.b16 %v543
        %v1300 = vunpack.c.l.b16 %v544
        %v1301 = vunpack.c.h.b16 %v544
        %v1302 = vunpack.c.l.b16 %v545
        %v1303 = vunpack.c.h.b16 %v545
        %v1304 = vunpack.c.l.b16 %v546
        %v1305 = vunpack.c.h.b16 %v546
        %v1306 = vunpack.c.l.b16 %v547
        %v1307 = vunpack.c.h.b16 %v547
        %v1308 = vunpack.c.l.b16 %v548
        %v1309 = vunpack.c.h.b16 %v548
        %v1310 = vunpack.c.l.b16 %v549
        %v1311 = vunpack.c.h.b16 %v549
        %v1312 = vunpack.c.l.b16 %v550
        %v1313 = vunpack.c.h.b16 %v550
        %v1314 = vunpack.c.l.b16 %v551
        %v1315 = vunpack.c.h.b16 %v551
        %v1316 = vunpack.c.l.b16 %v552
        %v1317 = vunpack.c.h.b16 %v552
        %v1318 = vunpack.c.l.b16 %v553
        %v1319 = vunpack.c.h.b16 %v553
        %v1320 = vunpack.c.l.b16 %v554
        %v1321 = vunpack.c.h.b16 %v554
        %v1322 = vunpack.c.l.b16 %v555
        %v1323 = vunpack.c.h.b16 %v555
        %v1324 = vpack.c.b16 %v820, %v812
        %v1325 = vpack.c.b16 %v821, %v813
        %v1326 = vpack.c.b16 %v822, %v814
        %v1327 = vpack.c.b16 %v823, %v815
        %v1328 = vpack.c.b16 %v824, %v816
        %v1329 = vpack.c.b16 %v825, %v817
        %v1330 = vpack.c.b16 %v826, %v818
        %v1331 = vpack.c.b16 %v827, %v819
        %v1332 = vpack.c.b16 %v836, %v828
        %v1333 = vpack.c.b16 %v837, %v829
        %v1334 = vpack.c.b16 %v838, %v830
        %v1335 = vpack.c.b16 %v839, %v831
        %v1336 = vpack.c.b16 %v840, %v832
        %v1337 = vpack.c.b16 %v841, %v833
        %v1338 = vpack.c.b16 %v842, %v834
        %v1339 = vpack.c.b16 %v843, %v835
        %v1340 = vpack.c.b16 %v852, %v844
        %v1341 = vpack.c.b16 %v853, %v845
        %v1342 = vpack.c.b16 %v854, %v846
        %v1343 = vpack.c.b16 %v855, %v847
        %v1344 = vpack.c.b16 %v856, %v848
        %v1345 = vpack.c.b16 %v857, %v849
        %v1346 = vpack.c.b16 %v858, %v850
        %v1347 = vpack.c.b16 %v859, %v851
        %v1348 = vpack.c.b16 %v868, %v860
        %v1349 = vpack.c.b16 %v869, %v861
        %v1350 = vpack.c.b16 %v870, %v862
        %v1351 = vpack.c.b16 %v871, %v863
        %v1352 = vpack.c.b16 %v872, %v864
        %v1353 = vpack.c.b16 %v873, %v865
        %v1354 = vpack.c.b16 %v874, %v866
        %v1355 = vpack.c.b16 %v875, %v867
        %v1356 = vpack.c.b16 %v884, %v876
        %v1357 = vpack.c.b16 %v885, %v877
        %v1358 = vpack.c.b16 %v886, %v878
        %v1359 = vpack.c.b16 %v887, %v879
        %v1360 = vpack.c.b16 %v888, %v880
        %v1361 = vpack.c.b16 %v889, %v881
        %v1362 = vpack.c.b16 %v890, %v882
        %v1363 = vpack.c.b16 %v891, %v883
        %v1364 = vpack.c.b16 %v900, %v892
        %v1365 = vpack.c.b16 %v901, %v893
        %v1366 = vpack.c.b16 %v902, %v894
        %v1367 = vpack.c.b16 %v903, %v895
        %v1368 = vpack.c.b16 %v904, %v896
        %v1369 = vpack.c.b16 %v905, %v897
        %v1370 = vpack.c.b16 %v906, %v898
        %v1371 = vpack.c.b16 %v907, %v899
        %v1372 = vpack.c.b16 %v916, %v908
        %v1373 = vpack.c.b16 %v917, %v909
        %v1374 = vpack.c.b16 %v918, %v910
        %v1375 = vpack.c.b16 %v919, %v911
        %v1376 = vpack.c.b16 %v920, %v912
        %v1377 = vpack.c.b16 %v921, %v913
        %v1378 = vpack.c.b16 %v922, %v914
        %v1379 = vpack.c.b16 %v923, %v915
        %v1380 = vpack.c.b16 %v932, %v924
        %v1381 = vpack.c.b16 %v933, %v925
        %v1382 = vpack.c.b16 %v934, %v926
        %v1383 = vpack.c.b16 %v935, %v927
        %v1384 = vpack.c.b16 %v936, %v928
        %v1385 = vpack.c.b16 %v937, %v929
        %v1386 = vpack.c.b16 %v938, %v930
        %v1387 = vpack.c.b16 %v939, %v931
        %v1388 = vpack.c.b16 %v948, %v940
        %v1389 = vpack.c.b16 %v949, %v941
        %v1390 = vpack.c.b16 %v950, %v942
        %v1391 = vpack.c.b16 %v951, %v943
        %v1392 = vpack.c.b16 %v952, %v944
        %v1393 = vpack.c.b16 %v953, %v945
        %v1394 = vpack.c.b16 %v954, %v946
        %v1395 = vpack.c.b16 %v955, %v947
        %v1396 = vpack.c.b16 %v964, %v956
        %v1397 = vpack.c.b16 %v965, %v957
        %v1398 = vpack.c.b16 %v966, %v958
        %v1399 = vpack.c.b16 %v967, %v959
        %v1400 = vpack.c.b16 %v968, %v960
        %v1401 = vpack.c.b16 %v969, %v961
        %v1402 = vpack.c.b16 %v970, %v962
        %v1403 = vpack.c.b16 %v971, %v963
        %v1404 = vpack.c.b16 %v980, %v972
        %v1405 = vpack.c.b16 %v981, %v973
        %v1406 = vpack.c.b16 %v982, %v974
        %v1407 = vpack.c.b16 %v983, %v975
        %v1408 = vpack.c.b16 %v984, %v976
        %v1409 = vpack.c.b16 %v985, %v977
        %v1410 = vpack.c.b16 %v986, %v978
        %v1411 = vpack.c.b16 %v987, %v979
        %v1412 = vpack.c.b16 %v996, %v988
        %v1413 = vpack.c.b16 %v997, %v989
        %v1414 = vpack.c.b16 %v998, %v990
        %v1415 = vpack.c.b16 %v999, %v991
        %v1416 = vpack.c.b16 %v1000, %v992
        %v1417 = vpack.c.b16 %v1001, %v993
        %v1418 = vpack.c.b16 %v1002, %v994
        %v1419 = vpack.c.b16 %v1003, %v995
        %v1420 = vpack.c.b16 %v1012, %v1004
        %v1421 = vpack.c.b16 %v1013, %v1005
        %v1422 = vpack.c.b16 %v1014, %v1006
        %v1423 = vpack.c.b16 %v1015, %v1007
        %v1424 = vpack.c.b16 %v1016, %v1008
        %v1425 = vpack.c.b16 %v1017, %v1009
        %v1426 = vpack.c.b16 %v1018, %v1010
        %v1427 = vpack.c.b16 %v1019, %v1011
        %v1428 = vpack.c.b16 %v1028, %v1020
        %v1429 = vpack.c.b16 %v1029, %v1021
        %v1430 = vpack.c.b16 %v1030, %v1022
        %v1431 = vpack.c.b16 %v1031, %v1023
        %v1432 = vpack.c.b16 %v1032, %v1024
        %v1433 = vpack.c.b16 %v1033, %v1025
        %v1434 = vpack.c.b16 %v1034, %v1026
        %v1435 = vpack.c.b16 %v1035, %v1027
        %v1436 = vpack.c.b16 %v1044, %v1036
        %v1437 = vpack.c.b16 %v1045, %v1037
        %v1438 = vpack.c.b16 %v1046, %v1038
        %v1439 = vpack.c.b16 %v1047, %v1039
        %v1440 = vpack.c.b16 %v1048, %v1040
        %v1441 = vpack.c.b16 %v1049, %v1041
        %v1442 = vpack.c.b16 %v1050, %v1042
        %v1443 = vpack.c.b16 %v1051, %v1043
        %v1444 = vpack.c.b16 %v1060, %v1052
        %v1445 = vpack.c.b16 %v1061, %v1053
        %v1446 = vpack.c.b16 %v1062, %v1054
        %v1447 = vpack.c.b16 %v1063, %v1055
        %v1448 = vpack.c.b16 %v1064, %v1056
        %v1449 = vpack.c.b16 %v1065, %v1057
        %v1450 = vpack.c.b16 %v1066, %v1058
        %v1451 = vpack.c.b16 %v1067, %v1059
        %v1452 = vpack.c.b16 %v1076, %v1068
        %v1453 = vpack.c.b16 %v1077, %v1069
        %v1454 = vpack.c.b16 %v1078, %v1070
        %v1455 = vpack.c.b16 %v1079, %v1071
        %v1456 = vpack.c.b16 %v1080, %v1072
        %v1457 = vpack.c.b16 %v1081, %v1073
        %v1458 = vpack.c.b16 %v1082, %v1074
        %v1459 = vpack.c.b16 %v1083, %v1075
        %v1460 = vpack.c.b16 %v1092, %v1084
        %v1461 = vpack.c.b16 %v1093, %v1085
        %v1462 = vpack.c.b16 %v1094, %v1086
        %v1463 = vpack.c.b16 %v1095, %v1087
        %v1464 = vpack.c.b16 %v1096, %v1088
        %v1465 = vpack.c.b16 %v1097, %v1089
        %v1466 = vpack.c.b16 %v1098, %v1090
        %v1467 = vpack.c.b16 %v1099, %v1091
        %v1468 = vpack.c.b16 %v1108, %v1100
        %v1469 = vpack.c.b16 %v1109, %v1101
        %v1470 = vpack.c.b16 %v1110, %v1102
        %v1471 = vpack.c.b16 %v1111, %v1103
        %v1472 = vpack.c.b16 %v1112, %v1104
        %v1473 = vpack.c.b16 %v1113, %v1105
        %v1474 = vpack.c.b16 %v1114, %v1106
        %v1475 = vpack.c.b16 %v1115, %v1107
        %v1476 = vpack.c.b16 %v1124, %v1116
        %v1477 = vpack.c.b16 %v1125, %v1117
        %v1478 = vpack.c.b16 %v1126, %v1118
        %v1479 = vpack.c.b16 %v1127, %v1119
        %v1480 = vpack.c.b16 %v1128, %v1120
        %v1481 = vpack.c.b16 %v1129, %v1121
        %v1482 = vpack.c.b16 %v1130, %v1122
        %v1483 = vpack.c.b16 %v1131, %v1123
        %v1484 = vpack.c.b16 %v1140, %v1132
        %v1485 = vpack.c.b16 %v1141, %v1133
        %v1486 = vpack.c.b16 %v1142, %v1134
        %v1487 = vpack.c.b16 %v1143, %v1135
        %v1488 = vpack.c.b16 %v1144, %v1136
        %v1489 = vpack.c.b16 %v1145, %v1137
        %v1490 = vpack.c.b16 %v1146, %v1138
        %v1491 = vpack.c.b16 %v1147, %v1139
        %v1492 = vpack.c.b16 %v1156, %v1148
        %v1493 = vpack.c.b16 %v1157, %v1149
        %v1494 = vpack.c.b16 %v1158, %v1150
        %v1495 = vpack.c.b16 %v1159, %v1151
        %v1496 = vpack.c.b16 %v1160, %v1152
        %v1497 = vpack.c.b16 %v1161, %v1153
        %v1498 = vpack.c.b16 %v1162, %v1154
        %v1499 = vpack.c.b16 %v1163, %v1155
        %v1500 = vpack.c.b16 %v1172, %v1164
        %v1501 = vpack.c.b16 %v1173, %v1165
        %v1502 = vpack.c.b16 %v1174, %v1166
        %v1503 = vpack.c.b16 %v1175, %v1167
        %v1504 = vpack.c.b16 %v1176, %v1168
        %v1505 = vpack.c.b16 %v1177, %v1169
        %v1506 = vpack.c.b16 %v1178, %v1170
        %v1507 = vpack.c.b16 %v1179, %v1171
        %v1508 = vpack.c.b16 %v1188, %v1180
        %v1509 = vpack.c.b16 %v1189, %v1181
        %v1510 = vpack.c.b16 %v1190, %v1182
        %v1511 = vpack.c.b16 %v1191, %v1183
        %v1512 = vpack.c.b16 %v1192, %v1184
        %v1513 = vpack.c.b16 %v1193, %v1185
        %v1514 = vpack.c.b16 %v1194, %v1186
        %v1515 = vpack.c.b16 %v1195, %v1187
        %v1516 = vpack.c.b16 %v1204, %v1196
        %v1517 = vpack.c.b16 %v1205, %v1197
        %v1518 = vpack.c.b16 %v1206, %v1198
        %v1519 = vpack.c.b16 %v1207, %v1199
        %v1520 = vpack.c.b16 %v1208, %v1200
        %v1521 = vpack.c.b16 %v1209, %v1201
        %v1522 = vpack.c.b16 %v1210, %v1202
        %v1523 = vpack.c.b16 %v1211, %v1203
        %v1524 = vpack.c.b16 %v1220, %v1212
        %v1525 = vpack.c.b16 %v1221, %v1213
        %v1526 = vpack.c.b16 %v1222, %v1214
        %v1527 = vpack.c.b16 %v1223, %v1215
        %v1528 = vpack.c.b16 %v1224, %v1216
        %v1529 = vpack.c.b16 %v1225, %v1217
        %v1530 = vpack.c.b16 %v1226, %v1218
        %v1531 = vpack.c.b16 %v1227, %v1219
        %v1532 = vpack.c.b16 %v1236, %v1228
        %v1533 = vpack.c.b16 %v1237, %v1229
        %v1534 = vpack.c.b16 %v1238, %v1230
        %v1535 = vpack.c.b16 %v1239, %v1231
        %v1536 = vpack.c.b16 %v1240, %v1232
        %v1537 = vpack.c.b16 %v1241, %v1233
        %v1538 = vpack.c.b16 %v1242, %v1234
        %v1539 = vpack.c.b16 %v1243, %v1235
        %v1540 = vpack.c.b16 %v1252, %v1244
        %v1541 = vpack.c.b16 %v1253, %v1245
        %v1542 = vpack.c.b16 %v1254, %v1246
        %v1543 = vpack.c.b16 %v1255, %v1247
        %v1544 = vpack.c.b16 %v1256, %v1248
        %v1545 = vpack.c.b16 %v1257, %v1249
        %v1546 = vpack.c.b16 %v1258, %v1250
        %v1547 = vpack.c.b16 %v1259, %v1251
        %v1548 = vpack.c.b16 %v1268, %v1260
        %v1549 = vpack.c.b16 %v1269, %v1261
        %v1550 = vpack.c.b16 %v1270, %v1262
        %v1551 = vpack.c.b16 %v1271, %v1263
        %v1552 = vpack.c.b16 %v1272, %v1264
        %v1553 = vpack.c.b16 %v1273, %v1265
        %v1554 = vpack.c.b16 %v1274, %v1266
        %v1555 = vpack.c.b16 %v1275, %v1267
        %v1556 = vpack.c.b16 %v1284, %v1276
        %v1557 = vpack.c.b16 %v1285, %v1277
        %v1558 = vpack.c.b16 %v1286, %v1278
        %v1559 = vpack.c.b16 %v1287, %v1279
        %v1560 = vpack.c.b16 %v1288, %v1280
        %v1561 = vpack.c.b16 %v1289, %v1281
        %v1562 = vpack.c.b16 %v1290, %v1282
        %v1563 = vpack.c.b16 %v1291, %v1283
        %v1564 = vpack.c.b16 %v1300, %v1292
        %v1565 = vpack.c.b16 %v1301, %v1293
        %v1566 = vpack.c.b16 %v1302, %v1294
        %v1567 = vpack.c.b16 %v1303, %v1295
        %v1568 = vpack.c.b16 %v1304, %v1296
        %v1569 = vpack.c.b16 %v1305, %v1297
        %v1570 = vpack.c.b16 %v1306, %v1298
        %v1571 = vpack.c.b16 %v1307, %v1299
        %v1572 = vpack.c.b16 %v1316, %v1308
        %v1573 = vpack.c.b16 %v1317, %v1309
        %v1574 = vpack.c.b16 %v1318, %v1310
        %v1575 = vpack.c.b16 %v1319, %v1311
        %v1576 = vpack.c.b16 %v1320, %v1312
        %v1577 = vpack.c.b16 %v1321, %v1313
        %v1578 = vpack.c.b16 %v1322, %v1314
        %v1579 = vpack.c.b16 %v1323, %v1315
        %1836 = vmatpush.bf16.msra.mxu0 %v1380
        %1837 = vmatpush.bf16.msra.mxu0 %v1372
        %1838 = vmatpush.bf16.msra.mxu0 %v1364
        %1839 = vmatpush.bf16.msra.mxu0 %v1356
        %1840 = vmatpush.bf16.msra.mxu0 %v1348
        %1841 = vmatpush.bf16.msra.mxu0 %v1340
        %1842 = vmatpush.bf16.msra.mxu0 %v1332
        %1843 = vmatpush.bf16.msra.mxu0 %v1324
        %1844 = vmatmul.bf16.gmra.mxu0 %v296
        %v1845 = vpop.f32.mrf.mxu0
        %v1846 = vadd.f32 0.0, %v1845
        %v1847 = vpop.f32.mrf.mxu0
        %v1848 = vadd.f32 0.0, %v1847
        %1849 = vdwg.mxu0
        %1850 = vmatpush.bf16.msra.mxu0 %v1444
        %1851 = vmatpush.bf16.msra.mxu0 %v1436
        %1852 = vmatpush.bf16.msra.mxu0 %v1428
        %1853 = vmatpush.bf16.msra.mxu0 %v1420
        %1854 = vmatpush.bf16.msra.mxu0 %v1412
        %1855 = vmatpush.bf16.msra.mxu0 %v1404
        %1856 = vmatpush.bf16.msra.mxu0 %v1396
        %1857 = vmatpush.bf16.msra.mxu0 %v1388
        %1858 = vmatmul.bf16.gmra.mxu0 %v297
        %v1859 = vpop.f32.mrf.mxu0
        %v1860 = vadd.f32 %v1846, %v1859
        %v1861 = vpop.f32.mrf.mxu0
        %v1862 = vadd.f32 %v1848, %v1861
        %1863 = vdwg.mxu0
        %1864 = vmatpush.bf16.msra.mxu0 %v1508
        %1865 = vmatpush.bf16.msra.mxu0 %v1500
        %1866 = vmatpush.bf16.msra.mxu0 %v1492
        %1867 = vmatpush.bf16.msra.mxu0 %v1484
        %1868 = vmatpush.bf16.msra.mxu0 %v1476
        %1869 = vmatpush.bf16.msra.mxu0 %v1468
        %1870 = vmatpush.bf16.msra.mxu0 %v1460
        %1871 = vmatpush.bf16.msra.mxu0 %v1452
        %1872 = vmatmul.bf16.gmra.mxu0 %v298
        %v1873 = vpop.f32.mrf.mxu0
        %v1874 = vadd.f32 %v1860, %v1873
        %v1875 = vpop.f32.mrf.mxu0
        %v1876 = vadd.f32 %v1862, %v1875
        %1877 = vdwg.mxu0
        %1878 = vmatpush.bf16.msra.mxu0 %v1572
        %1879 = vmatpush.bf16.msra.mxu0 %v1564
        %1880 = vmatpush.bf16.msra.mxu0 %v1556
        %1881 = vmatpush.bf16.msra.mxu0 %v1548
        %1882 = vmatpush.bf16.msra.mxu0 %v1540
        %1883 = vmatpush.bf16.msra.mxu0 %v1532
        %1884 = vmatpush.bf16.msra.mxu0 %v1524
        %1885 = vmatpush.bf16.msra.mxu0 %v1516
        %1886 = vmatmul.bf16.gmra.mxu0 %v299
        %v1887 = vpop.f32.mrf.mxu0
        %v1888 = vadd.f32 %v1874, %v1887
        %v1889 = vpop.f32.mrf.mxu0
        %v1890 = vadd.f32 %v1876, %v1889
        %1891 = vdwg.mxu0
        %1892 = vmatpush.bf16.msra.mxu0 %v1381
        %1893 = vmatpush.bf16.msra.mxu0 %v1373
        %1894 = vmatpush.bf16.msra.mxu0 %v1365
        %1895 = vmatpush.bf16.msra.mxu0 %v1357
        %1896 = vmatpush.bf16.msra.mxu0 %v1349
        %1897 = vmatpush.bf16.msra.mxu0 %v1341
        %1898 = vmatpush.bf16.msra.mxu0 %v1333
        %1899 = vmatpush.bf16.msra.mxu0 %v1325
        %1900 = vmatmul.bf16.gmra.mxu0 %v296
        %v1901 = vpop.f32.mrf.mxu0
        %v1902 = vadd.f32 0.0, %v1901
        %v1903 = vpop.f32.mrf.mxu0
        %v1904 = vadd.f32 0.0, %v1903
        %1905 = vdwg.mxu0
        %1906 = vmatpush.bf16.msra.mxu0 %v1445
        %1907 = vmatpush.bf16.msra.mxu0 %v1437
        %1908 = vmatpush.bf16.msra.mxu0 %v1429
        %1909 = vmatpush.bf16.msra.mxu0 %v1421
        %1910 = vmatpush.bf16.msra.mxu0 %v1413
        %1911 = vmatpush.bf16.msra.mxu0 %v1405
        %1912 = vmatpush.bf16.msra.mxu0 %v1397
        %1913 = vmatpush.bf16.msra.mxu0 %v1389
        %1914 = vmatmul.bf16.gmra.mxu0 %v297
        %v1915 = vpop.f32.mrf.mxu0
        %v1916 = vadd.f32 %v1902, %v1915
        %v1917 = vpop.f32.mrf.mxu0
        %v1918 = vadd.f32 %v1904, %v1917
        %1919 = vdwg.mxu0
        %1920 = vmatpush.bf16.msra.mxu0 %v1509
        %1921 = vmatpush.bf16.msra.mxu0 %v1501
        %1922 = vmatpush.bf16.msra.mxu0 %v1493
        %1923 = vmatpush.bf16.msra.mxu0 %v1485
        %1924 = vmatpush.bf16.msra.mxu0 %v1477
        %1925 = vmatpush.bf16.msra.mxu0 %v1469
        %1926 = vmatpush.bf16.msra.mxu0 %v1461
        %1927 = vmatpush.bf16.msra.mxu0 %v1453
        %1928 = vmatmul.bf16.gmra.mxu0 %v298
        %v1929 = vpop.f32.mrf.mxu0
        %v1930 = vadd.f32 %v1916, %v1929
        %v1931 = vpop.f32.mrf.mxu0
        %v1932 = vadd.f32 %v1918, %v1931
        %1933 = vdwg.mxu0
        %1934 = vmatpush.bf16.msra.mxu0 %v1573
        %1935 = vmatpush.bf16.msra.mxu0 %v1565
        %1936 = vmatpush.bf16.msra.mxu0 %v1557
        %1937 = vmatpush.bf16.msra.mxu0 %v1549
        %1938 = vmatpush.bf16.msra.mxu0 %v1541
        %1939 = vmatpush.bf16.msra.mxu0 %v1533
        %1940 = vmatpush.bf16.msra.mxu0 %v1525
        %1941 = vmatpush.bf16.msra.mxu0 %v1517
        %1942 = vmatmul.bf16.gmra.mxu0 %v299
        %v1943 = vpop.f32.mrf.mxu0
        %v1944 = vadd.f32 %v1930, %v1943
        %v1945 = vpop.f32.mrf.mxu0
        %v1946 = vadd.f32 %v1932, %v1945
        %1947 = vdwg.mxu0
        %1948 = vmatpush.bf16.msra.mxu0 %v1382
        %1949 = vmatpush.bf16.msra.mxu0 %v1374
        %1950 = vmatpush.bf16.msra.mxu0 %v1366
        %1951 = vmatpush.bf16.msra.mxu0 %v1358
        %1952 = vmatpush.bf16.msra.mxu0 %v1350
        %1953 = vmatpush.bf16.msra.mxu0 %v1342
        %1954 = vmatpush.bf16.msra.mxu0 %v1334
        %1955 = vmatpush.bf16.msra.mxu0 %v1326
        %1956 = vmatmul.bf16.gmra.mxu0 %v296
        %v1957 = vpop.f32.mrf.mxu0
        %v1958 = vadd.f32 0.0, %v1957
        %v1959 = vpop.f32.mrf.mxu0
        %v1960 = vadd.f32 0.0, %v1959
        %1961 = vdwg.mxu0
        %1962 = vmatpush.bf16.msra.mxu0 %v1446
        %1963 = vmatpush.bf16.msra.mxu0 %v1438
        %1964 = vmatpush.bf16.msra.mxu0 %v1430
        %1965 = vmatpush.bf16.msra.mxu0 %v1422
        %1966 = vmatpush.bf16.msra.mxu0 %v1414
        %1967 = vmatpush.bf16.msra.mxu0 %v1406
        %1968 = vmatpush.bf16.msra.mxu0 %v1398
        %1969 = vmatpush.bf16.msra.mxu0 %v1390
        %1970 = vmatmul.bf16.gmra.mxu0 %v297
        %v1971 = vpop.f32.mrf.mxu0
        %v1972 = vadd.f32 %v1958, %v1971
        %v1973 = vpop.f32.mrf.mxu0
        %v1974 = vadd.f32 %v1960, %v1973
        %1975 = vdwg.mxu0
        %1976 = vmatpush.bf16.msra.mxu0 %v1510
        %1977 = vmatpush.bf16.msra.mxu0 %v1502
        %1978 = vmatpush.bf16.msra.mxu0 %v1494
        %1979 = vmatpush.bf16.msra.mxu0 %v1486
        %1980 = vmatpush.bf16.msra.mxu0 %v1478
        %1981 = vmatpush.bf16.msra.mxu0 %v1470
        %1982 = vmatpush.bf16.msra.mxu0 %v1462
        %1983 = vmatpush.bf16.msra.mxu0 %v1454
        %1984 = vmatmul.bf16.gmra.mxu0 %v298
        %v1985 = vpop.f32.mrf.mxu0
        %v1986 = vadd.f32 %v1972, %v1985
        %v1987 = vpop.f32.mrf.mxu0
        %v1988 = vadd.f32 %v1974, %v1987
        %1989 = vdwg.mxu0
        %1990 = vmatpush.bf16.msra.mxu0 %v1574
        %1991 = vmatpush.bf16.msra.mxu0 %v1566
        %1992 = vmatpush.bf16.msra.mxu0 %v1558
        %1993 = vmatpush.bf16.msra.mxu0 %v1550
        %1994 = vmatpush.bf16.msra.mxu0 %v1542
        %1995 = vmatpush.bf16.msra.mxu0 %v1534
        %1996 = vmatpush.bf16.msra.mxu0 %v1526
        %1997 = vmatpush.bf16.msra.mxu0 %v1518
        %1998 = vmatmul.bf16.gmra.mxu0 %v299
        %v1999 = vpop.f32.mrf.mxu0
        %v2000 = vadd.f32 %v1986, %v1999
        %v2001 = vpop.f32.mrf.mxu0
        %v2002 = vadd.f32 %v1988, %v2001
        %2003 = vdwg.mxu0
        %2004 = vmatpush.bf16.msra.mxu0 %v1383
        %2005 = vmatpush.bf16.msra.mxu0 %v1375
        %2006 = vmatpush.bf16.msra.mxu0 %v1367
        %2007 = vmatpush.bf16.msra.mxu0 %v1359
        %2008 = vmatpush.bf16.msra.mxu0 %v1351
        %2009 = vmatpush.bf16.msra.mxu0 %v1343
        %2010 = vmatpush.bf16.msra.mxu0 %v1335
        %2011 = vmatpush.bf16.msra.mxu0 %v1327
        %2012 = vmatmul.bf16.gmra.mxu0 %v296
        %v2013 = vpop.f32.mrf.mxu0
        %v2014 = vadd.f32 0.0, %v2013
        %v2015 = vpop.f32.mrf.mxu0
        %v2016 = vadd.f32 0.0, %v2015
        %2017 = vdwg.mxu0
        %2018 = vmatpush.bf16.msra.mxu0 %v1447
        %2019 = vmatpush.bf16.msra.mxu0 %v1439
        %2020 = vmatpush.bf16.msra.mxu0 %v1431
        %2021 = vmatpush.bf16.msra.mxu0 %v1423
        %2022 = vmatpush.bf16.msra.mxu0 %v1415
        %2023 = vmatpush.bf16.msra.mxu0 %v1407
        %2024 = vmatpush.bf16.msra.mxu0 %v1399
        %2025 = vmatpush.bf16.msra.mxu0 %v1391
        %2026 = vmatmul.bf16.gmra.mxu0 %v297
        %v2027 = vpop.f32.mrf.mxu0
        %v2028 = vadd.f32 %v2014, %v2027
        %v2029 = vpop.f32.mrf.mxu0
        %v2030 = vadd.f32 %v2016, %v2029
        %2031 = vdwg.mxu0
        %2032 = vmatpush.bf16.msra.mxu0 %v1511
        %2033 = vmatpush.bf16.msra.mxu0 %v1503
        %2034 = vmatpush.bf16.msra.mxu0 %v1495
        %2035 = vmatpush.bf16.msra.mxu0 %v1487
        %2036 = vmatpush.bf16.msra.mxu0 %v1479
        %2037 = vmatpush.bf16.msra.mxu0 %v1471
        %2038 = vmatpush.bf16.msra.mxu0 %v1463
        %2039 = vmatpush.bf16.msra.mxu0 %v1455
        %2040 = vmatmul.bf16.gmra.mxu0 %v298
        %v2041 = vpop.f32.mrf.mxu0
        %v2042 = vadd.f32 %v2028, %v2041
        %v2043 = vpop.f32.mrf.mxu0
        %v2044 = vadd.f32 %v2030, %v2043
        %2045 = vdwg.mxu0
        %2046 = vmatpush.bf16.msra.mxu0 %v1575
        %2047 = vmatpush.bf16.msra.mxu0 %v1567
        %2048 = vmatpush.bf16.msra.mxu0 %v1559
        %2049 = vmatpush.bf16.msra.mxu0 %v1551
        %2050 = vmatpush.bf16.msra.mxu0 %v1543
        %2051 = vmatpush.bf16.msra.mxu0 %v1535
        %2052 = vmatpush.bf16.msra.mxu0 %v1527
        %2053 = vmatpush.bf16.msra.mxu0 %v1519
        %2054 = vmatmul.bf16.gmra.mxu0 %v299
        %v2055 = vpop.f32.mrf.mxu0
        %v2056 = vadd.f32 %v2042, %v2055
        %v2057 = vpop.f32.mrf.mxu0
        %v2058 = vadd.f32 %v2044, %v2057
        %2059 = vdwg.mxu0
        %2060 = vmatpush.bf16.msra.mxu0 %v1384
        %2061 = vmatpush.bf16.msra.mxu0 %v1376
        %2062 = vmatpush.bf16.msra.mxu0 %v1368
        %2063 = vmatpush.bf16.msra.mxu0 %v1360
        %2064 = vmatpush.bf16.msra.mxu0 %v1352
        %2065 = vmatpush.bf16.msra.mxu0 %v1344
        %2066 = vmatpush.bf16.msra.mxu0 %v1336
        %2067 = vmatpush.bf16.msra.mxu0 %v1328
        %2068 = vmatmul.bf16.gmra.mxu0 %v296
        %v2069 = vpop.f32.mrf.mxu0
        %v2070 = vadd.f32 0.0, %v2069
        %v2071 = vpop.f32.mrf.mxu0
        %v2072 = vadd.f32 0.0, %v2071
        %2073 = vdwg.mxu0
        %2074 = vmatpush.bf16.msra.mxu0 %v1448
        %2075 = vmatpush.bf16.msra.mxu0 %v1440
        %2076 = vmatpush.bf16.msra.mxu0 %v1432
        %2077 = vmatpush.bf16.msra.mxu0 %v1424
        %2078 = vmatpush.bf16.msra.mxu0 %v1416
        %2079 = vmatpush.bf16.msra.mxu0 %v1408
        %2080 = vmatpush.bf16.msra.mxu0 %v1400
        %2081 = vmatpush.bf16.msra.mxu0 %v1392
        %2082 = vmatmul.bf16.gmra.mxu0 %v297
        %v2083 = vpop.f32.mrf.mxu0
        %v2084 = vadd.f32 %v2070, %v2083
        %v2085 = vpop.f32.mrf.mxu0
        %v2086 = vadd.f32 %v2072, %v2085
        %2087 = vdwg.mxu0
        %2088 = vmatpush.bf16.msra.mxu0 %v1512
        %2089 = vmatpush.bf16.msra.mxu0 %v1504
        %2090 = vmatpush.bf16.msra.mxu0 %v1496
        %2091 = vmatpush.bf16.msra.mxu0 %v1488
        %2092 = vmatpush.bf16.msra.mxu0 %v1480
        %2093 = vmatpush.bf16.msra.mxu0 %v1472
        %2094 = vmatpush.bf16.msra.mxu0 %v1464
        %2095 = vmatpush.bf16.msra.mxu0 %v1456
        %2096 = vmatmul.bf16.gmra.mxu0 %v298
        %v2097 = vpop.f32.mrf.mxu0
        %v2098 = vadd.f32 %v2084, %v2097
        %v2099 = vpop.f32.mrf.mxu0
        %v2100 = vadd.f32 %v2086, %v2099
        %2101 = vdwg.mxu0
        %2102 = vmatpush.bf16.msra.mxu0 %v1576
        %2103 = vmatpush.bf16.msra.mxu0 %v1568
        %2104 = vmatpush.bf16.msra.mxu0 %v1560
        %2105 = vmatpush.bf16.msra.mxu0 %v1552
        %2106 = vmatpush.bf16.msra.mxu0 %v1544
        %2107 = vmatpush.bf16.msra.mxu0 %v1536
        %2108 = vmatpush.bf16.msra.mxu0 %v1528
        %2109 = vmatpush.bf16.msra.mxu0 %v1520
        %2110 = vmatmul.bf16.gmra.mxu0 %v299
        %v2111 = vpop.f32.mrf.mxu0
        %v2112 = vadd.f32 %v2098, %v2111
        %v2113 = vpop.f32.mrf.mxu0
        %v2114 = vadd.f32 %v2100, %v2113
        %2115 = vdwg.mxu0
        %2116 = vmatpush.bf16.msra.mxu0 %v1385
        %2117 = vmatpush.bf16.msra.mxu0 %v1377
        %2118 = vmatpush.bf16.msra.mxu0 %v1369
        %2119 = vmatpush.bf16.msra.mxu0 %v1361
        %2120 = vmatpush.bf16.msra.mxu0 %v1353
        %2121 = vmatpush.bf16.msra.mxu0 %v1345
        %2122 = vmatpush.bf16.msra.mxu0 %v1337
        %2123 = vmatpush.bf16.msra.mxu0 %v1329
        %2124 = vmatmul.bf16.gmra.mxu0 %v296
        %v2125 = vpop.f32.mrf.mxu0
        %v2126 = vadd.f32 0.0, %v2125
        %v2127 = vpop.f32.mrf.mxu0
        %v2128 = vadd.f32 0.0, %v2127
        %2129 = vdwg.mxu0
        %2130 = vmatpush.bf16.msra.mxu0 %v1449
        %2131 = vmatpush.bf16.msra.mxu0 %v1441
        %2132 = vmatpush.bf16.msra.mxu0 %v1433
        %2133 = vmatpush.bf16.msra.mxu0 %v1425
        %2134 = vmatpush.bf16.msra.mxu0 %v1417
        %2135 = vmatpush.bf16.msra.mxu0 %v1409
        %2136 = vmatpush.bf16.msra.mxu0 %v1401
        %2137 = vmatpush.bf16.msra.mxu0 %v1393
        %2138 = vmatmul.bf16.gmra.mxu0 %v297
        %v2139 = vpop.f32.mrf.mxu0
        %v2140 = vadd.f32 %v2126, %v2139
        %v2141 = vpop.f32.mrf.mxu0
        %v2142 = vadd.f32 %v2128, %v2141
        %2143 = vdwg.mxu0
        %2144 = vmatpush.bf16.msra.mxu0 %v1513
        %2145 = vmatpush.bf16.msra.mxu0 %v1505
        %2146 = vmatpush.bf16.msra.mxu0 %v1497
        %2147 = vmatpush.bf16.msra.mxu0 %v1489
        %2148 = vmatpush.bf16.msra.mxu0 %v1481
        %2149 = vmatpush.bf16.msra.mxu0 %v1473
        %2150 = vmatpush.bf16.msra.mxu0 %v1465
        %2151 = vmatpush.bf16.msra.mxu0 %v1457
        %2152 = vmatmul.bf16.gmra.mxu0 %v298
        %v2153 = vpop.f32.mrf.mxu0
        %v2154 = vadd.f32 %v2140, %v2153
        %v2155 = vpop.f32.mrf.mxu0
        %v2156 = vadd.f32 %v2142, %v2155
        %2157 = vdwg.mxu0
        %2158 = vmatpush.bf16.msra.mxu0 %v1577
        %2159 = vmatpush.bf16.msra.mxu0 %v1569
        %2160 = vmatpush.bf16.msra.mxu0 %v1561
        %2161 = vmatpush.bf16.msra.mxu0 %v1553
        %2162 = vmatpush.bf16.msra.mxu0 %v1545
        %2163 = vmatpush.bf16.msra.mxu0 %v1537
        %2164 = vmatpush.bf16.msra.mxu0 %v1529
        %2165 = vmatpush.bf16.msra.mxu0 %v1521
        %2166 = vmatmul.bf16.gmra.mxu0 %v299
        %v2167 = vpop.f32.mrf.mxu0
        %v2168 = vadd.f32 %v2154, %v2167
        %v2169 = vpop.f32.mrf.mxu0
        %v2170 = vadd.f32 %v2156, %v2169
        %2171 = vdwg.mxu0
        %2172 = vmatpush.bf16.msra.mxu0 %v1386
        %2173 = vmatpush.bf16.msra.mxu0 %v1378
        %2174 = vmatpush.bf16.msra.mxu0 %v1370
        %2175 = vmatpush.bf16.msra.mxu0 %v1362
        %2176 = vmatpush.bf16.msra.mxu0 %v1354
        %2177 = vmatpush.bf16.msra.mxu0 %v1346
        %2178 = vmatpush.bf16.msra.mxu0 %v1338
        %2179 = vmatpush.bf16.msra.mxu0 %v1330
        %2180 = vmatmul.bf16.gmra.mxu0 %v296
        %v2181 = vpop.f32.mrf.mxu0
        %v2182 = vadd.f32 0.0, %v2181
        %v2183 = vpop.f32.mrf.mxu0
        %v2184 = vadd.f32 0.0, %v2183
        %2185 = vdwg.mxu0
        %2186 = vmatpush.bf16.msra.mxu0 %v1450
        %2187 = vmatpush.bf16.msra.mxu0 %v1442
        %2188 = vmatpush.bf16.msra.mxu0 %v1434
        %2189 = vmatpush.bf16.msra.mxu0 %v1426
        %2190 = vmatpush.bf16.msra.mxu0 %v1418
        %2191 = vmatpush.bf16.msra.mxu0 %v1410
        %2192 = vmatpush.bf16.msra.mxu0 %v1402
        %2193 = vmatpush.bf16.msra.mxu0 %v1394
        %2194 = vmatmul.bf16.gmra.mxu0 %v297
        %v2195 = vpop.f32.mrf.mxu0
        %v2196 = vadd.f32 %v2182, %v2195
        %v2197 = vpop.f32.mrf.mxu0
        %v2198 = vadd.f32 %v2184, %v2197
        %2199 = vdwg.mxu0
        %2200 = vmatpush.bf16.msra.mxu0 %v1514
        %2201 = vmatpush.bf16.msra.mxu0 %v1506
        %2202 = vmatpush.bf16.msra.mxu0 %v1498
        %2203 = vmatpush.bf16.msra.mxu0 %v1490
        %2204 = vmatpush.bf16.msra.mxu0 %v1482
        %2205 = vmatpush.bf16.msra.mxu0 %v1474
        %2206 = vmatpush.bf16.msra.mxu0 %v1466
        %2207 = vmatpush.bf16.msra.mxu0 %v1458
        %2208 = vmatmul.bf16.gmra.mxu0 %v298
        %v2209 = vpop.f32.mrf.mxu0
        %v2210 = vadd.f32 %v2196, %v2209
        %v2211 = vpop.f32.mrf.mxu0
        %v2212 = vadd.f32 %v2198, %v2211
        %2213 = vdwg.mxu0
        %2214 = vmatpush.bf16.msra.mxu0 %v1578
        %2215 = vmatpush.bf16.msra.mxu0 %v1570
        %2216 = vmatpush.bf16.msra.mxu0 %v1562
        %2217 = vmatpush.bf16.msra.mxu0 %v1554
        %2218 = vmatpush.bf16.msra.mxu0 %v1546
        %2219 = vmatpush.bf16.msra.mxu0 %v1538
        %2220 = vmatpush.bf16.msra.mxu0 %v1530
        %2221 = vmatpush.bf16.msra.mxu0 %v1522
        %2222 = vmatmul.bf16.gmra.mxu0 %v299
        %v2223 = vpop.f32.mrf.mxu0
        %v2224 = vadd.f32 %v2210, %v2223
        %v2225 = vpop.f32.mrf.mxu0
        %v2226 = vadd.f32 %v2212, %v2225
        %2227 = vdwg.mxu0
        %2228 = vmatpush.bf16.msra.mxu0 %v1387
        %2229 = vmatpush.bf16.msra.mxu0 %v1379
        %2230 = vmatpush.bf16.msra.mxu0 %v1371
        %2231 = vmatpush.bf16.msra.mxu0 %v1363
        %2232 = vmatpush.bf16.msra.mxu0 %v1355
        %2233 = vmatpush.bf16.msra.mxu0 %v1347
        %2234 = vmatpush.bf16.msra.mxu0 %v1339
        %2235 = vmatpush.bf16.msra.mxu0 %v1331
        %2236 = vmatmul.bf16.gmra.mxu0 %v296
        %v2237 = vpop.f32.mrf.mxu0
        %v2238 = vadd.f32 0.0, %v2237
        %v2239 = vpop.f32.mrf.mxu0
        %v2240 = vadd.f32 0.0, %v2239
        %2241 = vdwg.mxu0
        %2242 = vmatpush.bf16.msra.mxu0 %v1451
        %2243 = vmatpush.bf16.msra.mxu0 %v1443
        %2244 = vmatpush.bf16.msra.mxu0 %v1435
        %2245 = vmatpush.bf16.msra.mxu0 %v1427
        %2246 = vmatpush.bf16.msra.mxu0 %v1419
        %2247 = vmatpush.bf16.msra.mxu0 %v1411
        %2248 = vmatpush.bf16.msra.mxu0 %v1403
        %2249 = vmatpush.bf16.msra.mxu0 %v1395
        %2250 = vmatmul.bf16.gmra.mxu0 %v297
        %v2251 = vpop.f32.mrf.mxu0
        %v2252 = vadd.f32 %v2238, %v2251
        %v2253 = vpop.f32.mrf.mxu0
        %v2254 = vadd.f32 %v2240, %v2253
        %2255 = vdwg.mxu0
        %2256 = vmatpush.bf16.msra.mxu0 %v1515
        %2257 = vmatpush.bf16.msra.mxu0 %v1507
        %2258 = vmatpush.bf16.msra.mxu0 %v1499
        %2259 = vmatpush.bf16.msra.mxu0 %v1491
        %2260 = vmatpush.bf16.msra.mxu0 %v1483
        %2261 = vmatpush.bf16.msra.mxu0 %v1475
        %2262 = vmatpush.bf16.msra.mxu0 %v1467
        %2263 = vmatpush.bf16.msra.mxu0 %v1459
        %2264 = vmatmul.bf16.gmra.mxu0 %v298
        %v2265 = vpop.f32.mrf.mxu0
        %v2266 = vadd.f32 %v2252, %v2265
        %v2267 = vpop.f32.mrf.mxu0
        %v2268 = vadd.f32 %v2254, %v2267
        %2269 = vdwg.mxu0
        %2270 = vmatpush.bf16.msra.mxu0 %v1579
        %2271 = vmatpush.bf16.msra.mxu0 %v1571
        %2272 = vmatpush.bf16.msra.mxu0 %v1563
        %2273 = vmatpush.bf16.msra.mxu0 %v1555
        %2274 = vmatpush.bf16.msra.mxu0 %v1547
        %2275 = vmatpush.bf16.msra.mxu0 %v1539
        %2276 = vmatpush.bf16.msra.mxu0 %v1531
        %2277 = vmatpush.bf16.msra.mxu0 %v1523
        %2278 = vmatmul.bf16.gmra.mxu0 %v299
        %v2279 = vpop.f32.mrf.mxu0
        %v2280 = vadd.f32 %v2266, %v2279
        %v2281 = vpop.f32.mrf.mxu0
        %v2282 = vadd.f32 %v2268, %v2281
        %2283 = vdwg.mxu0
        %v2284 = vadd.f32 %v272, %v1888
        %v2285 = vadd.f32 %v273, %v1944
        %v2286 = vadd.f32 %v274, %v2000
        %v2287 = vadd.f32 %v275, %v2056
        %v2288 = vadd.f32 %v276, %v2112
        %v2289 = vadd.f32 %v277, %v2168
        %v2290 = vadd.f32 %v278, %v2224
        %v2291 = vadd.f32 %v279, %v2280
        %v2292 = vadd.f32 %v280, %v1890
        %v2293 = vadd.f32 %v281, %v1946
        %v2294 = vadd.f32 %v282, %v2002
        %v2295 = vadd.f32 %v283, %v2058
        %v2296 = vadd.f32 %v284, %v2114
        %v2297 = vadd.f32 %v285, %v2170
        %v2298 = vadd.f32 %v286, %v2226
        %v2299 = vadd.f32 %v287, %v2282
        %2300 = vst [vmem:[#allocation2] sm:$0xff] %v2284
        %2301 = vst [vmem:[#allocation2 + $0x8] sm:$0xff] %v2285
        %2302 = vst [vmem:[#allocation2 + $0x10] sm:$0xff] %v2286
        %2303 = vst [vmem:[#allocation2 + $0x18] sm:$0xff] %v2287
        %2304 = vst [vmem:[#allocation2 + $0x20] sm:$0xff] %v2288
        %2305 = vst [vmem:[#allocation2 + $0x28] sm:$0xff] %v2289
        %2306 = vst [vmem:[#allocation2 + $0x30] sm:$0xff] %v2290
        %2307 = vst [vmem:[#allocation2 + $0x38] sm:$0xff] %v2291
        %2308 = vst [vmem:[#allocation2 + $0x40] sm:$0xff] %v2292
        %2309 = vst [vmem:[#allocation2 + $0x48] sm:$0xff] %v2293
        %2310 = vst [vmem:[#allocation2 + $0x50] sm:$0xff] %v2294
        %2311 = vst [vmem:[#allocation2 + $0x58] sm:$0xff] %v2295
        %2312 = vst [vmem:[#allocation2 + $0x60] sm:$0xff] %v2296
        %2313 = vst [vmem:[#allocation2 + $0x68] sm:$0xff] %v2297
        %2314 = vst [vmem:[#allocation2 + $0x70] sm:$0xff] %v2298
        %2315 = vst [vmem:[#allocation2 + $0x78] sm:$0xff] %v2299
        %p2316 = scmp.eq.s32.totalorder %s19, 7
        // Predicated region
        $region60: #{crnn_forward.12} parent=50 // pred_check
          %p2317 = pneg %p2316
        $region61: #{crnn_forward.12} parent=50 // pred_check_branch
          %2319 = sbr.rel (%p2317) target = $region63
        $region62: #{crnn_forward.12} parent=50 // pred_region
          %v2320 = vld [vmem:[#allocation2] sm:$0xff]
          %v2321 = vld [vmem:[#allocation2 + $0x8] sm:$0xff]
          %v2322 = vld [vmem:[#allocation2 + $0x10] sm:$0xff]
          %v2323 = vld [vmem:[#allocation2 + $0x18] sm:$0xff]
          %v2324 = vld [vmem:[#allocation2 + $0x20] sm:$0xff]
          %v2325 = vld [vmem:[#allocation2 + $0x28] sm:$0xff]
          %v2326 = vld [vmem:[#allocation2 + $0x30] sm:$0xff]
          %v2327 = vld [vmem:[#allocation2 + $0x38] sm:$0xff]
          %v2328 = vld [vmem:[#allocation2 + $0x40] sm:$0xff]
          %v2329 = vld [vmem:[#allocation2 + $0x48] sm:$0xff]
          %v2330 = vld [vmem:[#allocation2 + $0x50] sm:$0xff]
          %v2331 = vld [vmem:[#allocation2 + $0x58] sm:$0xff]
          %v2332 = vld [vmem:[#allocation2 + $0x60] sm:$0xff]
          %v2333 = vld [vmem:[#allocation2 + $0x68] sm:$0xff]
          %v2334 = vld [vmem:[#allocation2 + $0x70] sm:$0xff]
          %v2335 = vld [vmem:[#allocation2 + $0x78] sm:$0xff]
          %v2336 = vld [vmem:[%s2] sm:$0xff]
          %v2338 = vperm.slane %v2336, 0
          %v2339 = vperm.slane %v2336, 1
          %v2340 = vperm.slane %v2336, 2
          %v2341 = vperm.slane %v2336, 3
          %v2342 = vperm.slane %v2336, 4
          %v2343 = vperm.slane %v2336, 5
          %v2344 = vperm.slane %v2336, 6
          %v2345 = vperm.slane %v2336, 7
          %v2354 = vadd.f32 %v2320, %v2338
          %v2355 = vadd.f32 %v2321, %v2339
          %v2356 = vadd.f32 %v2322, %v2340
          %v2357 = vadd.f32 %v2323, %v2341
          %v2358 = vadd.f32 %v2324, %v2342
          %v2359 = vadd.f32 %v2325, %v2343
          %v2360 = vadd.f32 %v2326, %v2344
          %v2361 = vadd.f32 %v2327, %v2345
          %v2362 = vadd.f32 %v2328, %v2338
          %v2363 = vadd.f32 %v2329, %v2339
          %v2364 = vadd.f32 %v2330, %v2340
          %v2365 = vadd.f32 %v2331, %v2341
          %v2366 = vadd.f32 %v2332, %v2342
          %v2367 = vadd.f32 %v2333, %v2343
          %v2368 = vadd.f32 %v2334, %v2344
          %v2369 = vadd.f32 %v2335, %v2345
          %2370 = vst [vmem:[%s250] sm:$0xff] %v2354
          %2371 = vst [vmem:[%s250 + $0x8] sm:$0xff] %v2355
          %2372 = vst [vmem:[%s250 + $0x10] sm:$0xff] %v2356
          %2373 = vst [vmem:[%s250 + $0x18] sm:$0xff] %v2357
          %2374 = vst [vmem:[%s250 + $0x20] sm:$0xff] %v2358
          %2375 = vst [vmem:[%s250 + $0x28] sm:$0xff] %v2359
          %2376 = vst [vmem:[%s250 + $0x30] sm:$0xff] %v2360
          %2377 = vst [vmem:[%s250 + $0x38] sm:$0xff] %v2361
          %2378 = vst [vmem:[%s250 + $0x40] sm:$0xff] %v2362
          %2379 = vst [vmem:[%s250 + $0x48] sm:$0xff] %v2363
          %2380 = vst [vmem:[%s250 + $0x50] sm:$0xff] %v2364
          %2381 = vst [vmem:[%s250 + $0x58] sm:$0xff] %v2365
          %2382 = vst [vmem:[%s250 + $0x60] sm:$0xff] %v2366
          %2383 = vst [vmem:[%s250 + $0x68] sm:$0xff] %v2367
          %2384 = vst [vmem:[%s250 + $0x70] sm:$0xff] %v2368
          %2385 = vst [vmem:[%s250 + $0x78] sm:$0xff] %v2369
        $region63: #{crnn_forward.12} parent=50 // pred_fallthru
          _
        %s2386 = smul.u32 2, %s18
        %p2387 = scmp.lt.s32.totalorder %s2386, 1
        %s2388 = scalar_select %p2387, %s2386, 1
        %s2389 = smul.addr %s2388, 8
        %s2390 = smul.addr %s2389, 8
        %s2391 = scalar_lea.vmem %s3, %s2390
        // Predicated region
        $region64: #{crnn_forward.12} parent=50 // pred_check
          %p2392 = pneg %p119
        $region65: #{crnn_forward.12} parent=50 // pred_check_branch
          %2394 = sbr.rel (%p2392) target = $region67
        $region66: #{crnn_forward.12} parent=50 // pred_region
          %s2395 = smul.u32 2, %s18
        $region67: #{crnn_forward.12} parent=50 // pred_fallthru
          _
        // Predicated region
        $region68: #{crnn_forward.12} parent=50 // pred_check
          %p2396 = pneg %p119
        $region69: #{crnn_forward.12} parent=50 // pred_check_branch
          %2398 = sbr.rel (%p2396) target = $region71
        $region70: #{crnn_forward.12} parent=50 // pred_region
          %s2399 = smul.u32 2, %s18
          %p2400 = scmp.lt.s32.totalorder %s2399, 1
          %s2401 = scalar_select %p2400, %s2399, 1
          %s2402 = smul.addr %s2401, 8
          %s2403 = smul.addr %s2402, 8
          %s2404 = scalar_lea.vmem %s3, %s2403
        $region71: #{crnn_forward.12} parent=50 // pred_fallthru
          _
      $region51: #{crnn_forward.12} parent=5 // pred_fallthru
        _
      %p2405 = scmp.le.s32.totalorder 2, %s9
      // Predicated region
      $region72: #{crnn_forward.12} parent=5 // pred_check
        %p2406 = pneg %p2405
      $region73: #{crnn_forward.12} parent=5 // pred_check_branch
        %2408 = sbr.rel (%p2406) target = $region75
      $region74: #{crnn_forward.12} parent=5 // pred_region
        %s2409 = ssub.s32 %s9, 2
      $region75: #{crnn_forward.12} parent=5 // pred_fallthru
        _
    $region6: #{crnn_forward.12} parent=1 // loop_footer
      %s13 = sadd.s32 1, %s9
    $region7: #{crnn_forward.12} parent=1 // loop_footer_branch
      %8 = sbr.rel target = $region3
    $region8: #{crnn_forward.12} parent=1 // loop_exit
      _

// kernel: crnn_forward.14
$region0: #{crnn_forward.14}
  #allocation0 [shape = 'u32[]', space=smem, size = 0x4, offset = 0x4, fixed_abs, tag = 'smem constant byte address 0x4 - core index']
  #allocation1 [shape = 'u32[72,128]{1,0:T(1,128)}', space=vmem, size = 0x9000, scoped, tag = 'internal scratch']
  #allocation2 [shape = 'f32[16,1024]{1,0:T(8,128)}', space=vmem, size = 0x10000, scoped, tag = 'scratch operand']
  %s0 = inlined_call_operand.vmem [shape: f32[16,256], index: 0, kind: input, shape index: {}]
  %s1 = inlined_call_operand.vmem [shape: bf16[256,1024], index: 1, kind: input, shape index: {}]
  %s2 = inlined_call_operand.vmem [shape: f32[1,1024], index: 2, kind: input, shape index: {}]
  %s3 = inlined_call_operand.vmem [shape: f32[16,1024], index: 3, kind: output, shape index: {}]
  %s4 = sld [smem:[#allocation0]]
  $region30: #{crnn_forward.14} parent=0
    _
  %s6 = ssub.s32 1, %s4
  %s7 = scalar_select 0, %s6, %s4
  // Predicated region
  $region2: #{crnn_forward.14} parent=0 // pred_check
    _
  $region3: #{crnn_forward.14} parent=0 // pred_check_branch
    %9 = sbr.rel (0) target = $region5
  $region4: #{crnn_forward.14} parent=0 // pred_region
    _
  $region5: #{crnn_forward.14} parent=0 // pred_fallthru
    _
  // Predicated region
  $region6: #{crnn_forward.14} parent=0 // pred_check
    _
  $region7: #{crnn_forward.14} parent=0 // pred_check_branch
    %11 = sbr.rel (0) target = $region9
  $region8: #{crnn_forward.14} parent=0 // pred_region
    _
  $region9: #{crnn_forward.14} parent=0 // pred_fallthru
    _
  // Predicated region
  $region10: #{crnn_forward.14} parent=0 // pred_check
    _
  $region11: #{crnn_forward.14} parent=0 // pred_check_branch
    %13 = sbr.rel (0) target = $region13
  $region12: #{crnn_forward.14} parent=0 // pred_region
    _
  $region13: #{crnn_forward.14} parent=0 // pred_fallthru
    _
  %p14 = scmp.eq.s32.totalorder 0, 0
  // Predicated region
  $region14: #{crnn_forward.14} parent=0 // pred_check
    %p15 = pneg %p14
  $region15: #{crnn_forward.14} parent=0 // pred_check_branch
    %17 = sbr.rel (%p15) target = $region17
  $region16: #{crnn_forward.14} parent=0 // pred_region
    %18 = vst [vmem:[#allocation2] sm:$0xff] 0.0
    %19 = vst [vmem:[#allocation2 + $0x8] sm:$0xff] 0.0
    %20 = vst [vmem:[#allocation2 + $0x10] sm:$0xff] 0.0
    %21 = vst [vmem:[#allocation2 + $0x18] sm:$0xff] 0.0
    %22 = vst [vmem:[#allocation2 + $0x20] sm:$0xff] 0.0
    %23 = vst [vmem:[#allocation2 + $0x28] sm:$0xff] 0.0
    %24 = vst [vmem:[#allocation2 + $0x30] sm:$0xff] 0.0
    %25 = vst [vmem:[#allocation2 + $0x38] sm:$0xff] 0.0
    %26 = vst [vmem:[#allocation2 + $0x40] sm:$0xff] 0.0
    %27 = vst [vmem:[#allocation2 + $0x48] sm:$0xff] 0.0
    %28 = vst [vmem:[#allocation2 + $0x50] sm:$0xff] 0.0
    %29 = vst [vmem:[#allocation2 + $0x58] sm:$0xff] 0.0
    %30 = vst [vmem:[#allocation2 + $0x60] sm:$0xff] 0.0
    %31 = vst [vmem:[#allocation2 + $0x68] sm:$0xff] 0.0
    %32 = vst [vmem:[#allocation2 + $0x70] sm:$0xff] 0.0
    %33 = vst [vmem:[#allocation2 + $0x78] sm:$0xff] 0.0
  $region17: #{crnn_forward.14} parent=0 // pred_fallthru
    _
  %v34 = vld [vmem:[#allocation2] sm:$0xff]
  %v35 = vld [vmem:[#allocation2 + $0x8] sm:$0xff]
  %v36 = vld [vmem:[#allocation2 + $0x10] sm:$0xff]
  %v37 = vld [vmem:[#allocation2 + $0x18] sm:$0xff]
  %v38 = vld [vmem:[#allocation2 + $0x20] sm:$0xff]
  %v39 = vld [vmem:[#allocation2 + $0x28] sm:$0xff]
  %v40 = vld [vmem:[#allocation2 + $0x30] sm:$0xff]
  %v41 = vld [vmem:[#allocation2 + $0x38] sm:$0xff]
  %v42 = vld [vmem:[#allocation2 + $0x40] sm:$0xff]
  %v43 = vld [vmem:[#allocation2 + $0x48] sm:$0xff]
  %v44 = vld [vmem:[#allocation2 + $0x50] sm:$0xff]
  %v45 = vld [vmem:[#allocation2 + $0x58] sm:$0xff]
  %v46 = vld [vmem:[#allocation2 + $0x60] sm:$0xff]
  %v47 = vld [vmem:[#allocation2 + $0x68] sm:$0xff]
  %v48 = vld [vmem:[#allocation2 + $0x70] sm:$0xff]
  %v49 = vld [vmem:[#allocation2 + $0x78] sm:$0xff]
  %v50 = vld [vmem:[%s0] sm:$0xff]
  %v51 = vld [vmem:[%s0 + $0x8] sm:$0xff]
  %v52 = vld [vmem:[%s0 + $0x10] sm:$0xff]
  %v53 = vld [vmem:[%s0 + $0x18] sm:$0xff]
  %v54 = vpack.c.bf16 %v52, %v50
  %v55 = vpack.c.bf16 %v53, %v51
  %v56 = vld [vmem:[%s1] sm:$0xff]
  %v57 = vld [vmem:[%s1 + $0x8] sm:$0xff]
  %v58 = vld [vmem:[%s1 + $0x10] sm:$0xff]
  %v59 = vld [vmem:[%s1 + $0x18] sm:$0xff]
  %v60 = vld [vmem:[%s1 + $0x20] sm:$0xff]
  %v61 = vld [vmem:[%s1 + $0x28] sm:$0xff]
  %v62 = vld [vmem:[%s1 + $0x30] sm:$0xff]
  %v63 = vld [vmem:[%s1 + $0x38] sm:$0xff]
  %v64 = vld [vmem:[%s1 + $0x40] sm:$0xff]
  %v65 = vld [vmem:[%s1 + $0x48] sm:$0xff]
  %v66 = vld [vmem:[%s1 + $0x50] sm:$0xff]
  %v67 = vld [vmem:[%s1 + $0x58] sm:$0xff]
  %v68 = vld [vmem:[%s1 + $0x60] sm:$0xff]
  %v69 = vld [vmem:[%s1 + $0x68] sm:$0xff]
  %v70 = vld [vmem:[%s1 + $0x70] sm:$0xff]
  %v71 = vld [vmem:[%s1 + $0x78] sm:$0xff]
  %v72 = vld [vmem:[%s1 + $0x80] sm:$0xff]
  %v73 = vld [vmem:[%s1 + $0x88] sm:$0xff]
  %v74 = vld [vmem:[%s1 + $0x90] sm:$0xff]
  %v75 = vld [vmem:[%s1 + $0x98] sm:$0xff]
  %v76 = vld [vmem:[%s1 + $0xa0] sm:$0xff]
  %v77 = vld [vmem:[%s1 + $0xa8] sm:$0xff]
  %v78 = vld [vmem:[%s1 + $0xb0] sm:$0xff]
  %v79 = vld [vmem:[%s1 + $0xb8] sm:$0xff]
  %v80 = vld [vmem:[%s1 + $0xc0] sm:$0xff]
  %v81 = vld [vmem:[%s1 + $0xc8] sm:$0xff]
  %v82 = vld [vmem:[%s1 + $0xd0] sm:$0xff]
  %v83 = vld [vmem:[%s1 + $0xd8] sm:$0xff]
  %v84 = vld [vmem:[%s1 + $0xe0] sm:$0xff]
  %v85 = vld [vmem:[%s1 + $0xe8] sm:$0xff]
  %v86 = vld [vmem:[%s1 + $0xf0] sm:$0xff]
  %v87 = vld [vmem:[%s1 + $0xf8] sm:$0xff]
  %v88 = vld [vmem:[%s1 + $0x100] sm:$0xff]
  %v89 = vld [vmem:[%s1 + $0x108] sm:$0xff]
  %v90 = vld [vmem:[%s1 + $0x110] sm:$0xff]
  %v91 = vld [vmem:[%s1 + $0x118] sm:$0xff]
  %v92 = vld [vmem:[%s1 + $0x120] sm:$0xff]
  %v93 = vld [vmem:[%s1 + $0x128] sm:$0xff]
  %v94 = vld [vmem:[%s1 + $0x130] sm:$0xff]
  %v95 = vld [vmem:[%s1 + $0x138] sm:$0xff]
  %v96 = vld [vmem:[%s1 + $0x140] sm:$0xff]
  %v97 = vld [vmem:[%s1 + $0x148] sm:$0xff]
  %v98 = vld [vmem:[%s1 + $0x150] sm:$0xff]
  %v99 = vld [vmem:[%s1 + $0x158] sm:$0xff]
  %v100 = vld [vmem:[%s1 + $0x160] sm:$0xff]
  %v101 = vld [vmem:[%s1 + $0x168] sm:$0xff]
  %v102 = vld [vmem:[%s1 + $0x170] sm:$0xff]
  %v103 = vld [vmem:[%s1 + $0x178] sm:$0xff]
  %v104 = vld [vmem:[%s1 + $0x180] sm:$0xff]
  %v105 = vld [vmem:[%s1 + $0x188] sm:$0xff]
  %v106 = vld [vmem:[%s1 + $0x190] sm:$0xff]
  %v107 = vld [vmem:[%s1 + $0x198] sm:$0xff]
  %v108 = vld [vmem:[%s1 + $0x1a0] sm:$0xff]
  %v109 = vld [vmem:[%s1 + $0x1a8] sm:$0xff]
  %v110 = vld [vmem:[%s1 + $0x1b0] sm:$0xff]
  %v111 = vld [vmem:[%s1 + $0x1b8] sm:$0xff]
  %v112 = vld [vmem:[%s1 + $0x1c0] sm:$0xff]
  %v113 = vld [vmem:[%s1 + $0x1c8] sm:$0xff]
  %v114 = vld [vmem:[%s1 + $0x1d0] sm:$0xff]
  %v115 = vld [vmem:[%s1 + $0x1d8] sm:$0xff]
  %v116 = vld [vmem:[%s1 + $0x1e0] sm:$0xff]
  %v117 = vld [vmem:[%s1 + $0x1e8] sm:$0xff]
  %v118 = vld [vmem:[%s1 + $0x1f0] sm:$0xff]
  %v119 = vld [vmem:[%s1 + $0x1f8] sm:$0xff]
  %v120 = vld [vmem:[%s1 + $0x200] sm:$0xff]
  %v121 = vld [vmem:[%s1 + $0x208] sm:$0xff]
  %v122 = vld [vmem:[%s1 + $0x210] sm:$0xff]
  %v123 = vld [vmem:[%s1 + $0x218] sm:$0xff]
  %v124 = vld [vmem:[%s1 + $0x220] sm:$0xff]
  %v125 = vld [vmem:[%s1 + $0x228] sm:$0xff]
  %v126 = vld [vmem:[%s1 + $0x230] sm:$0xff]
  %v127 = vld [vmem:[%s1 + $0x238] sm:$0xff]
  %v128 = vld [vmem:[%s1 + $0x240] sm:$0xff]
  %v129 = vld [vmem:[%s1 + $0x248] sm:$0xff]
  %v130 = vld [vmem:[%s1 + $0x250] sm:$0xff]
  %v131 = vld [vmem:[%s1 + $0x258] sm:$0xff]
  %v132 = vld [vmem:[%s1 + $0x260] sm:$0xff]
  %v133 = vld [vmem:[%s1 + $0x268] sm:$0xff]
  %v134 = vld [vmem:[%s1 + $0x270] sm:$0xff]
  %v135 = vld [vmem:[%s1 + $0x278] sm:$0xff]
  %v136 = vld [vmem:[%s1 + $0x280] sm:$0xff]
  %v137 = vld [vmem:[%s1 + $0x288] sm:$0xff]
  %v138 = vld [vmem:[%s1 + $0x290] sm:$0xff]
  %v139 = vld [vmem:[%s1 + $0x298] sm:$0xff]
  %v140 = vld [vmem:[%s1 + $0x2a0] sm:$0xff]
  %v141 = vld [vmem:[%s1 + $0x2a8] sm:$0xff]
  %v142 = vld [vmem:[%s1 + $0x2b0] sm:$0xff]
  %v143 = vld [vmem:[%s1 + $0x2b8] sm:$0xff]
  %v144 = vld [vmem:[%s1 + $0x2c0] sm:$0xff]
  %v145 = vld [vmem:[%s1 + $0x2c8] sm:$0xff]
  %v146 = vld [vmem:[%s1 + $0x2d0] sm:$0xff]
  %v147 = vld [vmem:[%s1 + $0x2d8] sm:$0xff]
  %v148 = vld [vmem:[%s1 + $0x2e0] sm:$0xff]
  %v149 = vld [vmem:[%s1 + $0x2e8] sm:$0xff]
  %v150 = vld [vmem:[%s1 + $0x2f0] sm:$0xff]
  %v151 = vld [vmem:[%s1 + $0x2f8] sm:$0xff]
  %v152 = vld [vmem:[%s1 + $0x300] sm:$0xff]
  %v153 = vld [vmem:[%s1 + $0x308] sm:$0xff]
  %v154 = vld [vmem:[%s1 + $0x310] sm:$0xff]
  %v155 = vld [vmem:[%s1 + $0x318] sm:$0xff]
  %v156 = vld [vmem:[%s1 + $0x320] sm:$0xff]
  %v157 = vld [vmem:[%s1 + $0x328] sm:$0xff]
  %v158 = vld [vmem:[%s1 + $0x330] sm:$0xff]
  %v159 = vld [vmem:[%s1 + $0x338] sm:$0xff]
  %v160 = vld [vmem:[%s1 + $0x340] sm:$0xff]
  %v161 = vld [vmem:[%s1 + $0x348] sm:$0xff]
  %v162 = vld [vmem:[%s1 + $0x350] sm:$0xff]
  %v163 = vld [vmem:[%s1 + $0x358] sm:$0xff]
  %v164 = vld [vmem:[%s1 + $0x360] sm:$0xff]
  %v165 = vld [vmem:[%s1 + $0x368] sm:$0xff]
  %v166 = vld [vmem:[%s1 + $0x370] sm:$0xff]
  %v167 = vld [vmem:[%s1 + $0x378] sm:$0xff]
  %v168 = vld [vmem:[%s1 + $0x380] sm:$0xff]
  %v169 = vld [vmem:[%s1 + $0x388] sm:$0xff]
  %v170 = vld [vmem:[%s1 + $0x390] sm:$0xff]
  %v171 = vld [vmem:[%s1 + $0x398] sm:$0xff]
  %v172 = vld [vmem:[%s1 + $0x3a0] sm:$0xff]
  %v173 = vld [vmem:[%s1 + $0x3a8] sm:$0xff]
  %v174 = vld [vmem:[%s1 + $0x3b0] sm:$0xff]
  %v175 = vld [vmem:[%s1 + $0x3b8] sm:$0xff]
  %v176 = vld [vmem:[%s1 + $0x3c0] sm:$0xff]
  %v177 = vld [vmem:[%s1 + $0x3c8] sm:$0xff]
  %v178 = vld [vmem:[%s1 + $0x3d0] sm:$0xff]
  %v179 = vld [vmem:[%s1 + $0x3d8] sm:$0xff]
  %v180 = vld [vmem:[%s1 + $0x3e0] sm:$0xff]
  %v181 = vld [vmem:[%s1 + $0x3e8] sm:$0xff]
  %v182 = vld [vmem:[%s1 + $0x3f0] sm:$0xff]
  %v183 = vld [vmem:[%s1 + $0x3f8] sm:$0xff]
  %v312 = vunpack.c.l.b16 %v56
  %v313 = vunpack.c.h.b16 %v56
  %v314 = vunpack.c.l.b16 %v57
  %v315 = vunpack.c.h.b16 %v57
  %v316 = vunpack.c.l.b16 %v58
  %v317 = vunpack.c.h.b16 %v58
  %v318 = vunpack.c.l.b16 %v59
  %v319 = vunpack.c.h.b16 %v59
  %v320 = vunpack.c.l.b16 %v60
  %v321 = vunpack.c.h.b16 %v60
  %v322 = vunpack.c.l.b16 %v61
  %v323 = vunpack.c.h.b16 %v61
  %v324 = vunpack.c.l.b16 %v62
  %v325 = vunpack.c.h.b16 %v62
  %v326 = vunpack.c.l.b16 %v63
  %v327 = vunpack.c.h.b16 %v63
  %v328 = vunpack.c.l.b16 %v64
  %v329 = vunpack.c.h.b16 %v64
  %v330 = vunpack.c.l.b16 %v65
  %v331 = vunpack.c.h.b16 %v65
  %v332 = vunpack.c.l.b16 %v66
  %v333 = vunpack.c.h.b16 %v66
  %v334 = vunpack.c.l.b16 %v67
  %v335 = vunpack.c.h.b16 %v67
  %v336 = vunpack.c.l.b16 %v68
  %v337 = vunpack.c.h.b16 %v68
  %v338 = vunpack.c.l.b16 %v69
  %v339 = vunpack.c.h.b16 %v69
  %v340 = vunpack.c.l.b16 %v70
  %v341 = vunpack.c.h.b16 %v70
  %v342 = vunpack.c.l.b16 %v71
  %v343 = vunpack.c.h.b16 %v71
  %v344 = vunpack.c.l.b16 %v72
  %v345 = vunpack.c.h.b16 %v72
  %v346 = vunpack.c.l.b16 %v73
  %v347 = vunpack.c.h.b16 %v73
  %v348 = vunpack.c.l.b16 %v74
  %v349 = vunpack.c.h.b16 %v74
  %v350 = vunpack.c.l.b16 %v75
  %v351 = vunpack.c.h.b16 %v75
  %v352 = vunpack.c.l.b16 %v76
  %v353 = vunpack.c.h.b16 %v76
  %v354 = vunpack.c.l.b16 %v77
  %v355 = vunpack.c.h.b16 %v77
  %v356 = vunpack.c.l.b16 %v78
  %v357 = vunpack.c.h.b16 %v78
  %v358 = vunpack.c.l.b16 %v79
  %v359 = vunpack.c.h.b16 %v79
  %v360 = vunpack.c.l.b16 %v80
  %v361 = vunpack.c.h.b16 %v80
  %v362 = vunpack.c.l.b16 %v81
  %v363 = vunpack.c.h.b16 %v81
  %v364 = vunpack.c.l.b16 %v82
  %v365 = vunpack.c.h.b16 %v82
  %v366 = vunpack.c.l.b16 %v83
  %v367 = vunpack.c.h.b16 %v83
  %v368 = vunpack.c.l.b16 %v84
  %v369 = vunpack.c.h.b16 %v84
  %v370 = vunpack.c.l.b16 %v85
  %v371 = vunpack.c.h.b16 %v85
  %v372 = vunpack.c.l.b16 %v86
  %v373 = vunpack.c.h.b16 %v86
  %v374 = vunpack.c.l.b16 %v87
  %v375 = vunpack.c.h.b16 %v87
  %v376 = vunpack.c.l.b16 %v88
  %v377 = vunpack.c.h.b16 %v88
  %v378 = vunpack.c.l.b16 %v89
  %v379 = vunpack.c.h.b16 %v89
  %v380 = vunpack.c.l.b16 %v90
  %v381 = vunpack.c.h.b16 %v90
  %v382 = vunpack.c.l.b16 %v91
  %v383 = vunpack.c.h.b16 %v91
  %v384 = vunpack.c.l.b16 %v92
  %v385 = vunpack.c.h.b16 %v92
  %v386 = vunpack.c.l.b16 %v93
  %v387 = vunpack.c.h.b16 %v93
  %v388 = vunpack.c.l.b16 %v94
  %v389 = vunpack.c.h.b16 %v94
  %v390 = vunpack.c.l.b16 %v95
  %v391 = vunpack.c.h.b16 %v95
  %v392 = vunpack.c.l.b16 %v96
  %v393 = vunpack.c.h.b16 %v96
  %v394 = vunpack.c.l.b16 %v97
  %v395 = vunpack.c.h.b16 %v97
  %v396 = vunpack.c.l.b16 %v98
  %v397 = vunpack.c.h.b16 %v98
  %v398 = vunpack.c.l.b16 %v99
  %v399 = vunpack.c.h.b16 %v99
  %v400 = vunpack.c.l.b16 %v100
  %v401 = vunpack.c.h.b16 %v100
  %v402 = vunpack.c.l.b16 %v101
  %v403 = vunpack.c.h.b16 %v101
  %v404 = vunpack.c.l.b16 %v102
  %v405 = vunpack.c.h.b16 %v102
  %v406 = vunpack.c.l.b16 %v103
  %v407 = vunpack.c.h.b16 %v103
  %v408 = vunpack.c.l.b16 %v104
  %v409 = vunpack.c.h.b16 %v104
  %v410 = vunpack.c.l.b16 %v105
  %v411 = vunpack.c.h.b16 %v105
  %v412 = vunpack.c.l.b16 %v106
  %v413 = vunpack.c.h.b16 %v106
  %v414 = vunpack.c.l.b16 %v107
  %v415 = vunpack.c.h.b16 %v107
  %v416 = vunpack.c.l.b16 %v108
  %v417 = vunpack.c.h.b16 %v108
  %v418 = vunpack.c.l.b16 %v109
  %v419 = vunpack.c.h.b16 %v109
  %v420 = vunpack.c.l.b16 %v110
  %v421 = vunpack.c.h.b16 %v110
  %v422 = vunpack.c.l.b16 %v111
  %v423 = vunpack.c.h.b16 %v111
  %v424 = vunpack.c.l.b16 %v112
  %v425 = vunpack.c.h.b16 %v112
  %v426 = vunpack.c.l.b16 %v113
  %v427 = vunpack.c.h.b16 %v113
  %v428 = vunpack.c.l.b16 %v114
  %v429 = vunpack.c.h.b16 %v114
  %v430 = vunpack.c.l.b16 %v115
  %v431 = vunpack.c.h.b16 %v115
  %v432 = vunpack.c.l.b16 %v116
  %v433 = vunpack.c.h.b16 %v116
  %v434 = vunpack.c.l.b16 %v117
  %v435 = vunpack.c.h.b16 %v117
  %v436 = vunpack.c.l.b16 %v118
  %v437 = vunpack.c.h.b16 %v118
  %v438 = vunpack.c.l.b16 %v119
  %v439 = vunpack.c.h.b16 %v119
  %v440 = vunpack.c.l.b16 %v120
  %v441 = vunpack.c.h.b16 %v120
  %v442 = vunpack.c.l.b16 %v121
  %v443 = vunpack.c.h.b16 %v121
  %v444 = vunpack.c.l.b16 %v122
  %v445 = vunpack.c.h.b16 %v122
  %v446 = vunpack.c.l.b16 %v123
  %v447 = vunpack.c.h.b16 %v123
  %v448 = vunpack.c.l.b16 %v124
  %v449 = vunpack.c.h.b16 %v124
  %v450 = vunpack.c.l.b16 %v125
  %v451 = vunpack.c.h.b16 %v125
  %v452 = vunpack.c.l.b16 %v126
  %v453 = vunpack.c.h.b16 %v126
  %v454 = vunpack.c.l.b16 %v127
  %v455 = vunpack.c.h.b16 %v127
  %v456 = vunpack.c.l.b16 %v128
  %v457 = vunpack.c.h.b16 %v128
  %v458 = vunpack.c.l.b16 %v129
  %v459 = vunpack.c.h.b16 %v129
  %v460 = vunpack.c.l.b16 %v130
  %v461 = vunpack.c.h.b16 %v130
  %v462 = vunpack.c.l.b16 %v131
  %v463 = vunpack.c.h.b16 %v131
  %v464 = vunpack.c.l.b16 %v132
  %v465 = vunpack.c.h.b16 %v132
  %v466 = vunpack.c.l.b16 %v133
  %v467 = vunpack.c.h.b16 %v133
  %v468 = vunpack.c.l.b16 %v134
  %v469 = vunpack.c.h.b16 %v134
  %v470 = vunpack.c.l.b16 %v135
  %v471 = vunpack.c.h.b16 %v135
  %v472 = vunpack.c.l.b16 %v136
  %v473 = vunpack.c.h.b16 %v136
  %v474 = vunpack.c.l.b16 %v137
  %v475 = vunpack.c.h.b16 %v137
  %v476 = vunpack.c.l.b16 %v138
  %v477 = vunpack.c.h.b16 %v138
  %v478 = vunpack.c.l.b16 %v139
  %v479 = vunpack.c.h.b16 %v139
  %v480 = vunpack.c.l.b16 %v140
  %v481 = vunpack.c.h.b16 %v140
  %v482 = vunpack.c.l.b16 %v141
  %v483 = vunpack.c.h.b16 %v141
  %v484 = vunpack.c.l.b16 %v142
  %v485 = vunpack.c.h.b16 %v142
  %v486 = vunpack.c.l.b16 %v143
  %v487 = vunpack.c.h.b16 %v143
  %v488 = vunpack.c.l.b16 %v144
  %v489 = vunpack.c.h.b16 %v144
  %v490 = vunpack.c.l.b16 %v145
  %v491 = vunpack.c.h.b16 %v145
  %v492 = vunpack.c.l.b16 %v146
  %v493 = vunpack.c.h.b16 %v146
  %v494 = vunpack.c.l.b16 %v147
  %v495 = vunpack.c.h.b16 %v147
  %v496 = vunpack.c.l.b16 %v148
  %v497 = vunpack.c.h.b16 %v148
  %v498 = vunpack.c.l.b16 %v149
  %v499 = vunpack.c.h.b16 %v149
  %v500 = vunpack.c.l.b16 %v150
  %v501 = vunpack.c.h.b16 %v150
  %v502 = vunpack.c.l.b16 %v151
  %v503 = vunpack.c.h.b16 %v151
  %v504 = vunpack.c.l.b16 %v152
  %v505 = vunpack.c.h.b16 %v152
  %v506 = vunpack.c.l.b16 %v153
  %v507 = vunpack.c.h.b16 %v153
  %v508 = vunpack.c.l.b16 %v154
  %v509 = vunpack.c.h.b16 %v154
  %v510 = vunpack.c.l.b16 %v155
  %v511 = vunpack.c.h.b16 %v155
  %v512 = vunpack.c.l.b16 %v156
  %v513 = vunpack.c.h.b16 %v156
  %v514 = vunpack.c.l.b16 %v157
  %v515 = vunpack.c.h.b16 %v157
  %v516 = vunpack.c.l.b16 %v158
  %v517 = vunpack.c.h.b16 %v158
  %v518 = vunpack.c.l.b16 %v159
  %v519 = vunpack.c.h.b16 %v159
  %v520 = vunpack.c.l.b16 %v160
  %v521 = vunpack.c.h.b16 %v160
  %v522 = vunpack.c.l.b16 %v161
  %v523 = vunpack.c.h.b16 %v161
  %v524 = vunpack.c.l.b16 %v162
  %v525 = vunpack.c.h.b16 %v162
  %v526 = vunpack.c.l.b16 %v163
  %v527 = vunpack.c.h.b16 %v163
  %v528 = vunpack.c.l.b16 %v164
  %v529 = vunpack.c.h.b16 %v164
  %v530 = vunpack.c.l.b16 %v165
  %v531 = vunpack.c.h.b16 %v165
  %v532 = vunpack.c.l.b16 %v166
  %v533 = vunpack.c.h.b16 %v166
  %v534 = vunpack.c.l.b16 %v167
  %v535 = vunpack.c.h.b16 %v167
  %v536 = vunpack.c.l.b16 %v168
  %v537 = vunpack.c.h.b16 %v168
  %v538 = vunpack.c.l.b16 %v169
  %v539 = vunpack.c.h.b16 %v169
  %v540 = vunpack.c.l.b16 %v170
  %v541 = vunpack.c.h.b16 %v170
  %v542 = vunpack.c.l.b16 %v171
  %v543 = vunpack.c.h.b16 %v171
  %v544 = vunpack.c.l.b16 %v172
  %v545 = vunpack.c.h.b16 %v172
  %v546 = vunpack.c.l.b16 %v173
  %v547 = vunpack.c.h.b16 %v173
  %v548 = vunpack.c.l.b16 %v174
  %v549 = vunpack.c.h.b16 %v174
  %v550 = vunpack.c.l.b16 %v175
  %v551 = vunpack.c.h.b16 %v175
  %v552 = vunpack.c.l.b16 %v176
  %v553 = vunpack.c.h.b16 %v176
  %v554 = vunpack.c.l.b16 %v177
  %v555 = vunpack.c.h.b16 %v177
  %v556 = vunpack.c.l.b16 %v178
  %v557 = vunpack.c.h.b16 %v178
  %v558 = vunpack.c.l.b16 %v179
  %v559 = vunpack.c.h.b16 %v179
  %v560 = vunpack.c.l.b16 %v180
  %v561 = vunpack.c.h.b16 %v180
  %v562 = vunpack.c.l.b16 %v181
  %v563 = vunpack.c.h.b16 %v181
  %v564 = vunpack.c.l.b16 %v182
  %v565 = vunpack.c.h.b16 %v182
  %v566 = vunpack.c.l.b16 %v183
  %v567 = vunpack.c.h.b16 %v183
  %v568 = vpack.c.b16 %v320, %v312
  %v569 = vpack.c.b16 %v321, %v313
  %v570 = vpack.c.b16 %v322, %v314
  %v571 = vpack.c.b16 %v323, %v315
  %v572 = vpack.c.b16 %v324, %v316
  %v573 = vpack.c.b16 %v325, %v317
  %v574 = vpack.c.b16 %v326, %v318
  %v575 = vpack.c.b16 %v327, %v319
  %v576 = vpack.c.b16 %v336, %v328
  %v577 = vpack.c.b16 %v337, %v329
  %v578 = vpack.c.b16 %v338, %v330
  %v579 = vpack.c.b16 %v339, %v331
  %v580 = vpack.c.b16 %v340, %v332
  %v581 = vpack.c.b16 %v341, %v333
  %v582 = vpack.c.b16 %v342, %v334
  %v583 = vpack.c.b16 %v343, %v335
  %v584 = vpack.c.b16 %v352, %v344
  %v585 = vpack.c.b16 %v353, %v345
  %v586 = vpack.c.b16 %v354, %v346
  %v587 = vpack.c.b16 %v355, %v347
  %v588 = vpack.c.b16 %v356, %v348
  %v589 = vpack.c.b16 %v357, %v349
  %v590 = vpack.c.b16 %v358, %v350
  %v591 = vpack.c.b16 %v359, %v351
  %v592 = vpack.c.b16 %v368, %v360
  %v593 = vpack.c.b16 %v369, %v361
  %v594 = vpack.c.b16 %v370, %v362
  %v595 = vpack.c.b16 %v371, %v363
  %v596 = vpack.c.b16 %v372, %v364
  %v597 = vpack.c.b16 %v373, %v365
  %v598 = vpack.c.b16 %v374, %v366
  %v599 = vpack.c.b16 %v375, %v367
  %v600 = vpack.c.b16 %v384, %v376
  %v601 = vpack.c.b16 %v385, %v377
  %v602 = vpack.c.b16 %v386, %v378
  %v603 = vpack.c.b16 %v387, %v379
  %v604 = vpack.c.b16 %v388, %v380
  %v605 = vpack.c.b16 %v389, %v381
  %v606 = vpack.c.b16 %v390, %v382
  %v607 = vpack.c.b16 %v391, %v383
  %v608 = vpack.c.b16 %v400, %v392
  %v609 = vpack.c.b16 %v401, %v393
  %v610 = vpack.c.b16 %v402, %v394
  %v611 = vpack.c.b16 %v403, %v395
  %v612 = vpack.c.b16 %v404, %v396
  %v613 = vpack.c.b16 %v405, %v397
  %v614 = vpack.c.b16 %v406, %v398
  %v615 = vpack.c.b16 %v407, %v399
  %v616 = vpack.c.b16 %v416, %v408
  %v617 = vpack.c.b16 %v417, %v409
  %v618 = vpack.c.b16 %v418, %v410
  %v619 = vpack.c.b16 %v419, %v411
  %v620 = vpack.c.b16 %v420, %v412
  %v621 = vpack.c.b16 %v421, %v413
  %v622 = vpack.c.b16 %v422, %v414
  %v623 = vpack.c.b16 %v423, %v415
  %v624 = vpack.c.b16 %v432, %v424
  %v625 = vpack.c.b16 %v433, %v425
  %v626 = vpack.c.b16 %v434, %v426
  %v627 = vpack.c.b16 %v435, %v427
  %v628 = vpack.c.b16 %v436, %v428
  %v629 = vpack.c.b16 %v437, %v429
  %v630 = vpack.c.b16 %v438, %v430
  %v631 = vpack.c.b16 %v439, %v431
  %v632 = vpack.c.b16 %v448, %v440
  %v633 = vpack.c.b16 %v449, %v441
  %v634 = vpack.c.b16 %v450, %v442
  %v635 = vpack.c.b16 %v451, %v443
  %v636 = vpack.c.b16 %v452, %v444
  %v637 = vpack.c.b16 %v453, %v445
  %v638 = vpack.c.b16 %v454, %v446
  %v639 = vpack.c.b16 %v455, %v447
  %v640 = vpack.c.b16 %v464, %v456
  %v641 = vpack.c.b16 %v465, %v457
  %v642 = vpack.c.b16 %v466, %v458
  %v643 = vpack.c.b16 %v467, %v459
  %v644 = vpack.c.b16 %v468, %v460
  %v645 = vpack.c.b16 %v469, %v461
  %v646 = vpack.c.b16 %v470, %v462
  %v647 = vpack.c.b16 %v471, %v463
  %v648 = vpack.c.b16 %v480, %v472
  %v649 = vpack.c.b16 %v481, %v473
  %v650 = vpack.c.b16 %v482, %v474
  %v651 = vpack.c.b16 %v483, %v475
  %v652 = vpack.c.b16 %v484, %v476
  %v653 = vpack.c.b16 %v485, %v477
  %v654 = vpack.c.b16 %v486, %v478
  %v655 = vpack.c.b16 %v487, %v479
  %v656 = vpack.c.b16 %v496, %v488
  %v657 = vpack.c.b16 %v497, %v489
  %v658 = vpack.c.b16 %v498, %v490
  %v659 = vpack.c.b16 %v499, %v491
  %v660 = vpack.c.b16 %v500, %v492
  %v661 = vpack.c.b16 %v501, %v493
  %v662 = vpack.c.b16 %v502, %v494
  %v663 = vpack.c.b16 %v503, %v495
  %v664 = vpack.c.b16 %v512, %v504
  %v665 = vpack.c.b16 %v513, %v505
  %v666 = vpack.c.b16 %v514, %v506
  %v667 = vpack.c.b16 %v515, %v507
  %v668 = vpack.c.b16 %v516, %v508
  %v669 = vpack.c.b16 %v517, %v509
  %v670 = vpack.c.b16 %v518, %v510
  %v671 = vpack.c.b16 %v519, %v511
  %v672 = vpack.c.b16 %v528, %v520
  %v673 = vpack.c.b16 %v529, %v521
  %v674 = vpack.c.b16 %v530, %v522
  %v675 = vpack.c.b16 %v531, %v523
  %v676 = vpack.c.b16 %v532, %v524
  %v677 = vpack.c.b16 %v533, %v525
  %v678 = vpack.c.b16 %v534, %v526
  %v679 = vpack.c.b16 %v535, %v527
  %v680 = vpack.c.b16 %v544, %v536
  %v681 = vpack.c.b16 %v545, %v537
  %v682 = vpack.c.b16 %v546, %v538
  %v683 = vpack.c.b16 %v547, %v539
  %v684 = vpack.c.b16 %v548, %v540
  %v685 = vpack.c.b16 %v549, %v541
  %v686 = vpack.c.b16 %v550, %v542
  %v687 = vpack.c.b16 %v551, %v543
  %v688 = vpack.c.b16 %v560, %v552
  %v689 = vpack.c.b16 %v561, %v553
  %v690 = vpack.c.b16 %v562, %v554
  %v691 = vpack.c.b16 %v563, %v555
  %v692 = vpack.c.b16 %v564, %v556
  %v693 = vpack.c.b16 %v565, %v557
  %v694 = vpack.c.b16 %v566, %v558
  %v695 = vpack.c.b16 %v567, %v559
  %824 = vmatpush.bf16.msra.mxu0 %v624
  %825 = vmatpush.bf16.msra.mxu0 %v616
  %826 = vmatpush.bf16.msra.mxu0 %v608
  %827 = vmatpush.bf16.msra.mxu0 %v600
  %828 = vmatpush.bf16.msra.mxu0 %v592
  %829 = vmatpush.bf16.msra.mxu0 %v584
  %830 = vmatpush.bf16.msra.mxu0 %v576
  %831 = vmatpush.bf16.msra.mxu0 %v568
  %832 = vmatmul.bf16.gmra.mxu0 %v54
  %v833 = vpop.f32.mrf.mxu0
  %v834 = vadd.f32 0.0, %v833
  %v835 = vpop.f32.mrf.mxu0
  %v836 = vadd.f32 0.0, %v835
  %837 = vdwg.mxu0
  %838 = vmatpush.bf16.msra.mxu0 %v688
  %839 = vmatpush.bf16.msra.mxu0 %v680
  %840 = vmatpush.bf16.msra.mxu0 %v672
  %841 = vmatpush.bf16.msra.mxu0 %v664
  %842 = vmatpush.bf16.msra.mxu0 %v656
  %843 = vmatpush.bf16.msra.mxu0 %v648
  %844 = vmatpush.bf16.msra.mxu0 %v640
  %845 = vmatpush.bf16.msra.mxu0 %v632
  %846 = vmatmul.bf16.gmra.mxu0 %v55
  %v847 = vpop.f32.mrf.mxu0
  %v848 = vadd.f32 %v834, %v847
  %v849 = vpop.f32.mrf.mxu0
  %v850 = vadd.f32 %v836, %v849
  %851 = vdwg.mxu0
  %852 = vmatpush.bf16.msra.mxu0 %v625
  %853 = vmatpush.bf16.msra.mxu0 %v617
  %854 = vmatpush.bf16.msra.mxu0 %v609
  %855 = vmatpush.bf16.msra.mxu0 %v601
  %856 = vmatpush.bf16.msra.mxu0 %v593
  %857 = vmatpush.bf16.msra.mxu0 %v585
  %858 = vmatpush.bf16.msra.mxu0 %v577
  %859 = vmatpush.bf16.msra.mxu0 %v569
  %860 = vmatmul.bf16.gmra.mxu0 %v54
  %v861 = vpop.f32.mrf.mxu0
  %v862 = vadd.f32 0.0, %v861
  %v863 = vpop.f32.mrf.mxu0
  %v864 = vadd.f32 0.0, %v863
  %865 = vdwg.mxu0
  %866 = vmatpush.bf16.msra.mxu0 %v689
  %867 = vmatpush.bf16.msra.mxu0 %v681
  %868 = vmatpush.bf16.msra.mxu0 %v673
  %869 = vmatpush.bf16.msra.mxu0 %v665
  %870 = vmatpush.bf16.msra.mxu0 %v657
  %871 = vmatpush.bf16.msra.mxu0 %v649
  %872 = vmatpush.bf16.msra.mxu0 %v641
  %873 = vmatpush.bf16.msra.mxu0 %v633
  %874 = vmatmul.bf16.gmra.mxu0 %v55
  %v875 = vpop.f32.mrf.mxu0
  %v876 = vadd.f32 %v862, %v875
  %v877 = vpop.f32.mrf.mxu0
  %v878 = vadd.f32 %v864, %v877
  %879 = vdwg.mxu0
  %880 = vmatpush.bf16.msra.mxu0 %v626
  %881 = vmatpush.bf16.msra.mxu0 %v618
  %882 = vmatpush.bf16.msra.mxu0 %v610
  %883 = vmatpush.bf16.msra.mxu0 %v602
  %884 = vmatpush.bf16.msra.mxu0 %v594
  %885 = vmatpush.bf16.msra.mxu0 %v586
  %886 = vmatpush.bf16.msra.mxu0 %v578
  %887 = vmatpush.bf16.msra.mxu0 %v570
  %888 = vmatmul.bf16.gmra.mxu0 %v54
  %v889 = vpop.f32.mrf.mxu0
  %v890 = vadd.f32 0.0, %v889
  %v891 = vpop.f32.mrf.mxu0
  %v892 = vadd.f32 0.0, %v891
  %893 = vdwg.mxu0
  %894 = vmatpush.bf16.msra.mxu0 %v690
  %895 = vmatpush.bf16.msra.mxu0 %v682
  %896 = vmatpush.bf16.msra.mxu0 %v674
  %897 = vmatpush.bf16.msra.mxu0 %v666
  %898 = vmatpush.bf16.msra.mxu0 %v658
  %899 = vmatpush.bf16.msra.mxu0 %v650
  %900 = vmatpush.bf16.msra.mxu0 %v642
  %901 = vmatpush.bf16.msra.mxu0 %v634
  %902 = vmatmul.bf16.gmra.mxu0 %v55
  %v903 = vpop.f32.mrf.mxu0
  %v904 = vadd.f32 %v890, %v903
  %v905 = vpop.f32.mrf.mxu0
  %v906 = vadd.f32 %v892, %v905
  %907 = vdwg.mxu0
  %908 = vmatpush.bf16.msra.mxu0 %v627
  %909 = vmatpush.bf16.msra.mxu0 %v619
  %910 = vmatpush.bf16.msra.mxu0 %v611
  %911 = vmatpush.bf16.msra.mxu0 %v603
  %912 = vmatpush.bf16.msra.mxu0 %v595
  %913 = vmatpush.bf16.msra.mxu0 %v587
  %914 = vmatpush.bf16.msra.mxu0 %v579
  %915 = vmatpush.bf16.msra.mxu0 %v571
  %916 = vmatmul.bf16.gmra.mxu0 %v54
  %v917 = vpop.f32.mrf.mxu0
  %v918 = vadd.f32 0.0, %v917
  %v919 = vpop.f32.mrf.mxu0
  %v920 = vadd.f32 0.0, %v919
  %921 = vdwg.mxu0
  %922 = vmatpush.bf16.msra.mxu0 %v691
  %923 = vmatpush.bf16.msra.mxu0 %v683
  %924 = vmatpush.bf16.msra.mxu0 %v675
  %925 = vmatpush.bf16.msra.mxu0 %v667
  %926 = vmatpush.bf16.msra.mxu0 %v659
  %927 = vmatpush.bf16.msra.mxu0 %v651
  %928 = vmatpush.bf16.msra.mxu0 %v643
  %929 = vmatpush.bf16.msra.mxu0 %v635
  %930 = vmatmul.bf16.gmra.mxu0 %v55
  %v931 = vpop.f32.mrf.mxu0
  %v932 = vadd.f32 %v918, %v931
  %v933 = vpop.f32.mrf.mxu0
  %v934 = vadd.f32 %v920, %v933
  %935 = vdwg.mxu0
  %936 = vmatpush.bf16.msra.mxu0 %v628
  %937 = vmatpush.bf16.msra.mxu0 %v620
  %938 = vmatpush.bf16.msra.mxu0 %v612
  %939 = vmatpush.bf16.msra.mxu0 %v604
  %940 = vmatpush.bf16.msra.mxu0 %v596
  %941 = vmatpush.bf16.msra.mxu0 %v588
  %942 = vmatpush.bf16.msra.mxu0 %v580
  %943 = vmatpush.bf16.msra.mxu0 %v572
  %944 = vmatmul.bf16.gmra.mxu0 %v54
  %v945 = vpop.f32.mrf.mxu0
  %v946 = vadd.f32 0.0, %v945
  %v947 = vpop.f32.mrf.mxu0
  %v948 = vadd.f32 0.0, %v947
  %949 = vdwg.mxu0
  %950 = vmatpush.bf16.msra.mxu0 %v692
  %951 = vmatpush.bf16.msra.mxu0 %v684
  %952 = vmatpush.bf16.msra.mxu0 %v676
  %953 = vmatpush.bf16.msra.mxu0 %v668
  %954 = vmatpush.bf16.msra.mxu0 %v660
  %955 = vmatpush.bf16.msra.mxu0 %v652
  %956 = vmatpush.bf16.msra.mxu0 %v644
  %957 = vmatpush.bf16.msra.mxu0 %v636
  %958 = vmatmul.bf16.gmra.mxu0 %v55
  %v959 = vpop.f32.mrf.mxu0
  %v960 = vadd.f32 %v946, %v959
  %v961 = vpop.f32.mrf.mxu0
  %v962 = vadd.f32 %v948, %v961
  %963 = vdwg.mxu0
  %964 = vmatpush.bf16.msra.mxu0 %v629
  %965 = vmatpush.bf16.msra.mxu0 %v621
  %966 = vmatpush.bf16.msra.mxu0 %v613
  %967 = vmatpush.bf16.msra.mxu0 %v605
  %968 = vmatpush.bf16.msra.mxu0 %v597
  %969 = vmatpush.bf16.msra.mxu0 %v589
  %970 = vmatpush.bf16.msra.mxu0 %v581
  %971 = vmatpush.bf16.msra.mxu0 %v573
  %972 = vmatmul.bf16.gmra.mxu0 %v54
  %v973 = vpop.f32.mrf.mxu0
  %v974 = vadd.f32 0.0, %v973
  %v975 = vpop.f32.mrf.mxu0
  %v976 = vadd.f32 0.0, %v975
  %977 = vdwg.mxu0
  %978 = vmatpush.bf16.msra.mxu0 %v693
  %979 = vmatpush.bf16.msra.mxu0 %v685
  %980 = vmatpush.bf16.msra.mxu0 %v677
  %981 = vmatpush.bf16.msra.mxu0 %v669
  %982 = vmatpush.bf16.msra.mxu0 %v661
  %983 = vmatpush.bf16.msra.mxu0 %v653
  %984 = vmatpush.bf16.msra.mxu0 %v645
  %985 = vmatpush.bf16.msra.mxu0 %v637
  %986 = vmatmul.bf16.gmra.mxu0 %v55
  %v987 = vpop.f32.mrf.mxu0
  %v988 = vadd.f32 %v974, %v987
  %v989 = vpop.f32.mrf.mxu0
  %v990 = vadd.f32 %v976, %v989
  %991 = vdwg.mxu0
  %992 = vmatpush.bf16.msra.mxu0 %v630
  %993 = vmatpush.bf16.msra.mxu0 %v622
  %994 = vmatpush.bf16.msra.mxu0 %v614
  %995 = vmatpush.bf16.msra.mxu0 %v606
  %996 = vmatpush.bf16.msra.mxu0 %v598
  %997 = vmatpush.bf16.msra.mxu0 %v590
  %998 = vmatpush.bf16.msra.mxu0 %v582
  %999 = vmatpush.bf16.msra.mxu0 %v574
  %1000 = vmatmul.bf16.gmra.mxu0 %v54
  %v1001 = vpop.f32.mrf.mxu0
  %v1002 = vadd.f32 0.0, %v1001
  %v1003 = vpop.f32.mrf.mxu0
  %v1004 = vadd.f32 0.0, %v1003
  %1005 = vdwg.mxu0
  %1006 = vmatpush.bf16.msra.mxu0 %v694
  %1007 = vmatpush.bf16.msra.mxu0 %v686
  %1008 = vmatpush.bf16.msra.mxu0 %v678
  %1009 = vmatpush.bf16.msra.mxu0 %v670
  %1010 = vmatpush.bf16.msra.mxu0 %v662
  %1011 = vmatpush.bf16.msra.mxu0 %v654
  %1012 = vmatpush.bf16.msra.mxu0 %v646
  %1013 = vmatpush.bf16.msra.mxu0 %v638
  %1014 = vmatmul.bf16.gmra.mxu0 %v55
  %v1015 = vpop.f32.mrf.mxu0
  %v1016 = vadd.f32 %v1002, %v1015
  %v1017 = vpop.f32.mrf.mxu0
  %v1018 = vadd.f32 %v1004, %v1017
  %1019 = vdwg.mxu0
  %1020 = vmatpush.bf16.msra.mxu0 %v631
  %1021 = vmatpush.bf16.msra.mxu0 %v623
  %1022 = vmatpush.bf16.msra.mxu0 %v615
  %1023 = vmatpush.bf16.msra.mxu0 %v607
  %1024 = vmatpush.bf16.msra.mxu0 %v599
  %1025 = vmatpush.bf16.msra.mxu0 %v591
  %1026 = vmatpush.bf16.msra.mxu0 %v583
  %1027 = vmatpush.bf16.msra.mxu0 %v575
  %1028 = vmatmul.bf16.gmra.mxu0 %v54
  %v1029 = vpop.f32.mrf.mxu0
  %v1030 = vadd.f32 0.0, %v1029
  %v1031 = vpop.f32.mrf.mxu0
  %v1032 = vadd.f32 0.0, %v1031
  %1033 = vdwg.mxu0
  %1034 = vmatpush.bf16.msra.mxu0 %v695
  %1035 = vmatpush.bf16.msra.mxu0 %v687
  %1036 = vmatpush.bf16.msra.mxu0 %v679
  %1037 = vmatpush.bf16.msra.mxu0 %v671
  %1038 = vmatpush.bf16.msra.mxu0 %v663
  %1039 = vmatpush.bf16.msra.mxu0 %v655
  %1040 = vmatpush.bf16.msra.mxu0 %v647
  %1041 = vmatpush.bf16.msra.mxu0 %v639
  %1042 = vmatmul.bf16.gmra.mxu0 %v55
  %v1043 = vpop.f32.mrf.mxu0
  %v1044 = vadd.f32 %v1030, %v1043
  %v1045 = vpop.f32.mrf.mxu0
  %v1046 = vadd.f32 %v1032, %v1045
  %1047 = vdwg.mxu0
  %v1048 = vadd.f32 %v34, %v848
  %v1049 = vadd.f32 %v35, %v876
  %v1050 = vadd.f32 %v36, %v904
  %v1051 = vadd.f32 %v37, %v932
  %v1052 = vadd.f32 %v38, %v960
  %v1053 = vadd.f32 %v39, %v988
  %v1054 = vadd.f32 %v40, %v1016
  %v1055 = vadd.f32 %v41, %v1044
  %v1056 = vadd.f32 %v42, %v850
  %v1057 = vadd.f32 %v43, %v878
  %v1058 = vadd.f32 %v44, %v906
  %v1059 = vadd.f32 %v45, %v934
  %v1060 = vadd.f32 %v46, %v962
  %v1061 = vadd.f32 %v47, %v990
  %v1062 = vadd.f32 %v48, %v1018
  %v1063 = vadd.f32 %v49, %v1046
  %1064 = vst [vmem:[#allocation2] sm:$0xff] %v1048
  %1065 = vst [vmem:[#allocation2 + $0x8] sm:$0xff] %v1049
  %1066 = vst [vmem:[#allocation2 + $0x10] sm:$0xff] %v1050
  %1067 = vst [vmem:[#allocation2 + $0x18] sm:$0xff] %v1051
  %1068 = vst [vmem:[#allocation2 + $0x20] sm:$0xff] %v1052
  %1069 = vst [vmem:[#allocation2 + $0x28] sm:$0xff] %v1053
  %1070 = vst [vmem:[#allocation2 + $0x30] sm:$0xff] %v1054
  %1071 = vst [vmem:[#allocation2 + $0x38] sm:$0xff] %v1055
  %1072 = vst [vmem:[#allocation2 + $0x40] sm:$0xff] %v1056
  %1073 = vst [vmem:[#allocation2 + $0x48] sm:$0xff] %v1057
  %1074 = vst [vmem:[#allocation2 + $0x50] sm:$0xff] %v1058
  %1075 = vst [vmem:[#allocation2 + $0x58] sm:$0xff] %v1059
  %1076 = vst [vmem:[#allocation2 + $0x60] sm:$0xff] %v1060
  %1077 = vst [vmem:[#allocation2 + $0x68] sm:$0xff] %v1061
  %1078 = vst [vmem:[#allocation2 + $0x70] sm:$0xff] %v1062
  %1079 = vst [vmem:[#allocation2 + $0x78] sm:$0xff] %v1063
  // Predicated region
  $region18: #{crnn_forward.14} parent=0 // pred_check
    %p1080 = pneg %p14
  $region19: #{crnn_forward.14} parent=0 // pred_check_branch
    %1082 = sbr.rel (%p1080) target = $region21
  $region20: #{crnn_forward.14} parent=0 // pred_region
    %v1083 = vld [vmem:[#allocation2] sm:$0xff]
    %v1084 = vld [vmem:[#allocation2 + $0x8] sm:$0xff]
    %v1085 = vld [vmem:[#allocation2 + $0x10] sm:$0xff]
    %v1086 = vld [vmem:[#allocation2 + $0x18] sm:$0xff]
    %v1087 = vld [vmem:[#allocation2 + $0x20] sm:$0xff]
    %v1088 = vld [vmem:[#allocation2 + $0x28] sm:$0xff]
    %v1089 = vld [vmem:[#allocation2 + $0x30] sm:$0xff]
    %v1090 = vld [vmem:[#allocation2 + $0x38] sm:$0xff]
    %v1091 = vld [vmem:[#allocation2 + $0x40] sm:$0xff]
    %v1092 = vld [vmem:[#allocation2 + $0x48] sm:$0xff]
    %v1093 = vld [vmem:[#allocation2 + $0x50] sm:$0xff]
    %v1094 = vld [vmem:[#allocation2 + $0x58] sm:$0xff]
    %v1095 = vld [vmem:[#allocation2 + $0x60] sm:$0xff]
    %v1096 = vld [vmem:[#allocation2 + $0x68] sm:$0xff]
    %v1097 = vld [vmem:[#allocation2 + $0x70] sm:$0xff]
    %v1098 = vld [vmem:[#allocation2 + $0x78] sm:$0xff]
    %v1099 = vld [vmem:[%s2] sm:$0xff]
    %v1101 = vperm.slane %v1099, 0
    %v1102 = vperm.slane %v1099, 1
    %v1103 = vperm.slane %v1099, 2
    %v1104 = vperm.slane %v1099, 3
    %v1105 = vperm.slane %v1099, 4
    %v1106 = vperm.slane %v1099, 5
    %v1107 = vperm.slane %v1099, 6
    %v1108 = vperm.slane %v1099, 7
    %v1117 = vadd.f32 %v1083, %v1101
    %v1118 = vadd.f32 %v1084, %v1102
    %v1119 = vadd.f32 %v1085, %v1103
    %v1120 = vadd.f32 %v1086, %v1104
    %v1121 = vadd.f32 %v1087, %v1105
    %v1122 = vadd.f32 %v1088, %v1106
    %v1123 = vadd.f32 %v1089, %v1107
    %v1124 = vadd.f32 %v1090, %v1108
    %v1125 = vadd.f32 %v1091, %v1101
    %v1126 = vadd.f32 %v1092, %v1102
    %v1127 = vadd.f32 %v1093, %v1103
    %v1128 = vadd.f32 %v1094, %v1104
    %v1129 = vadd.f32 %v1095, %v1105
    %v1130 = vadd.f32 %v1096, %v1106
    %v1131 = vadd.f32 %v1097, %v1107
    %v1132 = vadd.f32 %v1098, %v1108
    %1133 = vst [vmem:[%s3] sm:$0xff] %v1117
    %1134 = vst [vmem:[%s3 + $0x8] sm:$0xff] %v1118
    %1135 = vst [vmem:[%s3 + $0x10] sm:$0xff] %v1119
    %1136 = vst [vmem:[%s3 + $0x18] sm:$0xff] %v1120
    %1137 = vst [vmem:[%s3 + $0x20] sm:$0xff] %v1121
    %1138 = vst [vmem:[%s3 + $0x28] sm:$0xff] %v1122
    %1139 = vst [vmem:[%s3 + $0x30] sm:$0xff] %v1123
    %1140 = vst [vmem:[%s3 + $0x38] sm:$0xff] %v1124
    %1141 = vst [vmem:[%s3 + $0x40] sm:$0xff] %v1125
    %1142 = vst [vmem:[%s3 + $0x48] sm:$0xff] %v1126
    %1143 = vst [vmem:[%s3 + $0x50] sm:$0xff] %v1127
    %1144 = vst [vmem:[%s3 + $0x58] sm:$0xff] %v1128
    %1145 = vst [vmem:[%s3 + $0x60] sm:$0xff] %v1129
    %1146 = vst [vmem:[%s3 + $0x68] sm:$0xff] %v1130
    %1147 = vst [vmem:[%s3 + $0x70] sm:$0xff] %v1131
    %1148 = vst [vmem:[%s3 + $0x78] sm:$0xff] %v1132
  $region21: #{crnn_forward.14} parent=0 // pred_fallthru
    _
  // Predicated region
  $region22: #{crnn_forward.14} parent=0 // pred_check
    _
  $region23: #{crnn_forward.14} parent=0 // pred_check_branch
    %1150 = sbr.rel (0) target = $region25
  $region24: #{crnn_forward.14} parent=0 // pred_region
    _
  $region25: #{crnn_forward.14} parent=0 // pred_fallthru
    _
  // Predicated region
  $region26: #{crnn_forward.14} parent=0 // pred_check
    _
  $region27: #{crnn_forward.14} parent=0 // pred_check_branch
    %1152 = sbr.rel (0) target = $region29
  $region28: #{crnn_forward.14} parent=0 // pred_region
    _
  $region29: #{crnn_forward.14} parent=0 // pred_fallthru
    _

</llo_original>
